<compile_context>
chip_gen: v7x
topology: tpu7x:2x2x1
jax: 0.10.0
libtpu: 0.0.40
codegen_flags: <defaults>
</compile_context>

<pallas_src>
import functools
from collections import namedtuple

import jax
import jax.numpy as jnp
from jax.experimental import pallas as pl
from jax.experimental.pallas import tpu as pltpu

Memory = namedtuple("Memory", ["mems", "elapsed_times"])

# Tile-size targets (sweepable); _tile() shrinks them to divisors of the actual dims.
_TM, _TN, _TK = 512, 256, 512


@functools.lru_cache(maxsize=None)
def _vmem_limit_bytes():
    # v7x has 64 MiB physical VMEM vs 128 MiB on v5e/v6e -> budget per generation.
    try:
        cap = pltpu.get_tpu_info().vmem_capacity_bytes
        return int(min(cap * 0.75, 100 * 1024 * 1024))
    except Exception:
        return 48 * 1024 * 1024


def _tile(dim, target, base):
    """Largest tile <= target that divides `dim` and is a multiple of `base`;
    falls back to the full dim (which always satisfies the (8,128) block rule)."""
    if dim <= target:
        return dim
    cand = (target // base) * base
    while cand >= base:
        if dim % cand == 0:
            return cand
        cand -= base
    return dim


def _compiler_params(dims):
    return pltpu.CompilerParams(dimension_semantics=dims,
                                vmem_limit_bytes=_vmem_limit_bytes())


# ----------------------- fused (LN) + matmul + epilogue ----------------------

def _fused_linear_kernel(*refs, activation, has_residual, has_ln):
    # x:(tm,tk) w:(tk,tn) b:(1,tn) [g,(1,tk) beta,(1,tk)] [res:(tm,tn)] -> out:(tm,tn)
    # acc:(tm,tn) f32 scratch.  When has_ln, tk == K so LN sees the full feature dim.
    x_ref, w_ref, b_ref = refs[:3]
    idx = 3
    if has_ln:
        g_ref, beta_ref = refs[idx], refs[idx + 1]
        idx += 2
    if has_residual:
        r_ref = refs[idx]
        idx += 1
    o_ref, acc_ref = refs[idx], refs[idx + 1]

    @pl.when(pl.program_id(2) == 0)
    def _init():
        acc_ref[...] = jnp.zeros_like(acc_ref)

    x = x_ref[...]
    if has_ln:
        xf = x.astype(jnp.float32)                    # LN stats always in f32
        mean = jnp.mean(xf, axis=-1, keepdims=True)
        var = jnp.mean(jnp.square(xf - mean), axis=-1, keepdims=True)
        xf = (xf - mean) * jax.lax.rsqrt(var + 1e-5)  # torch LayerNorm eps=1e-5
        xf = xf * g_ref[...].astype(jnp.float32) + beta_ref[...].astype(jnp.float32)
        x = xf.astype(w_ref.dtype)

    acc_ref[...] += jnp.dot(x, w_ref[...], preferred_element_type=jnp.float32)

    @pl.when(pl.program_id(2) == pl.num_programs(2) - 1)
    def _finalize():
        y = acc_ref[...] + b_ref[...].astype(jnp.float32)
        if activation == "gelu":
            # TODO(synk): exact-erf GELU (nn.GELU default) approximated with the tanh
            # form in-kernel (erf lowering availability uncertain); |diff| < ~3e-3.
            y = jax.nn.gelu(y, approximate=True)
        if has_residual:
            y = y + r_ref[...].astype(jnp.float32)
        o_ref[...] = y.astype(o_ref.dtype)


def fused_linear(x, w, b, *, ln=None, residual=None, activation=None, out_dtype=None):
    """y = act(LN?(x) @ w + b) (+ residual), tiled (M,N,K) with f32 accumulation."""
    M, K = x.shape
    K2, N = w.shape
    assert K == K2
    out_dtype = out_dtype or x.dtype
    tm = _tile(M, _TM, 8)
    tn = _tile(N, _TN, 128)
    tk = K if ln is not None else _tile(K, _TK, 128)   # LN needs the full feature dim

    in_specs = [
        pl.BlockSpec((tm, tk), lambda i, j, k: (i, k)),
        pl.BlockSpec((tk, tn), lambda i, j, k: (k, j)),
        pl.BlockSpec((1, tn), lambda i, j, k: (0, j)),
    ]
    args = [x, w, b.reshape(1, N)]
    if ln is not None:
        g, beta = ln
        in_specs += [pl.BlockSpec((1, tk), lambda i, j, k: (0, k)),
                     pl.BlockSpec((1, tk), lambda i, j, k: (0, k))]
        args += [g.reshape(1, K), beta.reshape(1, K)]
    if residual is not None:
        in_specs.append(pl.BlockSpec((tm, tn), lambda i, j, k: (i, j)))
        args.append(residual)

    kernel = functools.partial(_fused_linear_kernel, activation=activation,
                               has_residual=residual is not None,
                               has_ln=ln is not None)
    return pl.pallas_call(
        kernel,
        out_shape=jax.ShapeDtypeStruct((M, N), out_dtype),
        grid=(M // tm, N // tn, K // tk),
        in_specs=in_specs,
        out_specs=pl.BlockSpec((tm, tn), lambda i, j, k: (i, j)),
        scratch_shapes=[pltpu.VMEM((tm, tn), jnp.float32)],
        compiler_params=_compiler_params(("parallel", "parallel", "arbitrary")),
    )(*args)


# ------------------- flash-style causal rel-pos attention --------------------

def _flash_attention_kernel(pos_ref, q_ref, k_ref, v_ref, o_ref,
                            m_sc, l_sc, acc_sc, *, scale, blk):
    # pos_ref: (n+blk, dh) zero-padded pos projection (resident); q/k/v: (blk, dh) bf16
    # blocks of head h, batch b; o_ref: (blk, dh); m/l: (blk,1) f32; acc: (blk, dh) f32.
    qi = pl.program_id(2)
    ki = pl.program_id(3)
    n = pos_ref.shape[0] - blk

    @pl.when(ki <= qi)                       # skip fully-masked upper-triangle KV blocks
    def _process():
        @pl.when(ki == 0)
        def _init():
            m_sc[...] = jnp.full(m_sc.shape, -1e30, jnp.float32)
            l_sc[...] = jnp.zeros(l_sc.shape, jnp.float32)
            acc_sc[...] = jnp.zeros(acc_sc.shape, jnp.float32)

        q = q_ref[...]                                           # (blk, dh)
        # pos rows needed for this (qi, ki) block: [n - (qi - ki + 1)*blk, + 2*blk)
        start = pl.multiple_of(n + (ki - qi - 1) * blk, blk)
        w = pos_ref[pl.ds(start, 2 * blk), :]                    # (2*blk, dh)
        # one MXU call: scores = q @ [K_block ; pos_window]^T -> (blk, 3*blk)
        rhs = jnp.concatenate([k_ref[...], w], axis=0)
        s = jax.lax.dot_general(q, rhs, (((1,), (1,)), ((), ())),
                                preferred_element_type=jnp.float32)
        content = s[:, :blk]
        # TransformerXL rel_shift as a per-row shear on the XLU (static shift, stride 1):
        #   rel[ii, jj] = q[ii] . pos[n - 1 - (q0 + ii) + (c0 + jj)]
        rel = pltpu.roll(s[:, blk:], shift=blk + 1, axis=1,
                         stride=1, stride_axis=0)[:, :blk]
        dots = (content + rel) * scale

        row = qi * blk + jax.lax.broadcasted_iota(jnp.int32, (blk, blk), 0)
        col = ki * blk + jax.lax.broadcasted_iota(jnp.int32, (blk, blk), 1)
        dots = jnp.where(col > row, -1e30, dots)                 # finite causal mask

        m_prev = m_sc[...]
        m_new = jnp.maximum(m_prev, jnp.max(dots, axis=-1, keepdims=True))
        alpha = jnp.exp(m_prev - m_new)
        # TODO(synk): on v6e/v7x the exp argument could be bf16 for ~2x EUP throughput.
        p = jnp.exp(dots - m_new)
        l_sc[...] = alpha * l_sc[...] + jnp.sum(p, axis=-1, keepdims=True)
        acc_sc[...] = alpha * acc_sc[...] + jax.lax.dot_general(
            p.astype(v_ref.dtype), v_ref[...], (((1,), (0,)), ((), ())),
            preferred_element_type=jnp.float32)
        m_sc[...] = m_new

        @pl.when(ki == qi)                   # last causal block for this query tile
        def _finalize():
            o_ref[...] = (acc_sc[...] *
                          pl.reciprocal(l_sc[...], approx=True)).astype(o_ref.dtype)


def causal_rel_attention(qkv, pos_proj, *, heads, scale):
    """qkv: (b, n, 3d) bf16 (columns [q|k|v], head-blocked); pos_proj: (n, dh) bf16.
    Returns (b*n, d) bf16 attention output (heads concatenated along lanes)."""
    b, n, three_d = qkv.shape
    d = three_d // 3
    dh = d // heads
    blk = _tile(n, 256, 128)
    assert n % blk == 0

    # head-major layout so every per-(b, h) block has full trailing dims (layout plumbing
    # left to XLA).  Output heads stay lane-padded to dh (<128 => masked stores; known).
    qkv_h = qkv.reshape(b, n, 3, heads, dh).transpose(2, 0, 3, 1, 4)   # (3, b, h, n, dh)
    q, k, v = qkv_h[0], qkv_h[1], qkv_h[2]
    pos_ext = jnp.concatenate(
        [pos_proj, jnp.zeros((blk, dh), pos_proj.dtype)], axis=0)       # (n+blk, dh)

    kernel = functools.partial(_flash_attention_kernel, scale=scale, blk=blk)
    out = pl.pallas_call(
        kernel,
        out_shape=jax.ShapeDtypeStruct((b, heads, n, dh), qkv.dtype),
        grid=(b, heads, n // blk, n // blk),
        in_specs=[
            pl.BlockSpec((n + blk, dh), lambda bi, hi, qi, ki: (0, 0)),
            pl.BlockSpec((None, None, blk, dh),
                         lambda bi, hi, qi, ki: (bi, hi, qi, 0)),
            # clamp skipped (fully-masked) KV blocks so no new DMA is issued for them
            pl.BlockSpec((None, None, blk, dh),
                         lambda bi, hi, qi, ki: (bi, hi, jnp.minimum(ki, qi), 0)),
            pl.BlockSpec((None, None, blk, dh),
                         lambda bi, hi, qi, ki: (bi, hi, jnp.minimum(ki, qi), 0)),
        ],
        out_specs=pl.BlockSpec((None, None, blk, dh),
                               lambda bi, hi, qi, ki: (bi, hi, qi, 0)),
        scratch_shapes=[pltpu.VMEM((blk, 1), jnp.float32),
                        pltpu.VMEM((blk, 1), jnp.float32),
                        pltpu.VMEM((blk, dh), jnp.float32)],
        compiler_params=_compiler_params(
            ("parallel", "parallel", "parallel", "arbitrary")),
    )(pos_ext, q, k, v)
    return out.transpose(0, 2, 1, 3).reshape(b * n, d)


# ------------------------------- model glue ---------------------------------

def sinusoidal_emb(n, dim):
    inv_freq = 1.0 / (10000.0 ** (jnp.arange(0, dim, 2, dtype=jnp.float32) / dim))
    t = jnp.arange(n - 1, -1, -1, dtype=jnp.float32)
    sinusoid = jnp.einsum("i,j->ij", t, inv_freq)
    return jnp.concatenate([jnp.sin(sinusoid), jnp.cos(sinusoid)], axis=-1)


def expire_span_transformer_xl_forward(params, tokens, cfg, memory=None):
    b, n = tokens.shape
    d, heads, depth = cfg["dim"], cfg["heads"], cfg["depth"]
    dh = d // heads
    seq_len, max_mem_len = cfg["seq_len"], cfg["max_mem_len"]
    scale = dh ** -0.5
    bf16 = jnp.bfloat16

    # residual stream carried in bf16; f32 only inside accumulators / LN / softmax stats
    x = params["token_emb"][tokens].astype(bf16).reshape(b * n, d)
    pos_emb = sinusoidal_emb(n, d)                          # (n, d) f32

    hidden_states = []
    mems_layers = memory.mems if memory is not None else (None,) * depth
    times_layers = memory.elapsed_times if memory is not None else (None,) * depth
    aux_loss = jnp.asarray(0.0, jnp.float32)

    for mem, elapsed, lp in zip(mems_layers, times_layers, params["layers"]):
        hidden_states.append(x.reshape(b, n, d))
        # TODO(synk): ExpireSpan memory path (mem is not None), masked_select/topk-based
        # expired-memory pruning, and training-mode forget-dropout produce data-dependent
        # shapes / RNG branches with no clean Pallas/JAX equivalent; only memory=None runs.
        assert mem is None and elapsed is None

        # --- PreNorm + CausalAttention: LN fused into the QKV matmul prologue, tiny
        #     pos projection left to XLA, flash attention, residual fused into out-proj.
        qkv = fused_linear(x, lp["w_qkv"].astype(bf16), lp["b_qkv"],
                           ln=(lp["ln1_g"], lp["ln1_b"]), out_dtype=bf16)
        pos_proj = (pos_emb @ lp["wpos"] + lp["bpos"]).astype(bf16)     # (n, dh)
        attn = causal_rel_attention(qkv.reshape(b, n, 3 * d), pos_proj,
                                    heads=heads, scale=scale)           # (b*n, d) bf16
        x = fused_linear(attn, lp["wo"].astype(bf16), lp["bo"],
                         residual=x, out_dtype=bf16)

        # --- PreNorm + FeedForward: LN fused into FF1 prologue, GELU in FF1 epilogue,
        #     residual fused into FF2 epilogue.
        hid = fused_linear(x, lp["wff1"].astype(bf16), lp["bff1"],
                           ln=(lp["ln2_g"], lp["ln2_b"]),
                           activation="gelu", out_dtype=bf16)
        x = fused_linear(hid, lp["wff2"].astype(bf16), lp["bff2"],
                         residual=x, out_dtype=bf16)

    # logits: vocab padded to a multiple of 128 (lane-dense stores, bounded weight
    # blocks on v7x); padding sliced off afterwards.
    w_log, b_log = params["w_logits"], params["b_logits"]
    vocab = w_log.shape[1]
    pad = (-vocab) % 128
    if pad:
        w_log = jnp.pad(w_log, ((0, 0), (0, pad)))
        b_log = jnp.pad(b_log, ((0, pad),))
    logits = fused_linear(x, w_log.astype(bf16), b_log, out_dtype=jnp.float32)
    logits = logits[:, :vocab].reshape(b, n, vocab)

    memory_out = memory
    if seq_len == n:
        # expire_mask is None for every layer -> no pruning branch
        new_memories = []
        for mems, hs in zip(mems_layers, hidden_states):
            cat = hs if mems is None else jnp.concatenate([mems, hs], axis=1)
            new_memories.append(jax.lax.stop_gradient(cat[:, -max_mem_len:]))
        new_times = jnp.tile(jnp.arange(n - 1, -1, -1, dtype=jnp.int32)[None, :], (b, 1))
        new_elapsed = []
        for t_prev in times_layers:
            t_cat = new_times if t_prev is None else jnp.concatenate([t_prev + n, new_times], axis=1)
            # NOTE: dim-0 slice is faithful to the PyTorch source (`t[-self.max_mem_len:]`)
            new_elapsed.append(t_cat[-max_mem_len:])
        memory_out = Memory(new_memories, new_elapsed)

    return logits, memory_out, aux_loss


# --------------------------- parameter init ----------------------------------

def init_params(key, cfg):
    dim, heads, depth, num_tokens = cfg["dim"], cfg["heads"], cfg["depth"], cfg["num_tokens"]
    dh = dim // heads
    keys = iter(jax.random.split(key, 8 + depth * 16))

    def lin(fin, fout):
        lim = 1.0 / (fin ** 0.5)
        w = jax.random.uniform(next(keys), (fin, fout), jnp.float32, -lim, lim)
        b_ = jax.random.uniform(next(keys), (fout,), jnp.float32, -lim, lim)
        return w, b_

    params = {"token_emb": jax.random.normal(next(keys), (num_tokens, dim), jnp.float32)}
    layers = []
    for _ in range(depth):
        lp = {}
        lp["ln1_g"] = jnp.ones((dim,), jnp.float32)
        lp["ln1_b"] = jnp.zeros((dim,), jnp.float32)
        wq, bq = lin(dim, dim)
        wkv, bkv = lin(dim, 2 * dim)
        lp["w_qkv"] = jnp.concatenate([wq, wkv], axis=1)       # [q | k | v]
        lp["b_qkv"] = jnp.concatenate([bq, bkv], axis=0)
        lp["wpos"], lp["bpos"] = lin(dim, dh)
        lp["wo"], lp["bo"] = lin(dim, dim)
        lp["ln2_g"] = jnp.ones((dim,), jnp.float32)
        lp["ln2_b"] = jnp.zeros((dim,), jnp.float32)
        lp["wff1"], lp["bff1"] = lin(dim, 4 * dim)
        lp["wff2"], lp["bff2"] = lin(4 * dim, dim)
        # ExpireSpan params (unused in the memory=None forward; kept for __init__ fidelity)
        w_exp, _ = lin(dim, 1)
        lp["w_exp"] = w_exp
        lp["b_exp"] = jnp.full((1,), -float(cfg["max_mem_len"]), jnp.float32)
        layers.append(lp)
    params["layers"] = layers
    params["w_logits"], params["b_logits"] = lin(dim, num_tokens)
    return params


# --------------------------- pure-JAX reference -------------------------------

def _rel_shift_ref(t):
    b_, h_, i_, j_ = t.shape
    zero = jnp.zeros((b_, h_, i_, 1), t.dtype)
    cat = jnp.concatenate([zero, t], axis=-1)
    return cat.reshape(b_, h_, j_ + 1, i_)[:, :, 1:].reshape(t.shape)


def _ln_ref(x, g, b_):
    mean = x.mean(-1, keepdims=True)
    var = ((x - mean) ** 2).mean(-1, keepdims=True)
    return (x - mean) / jnp.sqrt(var + 1e-5) * g + b_


def reference_forward(params, tokens, cfg):
    b, n = tokens.shape
    d, heads = cfg["dim"], cfg["heads"]
    dh = d // heads
    scale = dh ** -0.5
    x = params["token_emb"][tokens]
    pos_emb = sinusoidal_emb(n, d)
    for lp in params["layers"]:
        xn = _ln_ref(x, lp["ln1_g"], lp["ln1_b"])
        qkv = xn @ lp["w_qkv"] + lp["b_qkv"]
        q, k, v = jnp.split(qkv, 3, axis=-1)

        def to_heads(t):
            return t.reshape(b, n, heads, dh).transpose(0, 2, 1, 3)

        q, k, v = map(to_heads, (q, k, v))
        dots = jnp.einsum("bhid,bhjd->bhij", q, k) * scale
        pos = pos_emb @ lp["wpos"] + lp["bpos"]
        pos_dots = jnp.einsum("bhid,jd->bhij", q, pos) * scale
        pos_dots = _rel_shift_ref(pos_dots)
        dots = dots + pos_dots
        mask = jnp.triu(jnp.ones((n, n), bool), 1)
        dots = jnp.where(mask[None, None], -jnp.inf, dots)
        attn = jax.nn.softmax(dots, axis=-1)
        out = jnp.einsum("bhij,bhjd->bhid", attn, v)
        out = out.transpose(0, 2, 1, 3).reshape(b, n, d)
        x = out @ lp["wo"] + lp["bo"] + x

        xn2 = _ln_ref(x, lp["ln2_g"], lp["ln2_b"])
        hid = jax.nn.gelu(xn2 @ lp["wff1"] + lp["bff1"], approximate=False)
        x = hid @ lp["wff2"] + lp["bff2"] + x
    return x @ params["w_logits"] + params["b_logits"]


# ----------------------------------- main ------------------------------------

if __name__ == "__main__":
    # Small, lane-aligned test shapes (n, d, vocab multiples of 128 keep stores
    # lane-dense and all grid tiles exact).
    cfg = dict(num_tokens=256, dim=128, depth=2, seq_len=128, heads=4,
               num_memory_blocks=10, expire_loss_coef=1e-6, ramp_length=128)
    cfg["max_mem_len"] = cfg["num_memory_blocks"] * cfg["seq_len"]

    key = jax.random.PRNGKey(0)
    k_params, k_tok = jax.random.split(key)
    params = init_params(k_params, cfg)
    tokens = jax.random.randint(k_tok, (2, cfg["seq_len"]), 0, cfg["num_tokens"],
                                dtype=jnp.int32)

    fwd = jax.jit(functools.partial(expire_span_transformer_xl_forward, cfg=cfg))
    logits, memory, aux_loss = fwd(params, tokens)
    jax.block_until_ready((logits, memory, aux_loss))

    # sanity check against a pure-f32 JAX reference of the same forward
    ref_logits = reference_forward(params, tokens, cfg)
    assert logits.shape == (2, cfg["seq_len"], cfg["num_tokens"])
    assert len(memory.mems) == cfg["depth"] and len(memory.elapsed_times) == cfg["depth"]
    max_err = float(jnp.max(jnp.abs(logits - ref_logits)))
    # bf16 MXU operands + bf16 residual stream + tanh-GELU + approx reciprocal
    # => slightly looser tolerance than an all-f32 comparison
    assert jnp.allclose(logits, ref_logits, atol=1e-1, rtol=1e-1), f"max abs err {max_err}"

    print("KERNEL_OK")
</pallas_src>

<mosaic_0001>
module attributes {stable_mosaic.version = 11 : i64} {
  func.func @_fused_linear_kernel(%arg0: i32, %arg1: i32, %arg2: i32, %arg3: memref<256x128xbf16, #tpu.memory_space<vmem>>, %arg4: memref<128x128xbf16, #tpu.memory_space<vmem>>, %arg5: memref<1x128xf32, #tpu.memory_space<vmem>>, %arg6: memref<1x128xf32, #tpu.memory_space<vmem>>, %arg7: memref<1x128xf32, #tpu.memory_space<vmem>>, %arg8: memref<256x128xbf16, #tpu.memory_space<vmem>>, %arg9: memref<256x128xf32, #tpu.memory_space<vmem>>) attributes {dimension_semantics = [#tpu.dimension_semantics<parallel>, #tpu.dimension_semantics<parallel>, #tpu.dimension_semantics<arbitrary>], iteration_bounds = array<i64: 1, 3, 1>, scalar_prefetch = 0 : i64, scratch_operands = 1 : i64, tpu.core_type = #tpu.core_type<tc>, window_params = [{transform_indices = @transform_0, window_bounds = array<i64: 256, 128>}, {transform_indices = @transform_1, window_bounds = array<i64: 128, 128>}, {transform_indices = @transform_2, window_bounds = array<i64: 1, 128>}, {transform_indices = @transform_3, window_bounds = array<i64: 1, 128>}, {transform_indices = @transform_4, window_bounds = array<i64: 1, 128>}, {transform_indices = @transform_5, window_bounds = array<i64: 256, 128>}]} {
    %c0_i32 = arith.constant 0 : i32
    %0 = arith.cmpi eq, %arg2, %c0_i32 : i32
    %1 = arith.extui %0 : i1 to i32
    %c0_i32_0 = arith.constant 0 : i32
    %2 = arith.cmpi ne, %1, %c0_i32_0 : i32
    scf.if %2 {
      %cst_19 = arith.constant 0.000000e+00 : f32
      %38 = vector.broadcast %cst_19 : f32 to vector<256x128xf32>
      %c0_20 = arith.constant 0 : index
      %c0_21 = arith.constant 0 : index
      %39 = vector.load %arg9[%c0_20, %c0_21] : memref<256x128xf32, #tpu.memory_space<vmem>>, vector<256x128xf32>
      tpu.vector_store %arg9[%c0_20, %c0_21], %38 {strides = array<i32>} : memref<256x128xf32, #tpu.memory_space<vmem>>, vector<256x128xf32>,
    } else {
    }
    %c0 = arith.constant 0 : index
    %c0_1 = arith.constant 0 : index
    %3 = vector.load %arg3[%c0, %c0_1] : memref<256x128xbf16, #tpu.memory_space<vmem>>, vector<256x128xbf16>
    %4 = arith.extf %3 : vector<256x128xbf16> to vector<256x128xf32>
    %cst = arith.constant dense<0.000000e+00> : vector<256xf32>
    %5 = vector.multi_reduction <add>, %4, %cst [1] : vector<256x128xf32> to vector<256xf32>
    %6 = vector.shape_cast %5 : vector<256xf32> to vector<256x1xf32>
    %cst_2 = arith.constant 1.280000e+02 : f32
    %7 = vector.broadcast %cst_2 : f32 to vector<256x1xf32>
    %8 = arith.divf %6, %7 : vector<256x1xf32>
    %9 = vector.broadcast %8 : vector<256x1xf32> to vector<256x128xf32>
    %10 = arith.subf %4, %9 : vector<256x128xf32>
    %11 = arith.mulf %10, %10 : vector<256x128xf32>
    %cst_3 = arith.constant dense<0.000000e+00> : vector<256xf32>
    %12 = vector.multi_reduction <add>, %11, %cst_3 [1] : vector<256x128xf32> to vector<256xf32>
    %13 = vector.shape_cast %12 : vector<256xf32> to vector<256x1xf32>
    %cst_4 = arith.constant 1.280000e+02 : f32
    %14 = vector.broadcast %cst_4 : f32 to vector<256x1xf32>
    %15 = arith.divf %13, %14 : vector<256x1xf32>
    %16 = vector.broadcast %8 : vector<256x1xf32> to vector<256x128xf32>
    %17 = arith.subf %4, %16 : vector<256x128xf32>
    %cst_5 = arith.constant 9.99999974E-6 : f32
    %18 = vector.broadcast %cst_5 : f32 to vector<256x1xf32>
    %19 = arith.addf %15, %18 : vector<256x1xf32>
    %20 = math.rsqrt %19 : vector<256x1xf32>
    %21 = vector.broadcast %20 : vector<256x1xf32> to vector<256x128xf32>
    %22 = arith.mulf %17, %21 : vector<256x128xf32>
    %c0_6 = arith.constant 0 : index
    %c0_7 = arith.constant 0 : index
    %23 = vector.load %arg6[%c0_6, %c0_7] : memref<1x128xf32, #tpu.memory_space<vmem>>, vector<1x128xf32>
    %24 = vector.broadcast %23 : vector<1x128xf32> to vector<256x128xf32>
    %25 = arith.mulf %22, %24 : vector<256x128xf32>
    %c0_8 = arith.constant 0 : index
    %c0_9 = arith.constant 0 : index
    %26 = vector.load %arg7[%c0_8, %c0_9] : memref<1x128xf32, #tpu.memory_space<vmem>>, vector<1x128xf32>
    %27 = vector.broadcast %26 : vector<1x128xf32> to vector<256x128xf32>
    %28 = arith.addf %25, %27 : vector<256x128xf32>
    %29 = arith.truncf %28 : vector<256x128xf32> to vector<256x128xbf16>
    %c0_10 = arith.constant 0 : index
    %c0_11 = arith.constant 0 : index
    %30 = vector.load %arg9[%c0_10, %c0_11] : memref<256x128xf32, #tpu.memory_space<vmem>>, vector<256x128xf32>
    %c0_12 = arith.constant 0 : index
    %c0_13 = arith.constant 0 : index
    %31 = vector.load %arg4[%c0_12, %c0_13] : memref<128x128xbf16, #tpu.memory_space<vmem>>, vector<128x128xbf16>
    %cst_14 = arith.constant dense<0.000000e+00> : vector<256x128xf32>
    %32 = tpu.matmul %29, %31, %cst_14 {dimension_numbers = #tpu.dot_dimension_numbers<[1], [0], [0], [1], [0, 0, 1, 1], [], []>} : vector<256x128xbf16>, vector<128x128xbf16>, vector<256x128xf32> -> vector<256x128xf32>
    %33 = arith.addf %30, %32 : vector<256x128xf32>
    %c0_15 = arith.constant 0 : index
    %c0_16 = arith.constant 0 : index
    %34 = vector.load %arg9[%c0_15, %c0_16] : memref<256x128xf32, #tpu.memory_space<vmem>>, vector<256x128xf32>
    tpu.vector_store %arg9[%c0_15, %c0_16], %33 {strides = array<i32>} : memref<256x128xf32, #tpu.memory_space<vmem>>, vector<256x128xf32>,
    %c0_i32_17 = arith.constant 0 : i32
    %35 = arith.cmpi eq, %arg2, %c0_i32_17 : i32
    %36 = arith.extui %35 : i1 to i32
    %c0_i32_18 = arith.constant 0 : i32
    %37 = arith.cmpi ne, %36, %c0_i32_18 : i32
    scf.if %37 {
      %c0_19 = arith.constant 0 : index
      %c0_20 = arith.constant 0 : index
      %38 = vector.load %arg9[%c0_19, %c0_20] : memref<256x128xf32, #tpu.memory_space<vmem>>, vector<256x128xf32>
      %c0_21 = arith.constant 0 : index
      %c0_22 = arith.constant 0 : index
      %39 = vector.load %arg5[%c0_21, %c0_22] : memref<1x128xf32, #tpu.memory_space<vmem>>, vector<1x128xf32>
      %40 = vector.broadcast %39 : vector<1x128xf32> to vector<256x128xf32>
      %41 = arith.addf %38, %40 : vector<256x128xf32>
      %42 = arith.truncf %41 : vector<256x128xf32> to vector<256x128xbf16>
      %c0_23 = arith.constant 0 : index
      %c0_24 = arith.constant 0 : index
      %43 = vector.load %arg8[%c0_23, %c0_24] : memref<256x128xbf16, #tpu.memory_space<vmem>>, vector<256x128xbf16>
      tpu.vector_store %arg8[%c0_23, %c0_24], %42 {strides = array<i32>} : memref<256x128xbf16, #tpu.memory_space<vmem>>, vector<256x128xbf16>,
    } else {
    }
    return
  }
  func.func @transform_0(%arg0: i32, %arg1: i32, %arg2: i32) -> (i32, i32) {
    %c0_i32 = arith.constant 0 : i32
    return %arg0, %arg2 : i32, i32
  }
  func.func @transform_1(%arg0: i32, %arg1: i32, %arg2: i32) -> (i32, i32) {
    %c0_i32 = arith.constant 0 : i32
    return %arg2, %arg1 : i32, i32
  }
  func.func @transform_2(%arg0: i32, %arg1: i32, %arg2: i32) -> (i32, i32) {
    %c0_i32 = arith.constant 0 : i32
    %c0_i32_0 = arith.constant 0 : i32
    return %c0_i32, %arg1 : i32, i32
  }
  func.func @transform_3(%arg0: i32, %arg1: i32, %arg2: i32) -> (i32, i32) {
    %c0_i32 = arith.constant 0 : i32
    %c0_i32_0 = arith.constant 0 : i32
    return %c0_i32, %arg2 : i32, i32
  }
  func.func @transform_4(%arg0: i32, %arg1: i32, %arg2: i32) -> (i32, i32) {
    %c0_i32 = arith.constant 0 : i32
    %c0_i32_0 = arith.constant 0 : i32
    return %c0_i32, %arg2 : i32, i32
  }
  func.func @transform_5(%arg0: i32, %arg1: i32, %arg2: i32) -> (i32, i32) {
    %c0_i32 = arith.constant 0 : i32
    return %arg0, %arg1 : i32, i32
  }
}

module attributes {stable_mosaic.version = 11 : i64} {
  func.func @_flash_attention_kernel(%arg0: i32, %arg1: i32, %arg2: i32, %arg3: i32, %arg4: memref<256x32xbf16, #tpu.memory_space<vmem>>, %arg5: memref<1x1x128x32xbf16, #tpu.memory_space<vmem>>, %arg6: memref<1x1x128x32xbf16, #tpu.memory_space<vmem>>, %arg7: memref<1x1x128x32xbf16, #tpu.memory_space<vmem>>, %arg8: memref<1x1x128x32xbf16, #tpu.memory_space<vmem>>, %arg9: memref<128x1xf32, #tpu.memory_space<vmem>>, %arg10: memref<128x1xf32, #tpu.memory_space<vmem>>, %arg11: memref<128x32xf32, #tpu.memory_space<vmem>>) attributes {dimension_semantics = [#tpu.dimension_semantics<parallel>, #tpu.dimension_semantics<parallel>, #tpu.dimension_semantics<parallel>, #tpu.dimension_semantics<arbitrary>], iteration_bounds = array<i64: 2, 4, 1, 1>, scalar_prefetch = 0 : i64, scratch_operands = 3 : i64, tpu.core_type = #tpu.core_type<tc>, window_params = [{pipeline_mode = #tpu.pipeline_mode<synchronous>, transform_indices = @transform_0, window_bounds = array<i64: 256, 32>}, {transform_indices = @transform_1, window_bounds = array<i64: 1, 1, 128, 32>}, {transform_indices = @transform_2, window_bounds = array<i64: 1, 1, 128, 32>}, {transform_indices = @transform_3, window_bounds = array<i64: 1, 1, 128, 32>}, {transform_indices = @transform_4, window_bounds = array<i64: 1, 1, 128, 32>}]} {
    %0 = arith.cmpi sle, %arg3, %arg2 : i32
    %1 = arith.extui %0 : i1 to i32
    %c0_i32 = arith.constant 0 : i32
    %2 = arith.cmpi ne, %1, %c0_i32 : i32
    scf.if %2 {
      %c0_i32_0 = arith.constant 0 : i32
      %3 = arith.cmpi eq, %arg3, %c0_i32_0 : i32
      %4 = arith.extui %3 : i1 to i32
      %c0_i32_1 = arith.constant 0 : i32
      %5 = arith.cmpi ne, %4, %c0_i32_1 : i32
      scf.if %5 {
        %cst_35 = arith.constant -1.000000e+30 : f32
        %65 = vector.broadcast %cst_35 : f32 to vector<128x1xf32>
        %c0_36 = arith.constant 0 : index
        %c0_37 = arith.constant 0 : index
        %66 = vector.load %arg9[%c0_36, %c0_37] : memref<128x1xf32, #tpu.memory_space<vmem>>, vector<128x1xf32>
        tpu.vector_store %arg9[%c0_36, %c0_37], %65 {strides = array<i32>} : memref<128x1xf32, #tpu.memory_space<vmem>>, vector<128x1xf32>,
        %cst_38 = arith.constant 0.000000e+00 : f32
        %67 = vector.broadcast %cst_38 : f32 to vector<128x1xf32>
        %c0_39 = arith.constant 0 : index
        %c0_40 = arith.constant 0 : index
        %68 = vector.load %arg10[%c0_39, %c0_40] : memref<128x1xf32, #tpu.memory_space<vmem>>, vector<128x1xf32>
        tpu.vector_store %arg10[%c0_39, %c0_40], %67 {strides = array<i32>} : memref<128x1xf32, #tpu.memory_space<vmem>>, vector<128x1xf32>,
        %cst_41 = arith.constant 0.000000e+00 : f32
        %69 = vector.broadcast %cst_41 : f32 to vector<128x32xf32>
        %c0_42 = arith.constant 0 : index
        %c0_43 = arith.constant 0 : index
        %70 = vector.load %arg11[%c0_42, %c0_43] : memref<128x32xf32, #tpu.memory_space<vmem>>, vector<128x32xf32>
        tpu.vector_store %arg11[%c0_42, %c0_43], %69 {strides = array<i32>} : memref<128x32xf32, #tpu.memory_space<vmem>>, vector<128x32xf32>,
      } else {
      }
      %c0 = arith.constant 0 : index
      %c0_2 = arith.constant 0 : index
      %c0_3 = arith.constant 0 : index
      %c0_4 = arith.constant 0 : index
      %6 = vector.load %arg5[%c0, %c0_2, %c0_3, %c0_4] : memref<1x1x128x32xbf16, #tpu.memory_space<vmem>>, vector<1x1x128x32xbf16>
      %7 = vector.shape_cast %6 : vector<1x1x128x32xbf16> to vector<128x32xbf16>
      %8 = arith.subi %arg3, %arg2 : i32
      %c1_i32 = arith.constant 1 : i32
      %9 = arith.subi %8, %c1_i32 : i32
      %c128_i32 = arith.constant 128 : i32
      %10 = arith.muli %9, %c128_i32 : i32
      %c128_i32_5 = arith.constant 128 : i32
      %11 = arith.addi %c128_i32_5, %10 : i32
      %12 = tpu.assume_multiple %11, 128 : i32
      %13 = arith.index_cast %12 : i32 to index
      %c0_6 = arith.constant 0 : index
      %14 = vector.load %arg4[%13, %c0_6] : memref<256x32xbf16, #tpu.memory_space<vmem>>, vector<256x32xbf16>
      %c0_7 = arith.constant 0 : index
      %c0_8 = arith.constant 0 : index
      %c0_9 = arith.constant 0 : index
      %c0_10 = arith.constant 0 : index
      %15 = vector.load %arg6[%c0_7, %c0_8, %c0_9, %c0_10] : memref<1x1x128x32xbf16, #tpu.memory_space<vmem>>, vector<1x1x128x32xbf16>
      %16 = vector.shape_cast %15 : vector<1x1x128x32xbf16> to vector<128x32xbf16>
      %17 = tpu.concatenate %16, %14 in 0 : vector<128x32xbf16>, vector<256x32xbf16> -> vector<384x32xbf16>
      %cst = arith.constant dense<0.000000e+00> : vector<128x384xf32>
      %18 = tpu.matmul %7, %17, %cst {dimension_numbers = #tpu.dot_dimension_numbers<[1], [1], [0], [0], [0, 0, 1, 0], [], []>} : vector<128x32xbf16>, vector<384x32xbf16>, vector<128x384xf32> -> vector<128x384xf32>
      %19 = vector.extract_strided_slice %18 {offsets = [0, 0], sizes = [128, 128], strides = [1, 1]} : vector<128x384xf32> to vector<128x128xf32>
      %20 = vector.extract_strided_slice %18 {offsets = [0, 128], sizes = [128, 256], strides = [1, 1]} : vector<128x384xf32> to vector<128x256xf32>
      %c129_i32 = arith.constant 129 : i32
      %21 = tpu.dynamic_rotate %20 by %c129_i32 dim 1 {stride = 1 : si32, stride_dimension = 0 : si32} : vector<128x256xf32>, i32 -> vector<128x256xf32>
      %22 = vector.extract_strided_slice %21 {offsets = [0, 0], sizes = [128, 128], strides = [1, 1]} : vector<128x256xf32> to vector<128x128xf32>
      %23 = arith.addf %19, %22 : vector<128x128xf32>
      %cst_11 = arith.constant 0.176776692 : f32
      %24 = vector.broadcast %cst_11 : f32 to vector<128x128xf32>
      %25 = arith.mulf %23, %24 : vector<128x128xf32>
      %c128_i32_12 = arith.constant 128 : i32
      %26 = arith.muli %arg2, %c128_i32_12 : i32
      %27 = tpu.iota {dimensions = array<i32: 0>} : vector<128x128xi32>
      %28 = vector.broadcast %26 : i32 to vector<128x128xi32>
      %29 = arith.addi %28, %27 : vector<128x128xi32>
      %c128_i32_13 = arith.constant 128 : i32
      %30 = arith.muli %arg3, %c128_i32_13 : i32
      %31 = tpu.iota {dimensions = array<i32: 1>} : vector<128x128xi32>
      %32 = vector.broadcast %30 : i32 to vector<128x128xi32>
      %33 = arith.addi %32, %31 : vector<128x128xi32>
      %34 = arith.cmpi sgt, %33, %29 : vector<128x128xi32>
      %cst_14 = arith.constant -1.000000e+30 : f32
      %35 = vector.broadcast %cst_14 : f32 to vector<128x128xf32>
      %36 = arith.select %34, %35, %25 : vector<128x128xi1>, vector<128x128xf32>
      %c0_15 = arith.constant 0 : index
      %c0_16 = arith.constant 0 : index
      %37 = vector.load %arg9[%c0_15, %c0_16] : memref<128x1xf32, #tpu.memory_space<vmem>>, vector<128x1xf32>
      %cst_17 = arith.constant dense<0xFF800000> : vector<128xf32>
      %38 = vector.multi_reduction <maximumf>, %36, %cst_17 [1] : vector<128x128xf32> to vector<128xf32>
      %39 = vector.shape_cast %38 : vector<128xf32> to vector<128x1xf32>
      %40 = arith.maximumf %37, %39 : vector<128x1xf32>
      %41 = arith.subf %37, %40 : vector<128x1xf32>
      %42 = math.exp %41 : vector<128x1xf32>
      %43 = vector.broadcast %40 : vector<128x1xf32> to vector<128x128xf32>
      %44 = arith.subf %36, %43 : vector<128x128xf32>
      %45 = math.exp %44 : vector<128x128xf32>
      %c0_18 = arith.constant 0 : index
      %c0_19 = arith.constant 0 : index
      %46 = vector.load %arg10[%c0_18, %c0_19] : memref<128x1xf32, #tpu.memory_space<vmem>>, vector<128x1xf32>
      %47 = arith.mulf %42, %46 : vector<128x1xf32>
      %cst_20 = arith.constant dense<0.000000e+00> : vector<128xf32>
      %48 = vector.multi_reduction <add>, %45, %cst_20 [1] : vector<128x128xf32> to vector<128xf32>
      %49 = vector.shape_cast %48 : vector<128xf32> to vector<128x1xf32>
      %50 = arith.addf %47, %49 : vector<128x1xf32>
      %c0_21 = arith.constant 0 : index
      %c0_22 = arith.constant 0 : index
      %51 = vector.load %arg10[%c0_21, %c0_22] : memref<128x1xf32, #tpu.memory_space<vmem>>, vector<128x1xf32>
      tpu.vector_store %arg10[%c0_21, %c0_22], %50 {strides = array<i32>} : memref<128x1xf32, #tpu.memory_space<vmem>>, vector<128x1xf32>,
      %c0_23 = arith.constant 0 : index
      %c0_24 = arith.constant 0 : index
      %52 = vector.load %arg11[%c0_23, %c0_24] : memref<128x32xf32, #tpu.memory_space<vmem>>, vector<128x32xf32>
      %53 = vector.broadcast %42 : vector<128x1xf32> to vector<128x32xf32>
      %54 = arith.mulf %53, %52 : vector<128x32xf32>
      %55 = arith.truncf %45 : vector<128x128xf32> to vector<128x128xbf16>
      %c0_25 = arith.constant 0 : index
      %c0_26 = arith.constant 0 : index
      %c0_27 = arith.constant 0 : index
      %c0_28 = arith.constant 0 : index
      %56 = vector.load %arg7[%c0_25, %c0_26, %c0_27, %c0_28] : memref<1x1x128x32xbf16, #tpu.memory_space<vmem>>, vector<1x1x128x32xbf16>
      %57 = vector.shape_cast %56 : vector<1x1x128x32xbf16> to vector<128x32xbf16>
      %cst_29 = arith.constant dense<0.000000e+00> : vector<128x32xf32>
      %58 = tpu.matmul %55, %57, %cst_29 {dimension_numbers = #tpu.dot_dimension_numbers<[1], [0], [0], [1], [0, 0, 1, 1], [], []>} : vector<128x128xbf16>, vector<128x32xbf16>, vector<128x32xf32> -> vector<128x32xf32>
      %59 = arith.addf %54, %58 : vector<128x32xf32>
      %c0_30 = arith.constant 0 : index
      %c0_31 = arith.constant 0 : index
      %60 = vector.load %arg11[%c0_30, %c0_31] : memref<128x32xf32, #tpu.memory_space<vmem>>, vector<128x32xf32>
      tpu.vector_store %arg11[%c0_30, %c0_31], %59 {strides = array<i32>} : memref<128x32xf32, #tpu.memory_space<vmem>>, vector<128x32xf32>,
      %c0_32 = arith.constant 0 : index
      %c0_33 = arith.constant 0 : index
      %61 = vector.load %arg9[%c0_32, %c0_33] : memref<128x1xf32, #tpu.memory_space<vmem>>, vector<128x1xf32>
      tpu.vector_store %arg9[%c0_32, %c0_33], %40 {strides = array<i32>} : memref<128x1xf32, #tpu.memory_space<vmem>>, vector<128x1xf32>,
      %62 = arith.cmpi eq, %arg3, %arg2 : i32
      %63 = arith.extui %62 : i1 to i32
      %c0_i32_34 = arith.constant 0 : i32
      %64 = arith.cmpi ne, %63, %c0_i32_34 : i32
      scf.if %64 {
        %c0_35 = arith.constant 0 : index
        %c0_36 = arith.constant 0 : index
        %65 = vector.load %arg11[%c0_35, %c0_36] : memref<128x32xf32, #tpu.memory_space<vmem>>, vector<128x32xf32>
        %c0_37 = arith.constant 0 : index
        %c0_38 = arith.constant 0 : index
        %66 = vector.load %arg10[%c0_37, %c0_38] : memref<128x1xf32, #tpu.memory_space<vmem>>, vector<128x1xf32>
        %67 = tpu.reciprocal %66 {approx = true} : vector<128x1xf32> -> vector<128x1xf32>
        %68 = vector.broadcast %67 : vector<128x1xf32> to vector<128x32xf32>
        %69 = arith.mulf %65, %68 : vector<128x32xf32>
        %70 = arith.truncf %69 : vector<128x32xf32> to vector<128x32xbf16>
        %c0_39 = arith.constant 0 : index
        %c0_40 = arith.constant 0 : index
        %c0_41 = arith.constant 0 : index
        %c0_42 = arith.constant 0 : index
        %71 = vector.load %arg8[%c0_39, %c0_40, %c0_41, %c0_42] : memref<1x1x128x32xbf16, #tpu.memory_space<vmem>>, vector<1x1x128x32xbf16>
        %72 = vector.shape_cast %71 : vector<1x1x128x32xbf16> to vector<128x32xbf16>
        %73 = vector.shape_cast %70 : vector<128x32xbf16> to vector<1x1x128x32xbf16>
        tpu.vector_store %arg8[%c0_39, %c0_40, %c0_41, %c0_42], %73 {strides = array<i32>} : memref<1x1x128x32xbf16, #tpu.memory_space<vmem>>, vector<1x1x128x32xbf16>,
      } else {
      }
    } else {
    }
    return
  }
  func.func @transform_0(%arg0: i32, %arg1: i32, %arg2: i32, %arg3: i32) -> (i32, i32) {
    %c0_i32 = arith.constant 0 : i32
    %c0_i32_0 = arith.constant 0 : i32
    %c0_i32_1 = arith.constant 0 : i32
    return %c0_i32, %c0_i32_0 : i32, i32
  }
  func.func @transform_1(%arg0: i32, %arg1: i32, %arg2: i32, %arg3: i32) -> (i32, i32, i32, i32) {
    %c0_i32 = arith.constant 0 : i32
    %c0_i32_0 = arith.constant 0 : i32
    return %arg0, %arg1, %arg2, %c0_i32 : i32, i32, i32, i32
  }
  func.func @transform_2(%arg0: i32, %arg1: i32, %arg2: i32, %arg3: i32) -> (i32, i32, i32, i32) {
    %0 = arith.minsi %arg3, %arg2 : i32
    %c0_i32 = arith.constant 0 : i32
    %c0_i32_0 = arith.constant 0 : i32
    return %arg0, %arg1, %0, %c0_i32 : i32, i32, i32, i32
  }
  func.func @transform_3(%arg0: i32, %arg1: i32, %arg2: i32, %arg3: i32) -> (i32, i32, i32, i32) {
    %0 = arith.minsi %arg3, %arg2 : i32
    %c0_i32 = arith.constant 0 : i32
    %c0_i32_0 = arith.constant 0 : i32
    return %arg0, %arg1, %0, %c0_i32 : i32, i32, i32, i32
  }
  func.func @transform_4(%arg0: i32, %arg1: i32, %arg2: i32, %arg3: i32) -> (i32, i32, i32, i32) {
    %c0_i32 = arith.constant 0 : i32
    %c0_i32_0 = arith.constant 0 : i32
    return %arg0, %arg1, %arg2, %c0_i32 : i32, i32, i32, i32
  }
}

module attributes {stable_mosaic.version = 11 : i64} {
  func.func @_fused_linear_kernel(%arg0: i32, %arg1: i32, %arg2: i32, %arg3: memref<256x128xbf16, #tpu.memory_space<vmem>>, %arg4: memref<128x128xbf16, #tpu.memory_space<vmem>>, %arg5: memref<1x128xf32, #tpu.memory_space<vmem>>, %arg6: memref<256x128xbf16, #tpu.memory_space<vmem>>, %arg7: memref<256x128xbf16, #tpu.memory_space<vmem>>, %arg8: memref<256x128xf32, #tpu.memory_space<vmem>>) attributes {dimension_semantics = [#tpu.dimension_semantics<parallel>, #tpu.dimension_semantics<parallel>, #tpu.dimension_semantics<arbitrary>], iteration_bounds = array<i64: 1, 1, 1>, scalar_prefetch = 0 : i64, scratch_operands = 1 : i64, tpu.core_type = #tpu.core_type<tc>, window_params = [{transform_indices = @transform_0, window_bounds = array<i64: 256, 128>}, {transform_indices = @transform_1, window_bounds = array<i64: 128, 128>}, {transform_indices = @transform_2, window_bounds = array<i64: 1, 128>}, {transform_indices = @transform_3, window_bounds = array<i64: 256, 128>}, {transform_indices = @transform_4, window_bounds = array<i64: 256, 128>}]} {
    %c0_i32 = arith.constant 0 : i32
    %0 = arith.cmpi eq, %arg2, %c0_i32 : i32
    %1 = arith.extui %0 : i1 to i32
    %c0_i32_0 = arith.constant 0 : i32
    %2 = arith.cmpi ne, %1, %c0_i32_0 : i32
    scf.if %2 {
      %cst_10 = arith.constant 0.000000e+00 : f32
      %12 = vector.broadcast %cst_10 : f32 to vector<256x128xf32>
      %c0_11 = arith.constant 0 : index
      %c0_12 = arith.constant 0 : index
      %13 = vector.load %arg8[%c0_11, %c0_12] : memref<256x128xf32, #tpu.memory_space<vmem>>, vector<256x128xf32>
      tpu.vector_store %arg8[%c0_11, %c0_12], %12 {strides = array<i32>} : memref<256x128xf32, #tpu.memory_space<vmem>>, vector<256x128xf32>,
    } else {
    }
    %c0 = arith.constant 0 : index
    %c0_1 = arith.constant 0 : index
    %3 = vector.load %arg3[%c0, %c0_1] : memref<256x128xbf16, #tpu.memory_space<vmem>>, vector<256x128xbf16>
    %c0_2 = arith.constant 0 : index
    %c0_3 = arith.constant 0 : index
    %4 = vector.load %arg8[%c0_2, %c0_3] : memref<256x128xf32, #tpu.memory_space<vmem>>, vector<256x128xf32>
    %c0_4 = arith.constant 0 : index
    %c0_5 = arith.constant 0 : index
    %5 = vector.load %arg4[%c0_4, %c0_5] : memref<128x128xbf16, #tpu.memory_space<vmem>>, vector<128x128xbf16>
    %cst = arith.constant dense<0.000000e+00> : vector<256x128xf32>
    %6 = tpu.matmul %3, %5, %cst {dimension_numbers = #tpu.dot_dimension_numbers<[1], [0], [0], [1], [0, 0, 1, 1], [], []>} : vector<256x128xbf16>, vector<128x128xbf16>, vector<256x128xf32> -> vector<256x128xf32>
    %7 = arith.addf %4, %6 : vector<256x128xf32>
    %c0_6 = arith.constant 0 : index
    %c0_7 = arith.constant 0 : index
    %8 = vector.load %arg8[%c0_6, %c0_7] : memref<256x128xf32, #tpu.memory_space<vmem>>, vector<256x128xf32>
    tpu.vector_store %arg8[%c0_6, %c0_7], %7 {strides = array<i32>} : memref<256x128xf32, #tpu.memory_space<vmem>>, vector<256x128xf32>,
    %c0_i32_8 = arith.constant 0 : i32
    %9 = arith.cmpi eq, %arg2, %c0_i32_8 : i32
    %10 = arith.extui %9 : i1 to i32
    %c0_i32_9 = arith.constant 0 : i32
    %11 = arith.cmpi ne, %10, %c0_i32_9 : i32
    scf.if %11 {
      %c0_10 = arith.constant 0 : index
      %c0_11 = arith.constant 0 : index
      %12 = vector.load %arg8[%c0_10, %c0_11] : memref<256x128xf32, #tpu.memory_space<vmem>>, vector<256x128xf32>
      %c0_12 = arith.constant 0 : index
      %c0_13 = arith.constant 0 : index
      %13 = vector.load %arg5[%c0_12, %c0_13] : memref<1x128xf32, #tpu.memory_space<vmem>>, vector<1x128xf32>
      %14 = vector.broadcast %13 : vector<1x128xf32> to vector<256x128xf32>
      %15 = arith.addf %12, %14 : vector<256x128xf32>
      %c0_14 = arith.constant 0 : index
      %c0_15 = arith.constant 0 : index
      %16 = vector.load %arg6[%c0_14, %c0_15] : memref<256x128xbf16, #tpu.memory_space<vmem>>, vector<256x128xbf16>
      %17 = arith.extf %16 : vector<256x128xbf16> to vector<256x128xf32>
      %18 = arith.addf %15, %17 : vector<256x128xf32>
      %19 = arith.truncf %18 : vector<256x128xf32> to vector<256x128xbf16>
      %c0_16 = arith.constant 0 : index
      %c0_17 = arith.constant 0 : index
      %20 = vector.load %arg7[%c0_16, %c0_17] : memref<256x128xbf16, #tpu.memory_space<vmem>>, vector<256x128xbf16>
      tpu.vector_store %arg7[%c0_16, %c0_17], %19 {strides = array<i32>} : memref<256x128xbf16, #tpu.memory_space<vmem>>, vector<256x128xbf16>,
    } else {
    }
    return
  }
  func.func @transform_0(%arg0: i32, %arg1: i32, %arg2: i32) -> (i32, i32) {
    %c0_i32 = arith.constant 0 : i32
    return %arg0, %arg2 : i32, i32
  }
  func.func @transform_1(%arg0: i32, %arg1: i32, %arg2: i32) -> (i32, i32) {
    %c0_i32 = arith.constant 0 : i32
    return %arg2, %arg1 : i32, i32
  }
  func.func @transform_2(%arg0: i32, %arg1: i32, %arg2: i32) -> (i32, i32) {
    %c0_i32 = arith.constant 0 : i32
    %c0_i32_0 = arith.constant 0 : i32
    return %c0_i32, %arg1 : i32, i32
  }
  func.func @transform_3(%arg0: i32, %arg1: i32, %arg2: i32) -> (i32, i32) {
    %c0_i32 = arith.constant 0 : i32
    return %arg0, %arg1 : i32, i32
  }
  func.func @transform_4(%arg0: i32, %arg1: i32, %arg2: i32) -> (i32, i32) {
    %c0_i32 = arith.constant 0 : i32
    return %arg0, %arg1 : i32, i32
  }
}

module attributes {stable_mosaic.version = 11 : i64} {
  func.func @_fused_linear_kernel(%arg0: i32, %arg1: i32, %arg2: i32, %arg3: memref<256x128xbf16, #tpu.memory_space<vmem>>, %arg4: memref<128x256xbf16, #tpu.memory_space<vmem>>, %arg5: memref<1x256xf32, #tpu.memory_space<vmem>>, %arg6: memref<1x128xf32, #tpu.memory_space<vmem>>, %arg7: memref<1x128xf32, #tpu.memory_space<vmem>>, %arg8: memref<256x256xbf16, #tpu.memory_space<vmem>>, %arg9: memref<256x256xf32, #tpu.memory_space<vmem>>) attributes {dimension_semantics = [#tpu.dimension_semantics<parallel>, #tpu.dimension_semantics<parallel>, #tpu.dimension_semantics<arbitrary>], iteration_bounds = array<i64: 1, 2, 1>, scalar_prefetch = 0 : i64, scratch_operands = 1 : i64, tpu.core_type = #tpu.core_type<tc>, window_params = [{transform_indices = @transform_0, window_bounds = array<i64: 256, 128>}, {transform_indices = @transform_1, window_bounds = array<i64: 128, 256>}, {transform_indices = @transform_2, window_bounds = array<i64: 1, 256>}, {transform_indices = @transform_3, window_bounds = array<i64: 1, 128>}, {transform_indices = @transform_4, window_bounds = array<i64: 1, 128>}, {transform_indices = @transform_5, window_bounds = array<i64: 256, 256>}]} {
    %c0_i32 = arith.constant 0 : i32
    %0 = arith.cmpi eq, %arg2, %c0_i32 : i32
    %1 = arith.extui %0 : i1 to i32
    %c0_i32_0 = arith.constant 0 : i32
    %2 = arith.cmpi ne, %1, %c0_i32_0 : i32
    scf.if %2 {
      %cst_19 = arith.constant 0.000000e+00 : f32
      %38 = vector.broadcast %cst_19 : f32 to vector<256x256xf32>
      %c0_20 = arith.constant 0 : index
      %c0_21 = arith.constant 0 : index
      %39 = vector.load %arg9[%c0_20, %c0_21] : memref<256x256xf32, #tpu.memory_space<vmem>>, vector<256x256xf32>
      tpu.vector_store %arg9[%c0_20, %c0_21], %38 {strides = array<i32>} : memref<256x256xf32, #tpu.memory_space<vmem>>, vector<256x256xf32>,
    } else {
    }
    %c0 = arith.constant 0 : index
    %c0_1 = arith.constant 0 : index
    %3 = vector.load %arg3[%c0, %c0_1] : memref<256x128xbf16, #tpu.memory_space<vmem>>, vector<256x128xbf16>
    %4 = arith.extf %3 : vector<256x128xbf16> to vector<256x128xf32>
    %cst = arith.constant dense<0.000000e+00> : vector<256xf32>
    %5 = vector.multi_reduction <add>, %4, %cst [1] : vector<256x128xf32> to vector<256xf32>
    %6 = vector.shape_cast %5 : vector<256xf32> to vector<256x1xf32>
    %cst_2 = arith.constant 1.280000e+02 : f32
    %7 = vector.broadcast %cst_2 : f32 to vector<256x1xf32>
    %8 = arith.divf %6, %7 : vector<256x1xf32>
    %9 = vector.broadcast %8 : vector<256x1xf32> to vector<256x128xf32>
    %10 = arith.subf %4, %9 : vector<256x128xf32>
    %11 = arith.mulf %10, %10 : vector<256x128xf32>
    %cst_3 = arith.constant dense<0.000000e+00> : vector<256xf32>
    %12 = vector.multi_reduction <add>, %11, %cst_3 [1] : vector<256x128xf32> to vector<256xf32>
    %13 = vector.shape_cast %12 : vector<256xf32> to vector<256x1xf32>
    %cst_4 = arith.constant 1.280000e+02 : f32
    %14 = vector.broadcast %cst_4 : f32 to vector<256x1xf32>
    %15 = arith.divf %13, %14 : vector<256x1xf32>
    %16 = vector.broadcast %8 : vector<256x1xf32> to vector<256x128xf32>
    %17 = arith.subf %4, %16 : vector<256x128xf32>
    %cst_5 = arith.constant 9.99999974E-6 : f32
    %18 = vector.broadcast %cst_5 : f32 to vector<256x1xf32>
    %19 = arith.addf %15, %18 : vector<256x1xf32>
    %20 = math.rsqrt %19 : vector<256x1xf32>
    %21 = vector.broadcast %20 : vector<256x1xf32> to vector<256x128xf32>
    %22 = arith.mulf %17, %21 : vector<256x128xf32>
    %c0_6 = arith.constant 0 : index
    %c0_7 = arith.constant 0 : index
    %23 = vector.load %arg6[%c0_6, %c0_7] : memref<1x128xf32, #tpu.memory_space<vmem>>, vector<1x128xf32>
    %24 = vector.broadcast %23 : vector<1x128xf32> to vector<256x128xf32>
    %25 = arith.mulf %22, %24 : vector<256x128xf32>
    %c0_8 = arith.constant 0 : index
    %c0_9 = arith.constant 0 : index
    %26 = vector.load %arg7[%c0_8, %c0_9] : memref<1x128xf32, #tpu.memory_space<vmem>>, vector<1x128xf32>
    %27 = vector.broadcast %26 : vector<1x128xf32> to vector<256x128xf32>
    %28 = arith.addf %25, %27 : vector<256x128xf32>
    %29 = arith.truncf %28 : vector<256x128xf32> to vector<256x128xbf16>
    %c0_10 = arith.constant 0 : index
    %c0_11 = arith.constant 0 : index
    %30 = vector.load %arg9[%c0_10, %c0_11] : memref<256x256xf32, #tpu.memory_space<vmem>>, vector<256x256xf32>
    %c0_12 = arith.constant 0 : index
    %c0_13 = arith.constant 0 : index
    %31 = vector.load %arg4[%c0_12, %c0_13] : memref<128x256xbf16, #tpu.memory_space<vmem>>, vector<128x256xbf16>
    %cst_14 = arith.constant dense<0.000000e+00> : vector<256x256xf32>
    %32 = tpu.matmul %29, %31, %cst_14 {dimension_numbers = #tpu.dot_dimension_numbers<[1], [0], [0], [1], [0, 0, 1, 1], [], []>} : vector<256x128xbf16>, vector<128x256xbf16>, vector<256x256xf32> -> vector<256x256xf32>
    %33 = arith.addf %30, %32 : vector<256x256xf32>
    %c0_15 = arith.constant 0 : index
    %c0_16 = arith.constant 0 : index
    %34 = vector.load %arg9[%c0_15, %c0_16] : memref<256x256xf32, #tpu.memory_space<vmem>>, vector<256x256xf32>
    tpu.vector_store %arg9[%c0_15, %c0_16], %33 {strides = array<i32>} : memref<256x256xf32, #tpu.memory_space<vmem>>, vector<256x256xf32>,
    %c0_i32_17 = arith.constant 0 : i32
    %35 = arith.cmpi eq, %arg2, %c0_i32_17 : i32
    %36 = arith.extui %35 : i1 to i32
    %c0_i32_18 = arith.constant 0 : i32
    %37 = arith.cmpi ne, %36, %c0_i32_18 : i32
    scf.if %37 {
      %c0_19 = arith.constant 0 : index
      %c0_20 = arith.constant 0 : index
      %38 = vector.load %arg9[%c0_19, %c0_20] : memref<256x256xf32, #tpu.memory_space<vmem>>, vector<256x256xf32>
      %c0_21 = arith.constant 0 : index
      %c0_22 = arith.constant 0 : index
      %39 = vector.load %arg5[%c0_21, %c0_22] : memref<1x256xf32, #tpu.memory_space<vmem>>, vector<1x256xf32>
      %40 = vector.broadcast %39 : vector<1x256xf32> to vector<256x256xf32>
      %41 = arith.addf %38, %40 : vector<256x256xf32>
      %42 = arith.mulf %41, %41 : vector<256x256xf32>
      %43 = arith.mulf %41, %42 : vector<256x256xf32>
      %cst_23 = arith.constant 4.471500e-02 : f32
      %44 = vector.broadcast %cst_23 : f32 to vector<256x256xf32>
      %45 = arith.mulf %44, %43 : vector<256x256xf32>
      %46 = arith.addf %41, %45 : vector<256x256xf32>
      %cst_24 = arith.constant 0.797884583 : f32
      %47 = vector.broadcast %cst_24 : f32 to vector<256x256xf32>
      %48 = arith.mulf %47, %46 : vector<256x256xf32>
      %49 = math.tanh %48 : vector<256x256xf32>
      %cst_25 = arith.constant 1.000000e+00 : f32
      %50 = vector.broadcast %cst_25 : f32 to vector<256x256xf32>
      %51 = arith.addf %50, %49 : vector<256x256xf32>
      %cst_26 = arith.constant 5.000000e-01 : f32
      %52 = vector.broadcast %cst_26 : f32 to vector<256x256xf32>
      %53 = arith.mulf %52, %51 : vector<256x256xf32>
      %54 = arith.mulf %41, %53 : vector<256x256xf32>
      %55 = arith.truncf %54 : vector<256x256xf32> to vector<256x256xbf16>
      %c0_27 = arith.constant 0 : index
      %c0_28 = arith.constant 0 : index
      %56 = vector.load %arg8[%c0_27, %c0_28] : memref<256x256xbf16, #tpu.memory_space<vmem>>, vector<256x256xbf16>
      tpu.vector_store %arg8[%c0_27, %c0_28], %55 {strides = array<i32>} : memref<256x256xbf16, #tpu.memory_space<vmem>>, vector<256x256xbf16>,
    } else {
    }
    return
  }
  func.func @transform_0(%arg0: i32, %arg1: i32, %arg2: i32) -> (i32, i32) {
    %c0_i32 = arith.constant 0 : i32
    return %arg0, %arg2 : i32, i32
  }
  func.func @transform_1(%arg0: i32, %arg1: i32, %arg2: i32) -> (i32, i32) {
    %c0_i32 = arith.constant 0 : i32
    return %arg2, %arg1 : i32, i32
  }
  func.func @transform_2(%arg0: i32, %arg1: i32, %arg2: i32) -> (i32, i32) {
    %c0_i32 = arith.constant 0 : i32
    %c0_i32_0 = arith.constant 0 : i32
    return %c0_i32, %arg1 : i32, i32
  }
  func.func @transform_3(%arg0: i32, %arg1: i32, %arg2: i32) -> (i32, i32) {
    %c0_i32 = arith.constant 0 : i32
    %c0_i32_0 = arith.constant 0 : i32
    return %c0_i32, %arg2 : i32, i32
  }
  func.func @transform_4(%arg0: i32, %arg1: i32, %arg2: i32) -> (i32, i32) {
    %c0_i32 = arith.constant 0 : i32
    %c0_i32_0 = arith.constant 0 : i32
    return %c0_i32, %arg2 : i32, i32
  }
  func.func @transform_5(%arg0: i32, %arg1: i32, %arg2: i32) -> (i32, i32) {
    %c0_i32 = arith.constant 0 : i32
    return %arg0, %arg1 : i32, i32
  }
}

module attributes {stable_mosaic.version = 11 : i64} {
  func.func @_fused_linear_kernel(%arg0: i32, %arg1: i32, %arg2: i32, %arg3: memref<256x512xbf16, #tpu.memory_space<vmem>>, %arg4: memref<512x128xbf16, #tpu.memory_space<vmem>>, %arg5: memref<1x128xf32, #tpu.memory_space<vmem>>, %arg6: memref<256x128xbf16, #tpu.memory_space<vmem>>, %arg7: memref<256x128xbf16, #tpu.memory_space<vmem>>, %arg8: memref<256x128xf32, #tpu.memory_space<vmem>>) attributes {dimension_semantics = [#tpu.dimension_semantics<parallel>, #tpu.dimension_semantics<parallel>, #tpu.dimension_semantics<arbitrary>], iteration_bounds = array<i64: 1, 1, 1>, scalar_prefetch = 0 : i64, scratch_operands = 1 : i64, tpu.core_type = #tpu.core_type<tc>, window_params = [{transform_indices = @transform_0, window_bounds = array<i64: 256, 512>}, {transform_indices = @transform_1, window_bounds = array<i64: 512, 128>}, {transform_indices = @transform_2, window_bounds = array<i64: 1, 128>}, {transform_indices = @transform_3, window_bounds = array<i64: 256, 128>}, {transform_indices = @transform_4, window_bounds = array<i64: 256, 128>}]} {
    %c0_i32 = arith.constant 0 : i32
    %0 = arith.cmpi eq, %arg2, %c0_i32 : i32
    %1 = arith.extui %0 : i1 to i32
    %c0_i32_0 = arith.constant 0 : i32
    %2 = arith.cmpi ne, %1, %c0_i32_0 : i32
    scf.if %2 {
      %cst_10 = arith.constant 0.000000e+00 : f32
      %12 = vector.broadcast %cst_10 : f32 to vector<256x128xf32>
      %c0_11 = arith.constant 0 : index
      %c0_12 = arith.constant 0 : index
      %13 = vector.load %arg8[%c0_11, %c0_12] : memref<256x128xf32, #tpu.memory_space<vmem>>, vector<256x128xf32>
      tpu.vector_store %arg8[%c0_11, %c0_12], %12 {strides = array<i32>} : memref<256x128xf32, #tpu.memory_space<vmem>>, vector<256x128xf32>,
    } else {
    }
    %c0 = arith.constant 0 : index
    %c0_1 = arith.constant 0 : index
    %3 = vector.load %arg3[%c0, %c0_1] : memref<256x512xbf16, #tpu.memory_space<vmem>>, vector<256x512xbf16>
    %c0_2 = arith.constant 0 : index
    %c0_3 = arith.constant 0 : index
    %4 = vector.load %arg8[%c0_2, %c0_3] : memref<256x128xf32, #tpu.memory_space<vmem>>, vector<256x128xf32>
    %c0_4 = arith.constant 0 : index
    %c0_5 = arith.constant 0 : index
    %5 = vector.load %arg4[%c0_4, %c0_5] : memref<512x128xbf16, #tpu.memory_space<vmem>>, vector<512x128xbf16>
    %cst = arith.constant dense<0.000000e+00> : vector<256x128xf32>
    %6 = tpu.matmul %3, %5, %cst {dimension_numbers = #tpu.dot_dimension_numbers<[1], [0], [0], [1], [0, 0, 1, 1], [], []>} : vector<256x512xbf16>, vector<512x128xbf16>, vector<256x128xf32> -> vector<256x128xf32>
    %7 = arith.addf %4, %6 : vector<256x128xf32>
    %c0_6 = arith.constant 0 : index
    %c0_7 = arith.constant 0 : index
    %8 = vector.load %arg8[%c0_6, %c0_7] : memref<256x128xf32, #tpu.memory_space<vmem>>, vector<256x128xf32>
    tpu.vector_store %arg8[%c0_6, %c0_7], %7 {strides = array<i32>} : memref<256x128xf32, #tpu.memory_space<vmem>>, vector<256x128xf32>,
    %c0_i32_8 = arith.constant 0 : i32
    %9 = arith.cmpi eq, %arg2, %c0_i32_8 : i32
    %10 = arith.extui %9 : i1 to i32
    %c0_i32_9 = arith.constant 0 : i32
    %11 = arith.cmpi ne, %10, %c0_i32_9 : i32
    scf.if %11 {
      %c0_10 = arith.constant 0 : index
      %c0_11 = arith.constant 0 : index
      %12 = vector.load %arg8[%c0_10, %c0_11] : memref<256x128xf32, #tpu.memory_space<vmem>>, vector<256x128xf32>
      %c0_12 = arith.constant 0 : index
      %c0_13 = arith.constant 0 : index
      %13 = vector.load %arg5[%c0_12, %c0_13] : memref<1x128xf32, #tpu.memory_space<vmem>>, vector<1x128xf32>
      %14 = vector.broadcast %13 : vector<1x128xf32> to vector<256x128xf32>
      %15 = arith.addf %12, %14 : vector<256x128xf32>
      %c0_14 = arith.constant 0 : index
      %c0_15 = arith.constant 0 : index
      %16 = vector.load %arg6[%c0_14, %c0_15] : memref<256x128xbf16, #tpu.memory_space<vmem>>, vector<256x128xbf16>
      %17 = arith.extf %16 : vector<256x128xbf16> to vector<256x128xf32>
      %18 = arith.addf %15, %17 : vector<256x128xf32>
      %19 = arith.truncf %18 : vector<256x128xf32> to vector<256x128xbf16>
      %c0_16 = arith.constant 0 : index
      %c0_17 = arith.constant 0 : index
      %20 = vector.load %arg7[%c0_16, %c0_17] : memref<256x128xbf16, #tpu.memory_space<vmem>>, vector<256x128xbf16>
      tpu.vector_store %arg7[%c0_16, %c0_17], %19 {strides = array<i32>} : memref<256x128xbf16, #tpu.memory_space<vmem>>, vector<256x128xbf16>,
    } else {
    }
    return
  }
  func.func @transform_0(%arg0: i32, %arg1: i32, %arg2: i32) -> (i32, i32) {
    %c0_i32 = arith.constant 0 : i32
    return %arg0, %arg2 : i32, i32
  }
  func.func @transform_1(%arg0: i32, %arg1: i32, %arg2: i32) -> (i32, i32) {
    %c0_i32 = arith.constant 0 : i32
    return %arg2, %arg1 : i32, i32
  }
  func.func @transform_2(%arg0: i32, %arg1: i32, %arg2: i32) -> (i32, i32) {
    %c0_i32 = arith.constant 0 : i32
    %c0_i32_0 = arith.constant 0 : i32
    return %c0_i32, %arg1 : i32, i32
  }
  func.func @transform_3(%arg0: i32, %arg1: i32, %arg2: i32) -> (i32, i32) {
    %c0_i32 = arith.constant 0 : i32
    return %arg0, %arg1 : i32, i32
  }
  func.func @transform_4(%arg0: i32, %arg1: i32, %arg2: i32) -> (i32, i32) {
    %c0_i32 = arith.constant 0 : i32
    return %arg0, %arg1 : i32, i32
  }
}

module attributes {stable_mosaic.version = 11 : i64} {
  func.func @_fused_linear_kernel(%arg0: i32, %arg1: i32, %arg2: i32, %arg3: memref<256x128xbf16, #tpu.memory_space<vmem>>, %arg4: memref<128x256xbf16, #tpu.memory_space<vmem>>, %arg5: memref<1x256xf32, #tpu.memory_space<vmem>>, %arg6: memref<256x256xf32, #tpu.memory_space<vmem>>, %arg7: memref<256x256xf32, #tpu.memory_space<vmem>>) attributes {dimension_semantics = [#tpu.dimension_semantics<parallel>, #tpu.dimension_semantics<parallel>, #tpu.dimension_semantics<arbitrary>], iteration_bounds = array<i64: 1, 1, 1>, scalar_prefetch = 0 : i64, scratch_operands = 1 : i64, tpu.core_type = #tpu.core_type<tc>, window_params = [{transform_indices = @transform_0, window_bounds = array<i64: 256, 128>}, {transform_indices = @transform_1, window_bounds = array<i64: 128, 256>}, {transform_indices = @transform_2, window_bounds = array<i64: 1, 256>}, {transform_indices = @transform_3, window_bounds = array<i64: 256, 256>}]} {
    %c0_i32 = arith.constant 0 : i32
    %0 = arith.cmpi eq, %arg2, %c0_i32 : i32
    %1 = arith.extui %0 : i1 to i32
    %c0_i32_0 = arith.constant 0 : i32
    %2 = arith.cmpi ne, %1, %c0_i32_0 : i32
    scf.if %2 {
      %cst_10 = arith.constant 0.000000e+00 : f32
      %12 = vector.broadcast %cst_10 : f32 to vector<256x256xf32>
      %c0_11 = arith.constant 0 : index
      %c0_12 = arith.constant 0 : index
      %13 = vector.load %arg7[%c0_11, %c0_12] : memref<256x256xf32, #tpu.memory_space<vmem>>, vector<256x256xf32>
      tpu.vector_store %arg7[%c0_11, %c0_12], %12 {strides = array<i32>} : memref<256x256xf32, #tpu.memory_space<vmem>>, vector<256x256xf32>,
    } else {
    }
    %c0 = arith.constant 0 : index
    %c0_1 = arith.constant 0 : index
    %3 = vector.load %arg3[%c0, %c0_1] : memref<256x128xbf16, #tpu.memory_space<vmem>>, vector<256x128xbf16>
    %c0_2 = arith.constant 0 : index
    %c0_3 = arith.constant 0 : index
    %4 = vector.load %arg7[%c0_2, %c0_3] : memref<256x256xf32, #tpu.memory_space<vmem>>, vector<256x256xf32>
    %c0_4 = arith.constant 0 : index
    %c0_5 = arith.constant 0 : index
    %5 = vector.load %arg4[%c0_4, %c0_5] : memref<128x256xbf16, #tpu.memory_space<vmem>>, vector<128x256xbf16>
    %cst = arith.constant dense<0.000000e+00> : vector<256x256xf32>
    %6 = tpu.matmul %3, %5, %cst {dimension_numbers = #tpu.dot_dimension_numbers<[1], [0], [0], [1], [0, 0, 1, 1], [], []>} : vector<256x128xbf16>, vector<128x256xbf16>, vector<256x256xf32> -> vector<256x256xf32>
    %7 = arith.addf %4, %6 : vector<256x256xf32>
    %c0_6 = arith.constant 0 : index
    %c0_7 = arith.constant 0 : index
    %8 = vector.load %arg7[%c0_6, %c0_7] : memref<256x256xf32, #tpu.memory_space<vmem>>, vector<256x256xf32>
    tpu.vector_store %arg7[%c0_6, %c0_7], %7 {strides = array<i32>} : memref<256x256xf32, #tpu.memory_space<vmem>>, vector<256x256xf32>,
    %c0_i32_8 = arith.constant 0 : i32
    %9 = arith.cmpi eq, %arg2, %c0_i32_8 : i32
    %10 = arith.extui %9 : i1 to i32
    %c0_i32_9 = arith.constant 0 : i32
    %11 = arith.cmpi ne, %10, %c0_i32_9 : i32
    scf.if %11 {
      %c0_10 = arith.constant 0 : index
      %c0_11 = arith.constant 0 : index
      %12 = vector.load %arg7[%c0_10, %c0_11] : memref<256x256xf32, #tpu.memory_space<vmem>>, vector<256x256xf32>
      %c0_12 = arith.constant 0 : index
      %c0_13 = arith.constant 0 : index
      %13 = vector.load %arg5[%c0_12, %c0_13] : memref<1x256xf32, #tpu.memory_space<vmem>>, vector<1x256xf32>
      %14 = vector.broadcast %13 : vector<1x256xf32> to vector<256x256xf32>
      %15 = arith.addf %12, %14 : vector<256x256xf32>
      %c0_14 = arith.constant 0 : index
      %c0_15 = arith.constant 0 : index
      %16 = vector.load %arg6[%c0_14, %c0_15] : memref<256x256xf32, #tpu.memory_space<vmem>>, vector<256x256xf32>
      tpu.vector_store %arg6[%c0_14, %c0_15], %15 {strides = array<i32>} : memref<256x256xf32, #tpu.memory_space<vmem>>, vector<256x256xf32>,
    } else {
    }
    return
  }
  func.func @transform_0(%arg0: i32, %arg1: i32, %arg2: i32) -> (i32, i32) {
    %c0_i32 = arith.constant 0 : i32
    return %arg0, %arg2 : i32, i32
  }
  func.func @transform_1(%arg0: i32, %arg1: i32, %arg2: i32) -> (i32, i32) {
    %c0_i32 = arith.constant 0 : i32
    return %arg2, %arg1 : i32, i32
  }
  func.func @transform_2(%arg0: i32, %arg1: i32, %arg2: i32) -> (i32, i32) {
    %c0_i32 = arith.constant 0 : i32
    %c0_i32_0 = arith.constant 0 : i32
    return %c0_i32, %arg1 : i32, i32
  }
  func.func @transform_3(%arg0: i32, %arg1: i32, %arg2: i32) -> (i32, i32) {
    %c0_i32 = arith.constant 0 : i32
    return %arg0, %arg1 : i32, i32
  }
}

</mosaic_0001>

<llo_original>
// kernel: expire_span_transformer_xl_forward.11
$region0: #{expire_span_transformer_xl_forward.11}
  #allocation0 [shape = 'u32[]', space=smem, size = 0x4, offset = 0x4, fixed_abs, tag = 'smem constant byte address 0x4 - core index']
  #allocation1 [shape = 'u32[144,128]{1,0:T(1,128)}', space=vmem, size = 0x12000, scoped, tag = 'internal scratch']
  #allocation2 [shape = 'f32[256,128]{1,0:T(8,128)}', space=vmem, size = 0x20000, scoped, tag = 'scratch operand']
  %s0 = inlined_call_operand.vmem [shape: bf16[256,128], index: 0, kind: input, shape index: {}]
  %s1 = inlined_call_operand.vmem [shape: bf16[128,384], index: 1, kind: input, shape index: {}]
  %s2 = inlined_call_operand.vmem [shape: f32[1,384], index: 2, kind: input, shape index: {}]
  %s3 = inlined_call_operand.vmem [shape: f32[1,128], index: 3, kind: input, shape index: {}]
  %s4 = inlined_call_operand.vmem [shape: f32[1,128], index: 4, kind: input, shape index: {}]
  %s5 = inlined_call_operand.vmem [shape: bf16[256,384], index: 5, kind: output, shape index: {}]
  %s6 = sld [smem:[#allocation0]]
  $region139: #{expire_span_transformer_xl_forward.11} parent=0
    _
  %s8 = ssub.s32 1, %s6
  %s9 = scalar_select 0, %s8, %s6
  $region1: #{expire_span_transformer_xl_forward.11} parent=0
    #allocation3 [shape = 'u8[65536]{0}', space=vmem, size = 0x10000, scoped, tag = 'input window, operand 1']
    #allocation4 [shape = 'u8[131072]{0}', space=vmem, size = 0x20000, scoped, tag = 'output window, operand 0']
    loop: start=0, step=1, limit=5
    $region2: #{expire_span_transformer_xl_forward.11} parent=1 // loop_pre_header
      _
    $region3: #{expire_span_transformer_xl_forward.11} parent=1 // loop_header
      %s11 = sphi 0, %s15
      %p12 = scmp.ge.s32.totalorder %s11, 5
      %s18 = sphi 0, %s37
      %s19 = sphi 0, %s33
      %s20 = sphi 0, %s29
      %s21 = sphi 0, %s18
      %s22 = sphi 0, %s19
      %s23 = sphi 0, %s20
      %s24 = sphi 0, %s21
      %s25 = sphi 0, %s22
      %s26 = sphi 0, %s23
      %s42 = sphi 0, %s44
      %s45 = sphi 0, %s42
      %s46 = sphi 0, %s45
      %s62 = sphi 0, %s46
      %s70 = sphi 0, %s72
      %s73 = sphi 0, %s70
      %s74 = sphi 0, %s73
      %s90 = sphi 0, %s74
      %s96 = sphi 0, %s98
      %s99 = sphi 0, %s96
      %s100 = sphi 0, %s99
      %s116 = sphi 0, %s100
      %s122 = sphi 0, %s124
      %s125 = sphi 0, %s122
      %s126 = sphi 0, %s125
      %s142 = sphi 0, %s126
      %s148 = sphi 0, %s150
      %s151 = sphi 0, %s148
      %s152 = sphi 0, %s151
      %s168 = sphi 0, %s152
      %s176 = sphi 0, %s178
      %s179 = sphi 0, %s176
      %s180 = sphi 0, %s179
      %s196 = sphi 0, %s180
    $region4: #{expire_span_transformer_xl_forward.11} parent=1 // loop_header_branch
      %14 = sbr.rel (%p12) target = $region8
    $region5: #{expire_span_transformer_xl_forward.11} parent=1 // loop_body
      %s16 = ssub.s32 %s11, 1
      %s17 = ssub.s32 %s11, 2
      %s27 = sadd.s32 1, %s20
      %p28 = scmp.ge.s32.totalorder %s27, 1
      %s29 = scalar_select %p28, 0, %s27
      %s30 = sadd.s32 1, %s19
      %s31 = scalar_select %p28, %s30, %s19
      %p32 = scmp.ge.s32.totalorder %s31, 3
      %s33 = scalar_select %p32, 0, %s31
      %s34 = sadd.s32 1, %s18
      %s35 = scalar_select %p32, %s34, %s18
      %p36 = scmp.ge.s32.totalorder %s35, 1
      %s37 = scalar_select %p36, 0, %s35
      %s38 = ssub.s32 %s18, %s37
      %s39 = ssub.s32 %s20, %s29
      %s40 = sor.u32 %s38, %s39
      %p41 = scmp.eq.s32.totalorder %s40, 0
      %s43 = sadd.s32 %s42, 1
      %s44 = scalar_select %p41, %s42, %s43
      %p47 = pneg %p41
      %p48 = scmp.eq.s32.totalorder %s11, 2
      %p49 = por %p47, %p48
      %p50 = scmp.ne.s32.totalorder %s42, %s45
      %p51 = scmp.eq.s32.totalorder %s11, 0
      %p52 = por %p50, %p51
      %p53 = scmp.ne.s32.totalorder %s42, %s45
      %p54 = scmp.eq.s32.totalorder %s16, 2
      %p55 = por %p53, %p54
      %p56 = scmp.ne.s32.totalorder %s45, %s46
      %p57 = scmp.eq.s32.totalorder %s16, 0
      %p58 = por %p56, %p57
      %p59 = scmp.ne.s32.totalorder %s45, %s46
      %p60 = scmp.eq.s32.totalorder %s17, 2
      %p61 = por %p59, %p60
      %p63 = scmp.ne.s32.totalorder %s46, %s62
      %p64 = scmp.eq.s32.totalorder %s17, 0
      %p65 = por %p63, %p64
      %s66 = ssub.s32 %s20, %s29
      %s67 = ssub.s32 %s19, %s33
      %s68 = sor.u32 %s66, %s67
      %p69 = scmp.eq.s32.totalorder %s68, 0
      %s71 = sadd.s32 %s70, 1
      %s72 = scalar_select %p69, %s70, %s71
      %p75 = pneg %p69
      %p76 = scmp.eq.s32.totalorder %s11, 2
      %p77 = por %p75, %p76
      %p78 = scmp.ne.s32.totalorder %s70, %s73
      %p79 = scmp.eq.s32.totalorder %s11, 0
      %p80 = por %p78, %p79
      %p81 = scmp.ne.s32.totalorder %s70, %s73
      %p82 = scmp.eq.s32.totalorder %s16, 2
      %p83 = por %p81, %p82
      %p84 = scmp.ne.s32.totalorder %s73, %s74
      %p85 = scmp.eq.s32.totalorder %s16, 0
      %p86 = por %p84, %p85
      %p87 = scmp.ne.s32.totalorder %s73, %s74
      %p88 = scmp.eq.s32.totalorder %s17, 2
      %p89 = por %p87, %p88
      %p91 = scmp.ne.s32.totalorder %s74, %s90
      %p92 = scmp.eq.s32.totalorder %s17, 0
      %p93 = por %p91, %p92
      %s94 = ssub.s32 %s19, %s33
      %p95 = scmp.eq.s32.totalorder %s94, 0
      %s97 = sadd.s32 %s96, 1
      %s98 = scalar_select %p95, %s96, %s97
      %p101 = pneg %p95
      %p102 = scmp.eq.s32.totalorder %s11, 2
      %p103 = por %p101, %p102
      %p104 = scmp.ne.s32.totalorder %s96, %s99
      %p105 = scmp.eq.s32.totalorder %s11, 0
      %p106 = por %p104, %p105
      %p107 = scmp.ne.s32.totalorder %s96, %s99
      %p108 = scmp.eq.s32.totalorder %s16, 2
      %p109 = por %p107, %p108
      %p110 = scmp.ne.s32.totalorder %s99, %s100
      %p111 = scmp.eq.s32.totalorder %s16, 0
      %p112 = por %p110, %p111
      %p113 = scmp.ne.s32.totalorder %s99, %s100
      %p114 = scmp.eq.s32.totalorder %s17, 2
      %p115 = por %p113, %p114
      %p117 = scmp.ne.s32.totalorder %s100, %s116
      %p118 = scmp.eq.s32.totalorder %s17, 0
      %p119 = por %p117, %p118
      %s120 = ssub.s32 %s20, %s29
      %p121 = scmp.eq.s32.totalorder %s120, 0
      %s123 = sadd.s32 %s122, 1
      %s124 = scalar_select %p121, %s122, %s123
      %p127 = pneg %p121
      %p128 = scmp.eq.s32.totalorder %s11, 2
      %p129 = por %p127, %p128
      %p130 = scmp.ne.s32.totalorder %s122, %s125
      %p131 = scmp.eq.s32.totalorder %s11, 0
      %p132 = por %p130, %p131
      %p133 = scmp.ne.s32.totalorder %s122, %s125
      %p134 = scmp.eq.s32.totalorder %s16, 2
      %p135 = por %p133, %p134
      %p136 = scmp.ne.s32.totalorder %s125, %s126
      %p137 = scmp.eq.s32.totalorder %s16, 0
      %p138 = por %p136, %p137
      %p139 = scmp.ne.s32.totalorder %s125, %s126
      %p140 = scmp.eq.s32.totalorder %s17, 2
      %p141 = por %p139, %p140
      %p143 = scmp.ne.s32.totalorder %s126, %s142
      %p144 = scmp.eq.s32.totalorder %s17, 0
      %p145 = por %p143, %p144
      %s146 = ssub.s32 %s20, %s29
      %p147 = scmp.eq.s32.totalorder %s146, 0
      %s149 = sadd.s32 %s148, 1
      %s150 = scalar_select %p147, %s148, %s149
      %p153 = pneg %p147
      %p154 = scmp.eq.s32.totalorder %s11, 2
      %p155 = por %p153, %p154
      %p156 = scmp.ne.s32.totalorder %s148, %s151
      %p157 = scmp.eq.s32.totalorder %s11, 0
      %p158 = por %p156, %p157
      %p159 = scmp.ne.s32.totalorder %s148, %s151
      %p160 = scmp.eq.s32.totalorder %s16, 2
      %p161 = por %p159, %p160
      %p162 = scmp.ne.s32.totalorder %s151, %s152
      %p163 = scmp.eq.s32.totalorder %s16, 0
      %p164 = por %p162, %p163
      %p165 = scmp.ne.s32.totalorder %s151, %s152
      %p166 = scmp.eq.s32.totalorder %s17, 2
      %p167 = por %p165, %p166
      %p169 = scmp.ne.s32.totalorder %s152, %s168
      %p170 = scmp.eq.s32.totalorder %s17, 0
      %p171 = por %p169, %p170
      %s172 = ssub.s32 %s18, %s37
      %s173 = ssub.s32 %s19, %s33
      %s174 = sor.u32 %s172, %s173
      %p175 = scmp.eq.s32.totalorder %s174, 0
      %s177 = sadd.s32 %s176, 1
      %s178 = scalar_select %p175, %s176, %s177
      %p181 = pneg %p175
      %p182 = scmp.eq.s32.totalorder %s11, 2
      %p183 = por %p181, %p182
      %p184 = scmp.ne.s32.totalorder %s176, %s179
      %p185 = scmp.eq.s32.totalorder %s11, 0
      %p186 = por %p184, %p185
      %p187 = scmp.ne.s32.totalorder %s176, %s179
      %p188 = scmp.eq.s32.totalorder %s16, 2
      %p189 = por %p187, %p188
      %p190 = scmp.ne.s32.totalorder %s179, %s180
      %p191 = scmp.eq.s32.totalorder %s16, 0
      %p192 = por %p190, %p191
      %p193 = scmp.ne.s32.totalorder %s179, %s180
      %p194 = scmp.eq.s32.totalorder %s17, 2
      %p195 = por %p193, %p194
      %p197 = scmp.ne.s32.totalorder %s180, %s196
      %p198 = scmp.eq.s32.totalorder %s17, 0
      %p199 = por %p197, %p198
      %p200 = scmp.le.s32.totalorder 1, %s11
      %p201 = scmp.lt.s32.totalorder %s11, 4
      %p202 = pnand %p200, %p201
      %p203 = pneg %p202
      // Predicated region
      $region9: #{expire_span_transformer_xl_forward.11} parent=5 // pred_check
        _
      $region10: #{expire_span_transformer_xl_forward.11} parent=5 // pred_check_branch
        %205 = sbr.rel (%p202) target = $region12
      $region11: #{expire_span_transformer_xl_forward.11} parent=5 // pred_region
        %s206 = ssub.s32 %s11, 1
        // Predicated region
        $region13: #{expire_span_transformer_xl_forward.11} parent=11 // pred_check
          %p207 = pneg %p58
        $region14: #{expire_span_transformer_xl_forward.11} parent=11 // pred_check_branch
          %209 = sbr.rel (%p207) target = $region16
        $region15: #{expire_span_transformer_xl_forward.11} parent=11 // pred_region
          %s210 = smul.u32 32, %s21
          %p211 = scmp.lt.s32.totalorder %s210, 31
          %s212 = scalar_select %p211, %s210, 31
          %p213 = scmp.lt.s32.totalorder %s23, 0
          %s214 = scalar_select %p213, %s23, 0
          %s215 = sadd.s32 %s214, %s212
          %s216 = smul.addr %s215, 4
          %s217 = scalar_lea.vmem %s0, %s216
          %s218 = smul.u32 32, %s21
        $region16: #{expire_span_transformer_xl_forward.11} parent=11 // pred_fallthru
          _
        // Predicated region
        $region17: #{expire_span_transformer_xl_forward.11} parent=11 // pred_check
          %p219 = pneg %p138
        $region18: #{expire_span_transformer_xl_forward.11} parent=11 // pred_check_branch
          %221 = sbr.rel (%p219) target = $region20
        $region19: #{expire_span_transformer_xl_forward.11} parent=11 // pred_region
          %p222 = scmp.lt.s32.totalorder %s23, 0
          %s223 = scalar_select %p222, %s23, 0
          %s224 = scalar_lea.vmem %s3, %s223
        $region20: #{expire_span_transformer_xl_forward.11} parent=11 // pred_fallthru
          _
        // Predicated region
        $region21: #{expire_span_transformer_xl_forward.11} parent=11 // pred_check
          %p225 = pneg %p164
        $region22: #{expire_span_transformer_xl_forward.11} parent=11 // pred_check_branch
          %227 = sbr.rel (%p225) target = $region24
        $region23: #{expire_span_transformer_xl_forward.11} parent=11 // pred_region
          %p228 = scmp.lt.s32.totalorder %s23, 0
          %s229 = scalar_select %p228, %s23, 0
          %s230 = scalar_lea.vmem %s4, %s229
        $region24: #{expire_span_transformer_xl_forward.11} parent=11 // pred_fallthru
          _
      $region12: #{expire_span_transformer_xl_forward.11} parent=5 // pred_fallthru
        _
      %p231 = scmp.lt.s32.totalorder %s11, 3
      // Predicated region
      $region25: #{expire_span_transformer_xl_forward.11} parent=5 // pred_check
        %p232 = pneg %p231
      $region26: #{expire_span_transformer_xl_forward.11} parent=5 // pred_check_branch
        %234 = sbr.rel (%p232) target = $region28
      $region27: #{expire_span_transformer_xl_forward.11} parent=5 // pred_region
        // Predicated region
        $region29: #{expire_span_transformer_xl_forward.11} parent=27 // pred_check
          %p235 = pneg %p80
        $region30: #{expire_span_transformer_xl_forward.11} parent=27 // pred_check_branch
          %237 = sbr.rel (%p235) target = $region32
        $region31: #{expire_span_transformer_xl_forward.11} parent=27 // pred_region
          %s238 = sand.u32 %s70, 1
          %s239 = sand.u32 %s70, 1
          %s240 = smul.addr %s239, 64
          %s241 = scalar_lea.vmem [#allocation3], %s240
          %s242 = smul.u32 16, %s20
          %s243 = smul.addr %s242, 3
          %s244 = sadd.s32 %s19, %s243
          %s245 = smul.addr %s244, 4
          %s246 = scalar_lea.vmem %s1, %s245
          // Predicated region
          $region33: #{expire_span_transformer_xl_forward.11} parent=31 // pred_check
            _
          $region34: #{expire_span_transformer_xl_forward.11} parent=31 // pred_check_branch
            %248 = sbr.rel (0) target = $region36
          $region35: #{expire_span_transformer_xl_forward.11} parent=31 // pred_region
            // Predicated region
            $region37: #{expire_span_transformer_xl_forward.11} parent=35 // pred_check
              _
            $region38: #{expire_span_transformer_xl_forward.11} parent=35 // pred_check_branch
              %250 = sbr.rel target = $region40
            $region39: #{expire_span_transformer_xl_forward.11} parent=35 // pred_region
              // Predicated region
              $region52: #{expire_span_transformer_xl_forward.11} parent=39 // pred_check
                _
              $region53: #{expire_span_transformer_xl_forward.11} parent=39 // pred_check_branch
                %295 = sbr.rel (0) target = $region55
              $region54: #{expire_span_transformer_xl_forward.11} parent=39 // pred_region
                loop: start=0, step=1, limit=1
                $region56: #{expire_span_transformer_xl_forward.11} parent=54 // loop_pre_header
                  _
                $region57: #{expire_span_transformer_xl_forward.11} parent=54 // loop_header
                  %s297 = sphi 0, %s301
                  %p298 = scmp.ge.s32.totalorder %s297, 1
                  %s302 = sphi %s246, %s246
                  %s303 = sphi %s241, %s241
                $region58: #{expire_span_transformer_xl_forward.11} parent=54 // loop_header_branch
                  %300 = sbr.rel (%p298) target = $region62
                $region59: #{expire_span_transformer_xl_forward.11} parent=54 // loop_body
                  _
                $region60: #{expire_span_transformer_xl_forward.11} parent=54 // loop_footer
                  %s301 = sadd.s32 1, %s297
                $region61: #{expire_span_transformer_xl_forward.11} parent=54 // loop_footer_branch
                  %296 = sbr.rel target = $region57
                $region62: #{expire_span_transformer_xl_forward.11} parent=54 // loop_exit
                  _
                loop: start=0, step=1, limit=1
                $region63: #{expire_span_transformer_xl_forward.11} parent=54 // loop_pre_header
                  _
                $region64: #{expire_span_transformer_xl_forward.11} parent=54 // loop_header
                  %s306 = sphi 0, %s310
                  %p307 = scmp.ge.s32.totalorder %s306, 1
                  %s311 = sphi %s246, %s246
                  %s312 = sphi %s241, %s241
                $region65: #{expire_span_transformer_xl_forward.11} parent=54 // loop_header_branch
                  %309 = sbr.rel (%p307) target = $region69
                $region66: #{expire_span_transformer_xl_forward.11} parent=54 // loop_body
                  %v313 = vld [vmem:[%s311] sm:$0xf]
                  %314 = vst [vmem:[%s312] sm:$0xf] %v313
                  %v315 = vld [vmem:[%s311 + $0xc] sm:$0xf]
                  %316 = vst [vmem:[%s312 + $0x4] sm:$0xf] %v315
                  %v317 = vld [vmem:[%s311 + $0x18] sm:$0xf]
                  %318 = vst [vmem:[%s312 + $0x8] sm:$0xf] %v317
                  %v319 = vld [vmem:[%s311 + $0x24] sm:$0xf]
                  %320 = vst [vmem:[%s312 + $0xc] sm:$0xf] %v319
                  %v321 = vld [vmem:[%s311 + $0x30] sm:$0xf]
                  %322 = vst [vmem:[%s312 + $0x10] sm:$0xf] %v321
                  %v323 = vld [vmem:[%s311 + $0x3c] sm:$0xf]
                  %324 = vst [vmem:[%s312 + $0x14] sm:$0xf] %v323
                  %v325 = vld [vmem:[%s311 + $0x48] sm:$0xf]
                  %326 = vst [vmem:[%s312 + $0x18] sm:$0xf] %v325
                  %v327 = vld [vmem:[%s311 + $0x54] sm:$0xf]
                  %328 = vst [vmem:[%s312 + $0x1c] sm:$0xf] %v327
                  %v329 = vld [vmem:[%s311 + $0x60] sm:$0xf]
                  %330 = vst [vmem:[%s312 + $0x20] sm:$0xf] %v329
                  %v331 = vld [vmem:[%s311 + $0x6c] sm:$0xf]
                  %332 = vst [vmem:[%s312 + $0x24] sm:$0xf] %v331
                  %v333 = vld [vmem:[%s311 + $0x78] sm:$0xf]
                  %334 = vst [vmem:[%s312 + $0x28] sm:$0xf] %v333
                  %v335 = vld [vmem:[%s311 + $0x84] sm:$0xf]
                  %336 = vst [vmem:[%s312 + $0x2c] sm:$0xf] %v335
                  %v337 = vld [vmem:[%s311 + $0x90] sm:$0xf]
                  %338 = vst [vmem:[%s312 + $0x30] sm:$0xf] %v337
                  %v339 = vld [vmem:[%s311 + $0x9c] sm:$0xf]
                  %340 = vst [vmem:[%s312 + $0x34] sm:$0xf] %v339
                  %v341 = vld [vmem:[%s311 + $0xa8] sm:$0xf]
                  %342 = vst [vmem:[%s312 + $0x38] sm:$0xf] %v341
                  %v343 = vld [vmem:[%s311 + $0xb4] sm:$0xf]
                  %344 = vst [vmem:[%s312 + $0x3c] sm:$0xf] %v343
                $region67: #{expire_span_transformer_xl_forward.11} parent=54 // loop_footer
                  %s310 = sadd.s32 1, %s306
                $region68: #{expire_span_transformer_xl_forward.11} parent=54 // loop_footer_branch
                  %305 = sbr.rel target = $region64
                $region69: #{expire_span_transformer_xl_forward.11} parent=54 // loop_exit
                  _
              $region55: #{expire_span_transformer_xl_forward.11} parent=39 // pred_fallthru
                _
            $region40: #{expire_span_transformer_xl_forward.11} parent=35 // pred_fallthru
              _
            // Predicated region
            $region41: #{expire_span_transformer_xl_forward.11} parent=35 // pred_check
              _
            $region42: #{expire_span_transformer_xl_forward.11} parent=35 // pred_check_branch
              %252 = sbr.rel (0) target = $region44
            $region43: #{expire_span_transformer_xl_forward.11} parent=35 // pred_region
              loop: start=0, step=1, limit=1
              $region45: #{expire_span_transformer_xl_forward.11} parent=43 // loop_pre_header
                _
              $region46: #{expire_span_transformer_xl_forward.11} parent=43 // loop_header
                %s255 = sphi 0, %s259
                %p256 = scmp.ge.s32.totalorder %s255, 1
                %s260 = sphi %s246, %s246
                %s261 = sphi %s241, %s241
              $region47: #{expire_span_transformer_xl_forward.11} parent=43 // loop_header_branch
                %258 = sbr.rel (%p256) target = $region51
              $region48: #{expire_span_transformer_xl_forward.11} parent=43 // loop_body
                %v262 = vld [vmem:[%s260] sm:$0xf]
                %263 = vst [vmem:[%s261] sm:$0xf] %v262
                %v264 = vld [vmem:[%s260 + $0xc] sm:$0xf]
                %265 = vst [vmem:[%s261 + $0x4] sm:$0xf] %v264
                %v266 = vld [vmem:[%s260 + $0x18] sm:$0xf]
                %267 = vst [vmem:[%s261 + $0x8] sm:$0xf] %v266
                %v268 = vld [vmem:[%s260 + $0x24] sm:$0xf]
                %269 = vst [vmem:[%s261 + $0xc] sm:$0xf] %v268
                %v270 = vld [vmem:[%s260 + $0x30] sm:$0xf]
                %271 = vst [vmem:[%s261 + $0x10] sm:$0xf] %v270
                %v272 = vld [vmem:[%s260 + $0x3c] sm:$0xf]
                %273 = vst [vmem:[%s261 + $0x14] sm:$0xf] %v272
                %v274 = vld [vmem:[%s260 + $0x48] sm:$0xf]
                %275 = vst [vmem:[%s261 + $0x18] sm:$0xf] %v274
                %v276 = vld [vmem:[%s260 + $0x54] sm:$0xf]
                %277 = vst [vmem:[%s261 + $0x1c] sm:$0xf] %v276
                %v278 = vld [vmem:[%s260 + $0x60] sm:$0xf]
                %279 = vst [vmem:[%s261 + $0x20] sm:$0xf] %v278
                %v280 = vld [vmem:[%s260 + $0x6c] sm:$0xf]
                %281 = vst [vmem:[%s261 + $0x24] sm:$0xf] %v280
                %v282 = vld [vmem:[%s260 + $0x78] sm:$0xf]
                %283 = vst [vmem:[%s261 + $0x28] sm:$0xf] %v282
                %v284 = vld [vmem:[%s260 + $0x84] sm:$0xf]
                %285 = vst [vmem:[%s261 + $0x2c] sm:$0xf] %v284
                %v286 = vld [vmem:[%s260 + $0x90] sm:$0xf]
                %287 = vst [vmem:[%s261 + $0x30] sm:$0xf] %v286
                %v288 = vld [vmem:[%s260 + $0x9c] sm:$0xf]
                %289 = vst [vmem:[%s261 + $0x34] sm:$0xf] %v288
                %v290 = vld [vmem:[%s260 + $0xa8] sm:$0xf]
                %291 = vst [vmem:[%s261 + $0x38] sm:$0xf] %v290
                %v292 = vld [vmem:[%s260 + $0xb4] sm:$0xf]
                %293 = vst [vmem:[%s261 + $0x3c] sm:$0xf] %v292
              $region49: #{expire_span_transformer_xl_forward.11} parent=43 // loop_footer
                %s259 = sadd.s32 1, %s255
              $region50: #{expire_span_transformer_xl_forward.11} parent=43 // loop_footer_branch
                %254 = sbr.rel target = $region46
              $region51: #{expire_span_transformer_xl_forward.11} parent=43 // loop_exit
                _
            $region44: #{expire_span_transformer_xl_forward.11} parent=35 // pred_fallthru
              _
          $region36: #{expire_span_transformer_xl_forward.11} parent=31 // pred_fallthru
            _
          %345 = vnop
        $region32: #{expire_span_transformer_xl_forward.11} parent=27 // pred_fallthru
          _
        // Predicated region
        $region70: #{expire_span_transformer_xl_forward.11} parent=27 // pred_check
          %p346 = pneg %p106
        $region71: #{expire_span_transformer_xl_forward.11} parent=27 // pred_check_branch
          %348 = sbr.rel (%p346) target = $region73
        $region72: #{expire_span_transformer_xl_forward.11} parent=27 // pred_region
          %p349 = scmp.lt.s32.totalorder %s19, 2
          %s350 = scalar_select %p349, %s19, 2
          %s351 = scalar_lea.vmem %s2, %s350
        $region73: #{expire_span_transformer_xl_forward.11} parent=27 // pred_fallthru
          _
      $region28: #{expire_span_transformer_xl_forward.11} parent=5 // pred_fallthru
        _
      %p352 = scmp.le.s32.totalorder 1, %s11
      %p353 = scmp.lt.s32.totalorder %s11, 4
      %p354 = pnand %p352, %p353
      %p355 = pneg %p354
      // Predicated region
      $region74: #{expire_span_transformer_xl_forward.11} parent=5 // pred_check
        _
      $region75: #{expire_span_transformer_xl_forward.11} parent=5 // pred_check_branch
        %357 = sbr.rel (%p354) target = $region77
      $region76: #{expire_span_transformer_xl_forward.11} parent=5 // pred_region
        %s358 = ssub.s32 %s11, 1
        %s359 = sand.u32 %s73, 1
        %s360 = sand.u32 %s73, 1
        %s361 = smul.addr %s360, 64
        %s362 = scalar_lea.vmem [#allocation3], %s361
        // Predicated region
        $region78: #{expire_span_transformer_xl_forward.11} parent=76 // pred_check
          %p363 = pneg %p86
        $region79: #{expire_span_transformer_xl_forward.11} parent=76 // pred_check_branch
          %365 = sbr.rel (%p363) target = $region81
        $region80: #{expire_span_transformer_xl_forward.11} parent=76 // pred_region
          _
        $region81: #{expire_span_transformer_xl_forward.11} parent=76 // pred_fallthru
          _
        %s366 = smul.u32 32, %s21
        %p367 = scmp.lt.s32.totalorder %s366, 31
        %s368 = scalar_select %p367, %s366, 31
        %p369 = scmp.lt.s32.totalorder %s23, 0
        %s370 = scalar_select %p369, %s23, 0
        %s371 = sadd.s32 %s370, %s368
        %s372 = smul.addr %s371, 4
        %s373 = scalar_lea.vmem %s0, %s372
        %p374 = pneg %p58
        %p375 = pneg %p55
        %s376 = sand.u32 %s73, 1
        %s377 = sand.u32 %s73, 1
        %s378 = smul.addr %s377, 64
        %s379 = scalar_lea.vmem [#allocation3], %s378
        %p380 = pneg %p86
        %p381 = pneg %p83
        %p382 = scmp.lt.s32.totalorder %s22, 2
        %s383 = scalar_select %p382, %s22, 2
        %s384 = scalar_lea.vmem %s2, %s383
        %p385 = pneg %p112
        %p386 = pneg %p109
        %p387 = scmp.lt.s32.totalorder %s23, 0
        %s388 = scalar_select %p387, %s23, 0
        %s389 = scalar_lea.vmem %s3, %s388
        %p390 = pneg %p138
        %p391 = pneg %p135
        %p392 = scmp.lt.s32.totalorder %s23, 0
        %s393 = scalar_select %p392, %s23, 0
        %s394 = scalar_lea.vmem %s4, %s393
        %p395 = pneg %p164
        %p396 = pneg %p161
        %p397 = pneg %p192
        %p398 = pneg %p189
        %s399 = sand.u32 %s179, 1
        %s400 = sand.u32 %s179, 1
        %s401 = smul.addr %s400, 128
        %s402 = scalar_lea.vmem [#allocation4], %s401
        %s403 = smul.u32 32, %s21
        %p404 = scmp.lt.s32.totalorder %s403, 31
        %s405 = scalar_select %p404, %s403, 31
        %p406 = scmp.lt.s32.totalorder %s23, 0
        %s407 = scalar_select %p406, %s23, 0
        %s408 = sadd.s32 %s407, %s405
        %s409 = smul.addr %s408, 4
        %s410 = scalar_lea.vmem %s0, %s409
        %s411 = smul.u32 32, %s21
        %s412 = smul.u32 16, %s23
        %p413 = scmp.lt.s32.totalorder %s22, 2
        %s414 = scalar_select %p413, %s22, 2
        %s415 = scalar_lea.vmem %s2, %s414
        %p416 = scmp.lt.s32.totalorder %s23, 0
        %s417 = scalar_select %p416, %s23, 0
        %s418 = scalar_lea.vmem %s3, %s417
        %p419 = scmp.lt.s32.totalorder %s23, 0
        %s420 = scalar_select %p419, %s23, 0
        %s421 = scalar_lea.vmem %s4, %s420
        %s422 = smul.u32 32, %s21
        %p424 = scmp.eq.s32.totalorder %s23, 0
        // Predicated region
        $region82: #{expire_span_transformer_xl_forward.11} parent=76 // pred_check
          %p425 = pneg %p424
        $region83: #{expire_span_transformer_xl_forward.11} parent=76 // pred_check_branch
          %427 = sbr.rel (%p425) target = $region85
        $region84: #{expire_span_transformer_xl_forward.11} parent=76 // pred_region
          %428 = vst [vmem:[#allocation2] sm:$0xff] 0.0
          %429 = vst [vmem:[#allocation2 + $0x8] sm:$0xff] 0.0
          %430 = vst [vmem:[#allocation2 + $0x10] sm:$0xff] 0.0
          %431 = vst [vmem:[#allocation2 + $0x18] sm:$0xff] 0.0
          %432 = vst [vmem:[#allocation2 + $0x20] sm:$0xff] 0.0
          %433 = vst [vmem:[#allocation2 + $0x28] sm:$0xff] 0.0
          %434 = vst [vmem:[#allocation2 + $0x30] sm:$0xff] 0.0
          %435 = vst [vmem:[#allocation2 + $0x38] sm:$0xff] 0.0
          %436 = vst [vmem:[#allocation2 + $0x40] sm:$0xff] 0.0
          %437 = vst [vmem:[#allocation2 + $0x48] sm:$0xff] 0.0
          %438 = vst [vmem:[#allocation2 + $0x50] sm:$0xff] 0.0
          %439 = vst [vmem:[#allocation2 + $0x58] sm:$0xff] 0.0
          %440 = vst [vmem:[#allocation2 + $0x60] sm:$0xff] 0.0
          %441 = vst [vmem:[#allocation2 + $0x68] sm:$0xff] 0.0
          %442 = vst [vmem:[#allocation2 + $0x70] sm:$0xff] 0.0
          %443 = vst [vmem:[#allocation2 + $0x78] sm:$0xff] 0.0
          %444 = vst [vmem:[#allocation2 + $0x80] sm:$0xff] 0.0
          %445 = vst [vmem:[#allocation2 + $0x88] sm:$0xff] 0.0
          %446 = vst [vmem:[#allocation2 + $0x90] sm:$0xff] 0.0
          %447 = vst [vmem:[#allocation2 + $0x98] sm:$0xff] 0.0
          %448 = vst [vmem:[#allocation2 + $0xa0] sm:$0xff] 0.0
          %449 = vst [vmem:[#allocation2 + $0xa8] sm:$0xff] 0.0
          %450 = vst [vmem:[#allocation2 + $0xb0] sm:$0xff] 0.0
          %451 = vst [vmem:[#allocation2 + $0xb8] sm:$0xff] 0.0
          %452 = vst [vmem:[#allocation2 + $0xc0] sm:$0xff] 0.0
          %453 = vst [vmem:[#allocation2 + $0xc8] sm:$0xff] 0.0
          %454 = vst [vmem:[#allocation2 + $0xd0] sm:$0xff] 0.0
          %455 = vst [vmem:[#allocation2 + $0xd8] sm:$0xff] 0.0
          %456 = vst [vmem:[#allocation2 + $0xe0] sm:$0xff] 0.0
          %457 = vst [vmem:[#allocation2 + $0xe8] sm:$0xff] 0.0
          %458 = vst [vmem:[#allocation2 + $0xf0] sm:$0xff] 0.0
          %459 = vst [vmem:[#allocation2 + $0xf8] sm:$0xff] 0.0
        $region85: #{expire_span_transformer_xl_forward.11} parent=76 // pred_fallthru
          _
        %v460 = vld [vmem:[%s410] sm:$0xf]
        %v461 = vld [vmem:[%s410 + $0x4] sm:$0xf]
        %v462 = vld [vmem:[%s410 + $0x8] sm:$0xf]
        %v463 = vld [vmem:[%s410 + $0xc] sm:$0xf]
        %v464 = vld [vmem:[%s410 + $0x10] sm:$0xf]
        %v465 = vld [vmem:[%s410 + $0x14] sm:$0xf]
        %v466 = vld [vmem:[%s410 + $0x18] sm:$0xf]
        %v467 = vld [vmem:[%s410 + $0x1c] sm:$0xf]
        %v468 = vld [vmem:[%s410 + $0x20] sm:$0xf]
        %v469 = vld [vmem:[%s410 + $0x24] sm:$0xf]
        %v470 = vld [vmem:[%s410 + $0x28] sm:$0xf]
        %v471 = vld [vmem:[%s410 + $0x2c] sm:$0xf]
        %v472 = vld [vmem:[%s410 + $0x30] sm:$0xf]
        %v473 = vld [vmem:[%s410 + $0x34] sm:$0xf]
        %v474 = vld [vmem:[%s410 + $0x38] sm:$0xf]
        %v475 = vld [vmem:[%s410 + $0x3c] sm:$0xf]
        %v476 = vld [vmem:[%s410 + $0x40] sm:$0xf]
        %v477 = vld [vmem:[%s410 + $0x44] sm:$0xf]
        %v478 = vld [vmem:[%s410 + $0x48] sm:$0xf]
        %v479 = vld [vmem:[%s410 + $0x4c] sm:$0xf]
        %v480 = vld [vmem:[%s410 + $0x50] sm:$0xf]
        %v481 = vld [vmem:[%s410 + $0x54] sm:$0xf]
        %v482 = vld [vmem:[%s410 + $0x58] sm:$0xf]
        %v483 = vld [vmem:[%s410 + $0x5c] sm:$0xf]
        %v484 = vld [vmem:[%s410 + $0x60] sm:$0xf]
        %v485 = vld [vmem:[%s410 + $0x64] sm:$0xf]
        %v486 = vld [vmem:[%s410 + $0x68] sm:$0xf]
        %v487 = vld [vmem:[%s410 + $0x6c] sm:$0xf]
        %v488 = vld [vmem:[%s410 + $0x70] sm:$0xf]
        %v489 = vld [vmem:[%s410 + $0x74] sm:$0xf]
        %v490 = vld [vmem:[%s410 + $0x78] sm:$0xf]
        %v491 = vld [vmem:[%s410 + $0x7c] sm:$0xf]
        %v492 = vunpack.c.l.bf16 %v460
        %v493 = vunpack.c.l.bf16 %v461
        %v494 = vunpack.c.l.bf16 %v462
        %v495 = vunpack.c.l.bf16 %v463
        %v496 = vunpack.c.l.bf16 %v464
        %v497 = vunpack.c.l.bf16 %v465
        %v498 = vunpack.c.l.bf16 %v466
        %v499 = vunpack.c.l.bf16 %v467
        %v500 = vunpack.c.l.bf16 %v468
        %v501 = vunpack.c.l.bf16 %v469
        %v502 = vunpack.c.l.bf16 %v470
        %v503 = vunpack.c.l.bf16 %v471
        %v504 = vunpack.c.l.bf16 %v472
        %v505 = vunpack.c.l.bf16 %v473
        %v506 = vunpack.c.l.bf16 %v474
        %v507 = vunpack.c.l.bf16 %v475
        %v508 = vunpack.c.l.bf16 %v476
        %v509 = vunpack.c.l.bf16 %v477
        %v510 = vunpack.c.l.bf16 %v478
        %v511 = vunpack.c.l.bf16 %v479
        %v512 = vunpack.c.l.bf16 %v480
        %v513 = vunpack.c.l.bf16 %v481
        %v514 = vunpack.c.l.bf16 %v482
        %v515 = vunpack.c.l.bf16 %v483
        %v516 = vunpack.c.l.bf16 %v484
        %v517 = vunpack.c.l.bf16 %v485
        %v518 = vunpack.c.l.bf16 %v486
        %v519 = vunpack.c.l.bf16 %v487
        %v520 = vunpack.c.l.bf16 %v488
        %v521 = vunpack.c.l.bf16 %v489
        %v522 = vunpack.c.l.bf16 %v490
        %v523 = vunpack.c.l.bf16 %v491
        %524 = vadd.xlane.f32.xlu0 %v492
        %v525 = vpop.xlane.xlu0 %524
        %526 = vadd.xlane.f32.xlu0 %v493
        %v527 = vpop.xlane.xlu0 %526
        %528 = vadd.xlane.f32.xlu0 %v494
        %v529 = vpop.xlane.xlu0 %528
        %530 = vadd.xlane.f32.xlu0 %v495
        %v531 = vpop.xlane.xlu0 %530
        %532 = vadd.xlane.f32.xlu0 %v496
        %v533 = vpop.xlane.xlu0 %532
        %534 = vadd.xlane.f32.xlu0 %v497
        %v535 = vpop.xlane.xlu0 %534
        %536 = vadd.xlane.f32.xlu0 %v498
        %v537 = vpop.xlane.xlu0 %536
        %538 = vadd.xlane.f32.xlu0 %v499
        %v539 = vpop.xlane.xlu0 %538
        %540 = vadd.xlane.f32.xlu0 %v500
        %v541 = vpop.xlane.xlu0 %540
        %542 = vadd.xlane.f32.xlu0 %v501
        %v543 = vpop.xlane.xlu0 %542
        %544 = vadd.xlane.f32.xlu0 %v502
        %v545 = vpop.xlane.xlu0 %544
        %546 = vadd.xlane.f32.xlu0 %v503
        %v547 = vpop.xlane.xlu0 %546
        %548 = vadd.xlane.f32.xlu0 %v504
        %v549 = vpop.xlane.xlu0 %548
        %550 = vadd.xlane.f32.xlu0 %v505
        %v551 = vpop.xlane.xlu0 %550
        %552 = vadd.xlane.f32.xlu0 %v506
        %v553 = vpop.xlane.xlu0 %552
        %554 = vadd.xlane.f32.xlu0 %v507
        %v555 = vpop.xlane.xlu0 %554
        %556 = vadd.xlane.f32.xlu0 %v508
        %v557 = vpop.xlane.xlu0 %556
        %558 = vadd.xlane.f32.xlu0 %v509
        %v559 = vpop.xlane.xlu0 %558
        %560 = vadd.xlane.f32.xlu0 %v510
        %v561 = vpop.xlane.xlu0 %560
        %562 = vadd.xlane.f32.xlu0 %v511
        %v563 = vpop.xlane.xlu0 %562
        %564 = vadd.xlane.f32.xlu0 %v512
        %v565 = vpop.xlane.xlu0 %564
        %566 = vadd.xlane.f32.xlu0 %v513
        %v567 = vpop.xlane.xlu0 %566
        %568 = vadd.xlane.f32.xlu0 %v514
        %v569 = vpop.xlane.xlu0 %568
        %570 = vadd.xlane.f32.xlu0 %v515
        %v571 = vpop.xlane.xlu0 %570
        %572 = vadd.xlane.f32.xlu0 %v516
        %v573 = vpop.xlane.xlu0 %572
        %574 = vadd.xlane.f32.xlu0 %v517
        %v575 = vpop.xlane.xlu0 %574
        %576 = vadd.xlane.f32.xlu0 %v518
        %v577 = vpop.xlane.xlu0 %576
        %578 = vadd.xlane.f32.xlu0 %v519
        %v579 = vpop.xlane.xlu0 %578
        %580 = vadd.xlane.f32.xlu0 %v520
        %v581 = vpop.xlane.xlu0 %580
        %582 = vadd.xlane.f32.xlu0 %v521
        %v583 = vpop.xlane.xlu0 %582
        %584 = vadd.xlane.f32.xlu0 %v522
        %v585 = vpop.xlane.xlu0 %584
        %586 = vadd.xlane.f32.xlu0 %v523
        %v587 = vpop.xlane.xlu0 %586
        %v588 = vrcp.pop 128.0
        %v589 = vmul.f32 %v525, %v588
        %v590 = vmul.f32 %v527, %v588
        %v591 = vmul.f32 %v529, %v588
        %v592 = vmul.f32 %v531, %v588
        %v593 = vmul.f32 %v533, %v588
        %v594 = vmul.f32 %v535, %v588
        %v595 = vmul.f32 %v537, %v588
        %v596 = vmul.f32 %v539, %v588
        %v597 = vmul.f32 %v541, %v588
        %v598 = vmul.f32 %v543, %v588
        %v599 = vmul.f32 %v545, %v588
        %v600 = vmul.f32 %v547, %v588
        %v601 = vmul.f32 %v549, %v588
        %v602 = vmul.f32 %v551, %v588
        %v603 = vmul.f32 %v553, %v588
        %v604 = vmul.f32 %v555, %v588
        %v605 = vmul.f32 %v557, %v588
        %v606 = vmul.f32 %v559, %v588
        %v607 = vmul.f32 %v561, %v588
        %v608 = vmul.f32 %v563, %v588
        %v609 = vmul.f32 %v565, %v588
        %v610 = vmul.f32 %v567, %v588
        %v611 = vmul.f32 %v569, %v588
        %v612 = vmul.f32 %v571, %v588
        %v613 = vmul.f32 %v573, %v588
        %v614 = vmul.f32 %v575, %v588
        %v615 = vmul.f32 %v577, %v588
        %v616 = vmul.f32 %v579, %v588
        %v617 = vmul.f32 %v581, %v588
        %v618 = vmul.f32 %v583, %v588
        %v619 = vmul.f32 %v585, %v588
        %v620 = vmul.f32 %v587, %v588
        %v621 = vsub.f32 %v492, %v589
        %v622 = vsub.f32 %v493, %v590
        %v623 = vsub.f32 %v494, %v591
        %v624 = vsub.f32 %v495, %v592
        %v625 = vsub.f32 %v496, %v593
        %v626 = vsub.f32 %v497, %v594
        %v627 = vsub.f32 %v498, %v595
        %v628 = vsub.f32 %v499, %v596
        %v629 = vsub.f32 %v500, %v597
        %v630 = vsub.f32 %v501, %v598
        %v631 = vsub.f32 %v502, %v599
        %v632 = vsub.f32 %v503, %v600
        %v633 = vsub.f32 %v504, %v601
        %v634 = vsub.f32 %v505, %v602
        %v635 = vsub.f32 %v506, %v603
        %v636 = vsub.f32 %v507, %v604
        %v637 = vsub.f32 %v508, %v605
        %v638 = vsub.f32 %v509, %v606
        %v639 = vsub.f32 %v510, %v607
        %v640 = vsub.f32 %v511, %v608
        %v641 = vsub.f32 %v512, %v609
        %v642 = vsub.f32 %v513, %v610
        %v643 = vsub.f32 %v514, %v611
        %v644 = vsub.f32 %v515, %v612
        %v645 = vsub.f32 %v516, %v613
        %v646 = vsub.f32 %v517, %v614
        %v647 = vsub.f32 %v518, %v615
        %v648 = vsub.f32 %v519, %v616
        %v649 = vsub.f32 %v520, %v617
        %v650 = vsub.f32 %v521, %v618
        %v651 = vsub.f32 %v522, %v619
        %v652 = vsub.f32 %v523, %v620
        %v653 = vmul.f32 %v621, %v621
        %v654 = vmul.f32 %v622, %v622
        %v655 = vmul.f32 %v623, %v623
        %v656 = vmul.f32 %v624, %v624
        %v657 = vmul.f32 %v625, %v625
        %v658 = vmul.f32 %v626, %v626
        %v659 = vmul.f32 %v627, %v627
        %v660 = vmul.f32 %v628, %v628
        %v661 = vmul.f32 %v629, %v629
        %v662 = vmul.f32 %v630, %v630
        %v663 = vmul.f32 %v631, %v631
        %v664 = vmul.f32 %v632, %v632
        %v665 = vmul.f32 %v633, %v633
        %v666 = vmul.f32 %v634, %v634
        %v667 = vmul.f32 %v635, %v635
        %v668 = vmul.f32 %v636, %v636
        %v669 = vmul.f32 %v637, %v637
        %v670 = vmul.f32 %v638, %v638
        %v671 = vmul.f32 %v639, %v639
        %v672 = vmul.f32 %v640, %v640
        %v673 = vmul.f32 %v641, %v641
        %v674 = vmul.f32 %v642, %v642
        %v675 = vmul.f32 %v643, %v643
        %v676 = vmul.f32 %v644, %v644
        %v677 = vmul.f32 %v645, %v645
        %v678 = vmul.f32 %v646, %v646
        %v679 = vmul.f32 %v647, %v647
        %v680 = vmul.f32 %v648, %v648
        %v681 = vmul.f32 %v649, %v649
        %v682 = vmul.f32 %v650, %v650
        %v683 = vmul.f32 %v651, %v651
        %v684 = vmul.f32 %v652, %v652
        %685 = vadd.xlane.f32.xlu0 %v653
        %v686 = vpop.xlane.xlu0 %685
        %687 = vadd.xlane.f32.xlu0 %v654
        %v688 = vpop.xlane.xlu0 %687
        %689 = vadd.xlane.f32.xlu0 %v655
        %v690 = vpop.xlane.xlu0 %689
        %691 = vadd.xlane.f32.xlu0 %v656
        %v692 = vpop.xlane.xlu0 %691
        %693 = vadd.xlane.f32.xlu0 %v657
        %v694 = vpop.xlane.xlu0 %693
        %695 = vadd.xlane.f32.xlu0 %v658
        %v696 = vpop.xlane.xlu0 %695
        %697 = vadd.xlane.f32.xlu0 %v659
        %v698 = vpop.xlane.xlu0 %697
        %699 = vadd.xlane.f32.xlu0 %v660
        %v700 = vpop.xlane.xlu0 %699
        %701 = vadd.xlane.f32.xlu0 %v661
        %v702 = vpop.xlane.xlu0 %701
        %703 = vadd.xlane.f32.xlu0 %v662
        %v704 = vpop.xlane.xlu0 %703
        %705 = vadd.xlane.f32.xlu0 %v663
        %v706 = vpop.xlane.xlu0 %705
        %707 = vadd.xlane.f32.xlu0 %v664
        %v708 = vpop.xlane.xlu0 %707
        %709 = vadd.xlane.f32.xlu0 %v665
        %v710 = vpop.xlane.xlu0 %709
        %711 = vadd.xlane.f32.xlu0 %v666
        %v712 = vpop.xlane.xlu0 %711
        %713 = vadd.xlane.f32.xlu0 %v667
        %v714 = vpop.xlane.xlu0 %713
        %715 = vadd.xlane.f32.xlu0 %v668
        %v716 = vpop.xlane.xlu0 %715
        %717 = vadd.xlane.f32.xlu0 %v669
        %v718 = vpop.xlane.xlu0 %717
        %719 = vadd.xlane.f32.xlu0 %v670
        %v720 = vpop.xlane.xlu0 %719
        %721 = vadd.xlane.f32.xlu0 %v671
        %v722 = vpop.xlane.xlu0 %721
        %723 = vadd.xlane.f32.xlu0 %v672
        %v724 = vpop.xlane.xlu0 %723
        %725 = vadd.xlane.f32.xlu0 %v673
        %v726 = vpop.xlane.xlu0 %725
        %727 = vadd.xlane.f32.xlu0 %v674
        %v728 = vpop.xlane.xlu0 %727
        %729 = vadd.xlane.f32.xlu0 %v675
        %v730 = vpop.xlane.xlu0 %729
        %731 = vadd.xlane.f32.xlu0 %v676
        %v732 = vpop.xlane.xlu0 %731
        %733 = vadd.xlane.f32.xlu0 %v677
        %v734 = vpop.xlane.xlu0 %733
        %735 = vadd.xlane.f32.xlu0 %v678
        %v736 = vpop.xlane.xlu0 %735
        %737 = vadd.xlane.f32.xlu0 %v679
        %v738 = vpop.xlane.xlu0 %737
        %739 = vadd.xlane.f32.xlu0 %v680
        %v740 = vpop.xlane.xlu0 %739
        %741 = vadd.xlane.f32.xlu0 %v681
        %v742 = vpop.xlane.xlu0 %741
        %743 = vadd.xlane.f32.xlu0 %v682
        %v744 = vpop.xlane.xlu0 %743
        %745 = vadd.xlane.f32.xlu0 %v683
        %v746 = vpop.xlane.xlu0 %745
        %747 = vadd.xlane.f32.xlu0 %v684
        %v748 = vpop.xlane.xlu0 %747
        %v749 = vmul.f32 %v686, %v588
        %v750 = vmul.f32 %v688, %v588
        %v751 = vmul.f32 %v690, %v588
        %v752 = vmul.f32 %v692, %v588
        %v753 = vmul.f32 %v694, %v588
        %v754 = vmul.f32 %v696, %v588
        %v755 = vmul.f32 %v698, %v588
        %v756 = vmul.f32 %v700, %v588
        %v757 = vmul.f32 %v702, %v588
        %v758 = vmul.f32 %v704, %v588
        %v759 = vmul.f32 %v706, %v588
        %v760 = vmul.f32 %v708, %v588
        %v761 = vmul.f32 %v710, %v588
        %v762 = vmul.f32 %v712, %v588
        %v763 = vmul.f32 %v714, %v588
        %v764 = vmul.f32 %v716, %v588
        %v765 = vmul.f32 %v718, %v588
        %v766 = vmul.f32 %v720, %v588
        %v767 = vmul.f32 %v722, %v588
        %v768 = vmul.f32 %v724, %v588
        %v769 = vmul.f32 %v726, %v588
        %v770 = vmul.f32 %v728, %v588
        %v771 = vmul.f32 %v730, %v588
        %v772 = vmul.f32 %v732, %v588
        %v773 = vmul.f32 %v734, %v588
        %v774 = vmul.f32 %v736, %v588
        %v775 = vmul.f32 %v738, %v588
        %v776 = vmul.f32 %v740, %v588
        %v777 = vmul.f32 %v742, %v588
        %v778 = vmul.f32 %v744, %v588
        %v779 = vmul.f32 %v746, %v588
        %v780 = vmul.f32 %v748, %v588
        %v781 = vadd.f32 %v749, 1e-05
        %v782 = vadd.f32 %v750, 1e-05
        %v783 = vadd.f32 %v751, 1e-05
        %v784 = vadd.f32 %v752, 1e-05
        %v785 = vadd.f32 %v753, 1e-05
        %v786 = vadd.f32 %v754, 1e-05
        %v787 = vadd.f32 %v755, 1e-05
        %v788 = vadd.f32 %v756, 1e-05
        %v789 = vadd.f32 %v757, 1e-05
        %v790 = vadd.f32 %v758, 1e-05
        %v791 = vadd.f32 %v759, 1e-05
        %v792 = vadd.f32 %v760, 1e-05
        %v793 = vadd.f32 %v761, 1e-05
        %v794 = vadd.f32 %v762, 1e-05
        %v795 = vadd.f32 %v763, 1e-05
        %v796 = vadd.f32 %v764, 1e-05
        %v797 = vadd.f32 %v765, 1e-05
        %v798 = vadd.f32 %v766, 1e-05
        %v799 = vadd.f32 %v767, 1e-05
        %v800 = vadd.f32 %v768, 1e-05
        %v801 = vadd.f32 %v769, 1e-05
        %v802 = vadd.f32 %v770, 1e-05
        %v803 = vadd.f32 %v771, 1e-05
        %v804 = vadd.f32 %v772, 1e-05
        %v805 = vadd.f32 %v773, 1e-05
        %v806 = vadd.f32 %v774, 1e-05
        %v807 = vadd.f32 %v775, 1e-05
        %v808 = vadd.f32 %v776, 1e-05
        %v809 = vadd.f32 %v777, 1e-05
        %v810 = vadd.f32 %v778, 1e-05
        %v811 = vadd.f32 %v779, 1e-05
        %v812 = vadd.f32 %v780, 1e-05
        %v813 = vrsqrt.pop %v781
        %v814 = vrsqrt.pop %v782
        %v815 = vrsqrt.pop %v783
        %v816 = vrsqrt.pop %v784
        %v817 = vrsqrt.pop %v785
        %v818 = vrsqrt.pop %v786
        %v819 = vrsqrt.pop %v787
        %v820 = vrsqrt.pop %v788
        %v821 = vrsqrt.pop %v789
        %v822 = vrsqrt.pop %v790
        %v823 = vrsqrt.pop %v791
        %v824 = vrsqrt.pop %v792
        %v825 = vrsqrt.pop %v793
        %v826 = vrsqrt.pop %v794
        %v827 = vrsqrt.pop %v795
        %v828 = vrsqrt.pop %v796
        %v829 = vrsqrt.pop %v797
        %v830 = vrsqrt.pop %v798
        %v831 = vrsqrt.pop %v799
        %v832 = vrsqrt.pop %v800
        %v833 = vrsqrt.pop %v801
        %v834 = vrsqrt.pop %v802
        %v835 = vrsqrt.pop %v803
        %v836 = vrsqrt.pop %v804
        %v837 = vrsqrt.pop %v805
        %v838 = vrsqrt.pop %v806
        %v839 = vrsqrt.pop %v807
        %v840 = vrsqrt.pop %v808
        %v841 = vrsqrt.pop %v809
        %v842 = vrsqrt.pop %v810
        %v843 = vrsqrt.pop %v811
        %v844 = vrsqrt.pop %v812
        %v845 = vmul.f32 %v621, %v813
        %v846 = vmul.f32 %v622, %v814
        %v847 = vmul.f32 %v623, %v815
        %v848 = vmul.f32 %v624, %v816
        %v849 = vmul.f32 %v625, %v817
        %v850 = vmul.f32 %v626, %v818
        %v851 = vmul.f32 %v627, %v819
        %v852 = vmul.f32 %v628, %v820
        %v853 = vmul.f32 %v629, %v821
        %v854 = vmul.f32 %v630, %v822
        %v855 = vmul.f32 %v631, %v823
        %v856 = vmul.f32 %v632, %v824
        %v857 = vmul.f32 %v633, %v825
        %v858 = vmul.f32 %v634, %v826
        %v859 = vmul.f32 %v635, %v827
        %v860 = vmul.f32 %v636, %v828
        %v861 = vmul.f32 %v637, %v829
        %v862 = vmul.f32 %v638, %v830
        %v863 = vmul.f32 %v639, %v831
        %v864 = vmul.f32 %v640, %v832
        %v865 = vmul.f32 %v641, %v833
        %v866 = vmul.f32 %v642, %v834
        %v867 = vmul.f32 %v643, %v835
        %v868 = vmul.f32 %v644, %v836
        %v869 = vmul.f32 %v645, %v837
        %v870 = vmul.f32 %v646, %v838
        %v871 = vmul.f32 %v647, %v839
        %v872 = vmul.f32 %v648, %v840
        %v873 = vmul.f32 %v649, %v841
        %v874 = vmul.f32 %v650, %v842
        %v875 = vmul.f32 %v651, %v843
        %v876 = vmul.f32 %v652, %v844
        %v877 = vld [vmem:[%s418] sm:$0x1]
        %v879 = vlaneseq
        %v880 = vshrl.u32 %v879, 7
        %v881 = vsub.s32 0, %v880
        %v882 = vrot.slane %v877, %v881
        %v884 = vmul.f32 %v845, %v882
        %v885 = vmul.f32 %v846, %v882
        %v886 = vmul.f32 %v847, %v882
        %v887 = vmul.f32 %v848, %v882
        %v888 = vmul.f32 %v849, %v882
        %v889 = vmul.f32 %v850, %v882
        %v890 = vmul.f32 %v851, %v882
        %v891 = vmul.f32 %v852, %v882
        %v892 = vmul.f32 %v853, %v882
        %v893 = vmul.f32 %v854, %v882
        %v894 = vmul.f32 %v855, %v882
        %v895 = vmul.f32 %v856, %v882
        %v896 = vmul.f32 %v857, %v882
        %v897 = vmul.f32 %v858, %v882
        %v898 = vmul.f32 %v859, %v882
        %v899 = vmul.f32 %v860, %v882
        %v900 = vmul.f32 %v861, %v882
        %v901 = vmul.f32 %v862, %v882
        %v902 = vmul.f32 %v863, %v882
        %v903 = vmul.f32 %v864, %v882
        %v904 = vmul.f32 %v865, %v882
        %v905 = vmul.f32 %v866, %v882
        %v906 = vmul.f32 %v867, %v882
        %v907 = vmul.f32 %v868, %v882
        %v908 = vmul.f32 %v869, %v882
        %v909 = vmul.f32 %v870, %v882
        %v910 = vmul.f32 %v871, %v882
        %v911 = vmul.f32 %v872, %v882
        %v912 = vmul.f32 %v873, %v882
        %v913 = vmul.f32 %v874, %v882
        %v914 = vmul.f32 %v875, %v882
        %v915 = vmul.f32 %v876, %v882
        %v916 = vld [vmem:[%s421] sm:$0x1]
        %v918 = vlaneseq
        %v919 = vshrl.u32 %v918, 7
        %v920 = vsub.s32 0, %v919
        %v921 = vrot.slane %v916, %v920
        %v923 = vadd.f32 %v884, %v921
        %v924 = vadd.f32 %v885, %v921
        %v925 = vadd.f32 %v886, %v921
        %v926 = vadd.f32 %v887, %v921
        %v927 = vadd.f32 %v888, %v921
        %v928 = vadd.f32 %v889, %v921
        %v929 = vadd.f32 %v890, %v921
        %v930 = vadd.f32 %v891, %v921
        %v931 = vadd.f32 %v892, %v921
        %v932 = vadd.f32 %v893, %v921
        %v933 = vadd.f32 %v894, %v921
        %v934 = vadd.f32 %v895, %v921
        %v935 = vadd.f32 %v896, %v921
        %v936 = vadd.f32 %v897, %v921
        %v937 = vadd.f32 %v898, %v921
        %v938 = vadd.f32 %v899, %v921
        %v939 = vadd.f32 %v900, %v921
        %v940 = vadd.f32 %v901, %v921
        %v941 = vadd.f32 %v902, %v921
        %v942 = vadd.f32 %v903, %v921
        %v943 = vadd.f32 %v904, %v921
        %v944 = vadd.f32 %v905, %v921
        %v945 = vadd.f32 %v906, %v921
        %v946 = vadd.f32 %v907, %v921
        %v947 = vadd.f32 %v908, %v921
        %v948 = vadd.f32 %v909, %v921
        %v949 = vadd.f32 %v910, %v921
        %v950 = vadd.f32 %v911, %v921
        %v951 = vadd.f32 %v912, %v921
        %v952 = vadd.f32 %v913, %v921
        %v953 = vadd.f32 %v914, %v921
        %v954 = vadd.f32 %v915, %v921
        %v955 = vpack.c.bf16 %v924, %v923
        %v956 = vpack.c.bf16 %v926, %v925
        %v957 = vpack.c.bf16 %v928, %v927
        %v958 = vpack.c.bf16 %v930, %v929
        %v959 = vpack.c.bf16 %v932, %v931
        %v960 = vpack.c.bf16 %v934, %v933
        %v961 = vpack.c.bf16 %v936, %v935
        %v962 = vpack.c.bf16 %v938, %v937
        %v963 = vpack.c.bf16 %v940, %v939
        %v964 = vpack.c.bf16 %v942, %v941
        %v965 = vpack.c.bf16 %v944, %v943
        %v966 = vpack.c.bf16 %v946, %v945
        %v967 = vpack.c.bf16 %v948, %v947
        %v968 = vpack.c.bf16 %v950, %v949
        %v969 = vpack.c.bf16 %v952, %v951
        %v970 = vpack.c.bf16 %v954, %v953
        %v971 = vld [vmem:[#allocation2] sm:$0xff]
        %v972 = vld [vmem:[#allocation2 + $0x8] sm:$0xff]
        %v973 = vld [vmem:[#allocation2 + $0x10] sm:$0xff]
        %v974 = vld [vmem:[#allocation2 + $0x18] sm:$0xff]
        %v975 = vld [vmem:[#allocation2 + $0x20] sm:$0xff]
        %v976 = vld [vmem:[#allocation2 + $0x28] sm:$0xff]
        %v977 = vld [vmem:[#allocation2 + $0x30] sm:$0xff]
        %v978 = vld [vmem:[#allocation2 + $0x38] sm:$0xff]
        %v979 = vld [vmem:[#allocation2 + $0x40] sm:$0xff]
        %v980 = vld [vmem:[#allocation2 + $0x48] sm:$0xff]
        %v981 = vld [vmem:[#allocation2 + $0x50] sm:$0xff]
        %v982 = vld [vmem:[#allocation2 + $0x58] sm:$0xff]
        %v983 = vld [vmem:[#allocation2 + $0x60] sm:$0xff]
        %v984 = vld [vmem:[#allocation2 + $0x68] sm:$0xff]
        %v985 = vld [vmem:[#allocation2 + $0x70] sm:$0xff]
        %v986 = vld [vmem:[#allocation2 + $0x78] sm:$0xff]
        %v987 = vld [vmem:[#allocation2 + $0x80] sm:$0xff]
        %v988 = vld [vmem:[#allocation2 + $0x88] sm:$0xff]
        %v989 = vld [vmem:[#allocation2 + $0x90] sm:$0xff]
        %v990 = vld [vmem:[#allocation2 + $0x98] sm:$0xff]
        %v991 = vld [vmem:[#allocation2 + $0xa0] sm:$0xff]
        %v992 = vld [vmem:[#allocation2 + $0xa8] sm:$0xff]
        %v993 = vld [vmem:[#allocation2 + $0xb0] sm:$0xff]
        %v994 = vld [vmem:[#allocation2 + $0xb8] sm:$0xff]
        %v995 = vld [vmem:[#allocation2 + $0xc0] sm:$0xff]
        %v996 = vld [vmem:[#allocation2 + $0xc8] sm:$0xff]
        %v997 = vld [vmem:[#allocation2 + $0xd0] sm:$0xff]
        %v998 = vld [vmem:[#allocation2 + $0xd8] sm:$0xff]
        %v999 = vld [vmem:[#allocation2 + $0xe0] sm:$0xff]
        %v1000 = vld [vmem:[#allocation2 + $0xe8] sm:$0xff]
        %v1001 = vld [vmem:[#allocation2 + $0xf0] sm:$0xff]
        %v1002 = vld [vmem:[#allocation2 + $0xf8] sm:$0xff]
        %v1003 = vld [vmem:[%s362] sm:$0xf]
        %v1004 = vld [vmem:[%s362 + $0x4] sm:$0xf]
        %v1005 = vld [vmem:[%s362 + $0x8] sm:$0xf]
        %v1006 = vld [vmem:[%s362 + $0xc] sm:$0xf]
        %v1007 = vld [vmem:[%s362 + $0x10] sm:$0xf]
        %v1008 = vld [vmem:[%s362 + $0x14] sm:$0xf]
        %v1009 = vld [vmem:[%s362 + $0x18] sm:$0xf]
        %v1010 = vld [vmem:[%s362 + $0x1c] sm:$0xf]
        %v1011 = vld [vmem:[%s362 + $0x20] sm:$0xf]
        %v1012 = vld [vmem:[%s362 + $0x24] sm:$0xf]
        %v1013 = vld [vmem:[%s362 + $0x28] sm:$0xf]
        %v1014 = vld [vmem:[%s362 + $0x2c] sm:$0xf]
        %v1015 = vld [vmem:[%s362 + $0x30] sm:$0xf]
        %v1016 = vld [vmem:[%s362 + $0x34] sm:$0xf]
        %v1017 = vld [vmem:[%s362 + $0x38] sm:$0xf]
        %v1018 = vld [vmem:[%s362 + $0x3c] sm:$0xf]
        %v1035 = vunpack.c.l.b16 %v1003
        %v1036 = vunpack.c.l.b16 %v1004
        %v1037 = vunpack.c.l.b16 %v1005
        %v1038 = vunpack.c.l.b16 %v1006
        %v1039 = vunpack.c.l.b16 %v1007
        %v1040 = vunpack.c.l.b16 %v1008
        %v1041 = vunpack.c.l.b16 %v1009
        %v1042 = vunpack.c.l.b16 %v1010
        %v1043 = vunpack.c.l.b16 %v1011
        %v1044 = vunpack.c.l.b16 %v1012
        %v1045 = vunpack.c.l.b16 %v1013
        %v1046 = vunpack.c.l.b16 %v1014
        %v1047 = vunpack.c.l.b16 %v1015
        %v1048 = vunpack.c.l.b16 %v1016
        %v1049 = vunpack.c.l.b16 %v1017
        %v1050 = vunpack.c.l.b16 %v1018
        %v1051 = vpack.c.b16 %v1036, %v1035
        %v1052 = vpack.c.b16 %v1038, %v1037
        %v1053 = vpack.c.b16 %v1040, %v1039
        %v1054 = vpack.c.b16 %v1042, %v1041
        %v1055 = vpack.c.b16 %v1044, %v1043
        %v1056 = vpack.c.b16 %v1046, %v1045
        %v1057 = vpack.c.b16 %v1048, %v1047
        %v1058 = vpack.c.b16 %v1050, %v1049
        %1067 = vmatprep.subr.bf16.mxu0 0
        %1068 = vmatpush1.bf16.msra.mxu0 %v1051
        %1069 = vmatprep.subr.bf16.mxu0 0
        %1070 = vmatpush1.bf16.msra.mxu0 %v1052
        %1071 = vmatprep.subr.bf16.mxu0 0
        %1072 = vmatpush1.bf16.msra.mxu0 %v1053
        %1073 = vmatprep.subr.bf16.mxu0 0
        %1074 = vmatpush1.bf16.msra.mxu0 %v1054
        %1075 = vmatprep.subr.bf16.mxu0 0
        %1076 = vmatpush1.bf16.msra.mxu0 %v1055
        %1077 = vmatprep.subr.bf16.mxu0 0
        %1078 = vmatpush1.bf16.msra.mxu0 %v1056
        %1079 = vmatprep.subr.bf16.mxu0 0
        %1080 = vmatpush1.bf16.msra.mxu0 %v1057
        %1081 = vmatprep.subr.bf16.mxu0 0
        %1082 = vmatpush1.bf16.msra.mxu0 %v1058
        %1083 = vmatprep.subr.bf16.mxu0 0
        %1084 = vmatpush1.bf16.msra.mxu0 0
        %1085 = vmatprep.subr.bf16.mxu0 0
        %1086 = vmatpush1.bf16.msra.mxu0 0
        %1087 = vmatprep.subr.bf16.mxu0 0
        %1088 = vmatpush1.bf16.msra.mxu0 0
        %1089 = vmatprep.subr.bf16.mxu0 0
        %1090 = vmatpush1.bf16.msra.mxu0 0
        %1091 = vmatprep.subr.bf16.mxu0 0
        %1092 = vmatpush1.bf16.msra.mxu0 0
        %1093 = vmatprep.subr.bf16.mxu0 0
        %1094 = vmatpush1.bf16.msra.mxu0 0
        %1095 = vmatprep.subr.bf16.mxu0 0
        %1096 = vmatpush1.bf16.msra.mxu0 0
        %1097 = vmatprep.subr.bf16.mxu0 0
        %1098 = vmatpush1.bf16.msra.mxu0 0
        %1099 = vmatprep.mubr.bf16.mxu0 0
        %1100 = vmatmul.mubr.bf16.gmra.mrb[0].mxu0 %v955
        %v1101 = vpop.f32.mrb[0].mxu0
        %v1102 = vadd.f32 0.0, %v1101
        %v1103 = vpop.f32.mrb[0].mxu0
        %v1104 = vpop.f32.mrb[0].mxu0
        %v1105 = vadd.f32 0.0, %v1104
        %v1106 = vpop.f32.mrb[0].mxu0
        %1107 = vmatprep.mubr.bf16.mxu0 0
        %1108 = vmatmul.mubr.bf16.gmra.mrb[0].mxu0 %v956
        %v1109 = vpop.f32.mrb[0].mxu0
        %v1110 = vadd.f32 0.0, %v1109
        %v1111 = vpop.f32.mrb[0].mxu0
        %v1112 = vpop.f32.mrb[0].mxu0
        %v1113 = vadd.f32 0.0, %v1112
        %v1114 = vpop.f32.mrb[0].mxu0
        %1115 = vmatprep.mubr.bf16.mxu0 0
        %1116 = vmatmul.mubr.bf16.gmra.mrb[0].mxu0 %v957
        %v1117 = vpop.f32.mrb[0].mxu0
        %v1118 = vadd.f32 0.0, %v1117
        %v1119 = vpop.f32.mrb[0].mxu0
        %v1120 = vpop.f32.mrb[0].mxu0
        %v1121 = vadd.f32 0.0, %v1120
        %v1122 = vpop.f32.mrb[0].mxu0
        %1123 = vmatprep.mubr.bf16.mxu0 0
        %1124 = vmatmul.mubr.bf16.gmra.mrb[0].mxu0 %v958
        %v1125 = vpop.f32.mrb[0].mxu0
        %v1126 = vadd.f32 0.0, %v1125
        %v1127 = vpop.f32.mrb[0].mxu0
        %v1128 = vpop.f32.mrb[0].mxu0
        %v1129 = vadd.f32 0.0, %v1128
        %v1130 = vpop.f32.mrb[0].mxu0
        %1131 = vmatprep.mubr.bf16.mxu0 0
        %1132 = vmatmul.mubr.bf16.gmra.mrb[0].mxu0 %v959
        %v1133 = vpop.f32.mrb[0].mxu0
        %v1134 = vadd.f32 0.0, %v1133
        %v1135 = vpop.f32.mrb[0].mxu0
        %v1136 = vpop.f32.mrb[0].mxu0
        %v1137 = vadd.f32 0.0, %v1136
        %v1138 = vpop.f32.mrb[0].mxu0
        %1139 = vmatprep.mubr.bf16.mxu0 0
        %1140 = vmatmul.mubr.bf16.gmra.mrb[0].mxu0 %v960
        %v1141 = vpop.f32.mrb[0].mxu0
        %v1142 = vadd.f32 0.0, %v1141
        %v1143 = vpop.f32.mrb[0].mxu0
        %v1144 = vpop.f32.mrb[0].mxu0
        %v1145 = vadd.f32 0.0, %v1144
        %v1146 = vpop.f32.mrb[0].mxu0
        %1147 = vmatprep.mubr.bf16.mxu0 0
        %1148 = vmatmul.mubr.bf16.gmra.mrb[0].mxu0 %v961
        %v1149 = vpop.f32.mrb[0].mxu0
        %v1150 = vadd.f32 0.0, %v1149
        %v1151 = vpop.f32.mrb[0].mxu0
        %v1152 = vpop.f32.mrb[0].mxu0
        %v1153 = vadd.f32 0.0, %v1152
        %v1154 = vpop.f32.mrb[0].mxu0
        %1155 = vmatprep.mubr.bf16.mxu0 0
        %1156 = vmatmul.mubr.bf16.gmra.mrb[0].mxu0 %v962
        %v1157 = vpop.f32.mrb[0].mxu0
        %v1158 = vadd.f32 0.0, %v1157
        %v1159 = vpop.f32.mrb[0].mxu0
        %v1160 = vpop.f32.mrb[0].mxu0
        %v1161 = vadd.f32 0.0, %v1160
        %v1162 = vpop.f32.mrb[0].mxu0
        %1163 = vmatprep.mubr.bf16.mxu0 0
        %1164 = vmatmul.mubr.bf16.gmra.mrb[0].mxu0 %v963
        %v1165 = vpop.f32.mrb[0].mxu0
        %v1166 = vadd.f32 0.0, %v1165
        %v1167 = vpop.f32.mrb[0].mxu0
        %v1168 = vpop.f32.mrb[0].mxu0
        %v1169 = vadd.f32 0.0, %v1168
        %v1170 = vpop.f32.mrb[0].mxu0
        %1171 = vmatprep.mubr.bf16.mxu0 0
        %1172 = vmatmul.mubr.bf16.gmra.mrb[0].mxu0 %v964
        %v1173 = vpop.f32.mrb[0].mxu0
        %v1174 = vadd.f32 0.0, %v1173
        %v1175 = vpop.f32.mrb[0].mxu0
        %v1176 = vpop.f32.mrb[0].mxu0
        %v1177 = vadd.f32 0.0, %v1176
        %v1178 = vpop.f32.mrb[0].mxu0
        %1179 = vmatprep.mubr.bf16.mxu0 0
        %1180 = vmatmul.mubr.bf16.gmra.mrb[0].mxu0 %v965
        %v1181 = vpop.f32.mrb[0].mxu0
        %v1182 = vadd.f32 0.0, %v1181
        %v1183 = vpop.f32.mrb[0].mxu0
        %v1184 = vpop.f32.mrb[0].mxu0
        %v1185 = vadd.f32 0.0, %v1184
        %v1186 = vpop.f32.mrb[0].mxu0
        %1187 = vmatprep.mubr.bf16.mxu0 0
        %1188 = vmatmul.mubr.bf16.gmra.mrb[0].mxu0 %v966
        %v1189 = vpop.f32.mrb[0].mxu0
        %v1190 = vadd.f32 0.0, %v1189
        %v1191 = vpop.f32.mrb[0].mxu0
        %v1192 = vpop.f32.mrb[0].mxu0
        %v1193 = vadd.f32 0.0, %v1192
        %v1194 = vpop.f32.mrb[0].mxu0
        %1195 = vmatprep.mubr.bf16.mxu0 0
        %1196 = vmatmul.mubr.bf16.gmra.mrb[0].mxu0 %v967
        %v1197 = vpop.f32.mrb[0].mxu0
        %v1198 = vadd.f32 0.0, %v1197
        %v1199 = vpop.f32.mrb[0].mxu0
        %v1200 = vpop.f32.mrb[0].mxu0
        %v1201 = vadd.f32 0.0, %v1200
        %v1202 = vpop.f32.mrb[0].mxu0
        %1203 = vmatprep.mubr.bf16.mxu0 0
        %1204 = vmatmul.mubr.bf16.gmra.mrb[0].mxu0 %v968
        %v1205 = vpop.f32.mrb[0].mxu0
        %v1206 = vadd.f32 0.0, %v1205
        %v1207 = vpop.f32.mrb[0].mxu0
        %v1208 = vpop.f32.mrb[0].mxu0
        %v1209 = vadd.f32 0.0, %v1208
        %v1210 = vpop.f32.mrb[0].mxu0
        %1211 = vmatprep.mubr.bf16.mxu0 0
        %1212 = vmatmul.mubr.bf16.gmra.mrb[0].mxu0 %v969
        %v1213 = vpop.f32.mrb[0].mxu0
        %v1214 = vadd.f32 0.0, %v1213
        %v1215 = vpop.f32.mrb[0].mxu0
        %v1216 = vpop.f32.mrb[0].mxu0
        %v1217 = vadd.f32 0.0, %v1216
        %v1218 = vpop.f32.mrb[0].mxu0
        %1219 = vmatprep.mubr.bf16.mxu0 0
        %1220 = vmatmul.mubr.bf16.gmra.mrb[0].mxu0 %v970
        %v1221 = vpop.f32.mrb[0].mxu0
        %v1222 = vadd.f32 0.0, %v1221
        %v1223 = vpop.f32.mrb[0].mxu0
        %v1224 = vpop.f32.mrb[0].mxu0
        %v1225 = vadd.f32 0.0, %v1224
        %v1226 = vpop.f32.mrb[0].mxu0
        %1227 = vdwg.mxu0
        %v1228 = vadd.f32 %v971, %v1102
        %v1229 = vadd.f32 %v972, %v1105
        %v1230 = vadd.f32 %v973, %v1110
        %v1231 = vadd.f32 %v974, %v1113
        %v1232 = vadd.f32 %v975, %v1118
        %v1233 = vadd.f32 %v976, %v1121
        %v1234 = vadd.f32 %v977, %v1126
        %v1235 = vadd.f32 %v978, %v1129
        %v1236 = vadd.f32 %v979, %v1134
        %v1237 = vadd.f32 %v980, %v1137
        %v1238 = vadd.f32 %v981, %v1142
        %v1239 = vadd.f32 %v982, %v1145
        %v1240 = vadd.f32 %v983, %v1150
        %v1241 = vadd.f32 %v984, %v1153
        %v1242 = vadd.f32 %v985, %v1158
        %v1243 = vadd.f32 %v986, %v1161
        %v1244 = vadd.f32 %v987, %v1166
        %v1245 = vadd.f32 %v988, %v1169
        %v1246 = vadd.f32 %v989, %v1174
        %v1247 = vadd.f32 %v990, %v1177
        %v1248 = vadd.f32 %v991, %v1182
        %v1249 = vadd.f32 %v992, %v1185
        %v1250 = vadd.f32 %v993, %v1190
        %v1251 = vadd.f32 %v994, %v1193
        %v1252 = vadd.f32 %v995, %v1198
        %v1253 = vadd.f32 %v996, %v1201
        %v1254 = vadd.f32 %v997, %v1206
        %v1255 = vadd.f32 %v998, %v1209
        %v1256 = vadd.f32 %v999, %v1214
        %v1257 = vadd.f32 %v1000, %v1217
        %v1258 = vadd.f32 %v1001, %v1222
        %v1259 = vadd.f32 %v1002, %v1225
        %1260 = vst [vmem:[#allocation2] sm:$0xff] %v1228
        %1261 = vst [vmem:[#allocation2 + $0x8] sm:$0xff] %v1229
        %1262 = vst [vmem:[#allocation2 + $0x10] sm:$0xff] %v1230
        %1263 = vst [vmem:[#allocation2 + $0x18] sm:$0xff] %v1231
        %1264 = vst [vmem:[#allocation2 + $0x20] sm:$0xff] %v1232
        %1265 = vst [vmem:[#allocation2 + $0x28] sm:$0xff] %v1233
        %1266 = vst [vmem:[#allocation2 + $0x30] sm:$0xff] %v1234
        %1267 = vst [vmem:[#allocation2 + $0x38] sm:$0xff] %v1235
        %1268 = vst [vmem:[#allocation2 + $0x40] sm:$0xff] %v1236
        %1269 = vst [vmem:[#allocation2 + $0x48] sm:$0xff] %v1237
        %1270 = vst [vmem:[#allocation2 + $0x50] sm:$0xff] %v1238
        %1271 = vst [vmem:[#allocation2 + $0x58] sm:$0xff] %v1239
        %1272 = vst [vmem:[#allocation2 + $0x60] sm:$0xff] %v1240
        %1273 = vst [vmem:[#allocation2 + $0x68] sm:$0xff] %v1241
        %1274 = vst [vmem:[#allocation2 + $0x70] sm:$0xff] %v1242
        %1275 = vst [vmem:[#allocation2 + $0x78] sm:$0xff] %v1243
        %1276 = vst [vmem:[#allocation2 + $0x80] sm:$0xff] %v1244
        %1277 = vst [vmem:[#allocation2 + $0x88] sm:$0xff] %v1245
        %1278 = vst [vmem:[#allocation2 + $0x90] sm:$0xff] %v1246
        %1279 = vst [vmem:[#allocation2 + $0x98] sm:$0xff] %v1247
        %1280 = vst [vmem:[#allocation2 + $0xa0] sm:$0xff] %v1248
        %1281 = vst [vmem:[#allocation2 + $0xa8] sm:$0xff] %v1249
        %1282 = vst [vmem:[#allocation2 + $0xb0] sm:$0xff] %v1250
        %1283 = vst [vmem:[#allocation2 + $0xb8] sm:$0xff] %v1251
        %1284 = vst [vmem:[#allocation2 + $0xc0] sm:$0xff] %v1252
        %1285 = vst [vmem:[#allocation2 + $0xc8] sm:$0xff] %v1253
        %1286 = vst [vmem:[#allocation2 + $0xd0] sm:$0xff] %v1254
        %1287 = vst [vmem:[#allocation2 + $0xd8] sm:$0xff] %v1255
        %1288 = vst [vmem:[#allocation2 + $0xe0] sm:$0xff] %v1256
        %1289 = vst [vmem:[#allocation2 + $0xe8] sm:$0xff] %v1257
        %1290 = vst [vmem:[#allocation2 + $0xf0] sm:$0xff] %v1258
        %1291 = vst [vmem:[#allocation2 + $0xf8] sm:$0xff] %v1259
        // Predicated region
        $region86: #{expire_span_transformer_xl_forward.11} parent=76 // pred_check
          %p1292 = pneg %p424
        $region87: #{expire_span_transformer_xl_forward.11} parent=76 // pred_check_branch
          %1294 = sbr.rel (%p1292) target = $region89
        $region88: #{expire_span_transformer_xl_forward.11} parent=76 // pred_region
          %v1295 = vld [vmem:[#allocation2] sm:$0xff]
          %v1296 = vld [vmem:[#allocation2 + $0x8] sm:$0xff]
          %v1297 = vld [vmem:[#allocation2 + $0x10] sm:$0xff]
          %v1298 = vld [vmem:[#allocation2 + $0x18] sm:$0xff]
          %v1299 = vld [vmem:[#allocation2 + $0x20] sm:$0xff]
          %v1300 = vld [vmem:[#allocation2 + $0x28] sm:$0xff]
          %v1301 = vld [vmem:[#allocation2 + $0x30] sm:$0xff]
          %v1302 = vld [vmem:[#allocation2 + $0x38] sm:$0xff]
          %v1303 = vld [vmem:[#allocation2 + $0x40] sm:$0xff]
          %v1304 = vld [vmem:[#allocation2 + $0x48] sm:$0xff]
          %v1305 = vld [vmem:[#allocation2 + $0x50] sm:$0xff]
          %v1306 = vld [vmem:[#allocation2 + $0x58] sm:$0xff]
          %v1307 = vld [vmem:[#allocation2 + $0x60] sm:$0xff]
          %v1308 = vld [vmem:[#allocation2 + $0x68] sm:$0xff]
          %v1309 = vld [vmem:[#allocation2 + $0x70] sm:$0xff]
          %v1310 = vld [vmem:[#allocation2 + $0x78] sm:$0xff]
          %v1311 = vld [vmem:[#allocation2 + $0x80] sm:$0xff]
          %v1312 = vld [vmem:[#allocation2 + $0x88] sm:$0xff]
          %v1313 = vld [vmem:[#allocation2 + $0x90] sm:$0xff]
          %v1314 = vld [vmem:[#allocation2 + $0x98] sm:$0xff]
          %v1315 = vld [vmem:[#allocation2 + $0xa0] sm:$0xff]
          %v1316 = vld [vmem:[#allocation2 + $0xa8] sm:$0xff]
          %v1317 = vld [vmem:[#allocation2 + $0xb0] sm:$0xff]
          %v1318 = vld [vmem:[#allocation2 + $0xb8] sm:$0xff]
          %v1319 = vld [vmem:[#allocation2 + $0xc0] sm:$0xff]
          %v1320 = vld [vmem:[#allocation2 + $0xc8] sm:$0xff]
          %v1321 = vld [vmem:[#allocation2 + $0xd0] sm:$0xff]
          %v1322 = vld [vmem:[#allocation2 + $0xd8] sm:$0xff]
          %v1323 = vld [vmem:[#allocation2 + $0xe0] sm:$0xff]
          %v1324 = vld [vmem:[#allocation2 + $0xe8] sm:$0xff]
          %v1325 = vld [vmem:[#allocation2 + $0xf0] sm:$0xff]
          %v1326 = vld [vmem:[#allocation2 + $0xf8] sm:$0xff]
          %v1327 = vld [vmem:[%s415] sm:$0x1]
          %v1329 = vlaneseq
          %v1330 = vshrl.u32 %v1329, 7
          %v1331 = vsub.s32 0, %v1330
          %v1332 = vrot.slane %v1327, %v1331
          %v1334 = vadd.f32 %v1295, %v1332
          %v1335 = vadd.f32 %v1296, %v1332
          %v1336 = vadd.f32 %v1297, %v1332
          %v1337 = vadd.f32 %v1298, %v1332
          %v1338 = vadd.f32 %v1299, %v1332
          %v1339 = vadd.f32 %v1300, %v1332
          %v1340 = vadd.f32 %v1301, %v1332
          %v1341 = vadd.f32 %v1302, %v1332
          %v1342 = vadd.f32 %v1303, %v1332
          %v1343 = vadd.f32 %v1304, %v1332
          %v1344 = vadd.f32 %v1305, %v1332
          %v1345 = vadd.f32 %v1306, %v1332
          %v1346 = vadd.f32 %v1307, %v1332
          %v1347 = vadd.f32 %v1308, %v1332
          %v1348 = vadd.f32 %v1309, %v1332
          %v1349 = vadd.f32 %v1310, %v1332
          %v1350 = vadd.f32 %v1311, %v1332
          %v1351 = vadd.f32 %v1312, %v1332
          %v1352 = vadd.f32 %v1313, %v1332
          %v1353 = vadd.f32 %v1314, %v1332
          %v1354 = vadd.f32 %v1315, %v1332
          %v1355 = vadd.f32 %v1316, %v1332
          %v1356 = vadd.f32 %v1317, %v1332
          %v1357 = vadd.f32 %v1318, %v1332
          %v1358 = vadd.f32 %v1319, %v1332
          %v1359 = vadd.f32 %v1320, %v1332
          %v1360 = vadd.f32 %v1321, %v1332
          %v1361 = vadd.f32 %v1322, %v1332
          %v1362 = vadd.f32 %v1323, %v1332
          %v1363 = vadd.f32 %v1324, %v1332
          %v1364 = vadd.f32 %v1325, %v1332
          %v1365 = vadd.f32 %v1326, %v1332
          %v1366 = vpack.c.bf16 %v1335, %v1334
          %v1367 = vpack.c.bf16 %v1337, %v1336
          %v1368 = vpack.c.bf16 %v1339, %v1338
          %v1369 = vpack.c.bf16 %v1341, %v1340
          %v1370 = vpack.c.bf16 %v1343, %v1342
          %v1371 = vpack.c.bf16 %v1345, %v1344
          %v1372 = vpack.c.bf16 %v1347, %v1346
          %v1373 = vpack.c.bf16 %v1349, %v1348
          %v1374 = vpack.c.bf16 %v1351, %v1350
          %v1375 = vpack.c.bf16 %v1353, %v1352
          %v1376 = vpack.c.bf16 %v1355, %v1354
          %v1377 = vpack.c.bf16 %v1357, %v1356
          %v1378 = vpack.c.bf16 %v1359, %v1358
          %v1379 = vpack.c.bf16 %v1361, %v1360
          %v1380 = vpack.c.bf16 %v1363, %v1362
          %v1381 = vpack.c.bf16 %v1365, %v1364
          %v1398 = vunpack.c.l.b16 %v1366
          %v1399 = vunpack.c.h.b16 %v1366
          %v1400 = vunpack.c.l.b16 %v1367
          %v1401 = vunpack.c.h.b16 %v1367
          %v1402 = vunpack.c.l.b16 %v1368
          %v1403 = vunpack.c.h.b16 %v1368
          %v1404 = vunpack.c.l.b16 %v1369
          %v1405 = vunpack.c.h.b16 %v1369
          %v1406 = vunpack.c.l.b16 %v1370
          %v1407 = vunpack.c.h.b16 %v1370
          %v1408 = vunpack.c.l.b16 %v1371
          %v1409 = vunpack.c.h.b16 %v1371
          %v1410 = vunpack.c.l.b16 %v1372
          %v1411 = vunpack.c.h.b16 %v1372
          %v1412 = vunpack.c.l.b16 %v1373
          %v1413 = vunpack.c.h.b16 %v1373
          %v1414 = vunpack.c.l.b16 %v1374
          %v1415 = vunpack.c.h.b16 %v1374
          %v1416 = vunpack.c.l.b16 %v1375
          %v1417 = vunpack.c.h.b16 %v1375
          %v1418 = vunpack.c.l.b16 %v1376
          %v1419 = vunpack.c.h.b16 %v1376
          %v1420 = vunpack.c.l.b16 %v1377
          %v1421 = vunpack.c.h.b16 %v1377
          %v1422 = vunpack.c.l.b16 %v1378
          %v1423 = vunpack.c.h.b16 %v1378
          %v1424 = vunpack.c.l.b16 %v1379
          %v1425 = vunpack.c.h.b16 %v1379
          %v1426 = vunpack.c.l.b16 %v1380
          %v1427 = vunpack.c.h.b16 %v1380
          %v1428 = vunpack.c.l.b16 %v1381
          %v1429 = vunpack.c.h.b16 %v1381
          %v1430 = vpack.c.b16 %v1398, %v1398
          %v1431 = vpack.c.b16 %v1399, %v1399
          %v1432 = vpack.c.b16 %v1400, %v1400
          %v1433 = vpack.c.b16 %v1401, %v1401
          %v1434 = vpack.c.b16 %v1402, %v1402
          %v1435 = vpack.c.b16 %v1403, %v1403
          %v1436 = vpack.c.b16 %v1404, %v1404
          %v1437 = vpack.c.b16 %v1405, %v1405
          %v1438 = vpack.c.b16 %v1406, %v1406
          %v1439 = vpack.c.b16 %v1407, %v1407
          %v1440 = vpack.c.b16 %v1408, %v1408
          %v1441 = vpack.c.b16 %v1409, %v1409
          %v1442 = vpack.c.b16 %v1410, %v1410
          %v1443 = vpack.c.b16 %v1411, %v1411
          %v1444 = vpack.c.b16 %v1412, %v1412
          %v1445 = vpack.c.b16 %v1413, %v1413
          %v1446 = vpack.c.b16 %v1414, %v1414
          %v1447 = vpack.c.b16 %v1415, %v1415
          %v1448 = vpack.c.b16 %v1416, %v1416
          %v1449 = vpack.c.b16 %v1417, %v1417
          %v1450 = vpack.c.b16 %v1418, %v1418
          %v1451 = vpack.c.b16 %v1419, %v1419
          %v1452 = vpack.c.b16 %v1420, %v1420
          %v1453 = vpack.c.b16 %v1421, %v1421
          %v1454 = vpack.c.b16 %v1422, %v1422
          %v1455 = vpack.c.b16 %v1423, %v1423
          %v1456 = vpack.c.b16 %v1424, %v1424
          %v1457 = vpack.c.b16 %v1425, %v1425
          %v1458 = vpack.c.b16 %v1426, %v1426
          %v1459 = vpack.c.b16 %v1427, %v1427
          %v1460 = vpack.c.b16 %v1428, %v1428
          %v1461 = vpack.c.b16 %v1429, %v1429
          %1494 = vst [vmem:[%s402] sm:$0xf] %v1430
          %1495 = vst [vmem:[%s402 + $0x4] sm:$0xf] %v1431
          %1496 = vst [vmem:[%s402 + $0x8] sm:$0xf] %v1432
          %1497 = vst [vmem:[%s402 + $0xc] sm:$0xf] %v1433
          %1498 = vst [vmem:[%s402 + $0x10] sm:$0xf] %v1434
          %1499 = vst [vmem:[%s402 + $0x14] sm:$0xf] %v1435
          %1500 = vst [vmem:[%s402 + $0x18] sm:$0xf] %v1436
          %1501 = vst [vmem:[%s402 + $0x1c] sm:$0xf] %v1437
          %1502 = vst [vmem:[%s402 + $0x20] sm:$0xf] %v1438
          %1503 = vst [vmem:[%s402 + $0x24] sm:$0xf] %v1439
          %1504 = vst [vmem:[%s402 + $0x28] sm:$0xf] %v1440
          %1505 = vst [vmem:[%s402 + $0x2c] sm:$0xf] %v1441
          %1506 = vst [vmem:[%s402 + $0x30] sm:$0xf] %v1442
          %1507 = vst [vmem:[%s402 + $0x34] sm:$0xf] %v1443
          %1508 = vst [vmem:[%s402 + $0x38] sm:$0xf] %v1444
          %1509 = vst [vmem:[%s402 + $0x3c] sm:$0xf] %v1445
          %1510 = vst [vmem:[%s402 + $0x40] sm:$0xf] %v1446
          %1511 = vst [vmem:[%s402 + $0x44] sm:$0xf] %v1447
          %1512 = vst [vmem:[%s402 + $0x48] sm:$0xf] %v1448
          %1513 = vst [vmem:[%s402 + $0x4c] sm:$0xf] %v1449
          %1514 = vst [vmem:[%s402 + $0x50] sm:$0xf] %v1450
          %1515 = vst [vmem:[%s402 + $0x54] sm:$0xf] %v1451
          %1516 = vst [vmem:[%s402 + $0x58] sm:$0xf] %v1452
          %1517 = vst [vmem:[%s402 + $0x5c] sm:$0xf] %v1453
          %1518 = vst [vmem:[%s402 + $0x60] sm:$0xf] %v1454
          %1519 = vst [vmem:[%s402 + $0x64] sm:$0xf] %v1455
          %1520 = vst [vmem:[%s402 + $0x68] sm:$0xf] %v1456
          %1521 = vst [vmem:[%s402 + $0x6c] sm:$0xf] %v1457
          %1522 = vst [vmem:[%s402 + $0x70] sm:$0xf] %v1458
          %1523 = vst [vmem:[%s402 + $0x74] sm:$0xf] %v1459
          %1524 = vst [vmem:[%s402 + $0x78] sm:$0xf] %v1460
          %1525 = vst [vmem:[%s402 + $0x7c] sm:$0xf] %v1461
        $region89: #{expire_span_transformer_xl_forward.11} parent=76 // pred_fallthru
          _
        %s1526 = sand.u32 %s179, 1
        %s1527 = sand.u32 %s179, 1
        %s1528 = smul.addr %s1527, 128
        %s1529 = scalar_lea.vmem [#allocation4], %s1528
        // Predicated region
        $region90: #{expire_span_transformer_xl_forward.11} parent=76 // pred_check
          %p1530 = pneg %p189
        $region91: #{expire_span_transformer_xl_forward.11} parent=76 // pred_check_branch
          %1532 = sbr.rel (%p1530) target = $region93
        $region92: #{expire_span_transformer_xl_forward.11} parent=76 // pred_region
          %s1533 = smul.u32 32, %s21
          %s1534 = smul.addr %s1533, 3
          %s1535 = sadd.s32 %s22, %s1534
          %s1536 = smul.addr %s1535, 4
          %s1537 = scalar_lea.vmem %s5, %s1536
          // Predicated region
          $region94: #{expire_span_transformer_xl_forward.11} parent=92 // pred_check
            _
          $region95: #{expire_span_transformer_xl_forward.11} parent=92 // pred_check_branch
            %1539 = sbr.rel (0) target = $region97
          $region96: #{expire_span_transformer_xl_forward.11} parent=92 // pred_region
            // Predicated region
            $region98: #{expire_span_transformer_xl_forward.11} parent=96 // pred_check
              _
            $region99: #{expire_span_transformer_xl_forward.11} parent=96 // pred_check_branch
              %1541 = sbr.rel target = $region101
            $region100: #{expire_span_transformer_xl_forward.11} parent=96 // pred_region
              // Predicated region
              $region113: #{expire_span_transformer_xl_forward.11} parent=100 // pred_check
                _
              $region114: #{expire_span_transformer_xl_forward.11} parent=100 // pred_check_branch
                %1618 = sbr.rel (0) target = $region116
              $region115: #{expire_span_transformer_xl_forward.11} parent=100 // pred_region
                loop: start=0, step=1, limit=1
                $region117: #{expire_span_transformer_xl_forward.11} parent=115 // loop_pre_header
                  _
                $region118: #{expire_span_transformer_xl_forward.11} parent=115 // loop_header
                  %s1620 = sphi 0, %s1624
                  %p1621 = scmp.ge.s32.totalorder %s1620, 1
                  %s1625 = sphi %s1529, %s1529
                  %s1626 = sphi %s1537, %s1537
                $region119: #{expire_span_transformer_xl_forward.11} parent=115 // loop_header_branch
                  %1623 = sbr.rel (%p1621) target = $region123
                $region120: #{expire_span_transformer_xl_forward.11} parent=115 // loop_body
                  _
                $region121: #{expire_span_transformer_xl_forward.11} parent=115 // loop_footer
                  %s1624 = sadd.s32 1, %s1620
                $region122: #{expire_span_transformer_xl_forward.11} parent=115 // loop_footer_branch
                  %1619 = sbr.rel target = $region118
                $region123: #{expire_span_transformer_xl_forward.11} parent=115 // loop_exit
                  _
                loop: start=0, step=1, limit=1
                $region124: #{expire_span_transformer_xl_forward.11} parent=115 // loop_pre_header
                  _
                $region125: #{expire_span_transformer_xl_forward.11} parent=115 // loop_header
                  %s1629 = sphi 0, %s1633
                  %p1630 = scmp.ge.s32.totalorder %s1629, 1
                  %s1634 = sphi %s1529, %s1529
                  %s1635 = sphi %s1537, %s1537
                $region126: #{expire_span_transformer_xl_forward.11} parent=115 // loop_header_branch
                  %1632 = sbr.rel (%p1630) target = $region130
                $region127: #{expire_span_transformer_xl_forward.11} parent=115 // loop_body
                  %v1636 = vld [vmem:[%s1634] sm:$0xf]
                  %1637 = vst [vmem:[%s1635] sm:$0xf] %v1636
                  %v1638 = vld [vmem:[%s1634 + $0x4] sm:$0xf]
                  %1639 = vst [vmem:[%s1635 + $0xc] sm:$0xf] %v1638
                  %v1640 = vld [vmem:[%s1634 + $0x8] sm:$0xf]
                  %1641 = vst [vmem:[%s1635 + $0x18] sm:$0xf] %v1640
                  %v1642 = vld [vmem:[%s1634 + $0xc] sm:$0xf]
                  %1643 = vst [vmem:[%s1635 + $0x24] sm:$0xf] %v1642
                  %v1644 = vld [vmem:[%s1634 + $0x10] sm:$0xf]
                  %1645 = vst [vmem:[%s1635 + $0x30] sm:$0xf] %v1644
                  %v1646 = vld [vmem:[%s1634 + $0x14] sm:$0xf]
                  %1647 = vst [vmem:[%s1635 + $0x3c] sm:$0xf] %v1646
                  %v1648 = vld [vmem:[%s1634 + $0x18] sm:$0xf]
                  %1649 = vst [vmem:[%s1635 + $0x48] sm:$0xf] %v1648
                  %v1650 = vld [vmem:[%s1634 + $0x1c] sm:$0xf]
                  %1651 = vst [vmem:[%s1635 + $0x54] sm:$0xf] %v1650
                  %v1652 = vld [vmem:[%s1634 + $0x20] sm:$0xf]
                  %1653 = vst [vmem:[%s1635 + $0x60] sm:$0xf] %v1652
                  %v1654 = vld [vmem:[%s1634 + $0x24] sm:$0xf]
                  %1655 = vst [vmem:[%s1635 + $0x6c] sm:$0xf] %v1654
                  %v1656 = vld [vmem:[%s1634 + $0x28] sm:$0xf]
                  %1657 = vst [vmem:[%s1635 + $0x78] sm:$0xf] %v1656
                  %v1658 = vld [vmem:[%s1634 + $0x2c] sm:$0xf]
                  %1659 = vst [vmem:[%s1635 + $0x84] sm:$0xf] %v1658
                  %v1660 = vld [vmem:[%s1634 + $0x30] sm:$0xf]
                  %1661 = vst [vmem:[%s1635 + $0x90] sm:$0xf] %v1660
                  %v1662 = vld [vmem:[%s1634 + $0x34] sm:$0xf]
                  %1663 = vst [vmem:[%s1635 + $0x9c] sm:$0xf] %v1662
                  %v1664 = vld [vmem:[%s1634 + $0x38] sm:$0xf]
                  %1665 = vst [vmem:[%s1635 + $0xa8] sm:$0xf] %v1664
                  %v1666 = vld [vmem:[%s1634 + $0x3c] sm:$0xf]
                  %1667 = vst [vmem:[%s1635 + $0xb4] sm:$0xf] %v1666
                  %v1668 = vld [vmem:[%s1634 + $0x40] sm:$0xf]
                  %1669 = vst [vmem:[%s1635 + $0xc0] sm:$0xf] %v1668
                  %v1670 = vld [vmem:[%s1634 + $0x44] sm:$0xf]
                  %1671 = vst [vmem:[%s1635 + $0xcc] sm:$0xf] %v1670
                  %v1672 = vld [vmem:[%s1634 + $0x48] sm:$0xf]
                  %1673 = vst [vmem:[%s1635 + $0xd8] sm:$0xf] %v1672
                  %v1674 = vld [vmem:[%s1634 + $0x4c] sm:$0xf]
                  %1675 = vst [vmem:[%s1635 + $0xe4] sm:$0xf] %v1674
                  %v1676 = vld [vmem:[%s1634 + $0x50] sm:$0xf]
                  %1677 = vst [vmem:[%s1635 + $0xf0] sm:$0xf] %v1676
                  %v1678 = vld [vmem:[%s1634 + $0x54] sm:$0xf]
                  %1679 = vst [vmem:[%s1635 + $0xfc] sm:$0xf] %v1678
                  %v1680 = vld [vmem:[%s1634 + $0x58] sm:$0xf]
                  %1681 = vst [vmem:[%s1635 + $0x108] sm:$0xf] %v1680
                  %v1682 = vld [vmem:[%s1634 + $0x5c] sm:$0xf]
                  %1683 = vst [vmem:[%s1635 + $0x114] sm:$0xf] %v1682
                  %v1684 = vld [vmem:[%s1634 + $0x60] sm:$0xf]
                  %1685 = vst [vmem:[%s1635 + $0x120] sm:$0xf] %v1684
                  %v1686 = vld [vmem:[%s1634 + $0x64] sm:$0xf]
                  %1687 = vst [vmem:[%s1635 + $0x12c] sm:$0xf] %v1686
                  %v1688 = vld [vmem:[%s1634 + $0x68] sm:$0xf]
                  %1689 = vst [vmem:[%s1635 + $0x138] sm:$0xf] %v1688
                  %v1690 = vld [vmem:[%s1634 + $0x6c] sm:$0xf]
                  %1691 = vst [vmem:[%s1635 + $0x144] sm:$0xf] %v1690
                  %v1692 = vld [vmem:[%s1634 + $0x70] sm:$0xf]
                  %1693 = vst [vmem:[%s1635 + $0x150] sm:$0xf] %v1692
                  %v1694 = vld [vmem:[%s1634 + $0x74] sm:$0xf]
                  %1695 = vst [vmem:[%s1635 + $0x15c] sm:$0xf] %v1694
                  %v1696 = vld [vmem:[%s1634 + $0x78] sm:$0xf]
                  %1697 = vst [vmem:[%s1635 + $0x168] sm:$0xf] %v1696
                  %v1698 = vld [vmem:[%s1634 + $0x7c] sm:$0xf]
                  %1699 = vst [vmem:[%s1635 + $0x174] sm:$0xf] %v1698
                $region128: #{expire_span_transformer_xl_forward.11} parent=115 // loop_footer
                  %s1633 = sadd.s32 1, %s1629
                $region129: #{expire_span_transformer_xl_forward.11} parent=115 // loop_footer_branch
                  %1628 = sbr.rel target = $region125
                $region130: #{expire_span_transformer_xl_forward.11} parent=115 // loop_exit
                  _
              $region116: #{expire_span_transformer_xl_forward.11} parent=100 // pred_fallthru
                _
            $region101: #{expire_span_transformer_xl_forward.11} parent=96 // pred_fallthru
              _
            // Predicated region
            $region102: #{expire_span_transformer_xl_forward.11} parent=96 // pred_check
              _
            $region103: #{expire_span_transformer_xl_forward.11} parent=96 // pred_check_branch
              %1543 = sbr.rel (0) target = $region105
            $region104: #{expire_span_transformer_xl_forward.11} parent=96 // pred_region
              loop: start=0, step=1, limit=1
              $region106: #{expire_span_transformer_xl_forward.11} parent=104 // loop_pre_header
                _
              $region107: #{expire_span_transformer_xl_forward.11} parent=104 // loop_header
                %s1546 = sphi 0, %s1550
                %p1547 = scmp.ge.s32.totalorder %s1546, 1
                %s1551 = sphi %s1529, %s1529
                %s1552 = sphi %s1537, %s1537
              $region108: #{expire_span_transformer_xl_forward.11} parent=104 // loop_header_branch
                %1549 = sbr.rel (%p1547) target = $region112
              $region109: #{expire_span_transformer_xl_forward.11} parent=104 // loop_body
                %v1553 = vld [vmem:[%s1551] sm:$0xf]
                %1554 = vst [vmem:[%s1552] sm:$0xf] %v1553
                %v1555 = vld [vmem:[%s1551 + $0x4] sm:$0xf]
                %1556 = vst [vmem:[%s1552 + $0xc] sm:$0xf] %v1555
                %v1557 = vld [vmem:[%s1551 + $0x8] sm:$0xf]
                %1558 = vst [vmem:[%s1552 + $0x18] sm:$0xf] %v1557
                %v1559 = vld [vmem:[%s1551 + $0xc] sm:$0xf]
                %1560 = vst [vmem:[%s1552 + $0x24] sm:$0xf] %v1559
                %v1561 = vld [vmem:[%s1551 + $0x10] sm:$0xf]
                %1562 = vst [vmem:[%s1552 + $0x30] sm:$0xf] %v1561
                %v1563 = vld [vmem:[%s1551 + $0x14] sm:$0xf]
                %1564 = vst [vmem:[%s1552 + $0x3c] sm:$0xf] %v1563
                %v1565 = vld [vmem:[%s1551 + $0x18] sm:$0xf]
                %1566 = vst [vmem:[%s1552 + $0x48] sm:$0xf] %v1565
                %v1567 = vld [vmem:[%s1551 + $0x1c] sm:$0xf]
                %1568 = vst [vmem:[%s1552 + $0x54] sm:$0xf] %v1567
                %v1569 = vld [vmem:[%s1551 + $0x20] sm:$0xf]
                %1570 = vst [vmem:[%s1552 + $0x60] sm:$0xf] %v1569
                %v1571 = vld [vmem:[%s1551 + $0x24] sm:$0xf]
                %1572 = vst [vmem:[%s1552 + $0x6c] sm:$0xf] %v1571
                %v1573 = vld [vmem:[%s1551 + $0x28] sm:$0xf]
                %1574 = vst [vmem:[%s1552 + $0x78] sm:$0xf] %v1573
                %v1575 = vld [vmem:[%s1551 + $0x2c] sm:$0xf]
                %1576 = vst [vmem:[%s1552 + $0x84] sm:$0xf] %v1575
                %v1577 = vld [vmem:[%s1551 + $0x30] sm:$0xf]
                %1578 = vst [vmem:[%s1552 + $0x90] sm:$0xf] %v1577
                %v1579 = vld [vmem:[%s1551 + $0x34] sm:$0xf]
                %1580 = vst [vmem:[%s1552 + $0x9c] sm:$0xf] %v1579
                %v1581 = vld [vmem:[%s1551 + $0x38] sm:$0xf]
                %1582 = vst [vmem:[%s1552 + $0xa8] sm:$0xf] %v1581
                %v1583 = vld [vmem:[%s1551 + $0x3c] sm:$0xf]
                %1584 = vst [vmem:[%s1552 + $0xb4] sm:$0xf] %v1583
                %v1585 = vld [vmem:[%s1551 + $0x40] sm:$0xf]
                %1586 = vst [vmem:[%s1552 + $0xc0] sm:$0xf] %v1585
                %v1587 = vld [vmem:[%s1551 + $0x44] sm:$0xf]
                %1588 = vst [vmem:[%s1552 + $0xcc] sm:$0xf] %v1587
                %v1589 = vld [vmem:[%s1551 + $0x48] sm:$0xf]
                %1590 = vst [vmem:[%s1552 + $0xd8] sm:$0xf] %v1589
                %v1591 = vld [vmem:[%s1551 + $0x4c] sm:$0xf]
                %1592 = vst [vmem:[%s1552 + $0xe4] sm:$0xf] %v1591
                %v1593 = vld [vmem:[%s1551 + $0x50] sm:$0xf]
                %1594 = vst [vmem:[%s1552 + $0xf0] sm:$0xf] %v1593
                %v1595 = vld [vmem:[%s1551 + $0x54] sm:$0xf]
                %1596 = vst [vmem:[%s1552 + $0xfc] sm:$0xf] %v1595
                %v1597 = vld [vmem:[%s1551 + $0x58] sm:$0xf]
                %1598 = vst [vmem:[%s1552 + $0x108] sm:$0xf] %v1597
                %v1599 = vld [vmem:[%s1551 + $0x5c] sm:$0xf]
                %1600 = vst [vmem:[%s1552 + $0x114] sm:$0xf] %v1599
                %v1601 = vld [vmem:[%s1551 + $0x60] sm:$0xf]
                %1602 = vst [vmem:[%s1552 + $0x120] sm:$0xf] %v1601
                %v1603 = vld [vmem:[%s1551 + $0x64] sm:$0xf]
                %1604 = vst [vmem:[%s1552 + $0x12c] sm:$0xf] %v1603
                %v1605 = vld [vmem:[%s1551 + $0x68] sm:$0xf]
                %1606 = vst [vmem:[%s1552 + $0x138] sm:$0xf] %v1605
                %v1607 = vld [vmem:[%s1551 + $0x6c] sm:$0xf]
                %1608 = vst [vmem:[%s1552 + $0x144] sm:$0xf] %v1607
                %v1609 = vld [vmem:[%s1551 + $0x70] sm:$0xf]
                %1610 = vst [vmem:[%s1552 + $0x150] sm:$0xf] %v1609
                %v1611 = vld [vmem:[%s1551 + $0x74] sm:$0xf]
                %1612 = vst [vmem:[%s1552 + $0x15c] sm:$0xf] %v1611
                %v1613 = vld [vmem:[%s1551 + $0x78] sm:$0xf]
                %1614 = vst [vmem:[%s1552 + $0x168] sm:$0xf] %v1613
                %v1615 = vld [vmem:[%s1551 + $0x7c] sm:$0xf]
                %1616 = vst [vmem:[%s1552 + $0x174] sm:$0xf] %v1615
              $region110: #{expire_span_transformer_xl_forward.11} parent=104 // loop_footer
                %s1550 = sadd.s32 1, %s1546
              $region111: #{expire_span_transformer_xl_forward.11} parent=104 // loop_footer_branch
                %1545 = sbr.rel target = $region107
              $region112: #{expire_span_transformer_xl_forward.11} parent=104 // loop_exit
                _
            $region105: #{expire_span_transformer_xl_forward.11} parent=96 // pred_fallthru
              _
          $region97: #{expire_span_transformer_xl_forward.11} parent=92 // pred_fallthru
            _
          %1700 = vnop
        $region93: #{expire_span_transformer_xl_forward.11} parent=76 // pred_fallthru
          _
      $region77: #{expire_span_transformer_xl_forward.11} parent=5 // pred_fallthru
        _
      %p1701 = scmp.le.s32.totalorder 2, %s11
      // Predicated region
      $region131: #{expire_span_transformer_xl_forward.11} parent=5 // pred_check
        %p1702 = pneg %p1701
      $region132: #{expire_span_transformer_xl_forward.11} parent=5 // pred_check_branch
        %1704 = sbr.rel (%p1702) target = $region134
      $region133: #{expire_span_transformer_xl_forward.11} parent=5 // pred_region
        %s1705 = ssub.s32 %s11, 2
        // Predicated region
        $region135: #{expire_span_transformer_xl_forward.11} parent=133 // pred_check
          %p1706 = pneg %p195
        $region136: #{expire_span_transformer_xl_forward.11} parent=133 // pred_check_branch
          %1708 = sbr.rel (%p1706) target = $region138
        $region137: #{expire_span_transformer_xl_forward.11} parent=133 // pred_region
          %s1709 = sand.u32 %s180, 1
          %s1710 = sand.u32 %s180, 1
          %s1711 = smul.addr %s1710, 128
          %s1712 = scalar_lea.vmem [#allocation4], %s1711
        $region138: #{expire_span_transformer_xl_forward.11} parent=133 // pred_fallthru
          _
      $region134: #{expire_span_transformer_xl_forward.11} parent=5 // pred_fallthru
        _
    $region6: #{expire_span_transformer_xl_forward.11} parent=1 // loop_footer
      %s15 = sadd.s32 1, %s11
    $region7: #{expire_span_transformer_xl_forward.11} parent=1 // loop_footer_branch
      %10 = sbr.rel target = $region3
    $region8: #{expire_span_transformer_xl_forward.11} parent=1 // loop_exit
      _

// kernel: expire_span_transformer_xl_forward.13
$region0: #{expire_span_transformer_xl_forward.13}
  #allocation0 [shape = 'u32[]', space=smem, size = 0x4, offset = 0x4, fixed_abs, tag = 'smem constant byte address 0x4 - core index']
  #allocation1 [shape = 'u32[144,128]{1,0:T(1,128)}', space=vmem, size = 0x12000, scoped, tag = 'internal scratch']
  #allocation2 [shape = 'f32[256,128]{1,0:T(8,128)}', space=vmem, size = 0x20000, scoped, tag = 'scratch operand']
  %s0 = inlined_call_operand.vmem [shape: bf16[256,128], index: 0, kind: input, shape index: {}]
  %s1 = inlined_call_operand.vmem [shape: bf16[128,128], index: 1, kind: input, shape index: {}]
  %s2 = inlined_call_operand.vmem [shape: f32[1,128], index: 2, kind: input, shape index: {}]
  %s3 = inlined_call_operand.vmem [shape: bf16[256,128], index: 3, kind: input, shape index: {}]
  %s4 = inlined_call_operand.vmem [shape: bf16[256,128], index: 4, kind: output, shape index: {}]
  %s5 = sld [smem:[#allocation0]]
  $region34: #{expire_span_transformer_xl_forward.13} parent=0
    _
  %s7 = ssub.s32 1, %s5
  %s8 = scalar_select 0, %s7, %s5
  // Predicated region
  $region2: #{expire_span_transformer_xl_forward.13} parent=0 // pred_check
    _
  $region3: #{expire_span_transformer_xl_forward.13} parent=0 // pred_check_branch
    %10 = sbr.rel (0) target = $region5
  $region4: #{expire_span_transformer_xl_forward.13} parent=0 // pred_region
    _
  $region5: #{expire_span_transformer_xl_forward.13} parent=0 // pred_fallthru
    _
  // Predicated region
  $region6: #{expire_span_transformer_xl_forward.13} parent=0 // pred_check
    _
  $region7: #{expire_span_transformer_xl_forward.13} parent=0 // pred_check_branch
    %12 = sbr.rel (0) target = $region9
  $region8: #{expire_span_transformer_xl_forward.13} parent=0 // pred_region
    _
  $region9: #{expire_span_transformer_xl_forward.13} parent=0 // pred_fallthru
    _
  // Predicated region
  $region10: #{expire_span_transformer_xl_forward.13} parent=0 // pred_check
    _
  $region11: #{expire_span_transformer_xl_forward.13} parent=0 // pred_check_branch
    %14 = sbr.rel (0) target = $region13
  $region12: #{expire_span_transformer_xl_forward.13} parent=0 // pred_region
    _
  $region13: #{expire_span_transformer_xl_forward.13} parent=0 // pred_fallthru
    _
  // Predicated region
  $region14: #{expire_span_transformer_xl_forward.13} parent=0 // pred_check
    _
  $region15: #{expire_span_transformer_xl_forward.13} parent=0 // pred_check_branch
    %16 = sbr.rel (0) target = $region17
  $region16: #{expire_span_transformer_xl_forward.13} parent=0 // pred_region
    _
  $region17: #{expire_span_transformer_xl_forward.13} parent=0 // pred_fallthru
    _
  %p18 = scmp.eq.s32.totalorder 0, 0
  // Predicated region
  $region18: #{expire_span_transformer_xl_forward.13} parent=0 // pred_check
    %p19 = pneg %p18
  $region19: #{expire_span_transformer_xl_forward.13} parent=0 // pred_check_branch
    %21 = sbr.rel (%p19) target = $region21
  $region20: #{expire_span_transformer_xl_forward.13} parent=0 // pred_region
    %22 = vst [vmem:[#allocation2] sm:$0xff] 0.0
    %23 = vst [vmem:[#allocation2 + $0x8] sm:$0xff] 0.0
    %24 = vst [vmem:[#allocation2 + $0x10] sm:$0xff] 0.0
    %25 = vst [vmem:[#allocation2 + $0x18] sm:$0xff] 0.0
    %26 = vst [vmem:[#allocation2 + $0x20] sm:$0xff] 0.0
    %27 = vst [vmem:[#allocation2 + $0x28] sm:$0xff] 0.0
    %28 = vst [vmem:[#allocation2 + $0x30] sm:$0xff] 0.0
    %29 = vst [vmem:[#allocation2 + $0x38] sm:$0xff] 0.0
    %30 = vst [vmem:[#allocation2 + $0x40] sm:$0xff] 0.0
    %31 = vst [vmem:[#allocation2 + $0x48] sm:$0xff] 0.0
    %32 = vst [vmem:[#allocation2 + $0x50] sm:$0xff] 0.0
    %33 = vst [vmem:[#allocation2 + $0x58] sm:$0xff] 0.0
    %34 = vst [vmem:[#allocation2 + $0x60] sm:$0xff] 0.0
    %35 = vst [vmem:[#allocation2 + $0x68] sm:$0xff] 0.0
    %36 = vst [vmem:[#allocation2 + $0x70] sm:$0xff] 0.0
    %37 = vst [vmem:[#allocation2 + $0x78] sm:$0xff] 0.0
    %38 = vst [vmem:[#allocation2 + $0x80] sm:$0xff] 0.0
    %39 = vst [vmem:[#allocation2 + $0x88] sm:$0xff] 0.0
    %40 = vst [vmem:[#allocation2 + $0x90] sm:$0xff] 0.0
    %41 = vst [vmem:[#allocation2 + $0x98] sm:$0xff] 0.0
    %42 = vst [vmem:[#allocation2 + $0xa0] sm:$0xff] 0.0
    %43 = vst [vmem:[#allocation2 + $0xa8] sm:$0xff] 0.0
    %44 = vst [vmem:[#allocation2 + $0xb0] sm:$0xff] 0.0
    %45 = vst [vmem:[#allocation2 + $0xb8] sm:$0xff] 0.0
    %46 = vst [vmem:[#allocation2 + $0xc0] sm:$0xff] 0.0
    %47 = vst [vmem:[#allocation2 + $0xc8] sm:$0xff] 0.0
    %48 = vst [vmem:[#allocation2 + $0xd0] sm:$0xff] 0.0
    %49 = vst [vmem:[#allocation2 + $0xd8] sm:$0xff] 0.0
    %50 = vst [vmem:[#allocation2 + $0xe0] sm:$0xff] 0.0
    %51 = vst [vmem:[#allocation2 + $0xe8] sm:$0xff] 0.0
    %52 = vst [vmem:[#allocation2 + $0xf0] sm:$0xff] 0.0
    %53 = vst [vmem:[#allocation2 + $0xf8] sm:$0xff] 0.0
  $region21: #{expire_span_transformer_xl_forward.13} parent=0 // pred_fallthru
    _
  %v54 = vld [vmem:[%s0] sm:$0xf]
  %v55 = vld [vmem:[%s0 + $0x4] sm:$0xf]
  %v56 = vld [vmem:[%s0 + $0x8] sm:$0xf]
  %v57 = vld [vmem:[%s0 + $0xc] sm:$0xf]
  %v58 = vld [vmem:[%s0 + $0x10] sm:$0xf]
  %v59 = vld [vmem:[%s0 + $0x14] sm:$0xf]
  %v60 = vld [vmem:[%s0 + $0x18] sm:$0xf]
  %v61 = vld [vmem:[%s0 + $0x1c] sm:$0xf]
  %v62 = vld [vmem:[%s0 + $0x20] sm:$0xf]
  %v63 = vld [vmem:[%s0 + $0x24] sm:$0xf]
  %v64 = vld [vmem:[%s0 + $0x28] sm:$0xf]
  %v65 = vld [vmem:[%s0 + $0x2c] sm:$0xf]
  %v66 = vld [vmem:[%s0 + $0x30] sm:$0xf]
  %v67 = vld [vmem:[%s0 + $0x34] sm:$0xf]
  %v68 = vld [vmem:[%s0 + $0x38] sm:$0xf]
  %v69 = vld [vmem:[%s0 + $0x3c] sm:$0xf]
  %v70 = vld [vmem:[%s0 + $0x40] sm:$0xf]
  %v71 = vld [vmem:[%s0 + $0x44] sm:$0xf]
  %v72 = vld [vmem:[%s0 + $0x48] sm:$0xf]
  %v73 = vld [vmem:[%s0 + $0x4c] sm:$0xf]
  %v74 = vld [vmem:[%s0 + $0x50] sm:$0xf]
  %v75 = vld [vmem:[%s0 + $0x54] sm:$0xf]
  %v76 = vld [vmem:[%s0 + $0x58] sm:$0xf]
  %v77 = vld [vmem:[%s0 + $0x5c] sm:$0xf]
  %v78 = vld [vmem:[%s0 + $0x60] sm:$0xf]
  %v79 = vld [vmem:[%s0 + $0x64] sm:$0xf]
  %v80 = vld [vmem:[%s0 + $0x68] sm:$0xf]
  %v81 = vld [vmem:[%s0 + $0x6c] sm:$0xf]
  %v82 = vld [vmem:[%s0 + $0x70] sm:$0xf]
  %v83 = vld [vmem:[%s0 + $0x74] sm:$0xf]
  %v84 = vld [vmem:[%s0 + $0x78] sm:$0xf]
  %v85 = vld [vmem:[%s0 + $0x7c] sm:$0xf]
  %v86 = vld [vmem:[#allocation2] sm:$0xff]
  %v87 = vld [vmem:[#allocation2 + $0x8] sm:$0xff]
  %v88 = vld [vmem:[#allocation2 + $0x10] sm:$0xff]
  %v89 = vld [vmem:[#allocation2 + $0x18] sm:$0xff]
  %v90 = vld [vmem:[#allocation2 + $0x20] sm:$0xff]
  %v91 = vld [vmem:[#allocation2 + $0x28] sm:$0xff]
  %v92 = vld [vmem:[#allocation2 + $0x30] sm:$0xff]
  %v93 = vld [vmem:[#allocation2 + $0x38] sm:$0xff]
  %v94 = vld [vmem:[#allocation2 + $0x40] sm:$0xff]
  %v95 = vld [vmem:[#allocation2 + $0x48] sm:$0xff]
  %v96 = vld [vmem:[#allocation2 + $0x50] sm:$0xff]
  %v97 = vld [vmem:[#allocation2 + $0x58] sm:$0xff]
  %v98 = vld [vmem:[#allocation2 + $0x60] sm:$0xff]
  %v99 = vld [vmem:[#allocation2 + $0x68] sm:$0xff]
  %v100 = vld [vmem:[#allocation2 + $0x70] sm:$0xff]
  %v101 = vld [vmem:[#allocation2 + $0x78] sm:$0xff]
  %v102 = vld [vmem:[#allocation2 + $0x80] sm:$0xff]
  %v103 = vld [vmem:[#allocation2 + $0x88] sm:$0xff]
  %v104 = vld [vmem:[#allocation2 + $0x90] sm:$0xff]
  %v105 = vld [vmem:[#allocation2 + $0x98] sm:$0xff]
  %v106 = vld [vmem:[#allocation2 + $0xa0] sm:$0xff]
  %v107 = vld [vmem:[#allocation2 + $0xa8] sm:$0xff]
  %v108 = vld [vmem:[#allocation2 + $0xb0] sm:$0xff]
  %v109 = vld [vmem:[#allocation2 + $0xb8] sm:$0xff]
  %v110 = vld [vmem:[#allocation2 + $0xc0] sm:$0xff]
  %v111 = vld [vmem:[#allocation2 + $0xc8] sm:$0xff]
  %v112 = vld [vmem:[#allocation2 + $0xd0] sm:$0xff]
  %v113 = vld [vmem:[#allocation2 + $0xd8] sm:$0xff]
  %v114 = vld [vmem:[#allocation2 + $0xe0] sm:$0xff]
  %v115 = vld [vmem:[#allocation2 + $0xe8] sm:$0xff]
  %v116 = vld [vmem:[#allocation2 + $0xf0] sm:$0xff]
  %v117 = vld [vmem:[#allocation2 + $0xf8] sm:$0xff]
  %v118 = vld [vmem:[%s1] sm:$0xf]
  %v119 = vld [vmem:[%s1 + $0x4] sm:$0xf]
  %v120 = vld [vmem:[%s1 + $0x8] sm:$0xf]
  %v121 = vld [vmem:[%s1 + $0xc] sm:$0xf]
  %v122 = vld [vmem:[%s1 + $0x10] sm:$0xf]
  %v123 = vld [vmem:[%s1 + $0x14] sm:$0xf]
  %v124 = vld [vmem:[%s1 + $0x18] sm:$0xf]
  %v125 = vld [vmem:[%s1 + $0x1c] sm:$0xf]
  %v126 = vld [vmem:[%s1 + $0x20] sm:$0xf]
  %v127 = vld [vmem:[%s1 + $0x24] sm:$0xf]
  %v128 = vld [vmem:[%s1 + $0x28] sm:$0xf]
  %v129 = vld [vmem:[%s1 + $0x2c] sm:$0xf]
  %v130 = vld [vmem:[%s1 + $0x30] sm:$0xf]
  %v131 = vld [vmem:[%s1 + $0x34] sm:$0xf]
  %v132 = vld [vmem:[%s1 + $0x38] sm:$0xf]
  %v133 = vld [vmem:[%s1 + $0x3c] sm:$0xf]
  %v166 = vunpack.c.l.b16 %v54
  %v167 = vunpack.c.l.b16 %v55
  %v168 = vunpack.c.l.b16 %v56
  %v169 = vunpack.c.l.b16 %v57
  %v170 = vunpack.c.l.b16 %v58
  %v171 = vunpack.c.l.b16 %v59
  %v172 = vunpack.c.l.b16 %v60
  %v173 = vunpack.c.l.b16 %v61
  %v174 = vunpack.c.l.b16 %v62
  %v175 = vunpack.c.l.b16 %v63
  %v176 = vunpack.c.l.b16 %v64
  %v177 = vunpack.c.l.b16 %v65
  %v178 = vunpack.c.l.b16 %v66
  %v179 = vunpack.c.l.b16 %v67
  %v180 = vunpack.c.l.b16 %v68
  %v181 = vunpack.c.l.b16 %v69
  %v182 = vunpack.c.l.b16 %v70
  %v183 = vunpack.c.l.b16 %v71
  %v184 = vunpack.c.l.b16 %v72
  %v185 = vunpack.c.l.b16 %v73
  %v186 = vunpack.c.l.b16 %v74
  %v187 = vunpack.c.l.b16 %v75
  %v188 = vunpack.c.l.b16 %v76
  %v189 = vunpack.c.l.b16 %v77
  %v190 = vunpack.c.l.b16 %v78
  %v191 = vunpack.c.l.b16 %v79
  %v192 = vunpack.c.l.b16 %v80
  %v193 = vunpack.c.l.b16 %v81
  %v194 = vunpack.c.l.b16 %v82
  %v195 = vunpack.c.l.b16 %v83
  %v196 = vunpack.c.l.b16 %v84
  %v197 = vunpack.c.l.b16 %v85
  %v198 = vpack.c.b16 %v167, %v166
  %v199 = vpack.c.b16 %v169, %v168
  %v200 = vpack.c.b16 %v171, %v170
  %v201 = vpack.c.b16 %v173, %v172
  %v202 = vpack.c.b16 %v175, %v174
  %v203 = vpack.c.b16 %v177, %v176
  %v204 = vpack.c.b16 %v179, %v178
  %v205 = vpack.c.b16 %v181, %v180
  %v206 = vpack.c.b16 %v183, %v182
  %v207 = vpack.c.b16 %v185, %v184
  %v208 = vpack.c.b16 %v187, %v186
  %v209 = vpack.c.b16 %v189, %v188
  %v210 = vpack.c.b16 %v191, %v190
  %v211 = vpack.c.b16 %v193, %v192
  %v212 = vpack.c.b16 %v195, %v194
  %v213 = vpack.c.b16 %v197, %v196
  %v246 = vunpack.c.l.b16 %v118
  %v247 = vunpack.c.l.b16 %v119
  %v248 = vunpack.c.l.b16 %v120
  %v249 = vunpack.c.l.b16 %v121
  %v250 = vunpack.c.l.b16 %v122
  %v251 = vunpack.c.l.b16 %v123
  %v252 = vunpack.c.l.b16 %v124
  %v253 = vunpack.c.l.b16 %v125
  %v254 = vunpack.c.l.b16 %v126
  %v255 = vunpack.c.l.b16 %v127
  %v256 = vunpack.c.l.b16 %v128
  %v257 = vunpack.c.l.b16 %v129
  %v258 = vunpack.c.l.b16 %v130
  %v259 = vunpack.c.l.b16 %v131
  %v260 = vunpack.c.l.b16 %v132
  %v261 = vunpack.c.l.b16 %v133
  %v262 = vpack.c.b16 %v247, %v246
  %v263 = vpack.c.b16 %v249, %v248
  %v264 = vpack.c.b16 %v251, %v250
  %v265 = vpack.c.b16 %v253, %v252
  %v266 = vpack.c.b16 %v255, %v254
  %v267 = vpack.c.b16 %v257, %v256
  %v268 = vpack.c.b16 %v259, %v258
  %v269 = vpack.c.b16 %v261, %v260
  %278 = vmatprep.subr.bf16.mxu0 0
  %279 = vmatpush1.bf16.msra.mxu0 %v262
  %280 = vmatprep.subr.bf16.mxu0 0
  %281 = vmatpush1.bf16.msra.mxu0 %v263
  %282 = vmatprep.subr.bf16.mxu0 0
  %283 = vmatpush1.bf16.msra.mxu0 %v264
  %284 = vmatprep.subr.bf16.mxu0 0
  %285 = vmatpush1.bf16.msra.mxu0 %v265
  %286 = vmatprep.subr.bf16.mxu0 0
  %287 = vmatpush1.bf16.msra.mxu0 %v266
  %288 = vmatprep.subr.bf16.mxu0 0
  %289 = vmatpush1.bf16.msra.mxu0 %v267
  %290 = vmatprep.subr.bf16.mxu0 0
  %291 = vmatpush1.bf16.msra.mxu0 %v268
  %292 = vmatprep.subr.bf16.mxu0 0
  %293 = vmatpush1.bf16.msra.mxu0 %v269
  %294 = vmatprep.subr.bf16.mxu0 0
  %295 = vmatpush1.bf16.msra.mxu0 0
  %296 = vmatprep.subr.bf16.mxu0 0
  %297 = vmatpush1.bf16.msra.mxu0 0
  %298 = vmatprep.subr.bf16.mxu0 0
  %299 = vmatpush1.bf16.msra.mxu0 0
  %300 = vmatprep.subr.bf16.mxu0 0
  %301 = vmatpush1.bf16.msra.mxu0 0
  %302 = vmatprep.subr.bf16.mxu0 0
  %303 = vmatpush1.bf16.msra.mxu0 0
  %304 = vmatprep.subr.bf16.mxu0 0
  %305 = vmatpush1.bf16.msra.mxu0 0
  %306 = vmatprep.subr.bf16.mxu0 0
  %307 = vmatpush1.bf16.msra.mxu0 0
  %308 = vmatprep.subr.bf16.mxu0 0
  %309 = vmatpush1.bf16.msra.mxu0 0
  %310 = vmatprep.mubr.bf16.mxu0 0
  %311 = vmatmul.mubr.bf16.gmra.mrb[0].mxu0 %v198
  %v312 = vpop.f32.mrb[0].mxu0
  %v313 = vadd.f32 0.0, %v312
  %v314 = vpop.f32.mrb[0].mxu0
  %v315 = vpop.f32.mrb[0].mxu0
  %v316 = vadd.f32 0.0, %v315
  %v317 = vpop.f32.mrb[0].mxu0
  %318 = vmatprep.mubr.bf16.mxu0 0
  %319 = vmatmul.mubr.bf16.gmra.mrb[0].mxu0 %v199
  %v320 = vpop.f32.mrb[0].mxu0
  %v321 = vadd.f32 0.0, %v320
  %v322 = vpop.f32.mrb[0].mxu0
  %v323 = vpop.f32.mrb[0].mxu0
  %v324 = vadd.f32 0.0, %v323
  %v325 = vpop.f32.mrb[0].mxu0
  %326 = vmatprep.mubr.bf16.mxu0 0
  %327 = vmatmul.mubr.bf16.gmra.mrb[0].mxu0 %v200
  %v328 = vpop.f32.mrb[0].mxu0
  %v329 = vadd.f32 0.0, %v328
  %v330 = vpop.f32.mrb[0].mxu0
  %v331 = vpop.f32.mrb[0].mxu0
  %v332 = vadd.f32 0.0, %v331
  %v333 = vpop.f32.mrb[0].mxu0
  %334 = vmatprep.mubr.bf16.mxu0 0
  %335 = vmatmul.mubr.bf16.gmra.mrb[0].mxu0 %v201
  %v336 = vpop.f32.mrb[0].mxu0
  %v337 = vadd.f32 0.0, %v336
  %v338 = vpop.f32.mrb[0].mxu0
  %v339 = vpop.f32.mrb[0].mxu0
  %v340 = vadd.f32 0.0, %v339
  %v341 = vpop.f32.mrb[0].mxu0
  %342 = vmatprep.mubr.bf16.mxu0 0
  %343 = vmatmul.mubr.bf16.gmra.mrb[0].mxu0 %v202
  %v344 = vpop.f32.mrb[0].mxu0
  %v345 = vadd.f32 0.0, %v344
  %v346 = vpop.f32.mrb[0].mxu0
  %v347 = vpop.f32.mrb[0].mxu0
  %v348 = vadd.f32 0.0, %v347
  %v349 = vpop.f32.mrb[0].mxu0
  %350 = vmatprep.mubr.bf16.mxu0 0
  %351 = vmatmul.mubr.bf16.gmra.mrb[0].mxu0 %v203
  %v352 = vpop.f32.mrb[0].mxu0
  %v353 = vadd.f32 0.0, %v352
  %v354 = vpop.f32.mrb[0].mxu0
  %v355 = vpop.f32.mrb[0].mxu0
  %v356 = vadd.f32 0.0, %v355
  %v357 = vpop.f32.mrb[0].mxu0
  %358 = vmatprep.mubr.bf16.mxu0 0
  %359 = vmatmul.mubr.bf16.gmra.mrb[0].mxu0 %v204
  %v360 = vpop.f32.mrb[0].mxu0
  %v361 = vadd.f32 0.0, %v360
  %v362 = vpop.f32.mrb[0].mxu0
  %v363 = vpop.f32.mrb[0].mxu0
  %v364 = vadd.f32 0.0, %v363
  %v365 = vpop.f32.mrb[0].mxu0
  %366 = vmatprep.mubr.bf16.mxu0 0
  %367 = vmatmul.mubr.bf16.gmra.mrb[0].mxu0 %v205
  %v368 = vpop.f32.mrb[0].mxu0
  %v369 = vadd.f32 0.0, %v368
  %v370 = vpop.f32.mrb[0].mxu0
  %v371 = vpop.f32.mrb[0].mxu0
  %v372 = vadd.f32 0.0, %v371
  %v373 = vpop.f32.mrb[0].mxu0
  %374 = vmatprep.mubr.bf16.mxu0 0
  %375 = vmatmul.mubr.bf16.gmra.mrb[0].mxu0 %v206
  %v376 = vpop.f32.mrb[0].mxu0
  %v377 = vadd.f32 0.0, %v376
  %v378 = vpop.f32.mrb[0].mxu0
  %v379 = vpop.f32.mrb[0].mxu0
  %v380 = vadd.f32 0.0, %v379
  %v381 = vpop.f32.mrb[0].mxu0
  %382 = vmatprep.mubr.bf16.mxu0 0
  %383 = vmatmul.mubr.bf16.gmra.mrb[0].mxu0 %v207
  %v384 = vpop.f32.mrb[0].mxu0
  %v385 = vadd.f32 0.0, %v384
  %v386 = vpop.f32.mrb[0].mxu0
  %v387 = vpop.f32.mrb[0].mxu0
  %v388 = vadd.f32 0.0, %v387
  %v389 = vpop.f32.mrb[0].mxu0
  %390 = vmatprep.mubr.bf16.mxu0 0
  %391 = vmatmul.mubr.bf16.gmra.mrb[0].mxu0 %v208
  %v392 = vpop.f32.mrb[0].mxu0
  %v393 = vadd.f32 0.0, %v392
  %v394 = vpop.f32.mrb[0].mxu0
  %v395 = vpop.f32.mrb[0].mxu0
  %v396 = vadd.f32 0.0, %v395
  %v397 = vpop.f32.mrb[0].mxu0
  %398 = vmatprep.mubr.bf16.mxu0 0
  %399 = vmatmul.mubr.bf16.gmra.mrb[0].mxu0 %v209
  %v400 = vpop.f32.mrb[0].mxu0
  %v401 = vadd.f32 0.0, %v400
  %v402 = vpop.f32.mrb[0].mxu0
  %v403 = vpop.f32.mrb[0].mxu0
  %v404 = vadd.f32 0.0, %v403
  %v405 = vpop.f32.mrb[0].mxu0
  %406 = vmatprep.mubr.bf16.mxu0 0
  %407 = vmatmul.mubr.bf16.gmra.mrb[0].mxu0 %v210
  %v408 = vpop.f32.mrb[0].mxu0
  %v409 = vadd.f32 0.0, %v408
  %v410 = vpop.f32.mrb[0].mxu0
  %v411 = vpop.f32.mrb[0].mxu0
  %v412 = vadd.f32 0.0, %v411
  %v413 = vpop.f32.mrb[0].mxu0
  %414 = vmatprep.mubr.bf16.mxu0 0
  %415 = vmatmul.mubr.bf16.gmra.mrb[0].mxu0 %v211
  %v416 = vpop.f32.mrb[0].mxu0
  %v417 = vadd.f32 0.0, %v416
  %v418 = vpop.f32.mrb[0].mxu0
  %v419 = vpop.f32.mrb[0].mxu0
  %v420 = vadd.f32 0.0, %v419
  %v421 = vpop.f32.mrb[0].mxu0
  %422 = vmatprep.mubr.bf16.mxu0 0
  %423 = vmatmul.mubr.bf16.gmra.mrb[0].mxu0 %v212
  %v424 = vpop.f32.mrb[0].mxu0
  %v425 = vadd.f32 0.0, %v424
  %v426 = vpop.f32.mrb[0].mxu0
  %v427 = vpop.f32.mrb[0].mxu0
  %v428 = vadd.f32 0.0, %v427
  %v429 = vpop.f32.mrb[0].mxu0
  %430 = vmatprep.mubr.bf16.mxu0 0
  %431 = vmatmul.mubr.bf16.gmra.mrb[0].mxu0 %v213
  %v432 = vpop.f32.mrb[0].mxu0
  %v433 = vadd.f32 0.0, %v432
  %v434 = vpop.f32.mrb[0].mxu0
  %v435 = vpop.f32.mrb[0].mxu0
  %v436 = vadd.f32 0.0, %v435
  %v437 = vpop.f32.mrb[0].mxu0
  %438 = vdwg.mxu0
  %v439 = vadd.f32 %v86, %v313
  %v440 = vadd.f32 %v87, %v316
  %v441 = vadd.f32 %v88, %v321
  %v442 = vadd.f32 %v89, %v324
  %v443 = vadd.f32 %v90, %v329
  %v444 = vadd.f32 %v91, %v332
  %v445 = vadd.f32 %v92, %v337
  %v446 = vadd.f32 %v93, %v340
  %v447 = vadd.f32 %v94, %v345
  %v448 = vadd.f32 %v95, %v348
  %v449 = vadd.f32 %v96, %v353
  %v450 = vadd.f32 %v97, %v356
  %v451 = vadd.f32 %v98, %v361
  %v452 = vadd.f32 %v99, %v364
  %v453 = vadd.f32 %v100, %v369
  %v454 = vadd.f32 %v101, %v372
  %v455 = vadd.f32 %v102, %v377
  %v456 = vadd.f32 %v103, %v380
  %v457 = vadd.f32 %v104, %v385
  %v458 = vadd.f32 %v105, %v388
  %v459 = vadd.f32 %v106, %v393
  %v460 = vadd.f32 %v107, %v396
  %v461 = vadd.f32 %v108, %v401
  %v462 = vadd.f32 %v109, %v404
  %v463 = vadd.f32 %v110, %v409
  %v464 = vadd.f32 %v111, %v412
  %v465 = vadd.f32 %v112, %v417
  %v466 = vadd.f32 %v113, %v420
  %v467 = vadd.f32 %v114, %v425
  %v468 = vadd.f32 %v115, %v428
  %v469 = vadd.f32 %v116, %v433
  %v470 = vadd.f32 %v117, %v436
  %471 = vst [vmem:[#allocation2] sm:$0xff] %v439
  %472 = vst [vmem:[#allocation2 + $0x8] sm:$0xff] %v440
  %473 = vst [vmem:[#allocation2 + $0x10] sm:$0xff] %v441
  %474 = vst [vmem:[#allocation2 + $0x18] sm:$0xff] %v442
  %475 = vst [vmem:[#allocation2 + $0x20] sm:$0xff] %v443
  %476 = vst [vmem:[#allocation2 + $0x28] sm:$0xff] %v444
  %477 = vst [vmem:[#allocation2 + $0x30] sm:$0xff] %v445
  %478 = vst [vmem:[#allocation2 + $0x38] sm:$0xff] %v446
  %479 = vst [vmem:[#allocation2 + $0x40] sm:$0xff] %v447
  %480 = vst [vmem:[#allocation2 + $0x48] sm:$0xff] %v448
  %481 = vst [vmem:[#allocation2 + $0x50] sm:$0xff] %v449
  %482 = vst [vmem:[#allocation2 + $0x58] sm:$0xff] %v450
  %483 = vst [vmem:[#allocation2 + $0x60] sm:$0xff] %v451
  %484 = vst [vmem:[#allocation2 + $0x68] sm:$0xff] %v452
  %485 = vst [vmem:[#allocation2 + $0x70] sm:$0xff] %v453
  %486 = vst [vmem:[#allocation2 + $0x78] sm:$0xff] %v454
  %487 = vst [vmem:[#allocation2 + $0x80] sm:$0xff] %v455
  %488 = vst [vmem:[#allocation2 + $0x88] sm:$0xff] %v456
  %489 = vst [vmem:[#allocation2 + $0x90] sm:$0xff] %v457
  %490 = vst [vmem:[#allocation2 + $0x98] sm:$0xff] %v458
  %491 = vst [vmem:[#allocation2 + $0xa0] sm:$0xff] %v459
  %492 = vst [vmem:[#allocation2 + $0xa8] sm:$0xff] %v460
  %493 = vst [vmem:[#allocation2 + $0xb0] sm:$0xff] %v461
  %494 = vst [vmem:[#allocation2 + $0xb8] sm:$0xff] %v462
  %495 = vst [vmem:[#allocation2 + $0xc0] sm:$0xff] %v463
  %496 = vst [vmem:[#allocation2 + $0xc8] sm:$0xff] %v464
  %497 = vst [vmem:[#allocation2 + $0xd0] sm:$0xff] %v465
  %498 = vst [vmem:[#allocation2 + $0xd8] sm:$0xff] %v466
  %499 = vst [vmem:[#allocation2 + $0xe0] sm:$0xff] %v467
  %500 = vst [vmem:[#allocation2 + $0xe8] sm:$0xff] %v468
  %501 = vst [vmem:[#allocation2 + $0xf0] sm:$0xff] %v469
  %502 = vst [vmem:[#allocation2 + $0xf8] sm:$0xff] %v470
  // Predicated region
  $region22: #{expire_span_transformer_xl_forward.13} parent=0 // pred_check
    %p503 = pneg %p18
  $region23: #{expire_span_transformer_xl_forward.13} parent=0 // pred_check_branch
    %505 = sbr.rel (%p503) target = $region25
  $region24: #{expire_span_transformer_xl_forward.13} parent=0 // pred_region
    %v506 = vld [vmem:[#allocation2] sm:$0xff]
    %v507 = vld [vmem:[#allocation2 + $0x8] sm:$0xff]
    %v508 = vld [vmem:[#allocation2 + $0x10] sm:$0xff]
    %v509 = vld [vmem:[#allocation2 + $0x18] sm:$0xff]
    %v510 = vld [vmem:[#allocation2 + $0x20] sm:$0xff]
    %v511 = vld [vmem:[#allocation2 + $0x28] sm:$0xff]
    %v512 = vld [vmem:[#allocation2 + $0x30] sm:$0xff]
    %v513 = vld [vmem:[#allocation2 + $0x38] sm:$0xff]
    %v514 = vld [vmem:[#allocation2 + $0x40] sm:$0xff]
    %v515 = vld [vmem:[#allocation2 + $0x48] sm:$0xff]
    %v516 = vld [vmem:[#allocation2 + $0x50] sm:$0xff]
    %v517 = vld [vmem:[#allocation2 + $0x58] sm:$0xff]
    %v518 = vld [vmem:[#allocation2 + $0x60] sm:$0xff]
    %v519 = vld [vmem:[#allocation2 + $0x68] sm:$0xff]
    %v520 = vld [vmem:[#allocation2 + $0x70] sm:$0xff]
    %v521 = vld [vmem:[#allocation2 + $0x78] sm:$0xff]
    %v522 = vld [vmem:[#allocation2 + $0x80] sm:$0xff]
    %v523 = vld [vmem:[#allocation2 + $0x88] sm:$0xff]
    %v524 = vld [vmem:[#allocation2 + $0x90] sm:$0xff]
    %v525 = vld [vmem:[#allocation2 + $0x98] sm:$0xff]
    %v526 = vld [vmem:[#allocation2 + $0xa0] sm:$0xff]
    %v527 = vld [vmem:[#allocation2 + $0xa8] sm:$0xff]
    %v528 = vld [vmem:[#allocation2 + $0xb0] sm:$0xff]
    %v529 = vld [vmem:[#allocation2 + $0xb8] sm:$0xff]
    %v530 = vld [vmem:[#allocation2 + $0xc0] sm:$0xff]
    %v531 = vld [vmem:[#allocation2 + $0xc8] sm:$0xff]
    %v532 = vld [vmem:[#allocation2 + $0xd0] sm:$0xff]
    %v533 = vld [vmem:[#allocation2 + $0xd8] sm:$0xff]
    %v534 = vld [vmem:[#allocation2 + $0xe0] sm:$0xff]
    %v535 = vld [vmem:[#allocation2 + $0xe8] sm:$0xff]
    %v536 = vld [vmem:[#allocation2 + $0xf0] sm:$0xff]
    %v537 = vld [vmem:[#allocation2 + $0xf8] sm:$0xff]
    %v538 = vld [vmem:[%s2] sm:$0x1]
    %v540 = vlaneseq
    %v541 = vshrl.u32 %v540, 7
    %v542 = vsub.s32 0, %v541
    %v543 = vrot.slane %v538, %v542
    %v545 = vadd.f32 %v506, %v543
    %v546 = vadd.f32 %v507, %v543
    %v547 = vadd.f32 %v508, %v543
    %v548 = vadd.f32 %v509, %v543
    %v549 = vadd.f32 %v510, %v543
    %v550 = vadd.f32 %v511, %v543
    %v551 = vadd.f32 %v512, %v543
    %v552 = vadd.f32 %v513, %v543
    %v553 = vadd.f32 %v514, %v543
    %v554 = vadd.f32 %v515, %v543
    %v555 = vadd.f32 %v516, %v543
    %v556 = vadd.f32 %v517, %v543
    %v557 = vadd.f32 %v518, %v543
    %v558 = vadd.f32 %v519, %v543
    %v559 = vadd.f32 %v520, %v543
    %v560 = vadd.f32 %v521, %v543
    %v561 = vadd.f32 %v522, %v543
    %v562 = vadd.f32 %v523, %v543
    %v563 = vadd.f32 %v524, %v543
    %v564 = vadd.f32 %v525, %v543
    %v565 = vadd.f32 %v526, %v543
    %v566 = vadd.f32 %v527, %v543
    %v567 = vadd.f32 %v528, %v543
    %v568 = vadd.f32 %v529, %v543
    %v569 = vadd.f32 %v530, %v543
    %v570 = vadd.f32 %v531, %v543
    %v571 = vadd.f32 %v532, %v543
    %v572 = vadd.f32 %v533, %v543
    %v573 = vadd.f32 %v534, %v543
    %v574 = vadd.f32 %v535, %v543
    %v575 = vadd.f32 %v536, %v543
    %v576 = vadd.f32 %v537, %v543
    %v577 = vld [vmem:[%s3] sm:$0xf]
    %v578 = vld [vmem:[%s3 + $0x4] sm:$0xf]
    %v579 = vld [vmem:[%s3 + $0x8] sm:$0xf]
    %v580 = vld [vmem:[%s3 + $0xc] sm:$0xf]
    %v581 = vld [vmem:[%s3 + $0x10] sm:$0xf]
    %v582 = vld [vmem:[%s3 + $0x14] sm:$0xf]
    %v583 = vld [vmem:[%s3 + $0x18] sm:$0xf]
    %v584 = vld [vmem:[%s3 + $0x1c] sm:$0xf]
    %v585 = vld [vmem:[%s3 + $0x20] sm:$0xf]
    %v586 = vld [vmem:[%s3 + $0x24] sm:$0xf]
    %v587 = vld [vmem:[%s3 + $0x28] sm:$0xf]
    %v588 = vld [vmem:[%s3 + $0x2c] sm:$0xf]
    %v589 = vld [vmem:[%s3 + $0x30] sm:$0xf]
    %v590 = vld [vmem:[%s3 + $0x34] sm:$0xf]
    %v591 = vld [vmem:[%s3 + $0x38] sm:$0xf]
    %v592 = vld [vmem:[%s3 + $0x3c] sm:$0xf]
    %v593 = vld [vmem:[%s3 + $0x40] sm:$0xf]
    %v594 = vld [vmem:[%s3 + $0x44] sm:$0xf]
    %v595 = vld [vmem:[%s3 + $0x48] sm:$0xf]
    %v596 = vld [vmem:[%s3 + $0x4c] sm:$0xf]
    %v597 = vld [vmem:[%s3 + $0x50] sm:$0xf]
    %v598 = vld [vmem:[%s3 + $0x54] sm:$0xf]
    %v599 = vld [vmem:[%s3 + $0x58] sm:$0xf]
    %v600 = vld [vmem:[%s3 + $0x5c] sm:$0xf]
    %v601 = vld [vmem:[%s3 + $0x60] sm:$0xf]
    %v602 = vld [vmem:[%s3 + $0x64] sm:$0xf]
    %v603 = vld [vmem:[%s3 + $0x68] sm:$0xf]
    %v604 = vld [vmem:[%s3 + $0x6c] sm:$0xf]
    %v605 = vld [vmem:[%s3 + $0x70] sm:$0xf]
    %v606 = vld [vmem:[%s3 + $0x74] sm:$0xf]
    %v607 = vld [vmem:[%s3 + $0x78] sm:$0xf]
    %v608 = vld [vmem:[%s3 + $0x7c] sm:$0xf]
    %v609 = vunpack.c.l.bf16 %v577
    %v610 = vunpack.c.l.bf16 %v578
    %v611 = vunpack.c.l.bf16 %v579
    %v612 = vunpack.c.l.bf16 %v580
    %v613 = vunpack.c.l.bf16 %v581
    %v614 = vunpack.c.l.bf16 %v582
    %v615 = vunpack.c.l.bf16 %v583
    %v616 = vunpack.c.l.bf16 %v584
    %v617 = vunpack.c.l.bf16 %v585
    %v618 = vunpack.c.l.bf16 %v586
    %v619 = vunpack.c.l.bf16 %v587
    %v620 = vunpack.c.l.bf16 %v588
    %v621 = vunpack.c.l.bf16 %v589
    %v622 = vunpack.c.l.bf16 %v590
    %v623 = vunpack.c.l.bf16 %v591
    %v624 = vunpack.c.l.bf16 %v592
    %v625 = vunpack.c.l.bf16 %v593
    %v626 = vunpack.c.l.bf16 %v594
    %v627 = vunpack.c.l.bf16 %v595
    %v628 = vunpack.c.l.bf16 %v596
    %v629 = vunpack.c.l.bf16 %v597
    %v630 = vunpack.c.l.bf16 %v598
    %v631 = vunpack.c.l.bf16 %v599
    %v632 = vunpack.c.l.bf16 %v600
    %v633 = vunpack.c.l.bf16 %v601
    %v634 = vunpack.c.l.bf16 %v602
    %v635 = vunpack.c.l.bf16 %v603
    %v636 = vunpack.c.l.bf16 %v604
    %v637 = vunpack.c.l.bf16 %v605
    %v638 = vunpack.c.l.bf16 %v606
    %v639 = vunpack.c.l.bf16 %v607
    %v640 = vunpack.c.l.bf16 %v608
    %v641 = vadd.f32 %v545, %v609
    %v642 = vadd.f32 %v546, %v610
    %v643 = vadd.f32 %v547, %v611
    %v644 = vadd.f32 %v548, %v612
    %v645 = vadd.f32 %v549, %v613
    %v646 = vadd.f32 %v550, %v614
    %v647 = vadd.f32 %v551, %v615
    %v648 = vadd.f32 %v552, %v616
    %v649 = vadd.f32 %v553, %v617
    %v650 = vadd.f32 %v554, %v618
    %v651 = vadd.f32 %v555, %v619
    %v652 = vadd.f32 %v556, %v620
    %v653 = vadd.f32 %v557, %v621
    %v654 = vadd.f32 %v558, %v622
    %v655 = vadd.f32 %v559, %v623
    %v656 = vadd.f32 %v560, %v624
    %v657 = vadd.f32 %v561, %v625
    %v658 = vadd.f32 %v562, %v626
    %v659 = vadd.f32 %v563, %v627
    %v660 = vadd.f32 %v564, %v628
    %v661 = vadd.f32 %v565, %v629
    %v662 = vadd.f32 %v566, %v630
    %v663 = vadd.f32 %v567, %v631
    %v664 = vadd.f32 %v568, %v632
    %v665 = vadd.f32 %v569, %v633
    %v666 = vadd.f32 %v570, %v634
    %v667 = vadd.f32 %v571, %v635
    %v668 = vadd.f32 %v572, %v636
    %v669 = vadd.f32 %v573, %v637
    %v670 = vadd.f32 %v574, %v638
    %v671 = vadd.f32 %v575, %v639
    %v672 = vadd.f32 %v576, %v640
    %v673 = vpack.c.bf16 %v642, %v641
    %v674 = vpack.c.bf16 %v644, %v643
    %v675 = vpack.c.bf16 %v646, %v645
    %v676 = vpack.c.bf16 %v648, %v647
    %v677 = vpack.c.bf16 %v650, %v649
    %v678 = vpack.c.bf16 %v652, %v651
    %v679 = vpack.c.bf16 %v654, %v653
    %v680 = vpack.c.bf16 %v656, %v655
    %v681 = vpack.c.bf16 %v658, %v657
    %v682 = vpack.c.bf16 %v660, %v659
    %v683 = vpack.c.bf16 %v662, %v661
    %v684 = vpack.c.bf16 %v664, %v663
    %v685 = vpack.c.bf16 %v666, %v665
    %v686 = vpack.c.bf16 %v668, %v667
    %v687 = vpack.c.bf16 %v670, %v669
    %v688 = vpack.c.bf16 %v672, %v671
    %v705 = vunpack.c.l.b16 %v673
    %v706 = vunpack.c.h.b16 %v673
    %v707 = vunpack.c.l.b16 %v674
    %v708 = vunpack.c.h.b16 %v674
    %v709 = vunpack.c.l.b16 %v675
    %v710 = vunpack.c.h.b16 %v675
    %v711 = vunpack.c.l.b16 %v676
    %v712 = vunpack.c.h.b16 %v676
    %v713 = vunpack.c.l.b16 %v677
    %v714 = vunpack.c.h.b16 %v677
    %v715 = vunpack.c.l.b16 %v678
    %v716 = vunpack.c.h.b16 %v678
    %v717 = vunpack.c.l.b16 %v679
    %v718 = vunpack.c.h.b16 %v679
    %v719 = vunpack.c.l.b16 %v680
    %v720 = vunpack.c.h.b16 %v680
    %v721 = vunpack.c.l.b16 %v681
    %v722 = vunpack.c.h.b16 %v681
    %v723 = vunpack.c.l.b16 %v682
    %v724 = vunpack.c.h.b16 %v682
    %v725 = vunpack.c.l.b16 %v683
    %v726 = vunpack.c.h.b16 %v683
    %v727 = vunpack.c.l.b16 %v684
    %v728 = vunpack.c.h.b16 %v684
    %v729 = vunpack.c.l.b16 %v685
    %v730 = vunpack.c.h.b16 %v685
    %v731 = vunpack.c.l.b16 %v686
    %v732 = vunpack.c.h.b16 %v686
    %v733 = vunpack.c.l.b16 %v687
    %v734 = vunpack.c.h.b16 %v687
    %v735 = vunpack.c.l.b16 %v688
    %v736 = vunpack.c.h.b16 %v688
    %v737 = vpack.c.b16 %v705, %v705
    %v738 = vpack.c.b16 %v706, %v706
    %v739 = vpack.c.b16 %v707, %v707
    %v740 = vpack.c.b16 %v708, %v708
    %v741 = vpack.c.b16 %v709, %v709
    %v742 = vpack.c.b16 %v710, %v710
    %v743 = vpack.c.b16 %v711, %v711
    %v744 = vpack.c.b16 %v712, %v712
    %v745 = vpack.c.b16 %v713, %v713
    %v746 = vpack.c.b16 %v714, %v714
    %v747 = vpack.c.b16 %v715, %v715
    %v748 = vpack.c.b16 %v716, %v716
    %v749 = vpack.c.b16 %v717, %v717
    %v750 = vpack.c.b16 %v718, %v718
    %v751 = vpack.c.b16 %v719, %v719
    %v752 = vpack.c.b16 %v720, %v720
    %v753 = vpack.c.b16 %v721, %v721
    %v754 = vpack.c.b16 %v722, %v722
    %v755 = vpack.c.b16 %v723, %v723
    %v756 = vpack.c.b16 %v724, %v724
    %v757 = vpack.c.b16 %v725, %v725
    %v758 = vpack.c.b16 %v726, %v726
    %v759 = vpack.c.b16 %v727, %v727
    %v760 = vpack.c.b16 %v728, %v728
    %v761 = vpack.c.b16 %v729, %v729
    %v762 = vpack.c.b16 %v730, %v730
    %v763 = vpack.c.b16 %v731, %v731
    %v764 = vpack.c.b16 %v732, %v732
    %v765 = vpack.c.b16 %v733, %v733
    %v766 = vpack.c.b16 %v734, %v734
    %v767 = vpack.c.b16 %v735, %v735
    %v768 = vpack.c.b16 %v736, %v736
    %801 = vst [vmem:[%s4] sm:$0xf] %v737
    %802 = vst [vmem:[%s4 + $0x4] sm:$0xf] %v738
    %803 = vst [vmem:[%s4 + $0x8] sm:$0xf] %v739
    %804 = vst [vmem:[%s4 + $0xc] sm:$0xf] %v740
    %805 = vst [vmem:[%s4 + $0x10] sm:$0xf] %v741
    %806 = vst [vmem:[%s4 + $0x14] sm:$0xf] %v742
    %807 = vst [vmem:[%s4 + $0x18] sm:$0xf] %v743
    %808 = vst [vmem:[%s4 + $0x1c] sm:$0xf] %v744
    %809 = vst [vmem:[%s4 + $0x20] sm:$0xf] %v745
    %810 = vst [vmem:[%s4 + $0x24] sm:$0xf] %v746
    %811 = vst [vmem:[%s4 + $0x28] sm:$0xf] %v747
    %812 = vst [vmem:[%s4 + $0x2c] sm:$0xf] %v748
    %813 = vst [vmem:[%s4 + $0x30] sm:$0xf] %v749
    %814 = vst [vmem:[%s4 + $0x34] sm:$0xf] %v750
    %815 = vst [vmem:[%s4 + $0x38] sm:$0xf] %v751
    %816 = vst [vmem:[%s4 + $0x3c] sm:$0xf] %v752
    %817 = vst [vmem:[%s4 + $0x40] sm:$0xf] %v753
    %818 = vst [vmem:[%s4 + $0x44] sm:$0xf] %v754
    %819 = vst [vmem:[%s4 + $0x48] sm:$0xf] %v755
    %820 = vst [vmem:[%s4 + $0x4c] sm:$0xf] %v756
    %821 = vst [vmem:[%s4 + $0x50] sm:$0xf] %v757
    %822 = vst [vmem:[%s4 + $0x54] sm:$0xf] %v758
    %823 = vst [vmem:[%s4 + $0x58] sm:$0xf] %v759
    %824 = vst [vmem:[%s4 + $0x5c] sm:$0xf] %v760
    %825 = vst [vmem:[%s4 + $0x60] sm:$0xf] %v761
    %826 = vst [vmem:[%s4 + $0x64] sm:$0xf] %v762
    %827 = vst [vmem:[%s4 + $0x68] sm:$0xf] %v763
    %828 = vst [vmem:[%s4 + $0x6c] sm:$0xf] %v764
    %829 = vst [vmem:[%s4 + $0x70] sm:$0xf] %v765
    %830 = vst [vmem:[%s4 + $0x74] sm:$0xf] %v766
    %831 = vst [vmem:[%s4 + $0x78] sm:$0xf] %v767
    %832 = vst [vmem:[%s4 + $0x7c] sm:$0xf] %v768
  $region25: #{expire_span_transformer_xl_forward.13} parent=0 // pred_fallthru
    _
  // Predicated region
  $region26: #{expire_span_transformer_xl_forward.13} parent=0 // pred_check
    _
  $region27: #{expire_span_transformer_xl_forward.13} parent=0 // pred_check_branch
    %834 = sbr.rel (0) target = $region29
  $region28: #{expire_span_transformer_xl_forward.13} parent=0 // pred_region
    _
  $region29: #{expire_span_transformer_xl_forward.13} parent=0 // pred_fallthru
    _
  // Predicated region
  $region30: #{expire_span_transformer_xl_forward.13} parent=0 // pred_check
    _
  $region31: #{expire_span_transformer_xl_forward.13} parent=0 // pred_check_branch
    %836 = sbr.rel (0) target = $region33
  $region32: #{expire_span_transformer_xl_forward.13} parent=0 // pred_region
    _
  $region33: #{expire_span_transformer_xl_forward.13} parent=0 // pred_fallthru
    _

// kernel: expire_span_transformer_xl_forward.12
$region0: #{expire_span_transformer_xl_forward.12}
  #allocation0 [shape = 'u32[]', space=smem, size = 0x4, offset = 0x4, fixed_abs, tag = 'smem constant byte address 0x4 - core index']
  #allocation1 [shape = 'u32[144,128]{1,0:T(1,128)}', space=vmem, size = 0x12000, scoped, tag = 'internal scratch']
  #allocation2 [shape = 'f32[128,1]{1,0:T(8,128)}', space=vmem, size = 0x10000, scoped, tag = 'scratch operand']
  #allocation3 [shape = 'f32[128,1]{1,0:T(8,128)}', space=vmem, size = 0x10000, scoped, tag = 'scratch operand']
  #allocation4 [shape = 'f32[128,32]{1,0:T(8,128)}', space=vmem, size = 0x10000, scoped, tag = 'scratch operand']
  %s0 = inlined_call_operand.vmem [shape: bf16[256,32], index: 0, kind: input, shape index: {}]
  %s1 = inlined_call_operand.vmem [shape: bf16[2,4,128,32], index: 1, kind: input, shape index: {}]
  %s2 = inlined_call_operand.vmem [shape: bf16[2,4,128,32], index: 2, kind: input, shape index: {}]
  %s3 = inlined_call_operand.vmem [shape: bf16[2,4,128,32], index: 3, kind: input, shape index: {}]
  %s4 = inlined_call_operand.vmem [shape: bf16[2,4,128,32], index: 4, kind: output, shape index: {}]
  %s5 = sld [smem:[#allocation0]]
  $region61: #{expire_span_transformer_xl_forward.12} parent=0
    _
  %s7 = ssub.s32 1, %s5
  %s8 = scalar_select 0, %s7, %s5
  loop: start=0, step=1, limit=10
  $region2: #{expire_span_transformer_xl_forward.12} parent=0 // loop_pre_header
    _
  $region3: #{expire_span_transformer_xl_forward.12} parent=0 // loop_header
    %s10 = sphi 0, %s14
    %p11 = scmp.ge.s32.totalorder %s10, 10
    %s17 = sphi 0, %s43
    %s18 = sphi 0, %s39
    %s19 = sphi 0, %s35
    %s20 = sphi 0, %s31
    %s21 = sphi 0, %s17
    %s22 = sphi 0, %s18
    %s23 = sphi 0, %s19
    %s24 = sphi 0, %s20
    %s25 = sphi 0, %s21
    %s26 = sphi 0, %s22
    %s27 = sphi 0, %s23
    %s28 = sphi 0, %s24
    %s44 = sphi 0, %s44
    %s46 = sphi 0, %s44
    %s47 = sphi 0, %s46
    %s61 = sphi 0, %s47
    %s71 = sphi 0, %s73
    %s74 = sphi 0, %s71
    %s75 = sphi 0, %s74
    %s91 = sphi 0, %s75
    %s105 = sphi 0, %s107
    %s108 = sphi 0, %s105
    %s109 = sphi 0, %s108
    %s125 = sphi 0, %s109
    %s139 = sphi 0, %s141
    %s142 = sphi 0, %s139
    %s143 = sphi 0, %s142
    %s159 = sphi 0, %s143
    %s169 = sphi 0, %s171
    %s172 = sphi 0, %s169
    %s173 = sphi 0, %s172
    %s189 = sphi 0, %s173
  $region4: #{expire_span_transformer_xl_forward.12} parent=0 // loop_header_branch
    %13 = sbr.rel (%p11) target = $region8
  $region5: #{expire_span_transformer_xl_forward.12} parent=0 // loop_body
    %s15 = ssub.s32 %s10, 1
    %s16 = ssub.s32 %s10, 2
    %s29 = sadd.s32 1, %s20
    %p30 = scmp.ge.s32.totalorder %s29, 1
    %s31 = scalar_select %p30, 0, %s29
    %s32 = sadd.s32 1, %s19
    %s33 = scalar_select %p30, %s32, %s19
    %p34 = scmp.ge.s32.totalorder %s33, 1
    %s35 = scalar_select %p34, 0, %s33
    %s36 = sadd.s32 1, %s18
    %s37 = scalar_select %p34, %s36, %s18
    %p38 = scmp.ge.s32.totalorder %s37, 4
    %s39 = scalar_select %p38, 0, %s37
    %s40 = sadd.s32 1, %s17
    %s41 = scalar_select %p38, %s40, %s17
    %p42 = scmp.ge.s32.totalorder %s41, 2
    %s43 = scalar_select %p42, 0, %s41
    %s45 = sadd.s32 %s44, 1
    %p48 = scmp.eq.s32.totalorder %s10, 7
    %p49 = scmp.ne.s32.totalorder %s44, %s46
    %p50 = scmp.eq.s32.totalorder %s10, 0
    %p51 = por %p49, %p50
    %p52 = scmp.ne.s32.totalorder %s44, %s46
    %p53 = scmp.eq.s32.totalorder %s15, 7
    %p54 = por %p52, %p53
    %p55 = scmp.ne.s32.totalorder %s46, %s47
    %p56 = scmp.eq.s32.totalorder %s15, 0
    %p57 = por %p55, %p56
    %p58 = scmp.ne.s32.totalorder %s46, %s47
    %p59 = scmp.eq.s32.totalorder %s16, 7
    %p60 = por %p58, %p59
    %p62 = scmp.ne.s32.totalorder %s47, %s61
    %p63 = scmp.eq.s32.totalorder %s16, 0
    %p64 = por %p62, %p63
    %s65 = ssub.s32 %s17, %s43
    %s66 = ssub.s32 %s18, %s39
    %s67 = sor.u32 %s65, %s66
    %s68 = ssub.s32 %s19, %s35
    %s69 = sor.u32 %s67, %s68
    %p70 = scmp.eq.s32.totalorder %s69, 0
    %s72 = sadd.s32 %s71, 1
    %s73 = scalar_select %p70, %s71, %s72
    %p76 = pneg %p70
    %p77 = scmp.eq.s32.totalorder %s10, 7
    %p78 = por %p76, %p77
    %p79 = scmp.ne.s32.totalorder %s71, %s74
    %p80 = scmp.eq.s32.totalorder %s10, 0
    %p81 = por %p79, %p80
    %p82 = scmp.ne.s32.totalorder %s71, %s74
    %p83 = scmp.eq.s32.totalorder %s15, 7
    %p84 = por %p82, %p83
    %p85 = scmp.ne.s32.totalorder %s74, %s75
    %p86 = scmp.eq.s32.totalorder %s15, 0
    %p87 = por %p85, %p86
    %p88 = scmp.ne.s32.totalorder %s74, %s75
    %p89 = scmp.eq.s32.totalorder %s16, 7
    %p90 = por %p88, %p89
    %p92 = scmp.ne.s32.totalorder %s75, %s91
    %p93 = scmp.eq.s32.totalorder %s16, 0
    %p94 = por %p92, %p93
    %p95 = scmp.lt.s32.totalorder %s20, %s19
    %s96 = scalar_select %p95, %s20, %s19
    %p97 = scmp.lt.s32.totalorder %s31, %s35
    %s98 = scalar_select %p97, %s31, %s35
    %s99 = ssub.s32 %s17, %s43
    %s100 = ssub.s32 %s18, %s39
    %s101 = sor.u32 %s99, %s100
    %s102 = ssub.s32 %s96, %s98
    %s103 = sor.u32 %s101, %s102
    %p104 = scmp.eq.s32.totalorder %s103, 0
    %s106 = sadd.s32 %s105, 1
    %s107 = scalar_select %p104, %s105, %s106
    %p110 = pneg %p104
    %p111 = scmp.eq.s32.totalorder %s10, 7
    %p112 = por %p110, %p111
    %p113 = scmp.ne.s32.totalorder %s105, %s108
    %p114 = scmp.eq.s32.totalorder %s10, 0
    %p115 = por %p113, %p114
    %p116 = scmp.ne.s32.totalorder %s105, %s108
    %p117 = scmp.eq.s32.totalorder %s15, 7
    %p118 = por %p116, %p117
    %p119 = scmp.ne.s32.totalorder %s108, %s109
    %p120 = scmp.eq.s32.totalorder %s15, 0
    %p121 = por %p119, %p120
    %p122 = scmp.ne.s32.totalorder %s108, %s109
    %p123 = scmp.eq.s32.totalorder %s16, 7
    %p124 = por %p122, %p123
    %p126 = scmp.ne.s32.totalorder %s109, %s125
    %p127 = scmp.eq.s32.totalorder %s16, 0
    %p128 = por %p126, %p127
    %p129 = scmp.lt.s32.totalorder %s20, %s19
    %s130 = scalar_select %p129, %s20, %s19
    %p131 = scmp.lt.s32.totalorder %s31, %s35
    %s132 = scalar_select %p131, %s31, %s35
    %s133 = ssub.s32 %s17, %s43
    %s134 = ssub.s32 %s18, %s39
    %s135 = sor.u32 %s133, %s134
    %s136 = ssub.s32 %s130, %s132
    %s137 = sor.u32 %s135, %s136
    %p138 = scmp.eq.s32.totalorder %s137, 0
    %s140 = sadd.s32 %s139, 1
    %s141 = scalar_select %p138, %s139, %s140
    %p144 = pneg %p138
    %p145 = scmp.eq.s32.totalorder %s10, 7
    %p146 = por %p144, %p145
    %p147 = scmp.ne.s32.totalorder %s139, %s142
    %p148 = scmp.eq.s32.totalorder %s10, 0
    %p149 = por %p147, %p148
    %p150 = scmp.ne.s32.totalorder %s139, %s142
    %p151 = scmp.eq.s32.totalorder %s15, 7
    %p152 = por %p150, %p151
    %p153 = scmp.ne.s32.totalorder %s142, %s143
    %p154 = scmp.eq.s32.totalorder %s15, 0
    %p155 = por %p153, %p154
    %p156 = scmp.ne.s32.totalorder %s142, %s143
    %p157 = scmp.eq.s32.totalorder %s16, 7
    %p158 = por %p156, %p157
    %p160 = scmp.ne.s32.totalorder %s143, %s159
    %p161 = scmp.eq.s32.totalorder %s16, 0
    %p162 = por %p160, %p161
    %s163 = ssub.s32 %s17, %s43
    %s164 = ssub.s32 %s18, %s39
    %s165 = sor.u32 %s163, %s164
    %s166 = ssub.s32 %s19, %s35
    %s167 = sor.u32 %s165, %s166
    %p168 = scmp.eq.s32.totalorder %s167, 0
    %s170 = sadd.s32 %s169, 1
    %s171 = scalar_select %p168, %s169, %s170
    %p174 = pneg %p168
    %p175 = scmp.eq.s32.totalorder %s10, 7
    %p176 = por %p174, %p175
    %p177 = scmp.ne.s32.totalorder %s169, %s172
    %p178 = scmp.eq.s32.totalorder %s10, 0
    %p179 = por %p177, %p178
    %p180 = scmp.ne.s32.totalorder %s169, %s172
    %p181 = scmp.eq.s32.totalorder %s15, 7
    %p182 = por %p180, %p181
    %p183 = scmp.ne.s32.totalorder %s172, %s173
    %p184 = scmp.eq.s32.totalorder %s15, 0
    %p185 = por %p183, %p184
    %p186 = scmp.ne.s32.totalorder %s172, %s173
    %p187 = scmp.eq.s32.totalorder %s16, 7
    %p188 = por %p186, %p187
    %p190 = scmp.ne.s32.totalorder %s173, %s189
    %p191 = scmp.eq.s32.totalorder %s16, 0
    %p192 = por %p190, %p191
    %p193 = scmp.le.s32.totalorder 1, %s10
    %p194 = scmp.lt.s32.totalorder %s10, 9
    %p195 = pnand %p193, %p194
    %p196 = pneg %p195
    // Predicated region
    $region9: #{expire_span_transformer_xl_forward.12} parent=5 // pred_check
      _
    $region10: #{expire_span_transformer_xl_forward.12} parent=5 // pred_check_branch
      %198 = sbr.rel (%p195) target = $region12
    $region11: #{expire_span_transformer_xl_forward.12} parent=5 // pred_region
      %s199 = ssub.s32 %s10, 1
      // Predicated region
      $region13: #{expire_span_transformer_xl_forward.12} parent=11 // pred_check
        %p200 = pneg %p57
      $region14: #{expire_span_transformer_xl_forward.12} parent=11 // pred_check_branch
        %202 = sbr.rel (%p200) target = $region16
      $region15: #{expire_span_transformer_xl_forward.12} parent=11 // pred_region
        _
      $region16: #{expire_span_transformer_xl_forward.12} parent=11 // pred_fallthru
        _
    $region12: #{expire_span_transformer_xl_forward.12} parent=5 // pred_fallthru
      _
    %p203 = scmp.lt.s32.totalorder %s10, 8
    // Predicated region
    $region17: #{expire_span_transformer_xl_forward.12} parent=5 // pred_check
      %p204 = pneg %p203
    $region18: #{expire_span_transformer_xl_forward.12} parent=5 // pred_check_branch
      %206 = sbr.rel (%p204) target = $region20
    $region19: #{expire_span_transformer_xl_forward.12} parent=5 // pred_region
      // Predicated region
      $region21: #{expire_span_transformer_xl_forward.12} parent=19 // pred_check
        %p207 = pneg %p81
      $region22: #{expire_span_transformer_xl_forward.12} parent=19 // pred_check_branch
        %209 = sbr.rel (%p207) target = $region24
      $region23: #{expire_span_transformer_xl_forward.12} parent=19 // pred_region
        %s210 = smul.u32 16, %s19
        %p211 = scmp.lt.s32.totalorder %s17, 1
        %s212 = scalar_select %p211, %s17, 1
        %p213 = scmp.lt.s32.totalorder %s18, 3
        %s214 = scalar_select %p213, %s18, 3
        %p215 = scmp.lt.s32.totalorder %s210, 15
        %s216 = scalar_select %p215, %s210, 15
        %s217 = smul.addr %s214, 16
        %s218 = sadd.s32 %s216, %s217
        %s219 = smul.addr %s212, 64
        %s220 = sadd.s32 %s218, %s219
        %s221 = smul.addr %s220, 4
        %s222 = scalar_lea.vmem %s1, %s221
        %s223 = smul.u32 16, %s19
      $region24: #{expire_span_transformer_xl_forward.12} parent=19 // pred_fallthru
        _
      // Predicated region
      $region25: #{expire_span_transformer_xl_forward.12} parent=19 // pred_check
        %p224 = pneg %p115
      $region26: #{expire_span_transformer_xl_forward.12} parent=19 // pred_check_branch
        %226 = sbr.rel (%p224) target = $region28
      $region27: #{expire_span_transformer_xl_forward.12} parent=19 // pred_region
        %p227 = scmp.lt.s32.totalorder %s20, %s19
        %s228 = scalar_select %p227, %s20, %s19
        %s229 = smul.u32 16, %s228
        %p230 = scmp.lt.s32.totalorder %s17, 1
        %s231 = scalar_select %p230, %s17, 1
        %p232 = scmp.lt.s32.totalorder %s18, 3
        %s233 = scalar_select %p232, %s18, 3
        %p234 = scmp.lt.s32.totalorder %s229, 15
        %s235 = scalar_select %p234, %s229, 15
        %s236 = smul.addr %s233, 16
        %s237 = sadd.s32 %s235, %s236
        %s238 = smul.addr %s231, 64
        %s239 = sadd.s32 %s237, %s238
        %s240 = smul.addr %s239, 4
        %s241 = scalar_lea.vmem %s2, %s240
        %p242 = scmp.lt.s32.totalorder %s20, %s19
        %s243 = scalar_select %p242, %s20, %s19
        %s244 = smul.u32 16, %s243
      $region28: #{expire_span_transformer_xl_forward.12} parent=19 // pred_fallthru
        _
      // Predicated region
      $region29: #{expire_span_transformer_xl_forward.12} parent=19 // pred_check
        %p245 = pneg %p149
      $region30: #{expire_span_transformer_xl_forward.12} parent=19 // pred_check_branch
        %247 = sbr.rel (%p245) target = $region32
      $region31: #{expire_span_transformer_xl_forward.12} parent=19 // pred_region
        %p248 = scmp.lt.s32.totalorder %s20, %s19
        %s249 = scalar_select %p248, %s20, %s19
        %s250 = smul.u32 16, %s249
        %p251 = scmp.lt.s32.totalorder %s17, 1
        %s252 = scalar_select %p251, %s17, 1
        %p253 = scmp.lt.s32.totalorder %s18, 3
        %s254 = scalar_select %p253, %s18, 3
        %p255 = scmp.lt.s32.totalorder %s250, 15
        %s256 = scalar_select %p255, %s250, 15
        %s257 = smul.addr %s254, 16
        %s258 = sadd.s32 %s256, %s257
        %s259 = smul.addr %s252, 64
        %s260 = sadd.s32 %s258, %s259
        %s261 = smul.addr %s260, 4
        %s262 = scalar_lea.vmem %s3, %s261
        %p263 = scmp.lt.s32.totalorder %s20, %s19
        %s264 = scalar_select %p263, %s20, %s19
        %s265 = smul.u32 16, %s264
      $region32: #{expire_span_transformer_xl_forward.12} parent=19 // pred_fallthru
        _
    $region20: #{expire_span_transformer_xl_forward.12} parent=5 // pred_fallthru
      _
    %p266 = scmp.le.s32.totalorder 1, %s10
    %p267 = scmp.lt.s32.totalorder %s10, 9
    %p268 = pnand %p266, %p267
    %p269 = pneg %p268
    // Predicated region
    $region33: #{expire_span_transformer_xl_forward.12} parent=5 // pred_check
      _
    $region34: #{expire_span_transformer_xl_forward.12} parent=5 // pred_check_branch
      %271 = sbr.rel (%p268) target = $region36
    $region35: #{expire_span_transformer_xl_forward.12} parent=5 // pred_region
      %s272 = ssub.s32 %s10, 1
      %p273 = pneg %p57
      %p274 = pneg %p54
      %s275 = smul.u32 16, %s23
      %p276 = scmp.lt.s32.totalorder %s21, 1
      %s277 = scalar_select %p276, %s21, 1
      %p278 = scmp.lt.s32.totalorder %s22, 3
      %s279 = scalar_select %p278, %s22, 3
      %p280 = scmp.lt.s32.totalorder %s275, 15
      %s281 = scalar_select %p280, %s275, 15
      %s282 = smul.addr %s279, 16
      %s283 = sadd.s32 %s281, %s282
      %s284 = smul.addr %s277, 64
      %s285 = sadd.s32 %s283, %s284
      %s286 = smul.addr %s285, 4
      %s287 = scalar_lea.vmem %s1, %s286
      %p288 = pneg %p87
      %p289 = pneg %p84
      %p290 = scmp.lt.s32.totalorder %s24, %s23
      %s291 = scalar_select %p290, %s24, %s23
      %s292 = smul.u32 16, %s291
      %p293 = scmp.lt.s32.totalorder %s21, 1
      %s294 = scalar_select %p293, %s21, 1
      %p295 = scmp.lt.s32.totalorder %s22, 3
      %s296 = scalar_select %p295, %s22, 3
      %p297 = scmp.lt.s32.totalorder %s292, 15
      %s298 = scalar_select %p297, %s292, 15
      %s299 = smul.addr %s296, 16
      %s300 = sadd.s32 %s298, %s299
      %s301 = smul.addr %s294, 64
      %s302 = sadd.s32 %s300, %s301
      %s303 = smul.addr %s302, 4
      %s304 = scalar_lea.vmem %s2, %s303
      %p305 = pneg %p121
      %p306 = pneg %p118
      %p307 = scmp.lt.s32.totalorder %s24, %s23
      %s308 = scalar_select %p307, %s24, %s23
      %s309 = smul.u32 16, %s308
      %p310 = scmp.lt.s32.totalorder %s21, 1
      %s311 = scalar_select %p310, %s21, 1
      %p312 = scmp.lt.s32.totalorder %s22, 3
      %s313 = scalar_select %p312, %s22, 3
      %p314 = scmp.lt.s32.totalorder %s309, 15
      %s315 = scalar_select %p314, %s309, 15
      %s316 = smul.addr %s313, 16
      %s317 = sadd.s32 %s315, %s316
      %s318 = smul.addr %s311, 64
      %s319 = sadd.s32 %s317, %s318
      %s320 = smul.addr %s319, 4
      %s321 = scalar_lea.vmem %s3, %s320
      %p322 = pneg %p155
      %p323 = pneg %p152
      %p324 = pneg %p185
      %p325 = pneg %p182
      %s326 = smul.u32 16, %s23
      %p327 = scmp.lt.s32.totalorder %s21, 1
      %s328 = scalar_select %p327, %s21, 1
      %p329 = scmp.lt.s32.totalorder %s22, 3
      %s330 = scalar_select %p329, %s22, 3
      %p331 = scmp.lt.s32.totalorder %s326, 15
      %s332 = scalar_select %p331, %s326, 15
      %s333 = smul.addr %s330, 16
      %s334 = sadd.s32 %s332, %s333
      %s335 = smul.addr %s328, 64
      %s336 = sadd.s32 %s334, %s335
      %s337 = smul.addr %s336, 4
      %s338 = scalar_lea.vmem %s4, %s337
      %s339 = smul.u32 16, %s23
      %p340 = scmp.lt.s32.totalorder %s21, 1
      %s341 = scalar_select %p340, %s21, 1
      %p342 = scmp.lt.s32.totalorder %s22, 3
      %s343 = scalar_select %p342, %s22, 3
      %p344 = scmp.lt.s32.totalorder %s339, 15
      %s345 = scalar_select %p344, %s339, 15
      %s346 = smul.addr %s343, 16
      %s347 = sadd.s32 %s345, %s346
      %s348 = smul.addr %s341, 64
      %s349 = sadd.s32 %s347, %s348
      %s350 = smul.addr %s349, 4
      %s351 = scalar_lea.vmem %s1, %s350
      %s352 = smul.u32 16, %s23
      %p353 = scmp.lt.s32.totalorder %s24, %s23
      %s354 = scalar_select %p353, %s24, %s23
      %s355 = smul.u32 16, %s354
      %p356 = scmp.lt.s32.totalorder %s21, 1
      %s357 = scalar_select %p356, %s21, 1
      %p358 = scmp.lt.s32.totalorder %s22, 3
      %s359 = scalar_select %p358, %s22, 3
      %p360 = scmp.lt.s32.totalorder %s355, 15
      %s361 = scalar_select %p360, %s355, 15
      %s362 = smul.addr %s359, 16
      %s363 = sadd.s32 %s361, %s362
      %s364 = smul.addr %s357, 64
      %s365 = sadd.s32 %s363, %s364
      %s366 = smul.addr %s365, 4
      %s367 = scalar_lea.vmem %s2, %s366
      %p368 = scmp.lt.s32.totalorder %s24, %s23
      %s369 = scalar_select %p368, %s24, %s23
      %s370 = smul.u32 16, %s369
      %p371 = scmp.lt.s32.totalorder %s24, %s23
      %s372 = scalar_select %p371, %s24, %s23
      %s373 = smul.u32 16, %s372
      %p374 = scmp.lt.s32.totalorder %s21, 1
      %s375 = scalar_select %p374, %s21, 1
      %p376 = scmp.lt.s32.totalorder %s22, 3
      %s377 = scalar_select %p376, %s22, 3
      %p378 = scmp.lt.s32.totalorder %s373, 15
      %s379 = scalar_select %p378, %s373, 15
      %s380 = smul.addr %s377, 16
      %s381 = sadd.s32 %s379, %s380
      %s382 = smul.addr %s375, 64
      %s383 = sadd.s32 %s381, %s382
      %s384 = smul.addr %s383, 4
      %s385 = scalar_lea.vmem %s3, %s384
      %p386 = scmp.lt.s32.totalorder %s24, %s23
      %s387 = scalar_select %p386, %s24, %s23
      %s388 = smul.u32 16, %s387
      %s389 = smul.u32 16, %s23
      %p390 = scmp.lt.s32.totalorder %s21, 1
      %s391 = scalar_select %p390, %s21, 1
      %p392 = scmp.lt.s32.totalorder %s22, 3
      %s393 = scalar_select %p392, %s22, 3
      %p394 = scmp.lt.s32.totalorder %s389, 15
      %s395 = scalar_select %p394, %s389, 15
      %s396 = smul.addr %s393, 16
      %s397 = sadd.s32 %s395, %s396
      %s398 = smul.addr %s391, 64
      %s399 = sadd.s32 %s397, %s398
      %s400 = smul.addr %s399, 4
      %s401 = scalar_lea.vmem %s4, %s400
      %s402 = smul.u32 16, %s23
      %p404 = scmp.le.s32.totalorder %s24, %s23
      // Predicated region
      $region37: #{expire_span_transformer_xl_forward.12} parent=35 // pred_check
        %p405 = pneg %p404
      $region38: #{expire_span_transformer_xl_forward.12} parent=35 // pred_check_branch
        %407 = sbr.rel (%p405) target = $region40
      $region39: #{expire_span_transformer_xl_forward.12} parent=35 // pred_region
        %p408 = scmp.eq.s32.totalorder %s24, 0
        // Predicated region
        $region41: #{expire_span_transformer_xl_forward.12} parent=39 // pred_check
          %p409 = pneg %p408
        $region42: #{expire_span_transformer_xl_forward.12} parent=39 // pred_check_branch
          %411 = sbr.rel (%p409) target = $region44
        $region43: #{expire_span_transformer_xl_forward.12} parent=39 // pred_region
          %vm412 = vcmask 7168
          %413 = vst.msk [vmem:[#allocation2] sm:$0xff] %vm412, -1e+30
          %414 = vst.msk [vmem:[#allocation2 + $0x8] sm:$0xff] %vm412, -1e+30
          %415 = vst.msk [vmem:[#allocation2 + $0x10] sm:$0xff] %vm412, -1e+30
          %416 = vst.msk [vmem:[#allocation2 + $0x18] sm:$0xff] %vm412, -1e+30
          %417 = vst.msk [vmem:[#allocation2 + $0x20] sm:$0xff] %vm412, -1e+30
          %418 = vst.msk [vmem:[#allocation2 + $0x28] sm:$0xff] %vm412, -1e+30
          %419 = vst.msk [vmem:[#allocation2 + $0x30] sm:$0xff] %vm412, -1e+30
          %420 = vst.msk [vmem:[#allocation2 + $0x38] sm:$0xff] %vm412, -1e+30
          %421 = vst.msk [vmem:[#allocation2 + $0x40] sm:$0xff] %vm412, -1e+30
          %422 = vst.msk [vmem:[#allocation2 + $0x48] sm:$0xff] %vm412, -1e+30
          %423 = vst.msk [vmem:[#allocation2 + $0x50] sm:$0xff] %vm412, -1e+30
          %424 = vst.msk [vmem:[#allocation2 + $0x58] sm:$0xff] %vm412, -1e+30
          %425 = vst.msk [vmem:[#allocation2 + $0x60] sm:$0xff] %vm412, -1e+30
          %426 = vst.msk [vmem:[#allocation2 + $0x68] sm:$0xff] %vm412, -1e+30
          %427 = vst.msk [vmem:[#allocation2 + $0x70] sm:$0xff] %vm412, -1e+30
          %428 = vst.msk [vmem:[#allocation2 + $0x78] sm:$0xff] %vm412, -1e+30
          %429 = vst.msk [vmem:[#allocation3] sm:$0xff] %vm412, 0.0
          %430 = vst.msk [vmem:[#allocation3 + $0x8] sm:$0xff] %vm412, 0.0
          %431 = vst.msk [vmem:[#allocation3 + $0x10] sm:$0xff] %vm412, 0.0
          %432 = vst.msk [vmem:[#allocation3 + $0x18] sm:$0xff] %vm412, 0.0
          %433 = vst.msk [vmem:[#allocation3 + $0x20] sm:$0xff] %vm412, 0.0
          %434 = vst.msk [vmem:[#allocation3 + $0x28] sm:$0xff] %vm412, 0.0
          %435 = vst.msk [vmem:[#allocation3 + $0x30] sm:$0xff] %vm412, 0.0
          %436 = vst.msk [vmem:[#allocation3 + $0x38] sm:$0xff] %vm412, 0.0
          %437 = vst.msk [vmem:[#allocation3 + $0x40] sm:$0xff] %vm412, 0.0
          %438 = vst.msk [vmem:[#allocation3 + $0x48] sm:$0xff] %vm412, 0.0
          %439 = vst.msk [vmem:[#allocation3 + $0x50] sm:$0xff] %vm412, 0.0
          %440 = vst.msk [vmem:[#allocation3 + $0x58] sm:$0xff] %vm412, 0.0
          %441 = vst.msk [vmem:[#allocation3 + $0x60] sm:$0xff] %vm412, 0.0
          %442 = vst.msk [vmem:[#allocation3 + $0x68] sm:$0xff] %vm412, 0.0
          %443 = vst.msk [vmem:[#allocation3 + $0x70] sm:$0xff] %vm412, 0.0
          %444 = vst.msk [vmem:[#allocation3 + $0x78] sm:$0xff] %vm412, 0.0
          %vm445 = vcmask 261120
          %446 = vst.msk [vmem:[#allocation4] sm:$0xff] %vm445, 0.0
          %447 = vst.msk [vmem:[#allocation4 + $0x8] sm:$0xff] %vm445, 0.0
          %448 = vst.msk [vmem:[#allocation4 + $0x10] sm:$0xff] %vm445, 0.0
          %449 = vst.msk [vmem:[#allocation4 + $0x18] sm:$0xff] %vm445, 0.0
          %450 = vst.msk [vmem:[#allocation4 + $0x20] sm:$0xff] %vm445, 0.0
          %451 = vst.msk [vmem:[#allocation4 + $0x28] sm:$0xff] %vm445, 0.0
          %452 = vst.msk [vmem:[#allocation4 + $0x30] sm:$0xff] %vm445, 0.0
          %453 = vst.msk [vmem:[#allocation4 + $0x38] sm:$0xff] %vm445, 0.0
          %454 = vst.msk [vmem:[#allocation4 + $0x40] sm:$0xff] %vm445, 0.0
          %455 = vst.msk [vmem:[#allocation4 + $0x48] sm:$0xff] %vm445, 0.0
          %456 = vst.msk [vmem:[#allocation4 + $0x50] sm:$0xff] %vm445, 0.0
          %457 = vst.msk [vmem:[#allocation4 + $0x58] sm:$0xff] %vm445, 0.0
          %458 = vst.msk [vmem:[#allocation4 + $0x60] sm:$0xff] %vm445, 0.0
          %459 = vst.msk [vmem:[#allocation4 + $0x68] sm:$0xff] %vm445, 0.0
          %460 = vst.msk [vmem:[#allocation4 + $0x70] sm:$0xff] %vm445, 0.0
          %461 = vst.msk [vmem:[#allocation4 + $0x78] sm:$0xff] %vm445, 0.0
        $region44: #{expire_span_transformer_xl_forward.12} parent=39 // pred_fallthru
          _
        %v462 = vld [vmem:[%s351] sm:$0xf]
        %v463 = vld [vmem:[%s351 + $0x4] sm:$0xf]
        %v464 = vld [vmem:[%s351 + $0x8] sm:$0xf]
        %v465 = vld [vmem:[%s351 + $0xc] sm:$0xf]
        %v466 = vld [vmem:[%s351 + $0x10] sm:$0xf]
        %v467 = vld [vmem:[%s351 + $0x14] sm:$0xf]
        %v468 = vld [vmem:[%s351 + $0x18] sm:$0xf]
        %v469 = vld [vmem:[%s351 + $0x1c] sm:$0xf]
        %v470 = vld [vmem:[%s351 + $0x20] sm:$0xf]
        %v471 = vld [vmem:[%s351 + $0x24] sm:$0xf]
        %v472 = vld [vmem:[%s351 + $0x28] sm:$0xf]
        %v473 = vld [vmem:[%s351 + $0x2c] sm:$0xf]
        %v474 = vld [vmem:[%s351 + $0x30] sm:$0xf]
        %v475 = vld [vmem:[%s351 + $0x34] sm:$0xf]
        %v476 = vld [vmem:[%s351 + $0x38] sm:$0xf]
        %v477 = vld [vmem:[%s351 + $0x3c] sm:$0xf]
        %s478 = ssub.s32 %s24, %s23
        %s479 = ssub.s32 %s478, 1
        %s480 = smul.u32 %s479, 128
        %s481 = sadd.s32 %s480, 128
        %s482 = sshra.s32 %s481, 3
        %s483 = sand.u32 %s481, 7
        %s484 = smul.addr %s482, 4
        %s485 = scalar_lea.vmem %s0, %s484
        %v486 = vld [vmem:[%s485] sm:$0xf]
        %v487 = vld [vmem:[%s485 + $0x4] sm:$0xf]
        %v488 = vld [vmem:[%s485 + $0x8] sm:$0xf]
        %v489 = vld [vmem:[%s485 + $0xc] sm:$0xf]
        %v490 = vld [vmem:[%s485 + $0x10] sm:$0xf]
        %v491 = vld [vmem:[%s485 + $0x14] sm:$0xf]
        %v492 = vld [vmem:[%s485 + $0x18] sm:$0xf]
        %v493 = vld [vmem:[%s485 + $0x1c] sm:$0xf]
        %v494 = vld [vmem:[%s485 + $0x20] sm:$0xf]
        %v495 = vld [vmem:[%s485 + $0x24] sm:$0xf]
        %v496 = vld [vmem:[%s485 + $0x28] sm:$0xf]
        %v497 = vld [vmem:[%s485 + $0x2c] sm:$0xf]
        %v498 = vld [vmem:[%s485 + $0x30] sm:$0xf]
        %v499 = vld [vmem:[%s485 + $0x34] sm:$0xf]
        %v500 = vld [vmem:[%s485 + $0x38] sm:$0xf]
        %v501 = vld [vmem:[%s485 + $0x3c] sm:$0xf]
        %v502 = vld [vmem:[%s485 + $0x40] sm:$0xf]
        %v503 = vld [vmem:[%s485 + $0x44] sm:$0xf]
        %v504 = vld [vmem:[%s485 + $0x48] sm:$0xf]
        %v505 = vld [vmem:[%s485 + $0x4c] sm:$0xf]
        %v506 = vld [vmem:[%s485 + $0x50] sm:$0xf]
        %v507 = vld [vmem:[%s485 + $0x54] sm:$0xf]
        %v508 = vld [vmem:[%s485 + $0x58] sm:$0xf]
        %v509 = vld [vmem:[%s485 + $0x5c] sm:$0xf]
        %v510 = vld [vmem:[%s485 + $0x60] sm:$0xf]
        %v511 = vld [vmem:[%s485 + $0x64] sm:$0xf]
        %v512 = vld [vmem:[%s485 + $0x68] sm:$0xf]
        %v513 = vld [vmem:[%s485 + $0x6c] sm:$0xf]
        %v514 = vld [vmem:[%s485 + $0x70] sm:$0xf]
        %v515 = vld [vmem:[%s485 + $0x74] sm:$0xf]
        %v516 = vld [vmem:[%s485 + $0x78] sm:$0xf]
        %v517 = vld [vmem:[%s485 + $0x7c] sm:$0xf]
        %v518 = vld [vmem:[%s367] sm:$0xf]
        %v519 = vld [vmem:[%s367 + $0x4] sm:$0xf]
        %v520 = vld [vmem:[%s367 + $0x8] sm:$0xf]
        %v521 = vld [vmem:[%s367 + $0xc] sm:$0xf]
        %v522 = vld [vmem:[%s367 + $0x10] sm:$0xf]
        %v523 = vld [vmem:[%s367 + $0x14] sm:$0xf]
        %v524 = vld [vmem:[%s367 + $0x18] sm:$0xf]
        %v525 = vld [vmem:[%s367 + $0x1c] sm:$0xf]
        %v526 = vld [vmem:[%s367 + $0x20] sm:$0xf]
        %v527 = vld [vmem:[%s367 + $0x24] sm:$0xf]
        %v528 = vld [vmem:[%s367 + $0x28] sm:$0xf]
        %v529 = vld [vmem:[%s367 + $0x2c] sm:$0xf]
        %v530 = vld [vmem:[%s367 + $0x30] sm:$0xf]
        %v531 = vld [vmem:[%s367 + $0x34] sm:$0xf]
        %v532 = vld [vmem:[%s367 + $0x38] sm:$0xf]
        %v533 = vld [vmem:[%s367 + $0x3c] sm:$0xf]
        %v550 = vunpack.c.l.b16 %v518
        %v551 = vunpack.c.l.b16 %v519
        %v552 = vunpack.c.l.b16 %v520
        %v553 = vunpack.c.l.b16 %v521
        %v554 = vunpack.c.l.b16 %v522
        %v555 = vunpack.c.l.b16 %v523
        %v556 = vunpack.c.l.b16 %v524
        %v557 = vunpack.c.l.b16 %v525
        %v558 = vunpack.c.l.b16 %v526
        %v559 = vunpack.c.l.b16 %v527
        %v560 = vunpack.c.l.b16 %v528
        %v561 = vunpack.c.l.b16 %v529
        %v562 = vunpack.c.l.b16 %v530
        %v563 = vunpack.c.l.b16 %v531
        %v564 = vunpack.c.l.b16 %v532
        %v565 = vunpack.c.l.b16 %v533
        %v566 = vpack.c.b16 %v551, %v550
        %v567 = vpack.c.b16 %v553, %v552
        %v568 = vpack.c.b16 %v555, %v554
        %v569 = vpack.c.b16 %v557, %v556
        %v570 = vpack.c.b16 %v559, %v558
        %v571 = vpack.c.b16 %v561, %v560
        %v572 = vpack.c.b16 %v563, %v562
        %v573 = vpack.c.b16 %v565, %v564
        %v606 = vunpack.c.l.b16 %v486
        %v607 = vunpack.c.l.b16 %v487
        %v608 = vunpack.c.l.b16 %v488
        %v609 = vunpack.c.l.b16 %v489
        %v610 = vunpack.c.l.b16 %v490
        %v611 = vunpack.c.l.b16 %v491
        %v612 = vunpack.c.l.b16 %v492
        %v613 = vunpack.c.l.b16 %v493
        %v614 = vunpack.c.l.b16 %v494
        %v615 = vunpack.c.l.b16 %v495
        %v616 = vunpack.c.l.b16 %v496
        %v617 = vunpack.c.l.b16 %v497
        %v618 = vunpack.c.l.b16 %v498
        %v619 = vunpack.c.l.b16 %v499
        %v620 = vunpack.c.l.b16 %v500
        %v621 = vunpack.c.l.b16 %v501
        %v622 = vunpack.c.l.b16 %v502
        %v623 = vunpack.c.l.b16 %v503
        %v624 = vunpack.c.l.b16 %v504
        %v625 = vunpack.c.l.b16 %v505
        %v626 = vunpack.c.l.b16 %v506
        %v627 = vunpack.c.l.b16 %v507
        %v628 = vunpack.c.l.b16 %v508
        %v629 = vunpack.c.l.b16 %v509
        %v630 = vunpack.c.l.b16 %v510
        %v631 = vunpack.c.l.b16 %v511
        %v632 = vunpack.c.l.b16 %v512
        %v633 = vunpack.c.l.b16 %v513
        %v634 = vunpack.c.l.b16 %v514
        %v635 = vunpack.c.l.b16 %v515
        %v636 = vunpack.c.l.b16 %v516
        %v637 = vunpack.c.l.b16 %v517
        %v638 = vpack.c.b16 %v607, %v606
        %v639 = vpack.c.b16 %v609, %v608
        %v640 = vpack.c.b16 %v611, %v610
        %v641 = vpack.c.b16 %v613, %v612
        %v642 = vpack.c.b16 %v615, %v614
        %v643 = vpack.c.b16 %v617, %v616
        %v644 = vpack.c.b16 %v619, %v618
        %v645 = vpack.c.b16 %v621, %v620
        %v646 = vpack.c.b16 %v623, %v622
        %v647 = vpack.c.b16 %v625, %v624
        %v648 = vpack.c.b16 %v627, %v626
        %v649 = vpack.c.b16 %v629, %v628
        %v650 = vpack.c.b16 %v631, %v630
        %v651 = vpack.c.b16 %v633, %v632
        %v652 = vpack.c.b16 %v635, %v634
        %v653 = vpack.c.b16 %v637, %v636
        %v670 = vunpack.c.l.b16 %v462
        %v671 = vunpack.c.l.b16 %v463
        %v672 = vunpack.c.l.b16 %v464
        %v673 = vunpack.c.l.b16 %v465
        %v674 = vunpack.c.l.b16 %v466
        %v675 = vunpack.c.l.b16 %v467
        %v676 = vunpack.c.l.b16 %v468
        %v677 = vunpack.c.l.b16 %v469
        %v678 = vunpack.c.l.b16 %v470
        %v679 = vunpack.c.l.b16 %v471
        %v680 = vunpack.c.l.b16 %v472
        %v681 = vunpack.c.l.b16 %v473
        %v682 = vunpack.c.l.b16 %v474
        %v683 = vunpack.c.l.b16 %v475
        %v684 = vunpack.c.l.b16 %v476
        %v685 = vunpack.c.l.b16 %v477
        %v686 = vpack.c.b16 %v671, %v670
        %v687 = vpack.c.b16 %v673, %v672
        %v688 = vpack.c.b16 %v675, %v674
        %v689 = vpack.c.b16 %v677, %v676
        %v690 = vpack.c.b16 %v679, %v678
        %v691 = vpack.c.b16 %v681, %v680
        %v692 = vpack.c.b16 %v683, %v682
        %v693 = vpack.c.b16 %v685, %v684
        %vm694 = vcmask 261120
        %v696 = vsel %vm694, %v686, 0
        %v699 = vsel %vm694, %v687, 0
        %v702 = vsel %vm694, %v688, 0
        %v705 = vsel %vm694, %v689, 0
        %v708 = vsel %vm694, %v690, 0
        %v711 = vsel %vm694, %v691, 0
        %v714 = vsel %vm694, %v692, 0
        %v717 = vsel %vm694, %v693, 0
        %v720 = vsel %vm694, %v566, 0
        %v723 = vsel %vm694, %v567, 0
        %v726 = vsel %vm694, %v568, 0
        %v729 = vsel %vm694, %v569, 0
        %v732 = vsel %vm694, %v570, 0
        %v735 = vsel %vm694, %v571, 0
        %v738 = vsel %vm694, %v572, 0
        %v741 = vsel %vm694, %v573, 0
        %v744 = vsel %vm694, %v638, 0
        %v747 = vsel %vm694, %v639, 0
        %v750 = vsel %vm694, %v640, 0
        %v753 = vsel %vm694, %v641, 0
        %v756 = vsel %vm694, %v642, 0
        %v759 = vsel %vm694, %v643, 0
        %v762 = vsel %vm694, %v644, 0
        %v765 = vsel %vm694, %v645, 0
        %v768 = vsel %vm694, %v646, 0
        %v771 = vsel %vm694, %v647, 0
        %v774 = vsel %vm694, %v648, 0
        %v777 = vsel %vm694, %v649, 0
        %v780 = vsel %vm694, %v650, 0
        %v783 = vsel %vm694, %v651, 0
        %v786 = vsel %vm694, %v652, 0
        %v789 = vsel %vm694, %v653, 0
        %791 = vmatprep.subr.bf16.mxu0 0
        %792 = vmatpush1.bf16.xpose.msra.mxu0 %v720
        %793 = vmatprep.subr.bf16.mxu0 0
        %794 = vmatpush1.bf16.xpose.msra.mxu0 %v723
        %795 = vmatprep.subr.bf16.mxu0 0
        %796 = vmatpush1.bf16.xpose.msra.mxu0 %v726
        %797 = vmatprep.subr.bf16.mxu0 0
        %798 = vmatpush1.bf16.xpose.msra.mxu0 %v729
        %799 = vmatprep.subr.bf16.mxu0 0
        %800 = vmatpush1.bf16.xpose.msra.mxu0 %v732
        %801 = vmatprep.subr.bf16.mxu0 0
        %802 = vmatpush1.bf16.xpose.msra.mxu0 %v735
        %803 = vmatprep.subr.bf16.mxu0 0
        %804 = vmatpush1.bf16.xpose.msra.mxu0 %v738
        %805 = vmatprep.subr.bf16.mxu0 0
        %806 = vmatpush1.bf16.xpose.msra.mxu0 %v741
        %807 = vmatprep.subr.bf16.mxu0 0
        %808 = vmatpush1.bf16.xpose.msra.mxu0 %v744
        %809 = vmatprep.subr.bf16.mxu0 0
        %810 = vmatpush1.bf16.xpose.msra.mxu0 %v747
        %811 = vmatprep.subr.bf16.mxu0 0
        %812 = vmatpush1.bf16.xpose.msra.mxu0 %v750
        %813 = vmatprep.subr.bf16.mxu0 0
        %814 = vmatpush1.bf16.xpose.msra.mxu0 %v753
        %815 = vmatprep.subr.bf16.mxu0 0
        %816 = vmatpush1.bf16.xpose.msra.mxu0 %v756
        %817 = vmatprep.subr.bf16.mxu0 0
        %818 = vmatpush1.bf16.xpose.msra.mxu0 %v759
        %819 = vmatprep.subr.bf16.mxu0 0
        %820 = vmatpush1.bf16.xpose.msra.mxu0 %v762
        %821 = vmatprep.subr.bf16.mxu0 0
        %822 = vmatpush1.bf16.xpose.msra.mxu0 %v765
        %823 = vmatprep.mubr.bf16.mxu0 0
        %824 = vmatmul.mubr.bf16.gmra.mrb[0].mxu0 %v696
        %v825 = vpop.f32.mrb[0].mxu0
        %v826 = vadd.f32 0.0, %v825
        %v827 = vpop.f32.mrb[0].mxu0
        %v828 = vadd.f32 0.0, %v827
        %v829 = vpop.f32.mrb[0].mxu0
        %v830 = vadd.f32 0.0, %v829
        %v831 = vpop.f32.mrb[0].mxu0
        %v832 = vadd.f32 0.0, %v831
        %833 = vmatprep.mubr.bf16.mxu0 0
        %834 = vmatmul.mubr.bf16.gmra.mrb[0].mxu0 %v699
        %v835 = vpop.f32.mrb[0].mxu0
        %v836 = vadd.f32 0.0, %v835
        %v837 = vpop.f32.mrb[0].mxu0
        %v838 = vadd.f32 0.0, %v837
        %v839 = vpop.f32.mrb[0].mxu0
        %v840 = vadd.f32 0.0, %v839
        %v841 = vpop.f32.mrb[0].mxu0
        %v842 = vadd.f32 0.0, %v841
        %843 = vmatprep.mubr.bf16.mxu0 0
        %844 = vmatmul.mubr.bf16.gmra.mrb[0].mxu0 %v702
        %v845 = vpop.f32.mrb[0].mxu0
        %v846 = vadd.f32 0.0, %v845
        %v847 = vpop.f32.mrb[0].mxu0
        %v848 = vadd.f32 0.0, %v847
        %v849 = vpop.f32.mrb[0].mxu0
        %v850 = vadd.f32 0.0, %v849
        %v851 = vpop.f32.mrb[0].mxu0
        %v852 = vadd.f32 0.0, %v851
        %853 = vmatprep.mubr.bf16.mxu0 0
        %854 = vmatmul.mubr.bf16.gmra.mrb[0].mxu0 %v705
        %v855 = vpop.f32.mrb[0].mxu0
        %v856 = vadd.f32 0.0, %v855
        %v857 = vpop.f32.mrb[0].mxu0
        %v858 = vadd.f32 0.0, %v857
        %v859 = vpop.f32.mrb[0].mxu0
        %v860 = vadd.f32 0.0, %v859
        %v861 = vpop.f32.mrb[0].mxu0
        %v862 = vadd.f32 0.0, %v861
        %863 = vmatprep.mubr.bf16.mxu0 0
        %864 = vmatmul.mubr.bf16.gmra.mrb[0].mxu0 %v708
        %v865 = vpop.f32.mrb[0].mxu0
        %v866 = vadd.f32 0.0, %v865
        %v867 = vpop.f32.mrb[0].mxu0
        %v868 = vadd.f32 0.0, %v867
        %v869 = vpop.f32.mrb[0].mxu0
        %v870 = vadd.f32 0.0, %v869
        %v871 = vpop.f32.mrb[0].mxu0
        %v872 = vadd.f32 0.0, %v871
        %873 = vmatprep.mubr.bf16.mxu0 0
        %874 = vmatmul.mubr.bf16.gmra.mrb[0].mxu0 %v711
        %v875 = vpop.f32.mrb[0].mxu0
        %v876 = vadd.f32 0.0, %v875
        %v877 = vpop.f32.mrb[0].mxu0
        %v878 = vadd.f32 0.0, %v877
        %v879 = vpop.f32.mrb[0].mxu0
        %v880 = vadd.f32 0.0, %v879
        %v881 = vpop.f32.mrb[0].mxu0
        %v882 = vadd.f32 0.0, %v881
        %883 = vmatprep.mubr.bf16.mxu0 0
        %884 = vmatmul.mubr.bf16.gmra.mrb[0].mxu0 %v714
        %v885 = vpop.f32.mrb[0].mxu0
        %v886 = vadd.f32 0.0, %v885
        %v887 = vpop.f32.mrb[0].mxu0
        %v888 = vadd.f32 0.0, %v887
        %v889 = vpop.f32.mrb[0].mxu0
        %v890 = vadd.f32 0.0, %v889
        %v891 = vpop.f32.mrb[0].mxu0
        %v892 = vadd.f32 0.0, %v891
        %893 = vmatprep.mubr.bf16.mxu0 0
        %894 = vmatmul.mubr.bf16.gmra.mrb[0].mxu0 %v717
        %v895 = vpop.f32.mrb[0].mxu0
        %v896 = vadd.f32 0.0, %v895
        %v897 = vpop.f32.mrb[0].mxu0
        %v898 = vadd.f32 0.0, %v897
        %v899 = vpop.f32.mrb[0].mxu0
        %v900 = vadd.f32 0.0, %v899
        %v901 = vpop.f32.mrb[0].mxu0
        %v902 = vadd.f32 0.0, %v901
        %903 = vdwg.mxu0
        %904 = vmatprep.subr.bf16.mxu0 0
        %905 = vmatpush1.bf16.xpose.msra.mxu0 %v768
        %906 = vmatprep.subr.bf16.mxu0 0
        %907 = vmatpush1.bf16.xpose.msra.mxu0 %v771
        %908 = vmatprep.subr.bf16.mxu0 0
        %909 = vmatpush1.bf16.xpose.msra.mxu0 %v774
        %910 = vmatprep.subr.bf16.mxu0 0
        %911 = vmatpush1.bf16.xpose.msra.mxu0 %v777
        %912 = vmatprep.subr.bf16.mxu0 0
        %913 = vmatpush1.bf16.xpose.msra.mxu0 %v780
        %914 = vmatprep.subr.bf16.mxu0 0
        %915 = vmatpush1.bf16.xpose.msra.mxu0 %v783
        %916 = vmatprep.subr.bf16.mxu0 0
        %917 = vmatpush1.bf16.xpose.msra.mxu0 %v786
        %918 = vmatprep.subr.bf16.mxu0 0
        %919 = vmatpush1.bf16.xpose.msra.mxu0 %v789
        %920 = vmatprep.subr.bf16.mxu0 0
        %921 = vmatpush1.bf16.xpose.msra.mxu0 0
        %922 = vmatprep.subr.bf16.mxu0 0
        %923 = vmatpush1.bf16.xpose.msra.mxu0 0
        %924 = vmatprep.subr.bf16.mxu0 0
        %925 = vmatpush1.bf16.xpose.msra.mxu0 0
        %926 = vmatprep.subr.bf16.mxu0 0
        %927 = vmatpush1.bf16.xpose.msra.mxu0 0
        %928 = vmatprep.subr.bf16.mxu0 0
        %929 = vmatpush1.bf16.xpose.msra.mxu0 0
        %930 = vmatprep.subr.bf16.mxu0 0
        %931 = vmatpush1.bf16.xpose.msra.mxu0 0
        %932 = vmatprep.subr.bf16.mxu0 0
        %933 = vmatpush1.bf16.xpose.msra.mxu0 0
        %934 = vmatprep.subr.bf16.mxu0 0
        %935 = vmatpush1.bf16.xpose.msra.mxu0 0
        %936 = vmatprep.mubr.bf16.mxu0 0
        %937 = vmatmul.mubr.bf16.gmra.mrb[0].mxu0 %v696
        %v938 = vpop.f32.mrb[0].mxu0
        %v939 = vadd.f32 0.0, %v938
        %v940 = vpop.f32.mrb[0].mxu0
        %v941 = vpop.f32.mrb[0].mxu0
        %v942 = vadd.f32 0.0, %v941
        %v943 = vpop.f32.mrb[0].mxu0
        %944 = vmatprep.mubr.bf16.mxu0 0
        %945 = vmatmul.mubr.bf16.gmra.mrb[0].mxu0 %v699
        %v946 = vpop.f32.mrb[0].mxu0
        %v947 = vadd.f32 0.0, %v946
        %v948 = vpop.f32.mrb[0].mxu0
        %v949 = vpop.f32.mrb[0].mxu0
        %v950 = vadd.f32 0.0, %v949
        %v951 = vpop.f32.mrb[0].mxu0
        %952 = vmatprep.mubr.bf16.mxu0 0
        %953 = vmatmul.mubr.bf16.gmra.mrb[0].mxu0 %v702
        %v954 = vpop.f32.mrb[0].mxu0
        %v955 = vadd.f32 0.0, %v954
        %v956 = vpop.f32.mrb[0].mxu0
        %v957 = vpop.f32.mrb[0].mxu0
        %v958 = vadd.f32 0.0, %v957
        %v959 = vpop.f32.mrb[0].mxu0
        %960 = vmatprep.mubr.bf16.mxu0 0
        %961 = vmatmul.mubr.bf16.gmra.mrb[0].mxu0 %v705
        %v962 = vpop.f32.mrb[0].mxu0
        %v963 = vadd.f32 0.0, %v962
        %v964 = vpop.f32.mrb[0].mxu0
        %v965 = vpop.f32.mrb[0].mxu0
        %v966 = vadd.f32 0.0, %v965
        %v967 = vpop.f32.mrb[0].mxu0
        %968 = vmatprep.mubr.bf16.mxu0 0
        %969 = vmatmul.mubr.bf16.gmra.mrb[0].mxu0 %v708
        %v970 = vpop.f32.mrb[0].mxu0
        %v971 = vadd.f32 0.0, %v970
        %v972 = vpop.f32.mrb[0].mxu0
        %v973 = vpop.f32.mrb[0].mxu0
        %v974 = vadd.f32 0.0, %v973
        %v975 = vpop.f32.mrb[0].mxu0
        %976 = vmatprep.mubr.bf16.mxu0 0
        %977 = vmatmul.mubr.bf16.gmra.mrb[0].mxu0 %v711
        %v978 = vpop.f32.mrb[0].mxu0
        %v979 = vadd.f32 0.0, %v978
        %v980 = vpop.f32.mrb[0].mxu0
        %v981 = vpop.f32.mrb[0].mxu0
        %v982 = vadd.f32 0.0, %v981
        %v983 = vpop.f32.mrb[0].mxu0
        %984 = vmatprep.mubr.bf16.mxu0 0
        %985 = vmatmul.mubr.bf16.gmra.mrb[0].mxu0 %v714
        %v986 = vpop.f32.mrb[0].mxu0
        %v987 = vadd.f32 0.0, %v986
        %v988 = vpop.f32.mrb[0].mxu0
        %v989 = vpop.f32.mrb[0].mxu0
        %v990 = vadd.f32 0.0, %v989
        %v991 = vpop.f32.mrb[0].mxu0
        %992 = vmatprep.mubr.bf16.mxu0 0
        %993 = vmatmul.mubr.bf16.gmra.mrb[0].mxu0 %v717
        %v994 = vpop.f32.mrb[0].mxu0
        %v995 = vadd.f32 0.0, %v994
        %v996 = vpop.f32.mrb[0].mxu0
        %v997 = vpop.f32.mrb[0].mxu0
        %v998 = vadd.f32 0.0, %v997
        %v999 = vpop.f32.mrb[0].mxu0
        %1000 = vdwg.mxu0
        %s1002 = sor.u32 256, 1
        %1003 = vrot.lane.b32.xlu0 %v828, %s1002
        %v1004 = vpop.permute.xlu0 %1003
        %s1006 = sor.u32 256, 1
        %1007 = vrot.lane.b32.xlu0 %v939, %s1006
        %v1008 = vpop.permute.xlu0 %1007
        %v1009 = vlaneseq
        %v1010 = vshrl.u32 %v1009, 7
        %v1011 = vadd.s32 %v1010, 1
        %v1012 = vlaneseq
        %v1013 = vand.u32 %v1012, 127
        %vm1014 = vcmp.lt.s32.totalorder %v1013, %v1011
        %v1015 = vsel %vm1014, %v1004, %v1008
        %s1017 = sor.u32 256, 9
        %1018 = vrot.lane.b32.xlu0 %v832, %s1017
        %v1019 = vpop.permute.xlu0 %1018
        %s1021 = sor.u32 256, 9
        %1022 = vrot.lane.b32.xlu0 %v942, %s1021
        %v1023 = vpop.permute.xlu0 %1022
        %v1024 = vadd.s32 %v1010, 9
        %vm1025 = vcmp.lt.s32.totalorder %v1013, %v1024
        %v1026 = vsel %vm1025, %v1019, %v1023
        %s1028 = sor.u32 256, 17
        %1029 = vrot.lane.b32.xlu0 %v838, %s1028
        %v1030 = vpop.permute.xlu0 %1029
        %s1032 = sor.u32 256, 17
        %1033 = vrot.lane.b32.xlu0 %v947, %s1032
        %v1034 = vpop.permute.xlu0 %1033
        %v1035 = vadd.s32 %v1010, 17
        %vm1036 = vcmp.lt.s32.totalorder %v1013, %v1035
        %v1037 = vsel %vm1036, %v1030, %v1034
        %s1039 = sor.u32 256, 25
        %1040 = vrot.lane.b32.xlu0 %v842, %s1039
        %v1041 = vpop.permute.xlu0 %1040
        %s1043 = sor.u32 256, 25
        %1044 = vrot.lane.b32.xlu0 %v950, %s1043
        %v1045 = vpop.permute.xlu0 %1044
        %v1046 = vadd.s32 %v1010, 25
        %vm1047 = vcmp.lt.s32.totalorder %v1013, %v1046
        %v1048 = vsel %vm1047, %v1041, %v1045
        %s1050 = sor.u32 256, 33
        %1051 = vrot.lane.b32.xlu0 %v848, %s1050
        %v1052 = vpop.permute.xlu0 %1051
        %s1054 = sor.u32 256, 33
        %1055 = vrot.lane.b32.xlu0 %v955, %s1054
        %v1056 = vpop.permute.xlu0 %1055
        %v1057 = vadd.s32 %v1010, 33
        %vm1058 = vcmp.lt.s32.totalorder %v1013, %v1057
        %v1059 = vsel %vm1058, %v1052, %v1056
        %s1061 = sor.u32 256, 41
        %1062 = vrot.lane.b32.xlu0 %v852, %s1061
        %v1063 = vpop.permute.xlu0 %1062
        %s1065 = sor.u32 256, 41
        %1066 = vrot.lane.b32.xlu0 %v958, %s1065
        %v1067 = vpop.permute.xlu0 %1066
        %v1068 = vadd.s32 %v1010, 41
        %vm1069 = vcmp.lt.s32.totalorder %v1013, %v1068
        %v1070 = vsel %vm1069, %v1063, %v1067
        %s1072 = sor.u32 256, 49
        %1073 = vrot.lane.b32.xlu0 %v858, %s1072
        %v1074 = vpop.permute.xlu0 %1073
        %s1076 = sor.u32 256, 49
        %1077 = vrot.lane.b32.xlu0 %v963, %s1076
        %v1078 = vpop.permute.xlu0 %1077
        %v1079 = vadd.s32 %v1010, 49
        %vm1080 = vcmp.lt.s32.totalorder %v1013, %v1079
        %v1081 = vsel %vm1080, %v1074, %v1078
        %s1083 = sor.u32 256, 57
        %1084 = vrot.lane.b32.xlu0 %v862, %s1083
        %v1085 = vpop.permute.xlu0 %1084
        %s1087 = sor.u32 256, 57
        %1088 = vrot.lane.b32.xlu0 %v966, %s1087
        %v1089 = vpop.permute.xlu0 %1088
        %v1090 = vadd.s32 %v1010, 57
        %vm1091 = vcmp.lt.s32.totalorder %v1013, %v1090
        %v1092 = vsel %vm1091, %v1085, %v1089
        %s1094 = sor.u32 256, 65
        %1095 = vrot.lane.b32.xlu0 %v868, %s1094
        %v1096 = vpop.permute.xlu0 %1095
        %s1098 = sor.u32 256, 65
        %1099 = vrot.lane.b32.xlu0 %v971, %s1098
        %v1100 = vpop.permute.xlu0 %1099
        %v1101 = vadd.s32 %v1010, 65
        %vm1102 = vcmp.lt.s32.totalorder %v1013, %v1101
        %v1103 = vsel %vm1102, %v1096, %v1100
        %s1105 = sor.u32 256, 73
        %1106 = vrot.lane.b32.xlu0 %v872, %s1105
        %v1107 = vpop.permute.xlu0 %1106
        %s1109 = sor.u32 256, 73
        %1110 = vrot.lane.b32.xlu0 %v974, %s1109
        %v1111 = vpop.permute.xlu0 %1110
        %v1112 = vadd.s32 %v1010, 73
        %vm1113 = vcmp.lt.s32.totalorder %v1013, %v1112
        %v1114 = vsel %vm1113, %v1107, %v1111
        %s1116 = sor.u32 256, 81
        %1117 = vrot.lane.b32.xlu0 %v878, %s1116
        %v1118 = vpop.permute.xlu0 %1117
        %s1120 = sor.u32 256, 81
        %1121 = vrot.lane.b32.xlu0 %v979, %s1120
        %v1122 = vpop.permute.xlu0 %1121
        %v1123 = vadd.s32 %v1010, 81
        %vm1124 = vcmp.lt.s32.totalorder %v1013, %v1123
        %v1125 = vsel %vm1124, %v1118, %v1122
        %s1127 = sor.u32 256, 89
        %1128 = vrot.lane.b32.xlu0 %v882, %s1127
        %v1129 = vpop.permute.xlu0 %1128
        %s1131 = sor.u32 256, 89
        %1132 = vrot.lane.b32.xlu0 %v982, %s1131
        %v1133 = vpop.permute.xlu0 %1132
        %v1134 = vadd.s32 %v1010, 89
        %vm1135 = vcmp.lt.s32.totalorder %v1013, %v1134
        %v1136 = vsel %vm1135, %v1129, %v1133
        %s1138 = sor.u32 256, 97
        %1139 = vrot.lane.b32.xlu0 %v888, %s1138
        %v1140 = vpop.permute.xlu0 %1139
        %s1142 = sor.u32 256, 97
        %1143 = vrot.lane.b32.xlu0 %v987, %s1142
        %v1144 = vpop.permute.xlu0 %1143
        %v1145 = vadd.s32 %v1010, 97
        %vm1146 = vcmp.lt.s32.totalorder %v1013, %v1145
        %v1147 = vsel %vm1146, %v1140, %v1144
        %s1149 = sor.u32 256, 105
        %1150 = vrot.lane.b32.xlu0 %v892, %s1149
        %v1151 = vpop.permute.xlu0 %1150
        %s1153 = sor.u32 256, 105
        %1154 = vrot.lane.b32.xlu0 %v990, %s1153
        %v1155 = vpop.permute.xlu0 %1154
        %v1156 = vadd.s32 %v1010, 105
        %vm1157 = vcmp.lt.s32.totalorder %v1013, %v1156
        %v1158 = vsel %vm1157, %v1151, %v1155
        %s1160 = sor.u32 256, 113
        %1161 = vrot.lane.b32.xlu0 %v898, %s1160
        %v1162 = vpop.permute.xlu0 %1161
        %s1164 = sor.u32 256, 113
        %1165 = vrot.lane.b32.xlu0 %v995, %s1164
        %v1166 = vpop.permute.xlu0 %1165
        %v1167 = vadd.s32 %v1010, 113
        %vm1168 = vcmp.lt.s32.totalorder %v1013, %v1167
        %v1169 = vsel %vm1168, %v1162, %v1166
        %s1171 = sor.u32 256, 121
        %1172 = vrot.lane.b32.xlu0 %v902, %s1171
        %v1173 = vpop.permute.xlu0 %1172
        %s1175 = sor.u32 256, 121
        %1176 = vrot.lane.b32.xlu0 %v998, %s1175
        %v1177 = vpop.permute.xlu0 %1176
        %v1178 = vadd.s32 %v1010, 121
        %vm1179 = vcmp.lt.s32.totalorder %v1013, %v1178
        %v1180 = vsel %vm1179, %v1173, %v1177
        %v1181 = vadd.f32 %v826, %v1015
        %v1182 = vadd.f32 %v830, %v1026
        %v1183 = vadd.f32 %v836, %v1037
        %v1184 = vadd.f32 %v840, %v1048
        %v1185 = vadd.f32 %v846, %v1059
        %v1186 = vadd.f32 %v850, %v1070
        %v1187 = vadd.f32 %v856, %v1081
        %v1188 = vadd.f32 %v860, %v1092
        %v1189 = vadd.f32 %v866, %v1103
        %v1190 = vadd.f32 %v870, %v1114
        %v1191 = vadd.f32 %v876, %v1125
        %v1192 = vadd.f32 %v880, %v1136
        %v1193 = vadd.f32 %v886, %v1147
        %v1194 = vadd.f32 %v890, %v1158
        %v1195 = vadd.f32 %v896, %v1169
        %v1196 = vadd.f32 %v900, %v1180
        %v1197 = vmul.f32 %v1181, 0.17677669
        %v1198 = vmul.f32 %v1182, 0.17677669
        %v1199 = vmul.f32 %v1183, 0.17677669
        %v1200 = vmul.f32 %v1184, 0.17677669
        %v1201 = vmul.f32 %v1185, 0.17677669
        %v1202 = vmul.f32 %v1186, 0.17677669
        %v1203 = vmul.f32 %v1187, 0.17677669
        %v1204 = vmul.f32 %v1188, 0.17677669
        %v1205 = vmul.f32 %v1189, 0.17677669
        %v1206 = vmul.f32 %v1190, 0.17677669
        %v1207 = vmul.f32 %v1191, 0.17677669
        %v1208 = vmul.f32 %v1192, 0.17677669
        %v1209 = vmul.f32 %v1193, 0.17677669
        %v1210 = vmul.f32 %v1194, 0.17677669
        %v1211 = vmul.f32 %v1195, 0.17677669
        %v1212 = vmul.f32 %v1196, 0.17677669
        %s1213 = smul.u32 %s23, 128
        %v1214 = vadd.s32 %v1010, 8
        %v1215 = vadd.s32 %v1010, 16
        %v1216 = vadd.s32 %v1010, 24
        %v1217 = vadd.s32 %v1010, 32
        %v1218 = vadd.s32 %v1010, 40
        %v1219 = vadd.s32 %v1010, 48
        %v1220 = vadd.s32 %v1010, 56
        %v1221 = vadd.s32 %v1010, 64
        %v1222 = vadd.s32 %v1010, 72
        %v1223 = vadd.s32 %v1010, 80
        %v1224 = vadd.s32 %v1010, 88
        %v1225 = vadd.s32 %v1010, 96
        %v1226 = vadd.s32 %v1010, 104
        %v1227 = vadd.s32 %v1010, 112
        %v1228 = vadd.s32 %v1010, 120
        %v1229 = vstv %s1213
        %v1230 = vadd.s32 %v1229, %v1010
        %v1231 = vadd.s32 %v1229, %v1214
        %v1232 = vadd.s32 %v1229, %v1215
        %v1233 = vadd.s32 %v1229, %v1216
        %v1234 = vadd.s32 %v1229, %v1217
        %v1235 = vadd.s32 %v1229, %v1218
        %v1236 = vadd.s32 %v1229, %v1219
        %v1237 = vadd.s32 %v1229, %v1220
        %v1238 = vadd.s32 %v1229, %v1221
        %v1239 = vadd.s32 %v1229, %v1222
        %v1240 = vadd.s32 %v1229, %v1223
        %v1241 = vadd.s32 %v1229, %v1224
        %v1242 = vadd.s32 %v1229, %v1225
        %v1243 = vadd.s32 %v1229, %v1226
        %v1244 = vadd.s32 %v1229, %v1227
        %v1245 = vadd.s32 %v1229, %v1228
        %s1246 = smul.u32 %s24, 128
        %v1247 = vstv %s1246
        %v1248 = vadd.s32 %v1247, %v1013
        %vm1249 = vcmp.gt.s32.totalorder %v1248, %v1230
        %vm1250 = vcmp.gt.s32.totalorder %v1248, %v1231
        %vm1251 = vcmp.gt.s32.totalorder %v1248, %v1232
        %vm1252 = vcmp.gt.s32.totalorder %v1248, %v1233
        %vm1253 = vcmp.gt.s32.totalorder %v1248, %v1234
        %vm1254 = vcmp.gt.s32.totalorder %v1248, %v1235
        %vm1255 = vcmp.gt.s32.totalorder %v1248, %v1236
        %vm1256 = vcmp.gt.s32.totalorder %v1248, %v1237
        %vm1257 = vcmp.gt.s32.totalorder %v1248, %v1238
        %vm1258 = vcmp.gt.s32.totalorder %v1248, %v1239
        %vm1259 = vcmp.gt.s32.totalorder %v1248, %v1240
        %vm1260 = vcmp.gt.s32.totalorder %v1248, %v1241
        %vm1261 = vcmp.gt.s32.totalorder %v1248, %v1242
        %vm1262 = vcmp.gt.s32.totalorder %v1248, %v1243
        %vm1263 = vcmp.gt.s32.totalorder %v1248, %v1244
        %vm1264 = vcmp.gt.s32.totalorder %v1248, %v1245
        %v1265 = vsel %vm1249, -1e+30, %v1197
        %v1266 = vsel %vm1250, -1e+30, %v1198
        %v1267 = vsel %vm1251, -1e+30, %v1199
        %v1268 = vsel %vm1252, -1e+30, %v1200
        %v1269 = vsel %vm1253, -1e+30, %v1201
        %v1270 = vsel %vm1254, -1e+30, %v1202
        %v1271 = vsel %vm1255, -1e+30, %v1203
        %v1272 = vsel %vm1256, -1e+30, %v1204
        %v1273 = vsel %vm1257, -1e+30, %v1205
        %v1274 = vsel %vm1258, -1e+30, %v1206
        %v1275 = vsel %vm1259, -1e+30, %v1207
        %v1276 = vsel %vm1260, -1e+30, %v1208
        %v1277 = vsel %vm1261, -1e+30, %v1209
        %v1278 = vsel %vm1262, -1e+30, %v1210
        %v1279 = vsel %vm1263, -1e+30, %v1211
        %v1280 = vsel %vm1264, -1e+30, %v1212
        %v1281 = vld [vmem:[#allocation2] sm:$0xff]
        %v1282 = vld [vmem:[#allocation2 + $0x8] sm:$0xff]
        %v1283 = vld [vmem:[#allocation2 + $0x10] sm:$0xff]
        %v1284 = vld [vmem:[#allocation2 + $0x18] sm:$0xff]
        %v1285 = vld [vmem:[#allocation2 + $0x20] sm:$0xff]
        %v1286 = vld [vmem:[#allocation2 + $0x28] sm:$0xff]
        %v1287 = vld [vmem:[#allocation2 + $0x30] sm:$0xff]
        %v1288 = vld [vmem:[#allocation2 + $0x38] sm:$0xff]
        %v1289 = vld [vmem:[#allocation2 + $0x40] sm:$0xff]
        %v1290 = vld [vmem:[#allocation2 + $0x48] sm:$0xff]
        %v1291 = vld [vmem:[#allocation2 + $0x50] sm:$0xff]
        %v1292 = vld [vmem:[#allocation2 + $0x58] sm:$0xff]
        %v1293 = vld [vmem:[#allocation2 + $0x60] sm:$0xff]
        %v1294 = vld [vmem:[#allocation2 + $0x68] sm:$0xff]
        %v1295 = vld [vmem:[#allocation2 + $0x70] sm:$0xff]
        %v1296 = vld [vmem:[#allocation2 + $0x78] sm:$0xff]
        %1297 = vmax.xlane.f32.xlu0 %v1265
        %v1298 = vpop.xlane.xlu0 %1297
        %1299 = vmax.xlane.f32.xlu0 %v1266
        %v1300 = vpop.xlane.xlu0 %1299
        %1301 = vmax.xlane.f32.xlu0 %v1267
        %v1302 = vpop.xlane.xlu0 %1301
        %1303 = vmax.xlane.f32.xlu0 %v1268
        %v1304 = vpop.xlane.xlu0 %1303
        %1305 = vmax.xlane.f32.xlu0 %v1269
        %v1306 = vpop.xlane.xlu0 %1305
        %1307 = vmax.xlane.f32.xlu0 %v1270
        %v1308 = vpop.xlane.xlu0 %1307
        %1309 = vmax.xlane.f32.xlu0 %v1271
        %v1310 = vpop.xlane.xlu0 %1309
        %1311 = vmax.xlane.f32.xlu0 %v1272
        %v1312 = vpop.xlane.xlu0 %1311
        %1313 = vmax.xlane.f32.xlu0 %v1273
        %v1314 = vpop.xlane.xlu0 %1313
        %1315 = vmax.xlane.f32.xlu0 %v1274
        %v1316 = vpop.xlane.xlu0 %1315
        %1317 = vmax.xlane.f32.xlu0 %v1275
        %v1318 = vpop.xlane.xlu0 %1317
        %1319 = vmax.xlane.f32.xlu0 %v1276
        %v1320 = vpop.xlane.xlu0 %1319
        %1321 = vmax.xlane.f32.xlu0 %v1277
        %v1322 = vpop.xlane.xlu0 %1321
        %1323 = vmax.xlane.f32.xlu0 %v1278
        %v1324 = vpop.xlane.xlu0 %1323
        %1325 = vmax.xlane.f32.xlu0 %v1279
        %v1326 = vpop.xlane.xlu0 %1325
        %1327 = vmax.xlane.f32.xlu0 %v1280
        %v1328 = vpop.xlane.xlu0 %1327
        %v1329 = vmax.f32 %v1281, %v1298
        %v1330 = vmax.f32 %v1282, %v1300
        %v1331 = vmax.f32 %v1283, %v1302
        %v1332 = vmax.f32 %v1284, %v1304
        %v1333 = vmax.f32 %v1285, %v1306
        %v1334 = vmax.f32 %v1286, %v1308
        %v1335 = vmax.f32 %v1287, %v1310
        %v1336 = vmax.f32 %v1288, %v1312
        %v1337 = vmax.f32 %v1289, %v1314
        %v1338 = vmax.f32 %v1290, %v1316
        %v1339 = vmax.f32 %v1291, %v1318
        %v1340 = vmax.f32 %v1292, %v1320
        %v1341 = vmax.f32 %v1293, %v1322
        %v1342 = vmax.f32 %v1294, %v1324
        %v1343 = vmax.f32 %v1295, %v1326
        %v1344 = vmax.f32 %v1296, %v1328
        %v1345 = vsub.f32 %v1281, %v1329
        %v1346 = vsub.f32 %v1282, %v1330
        %v1347 = vsub.f32 %v1283, %v1331
        %v1348 = vsub.f32 %v1284, %v1332
        %v1349 = vsub.f32 %v1285, %v1333
        %v1350 = vsub.f32 %v1286, %v1334
        %v1351 = vsub.f32 %v1287, %v1335
        %v1352 = vsub.f32 %v1288, %v1336
        %v1353 = vsub.f32 %v1289, %v1337
        %v1354 = vsub.f32 %v1290, %v1338
        %v1355 = vsub.f32 %v1291, %v1339
        %v1356 = vsub.f32 %v1292, %v1340
        %v1357 = vsub.f32 %v1293, %v1341
        %v1358 = vsub.f32 %v1294, %v1342
        %v1359 = vsub.f32 %v1295, %v1343
        %v1360 = vsub.f32 %v1296, %v1344
        %v1361 = vmul.f32 %v1345, 1.442695
        %v1362 = vpow.pop %v1361
        %v1363 = vmul.f32 %v1346, 1.442695
        %v1364 = vpow.pop %v1363
        %v1365 = vmul.f32 %v1347, 1.442695
        %v1366 = vpow.pop %v1365
        %v1367 = vmul.f32 %v1348, 1.442695
        %v1368 = vpow.pop %v1367
        %v1369 = vmul.f32 %v1349, 1.442695
        %v1370 = vpow.pop %v1369
        %v1371 = vmul.f32 %v1350, 1.442695
        %v1372 = vpow.pop %v1371
        %v1373 = vmul.f32 %v1351, 1.442695
        %v1374 = vpow.pop %v1373
        %v1375 = vmul.f32 %v1352, 1.442695
        %v1376 = vpow.pop %v1375
        %v1377 = vmul.f32 %v1353, 1.442695
        %v1378 = vpow.pop %v1377
        %v1379 = vmul.f32 %v1354, 1.442695
        %v1380 = vpow.pop %v1379
        %v1381 = vmul.f32 %v1355, 1.442695
        %v1382 = vpow.pop %v1381
        %v1383 = vmul.f32 %v1356, 1.442695
        %v1384 = vpow.pop %v1383
        %v1385 = vmul.f32 %v1357, 1.442695
        %v1386 = vpow.pop %v1385
        %v1387 = vmul.f32 %v1358, 1.442695
        %v1388 = vpow.pop %v1387
        %v1389 = vmul.f32 %v1359, 1.442695
        %v1390 = vpow.pop %v1389
        %v1391 = vmul.f32 %v1360, 1.442695
        %v1392 = vpow.pop %v1391
        %1394 = vset.pattern.permute.xlu0 0
        %1395 = vperm.xlu0 %1394, %v1329
        %v1396 = vpop.permute.xlu0 %1395
        %1399 = vset.pattern.permute.xlu0 0
        %1400 = vperm.xlu0 %1399, %v1330
        %v1401 = vpop.permute.xlu0 %1400
        %1404 = vset.pattern.permute.xlu0 0
        %1405 = vperm.xlu0 %1404, %v1331
        %v1406 = vpop.permute.xlu0 %1405
        %1409 = vset.pattern.permute.xlu0 0
        %1410 = vperm.xlu0 %1409, %v1332
        %v1411 = vpop.permute.xlu0 %1410
        %1414 = vset.pattern.permute.xlu0 0
        %1415 = vperm.xlu0 %1414, %v1333
        %v1416 = vpop.permute.xlu0 %1415
        %1419 = vset.pattern.permute.xlu0 0
        %1420 = vperm.xlu0 %1419, %v1334
        %v1421 = vpop.permute.xlu0 %1420
        %1424 = vset.pattern.permute.xlu0 0
        %1425 = vperm.xlu0 %1424, %v1335
        %v1426 = vpop.permute.xlu0 %1425
        %1429 = vset.pattern.permute.xlu0 0
        %1430 = vperm.xlu0 %1429, %v1336
        %v1431 = vpop.permute.xlu0 %1430
        %1434 = vset.pattern.permute.xlu0 0
        %1435 = vperm.xlu0 %1434, %v1337
        %v1436 = vpop.permute.xlu0 %1435
        %1439 = vset.pattern.permute.xlu0 0
        %1440 = vperm.xlu0 %1439, %v1338
        %v1441 = vpop.permute.xlu0 %1440
        %1444 = vset.pattern.permute.xlu0 0
        %1445 = vperm.xlu0 %1444, %v1339
        %v1446 = vpop.permute.xlu0 %1445
        %1449 = vset.pattern.permute.xlu0 0
        %1450 = vperm.xlu0 %1449, %v1340
        %v1451 = vpop.permute.xlu0 %1450
        %1454 = vset.pattern.permute.xlu0 0
        %1455 = vperm.xlu0 %1454, %v1341
        %v1456 = vpop.permute.xlu0 %1455
        %1459 = vset.pattern.permute.xlu0 0
        %1460 = vperm.xlu0 %1459, %v1342
        %v1461 = vpop.permute.xlu0 %1460
        %1464 = vset.pattern.permute.xlu0 0
        %1465 = vperm.xlu0 %1464, %v1343
        %v1466 = vpop.permute.xlu0 %1465
        %1469 = vset.pattern.permute.xlu0 0
        %1470 = vperm.xlu0 %1469, %v1344
        %v1471 = vpop.permute.xlu0 %1470
        %v1473 = vsub.f32 %v1265, %v1396
        %v1474 = vsub.f32 %v1266, %v1401
        %v1475 = vsub.f32 %v1267, %v1406
        %v1476 = vsub.f32 %v1268, %v1411
        %v1477 = vsub.f32 %v1269, %v1416
        %v1478 = vsub.f32 %v1270, %v1421
        %v1479 = vsub.f32 %v1271, %v1426
        %v1480 = vsub.f32 %v1272, %v1431
        %v1481 = vsub.f32 %v1273, %v1436
        %v1482 = vsub.f32 %v1274, %v1441
        %v1483 = vsub.f32 %v1275, %v1446
        %v1484 = vsub.f32 %v1276, %v1451
        %v1485 = vsub.f32 %v1277, %v1456
        %v1486 = vsub.f32 %v1278, %v1461
        %v1487 = vsub.f32 %v1279, %v1466
        %v1488 = vsub.f32 %v1280, %v1471
        %v1489 = vmul.f32 %v1473, 1.442695
        %v1490 = vpow.pop %v1489
        %v1491 = vmul.f32 %v1474, 1.442695
        %v1492 = vpow.pop %v1491
        %v1493 = vmul.f32 %v1475, 1.442695
        %v1494 = vpow.pop %v1493
        %v1495 = vmul.f32 %v1476, 1.442695
        %v1496 = vpow.pop %v1495
        %v1497 = vmul.f32 %v1477, 1.442695
        %v1498 = vpow.pop %v1497
        %v1499 = vmul.f32 %v1478, 1.442695
        %v1500 = vpow.pop %v1499
        %v1501 = vmul.f32 %v1479, 1.442695
        %v1502 = vpow.pop %v1501
        %v1503 = vmul.f32 %v1480, 1.442695
        %v1504 = vpow.pop %v1503
        %v1505 = vmul.f32 %v1481, 1.442695
        %v1506 = vpow.pop %v1505
        %v1507 = vmul.f32 %v1482, 1.442695
        %v1508 = vpow.pop %v1507
        %v1509 = vmul.f32 %v1483, 1.442695
        %v1510 = vpow.pop %v1509
        %v1511 = vmul.f32 %v1484, 1.442695
        %v1512 = vpow.pop %v1511
        %v1513 = vmul.f32 %v1485, 1.442695
        %v1514 = vpow.pop %v1513
        %v1515 = vmul.f32 %v1486, 1.442695
        %v1516 = vpow.pop %v1515
        %v1517 = vmul.f32 %v1487, 1.442695
        %v1518 = vpow.pop %v1517
        %v1519 = vmul.f32 %v1488, 1.442695
        %v1520 = vpow.pop %v1519
        %v1521 = vld [vmem:[#allocation3] sm:$0xff]
        %v1522 = vld [vmem:[#allocation3 + $0x8] sm:$0xff]
        %v1523 = vld [vmem:[#allocation3 + $0x10] sm:$0xff]
        %v1524 = vld [vmem:[#allocation3 + $0x18] sm:$0xff]
        %v1525 = vld [vmem:[#allocation3 + $0x20] sm:$0xff]
        %v1526 = vld [vmem:[#allocation3 + $0x28] sm:$0xff]
        %v1527 = vld [vmem:[#allocation3 + $0x30] sm:$0xff]
        %v1528 = vld [vmem:[#allocation3 + $0x38] sm:$0xff]
        %v1529 = vld [vmem:[#allocation3 + $0x40] sm:$0xff]
        %v1530 = vld [vmem:[#allocation3 + $0x48] sm:$0xff]
        %v1531 = vld [vmem:[#allocation3 + $0x50] sm:$0xff]
        %v1532 = vld [vmem:[#allocation3 + $0x58] sm:$0xff]
        %v1533 = vld [vmem:[#allocation3 + $0x60] sm:$0xff]
        %v1534 = vld [vmem:[#allocation3 + $0x68] sm:$0xff]
        %v1535 = vld [vmem:[#allocation3 + $0x70] sm:$0xff]
        %v1536 = vld [vmem:[#allocation3 + $0x78] sm:$0xff]
        %v1537 = vmul.f32 %v1362, %v1521
        %v1538 = vmul.f32 %v1364, %v1522
        %v1539 = vmul.f32 %v1366, %v1523
        %v1540 = vmul.f32 %v1368, %v1524
        %v1541 = vmul.f32 %v1370, %v1525
        %v1542 = vmul.f32 %v1372, %v1526
        %v1543 = vmul.f32 %v1374, %v1527
        %v1544 = vmul.f32 %v1376, %v1528
        %v1545 = vmul.f32 %v1378, %v1529
        %v1546 = vmul.f32 %v1380, %v1530
        %v1547 = vmul.f32 %v1382, %v1531
        %v1548 = vmul.f32 %v1384, %v1532
        %v1549 = vmul.f32 %v1386, %v1533
        %v1550 = vmul.f32 %v1388, %v1534
        %v1551 = vmul.f32 %v1390, %v1535
        %v1552 = vmul.f32 %v1392, %v1536
        %1553 = vadd.xlane.f32.xlu0 %v1490
        %v1554 = vpop.xlane.xlu0 %1553
        %1555 = vadd.xlane.f32.xlu0 %v1492
        %v1556 = vpop.xlane.xlu0 %1555
        %1557 = vadd.xlane.f32.xlu0 %v1494
        %v1558 = vpop.xlane.xlu0 %1557
        %1559 = vadd.xlane.f32.xlu0 %v1496
        %v1560 = vpop.xlane.xlu0 %1559
        %1561 = vadd.xlane.f32.xlu0 %v1498
        %v1562 = vpop.xlane.xlu0 %1561
        %1563 = vadd.xlane.f32.xlu0 %v1500
        %v1564 = vpop.xlane.xlu0 %1563
        %1565 = vadd.xlane.f32.xlu0 %v1502
        %v1566 = vpop.xlane.xlu0 %1565
        %1567 = vadd.xlane.f32.xlu0 %v1504
        %v1568 = vpop.xlane.xlu0 %1567
        %1569 = vadd.xlane.f32.xlu0 %v1506
        %v1570 = vpop.xlane.xlu0 %1569
        %1571 = vadd.xlane.f32.xlu0 %v1508
        %v1572 = vpop.xlane.xlu0 %1571
        %1573 = vadd.xlane.f32.xlu0 %v1510
        %v1574 = vpop.xlane.xlu0 %1573
        %1575 = vadd.xlane.f32.xlu0 %v1512
        %v1576 = vpop.xlane.xlu0 %1575
        %1577 = vadd.xlane.f32.xlu0 %v1514
        %v1578 = vpop.xlane.xlu0 %1577
        %1579 = vadd.xlane.f32.xlu0 %v1516
        %v1580 = vpop.xlane.xlu0 %1579
        %1581 = vadd.xlane.f32.xlu0 %v1518
        %v1582 = vpop.xlane.xlu0 %1581
        %1583 = vadd.xlane.f32.xlu0 %v1520
        %v1584 = vpop.xlane.xlu0 %1583
        %v1585 = vadd.f32 %v1537, %v1554
        %v1586 = vadd.f32 %v1538, %v1556
        %v1587 = vadd.f32 %v1539, %v1558
        %v1588 = vadd.f32 %v1540, %v1560
        %v1589 = vadd.f32 %v1541, %v1562
        %v1590 = vadd.f32 %v1542, %v1564
        %v1591 = vadd.f32 %v1543, %v1566
        %v1592 = vadd.f32 %v1544, %v1568
        %v1593 = vadd.f32 %v1545, %v1570
        %v1594 = vadd.f32 %v1546, %v1572
        %v1595 = vadd.f32 %v1547, %v1574
        %v1596 = vadd.f32 %v1548, %v1576
        %v1597 = vadd.f32 %v1549, %v1578
        %v1598 = vadd.f32 %v1550, %v1580
        %v1599 = vadd.f32 %v1551, %v1582
        %v1600 = vadd.f32 %v1552, %v1584
        %vm1601 = vcmask 7168
        %1602 = vst.msk [vmem:[#allocation3] sm:$0xff] %vm1601, %v1585
        %1603 = vst.msk [vmem:[#allocation3 + $0x8] sm:$0xff] %vm1601, %v1586
        %1604 = vst.msk [vmem:[#allocation3 + $0x10] sm:$0xff] %vm1601, %v1587
        %1605 = vst.msk [vmem:[#allocation3 + $0x18] sm:$0xff] %vm1601, %v1588
        %1606 = vst.msk [vmem:[#allocation3 + $0x20] sm:$0xff] %vm1601, %v1589
        %1607 = vst.msk [vmem:[#allocation3 + $0x28] sm:$0xff] %vm1601, %v1590
        %1608 = vst.msk [vmem:[#allocation3 + $0x30] sm:$0xff] %vm1601, %v1591
        %1609 = vst.msk [vmem:[#allocation3 + $0x38] sm:$0xff] %vm1601, %v1592
        %1610 = vst.msk [vmem:[#allocation3 + $0x40] sm:$0xff] %vm1601, %v1593
        %1611 = vst.msk [vmem:[#allocation3 + $0x48] sm:$0xff] %vm1601, %v1594
        %1612 = vst.msk [vmem:[#allocation3 + $0x50] sm:$0xff] %vm1601, %v1595
        %1613 = vst.msk [vmem:[#allocation3 + $0x58] sm:$0xff] %vm1601, %v1596
        %1614 = vst.msk [vmem:[#allocation3 + $0x60] sm:$0xff] %vm1601, %v1597
        %1615 = vst.msk [vmem:[#allocation3 + $0x68] sm:$0xff] %vm1601, %v1598
        %1616 = vst.msk [vmem:[#allocation3 + $0x70] sm:$0xff] %vm1601, %v1599
        %1617 = vst.msk [vmem:[#allocation3 + $0x78] sm:$0xff] %vm1601, %v1600
        %v1618 = vld [vmem:[#allocation4] sm:$0xff]
        %v1619 = vld [vmem:[#allocation4 + $0x8] sm:$0xff]
        %v1620 = vld [vmem:[#allocation4 + $0x10] sm:$0xff]
        %v1621 = vld [vmem:[#allocation4 + $0x18] sm:$0xff]
        %v1622 = vld [vmem:[#allocation4 + $0x20] sm:$0xff]
        %v1623 = vld [vmem:[#allocation4 + $0x28] sm:$0xff]
        %v1624 = vld [vmem:[#allocation4 + $0x30] sm:$0xff]
        %v1625 = vld [vmem:[#allocation4 + $0x38] sm:$0xff]
        %v1626 = vld [vmem:[#allocation4 + $0x40] sm:$0xff]
        %v1627 = vld [vmem:[#allocation4 + $0x48] sm:$0xff]
        %v1628 = vld [vmem:[#allocation4 + $0x50] sm:$0xff]
        %v1629 = vld [vmem:[#allocation4 + $0x58] sm:$0xff]
        %v1630 = vld [vmem:[#allocation4 + $0x60] sm:$0xff]
        %v1631 = vld [vmem:[#allocation4 + $0x68] sm:$0xff]
        %v1632 = vld [vmem:[#allocation4 + $0x70] sm:$0xff]
        %v1633 = vld [vmem:[#allocation4 + $0x78] sm:$0xff]
        %1635 = vset.pattern.permute.xlu0 0
        %1636 = vperm.xlu0 %1635, %v1362
        %v1637 = vpop.permute.xlu0 %1636
        %1640 = vset.pattern.permute.xlu0 0
        %1641 = vperm.xlu0 %1640, %v1364
        %v1642 = vpop.permute.xlu0 %1641
        %1645 = vset.pattern.permute.xlu0 0
        %1646 = vperm.xlu0 %1645, %v1366
        %v1647 = vpop.permute.xlu0 %1646
        %1650 = vset.pattern.permute.xlu0 0
        %1651 = vperm.xlu0 %1650, %v1368
        %v1652 = vpop.permute.xlu0 %1651
        %1655 = vset.pattern.permute.xlu0 0
        %1656 = vperm.xlu0 %1655, %v1370
        %v1657 = vpop.permute.xlu0 %1656
        %1660 = vset.pattern.permute.xlu0 0
        %1661 = vperm.xlu0 %1660, %v1372
        %v1662 = vpop.permute.xlu0 %1661
        %1665 = vset.pattern.permute.xlu0 0
        %1666 = vperm.xlu0 %1665, %v1374
        %v1667 = vpop.permute.xlu0 %1666
        %1670 = vset.pattern.permute.xlu0 0
        %1671 = vperm.xlu0 %1670, %v1376
        %v1672 = vpop.permute.xlu0 %1671
        %1675 = vset.pattern.permute.xlu0 0
        %1676 = vperm.xlu0 %1675, %v1378
        %v1677 = vpop.permute.xlu0 %1676
        %1680 = vset.pattern.permute.xlu0 0
        %1681 = vperm.xlu0 %1680, %v1380
        %v1682 = vpop.permute.xlu0 %1681
        %1685 = vset.pattern.permute.xlu0 0
        %1686 = vperm.xlu0 %1685, %v1382
        %v1687 = vpop.permute.xlu0 %1686
        %1690 = vset.pattern.permute.xlu0 0
        %1691 = vperm.xlu0 %1690, %v1384
        %v1692 = vpop.permute.xlu0 %1691
        %1695 = vset.pattern.permute.xlu0 0
        %1696 = vperm.xlu0 %1695, %v1386
        %v1697 = vpop.permute.xlu0 %1696
        %1700 = vset.pattern.permute.xlu0 0
        %1701 = vperm.xlu0 %1700, %v1388
        %v1702 = vpop.permute.xlu0 %1701
        %1705 = vset.pattern.permute.xlu0 0
        %1706 = vperm.xlu0 %1705, %v1390
        %v1707 = vpop.permute.xlu0 %1706
        %1710 = vset.pattern.permute.xlu0 0
        %1711 = vperm.xlu0 %1710, %v1392
        %v1712 = vpop.permute.xlu0 %1711
        %v1714 = vmul.f32 %v1637, %v1618
        %v1715 = vmul.f32 %v1642, %v1619
        %v1716 = vmul.f32 %v1647, %v1620
        %v1717 = vmul.f32 %v1652, %v1621
        %v1718 = vmul.f32 %v1657, %v1622
        %v1719 = vmul.f32 %v1662, %v1623
        %v1720 = vmul.f32 %v1667, %v1624
        %v1721 = vmul.f32 %v1672, %v1625
        %v1722 = vmul.f32 %v1677, %v1626
        %v1723 = vmul.f32 %v1682, %v1627
        %v1724 = vmul.f32 %v1687, %v1628
        %v1725 = vmul.f32 %v1692, %v1629
        %v1726 = vmul.f32 %v1697, %v1630
        %v1727 = vmul.f32 %v1702, %v1631
        %v1728 = vmul.f32 %v1707, %v1632
        %v1729 = vmul.f32 %v1712, %v1633
        %v1730 = vpack.c.bf16 %v1492, %v1490
        %v1731 = vpack.c.bf16 %v1496, %v1494
        %v1732 = vpack.c.bf16 %v1500, %v1498
        %v1733 = vpack.c.bf16 %v1504, %v1502
        %v1734 = vpack.c.bf16 %v1508, %v1506
        %v1735 = vpack.c.bf16 %v1512, %v1510
        %v1736 = vpack.c.bf16 %v1516, %v1514
        %v1737 = vpack.c.bf16 %v1520, %v1518
        %v1738 = vld [vmem:[%s385] sm:$0xf]
        %v1739 = vld [vmem:[%s385 + $0x4] sm:$0xf]
        %v1740 = vld [vmem:[%s385 + $0x8] sm:$0xf]
        %v1741 = vld [vmem:[%s385 + $0xc] sm:$0xf]
        %v1742 = vld [vmem:[%s385 + $0x10] sm:$0xf]
        %v1743 = vld [vmem:[%s385 + $0x14] sm:$0xf]
        %v1744 = vld [vmem:[%s385 + $0x18] sm:$0xf]
        %v1745 = vld [vmem:[%s385 + $0x1c] sm:$0xf]
        %v1746 = vld [vmem:[%s385 + $0x20] sm:$0xf]
        %v1747 = vld [vmem:[%s385 + $0x24] sm:$0xf]
        %v1748 = vld [vmem:[%s385 + $0x28] sm:$0xf]
        %v1749 = vld [vmem:[%s385 + $0x2c] sm:$0xf]
        %v1750 = vld [vmem:[%s385 + $0x30] sm:$0xf]
        %v1751 = vld [vmem:[%s385 + $0x34] sm:$0xf]
        %v1752 = vld [vmem:[%s385 + $0x38] sm:$0xf]
        %v1753 = vld [vmem:[%s385 + $0x3c] sm:$0xf]
        %v1770 = vunpack.c.l.b16 %v1738
        %v1771 = vunpack.c.l.b16 %v1739
        %v1772 = vunpack.c.l.b16 %v1740
        %v1773 = vunpack.c.l.b16 %v1741
        %v1774 = vunpack.c.l.b16 %v1742
        %v1775 = vunpack.c.l.b16 %v1743
        %v1776 = vunpack.c.l.b16 %v1744
        %v1777 = vunpack.c.l.b16 %v1745
        %v1778 = vunpack.c.l.b16 %v1746
        %v1779 = vunpack.c.l.b16 %v1747
        %v1780 = vunpack.c.l.b16 %v1748
        %v1781 = vunpack.c.l.b16 %v1749
        %v1782 = vunpack.c.l.b16 %v1750
        %v1783 = vunpack.c.l.b16 %v1751
        %v1784 = vunpack.c.l.b16 %v1752
        %v1785 = vunpack.c.l.b16 %v1753
        %v1786 = vpack.c.b16 %v1771, %v1770
        %v1787 = vpack.c.b16 %v1773, %v1772
        %v1788 = vpack.c.b16 %v1775, %v1774
        %v1789 = vpack.c.b16 %v1777, %v1776
        %v1790 = vpack.c.b16 %v1779, %v1778
        %v1791 = vpack.c.b16 %v1781, %v1780
        %v1792 = vpack.c.b16 %v1783, %v1782
        %v1793 = vpack.c.b16 %v1785, %v1784
        %1802 = vmatprep.subr.bf16.mxu0 0
        %1803 = vmatpush1.bf16.msra.mxu0 %v1786
        %1804 = vmatprep.subr.bf16.mxu0 0
        %1805 = vmatpush1.bf16.msra.mxu0 %v1787
        %1806 = vmatprep.subr.bf16.mxu0 0
        %1807 = vmatpush1.bf16.msra.mxu0 %v1788
        %1808 = vmatprep.subr.bf16.mxu0 0
        %1809 = vmatpush1.bf16.msra.mxu0 %v1789
        %1810 = vmatprep.subr.bf16.mxu0 0
        %1811 = vmatpush1.bf16.msra.mxu0 %v1790
        %1812 = vmatprep.subr.bf16.mxu0 0
        %1813 = vmatpush1.bf16.msra.mxu0 %v1791
        %1814 = vmatprep.subr.bf16.mxu0 0
        %1815 = vmatpush1.bf16.msra.mxu0 %v1792
        %1816 = vmatprep.subr.bf16.mxu0 0
        %1817 = vmatpush1.bf16.msra.mxu0 %v1793
        %1818 = vmatprep.subr.bf16.mxu0 0
        %1819 = vmatpush1.bf16.msra.mxu0 0
        %1820 = vmatprep.subr.bf16.mxu0 0
        %1821 = vmatpush1.bf16.msra.mxu0 0
        %1822 = vmatprep.subr.bf16.mxu0 0
        %1823 = vmatpush1.bf16.msra.mxu0 0
        %1824 = vmatprep.subr.bf16.mxu0 0
        %1825 = vmatpush1.bf16.msra.mxu0 0
        %1826 = vmatprep.subr.bf16.mxu0 0
        %1827 = vmatpush1.bf16.msra.mxu0 0
        %1828 = vmatprep.subr.bf16.mxu0 0
        %1829 = vmatpush1.bf16.msra.mxu0 0
        %1830 = vmatprep.subr.bf16.mxu0 0
        %1831 = vmatpush1.bf16.msra.mxu0 0
        %1832 = vmatprep.subr.bf16.mxu0 0
        %1833 = vmatpush1.bf16.msra.mxu0 0
        %1834 = vmatprep.mubr.bf16.mxu0 0
        %1835 = vmatmul.mubr.bf16.gmra.mrb[0].mxu0 %v1730
        %v1836 = vpop.f32.mrb[0].mxu0
        %v1837 = vadd.f32 0.0, %v1836
        %v1838 = vpop.f32.mrb[0].mxu0
        %v1839 = vpop.f32.mrb[0].mxu0
        %v1840 = vadd.f32 0.0, %v1839
        %v1841 = vpop.f32.mrb[0].mxu0
        %1842 = vmatprep.mubr.bf16.mxu0 0
        %1843 = vmatmul.mubr.bf16.gmra.mrb[0].mxu0 %v1731
        %v1844 = vpop.f32.mrb[0].mxu0
        %v1845 = vadd.f32 0.0, %v1844
        %v1846 = vpop.f32.mrb[0].mxu0
        %v1847 = vpop.f32.mrb[0].mxu0
        %v1848 = vadd.f32 0.0, %v1847
        %v1849 = vpop.f32.mrb[0].mxu0
        %1850 = vmatprep.mubr.bf16.mxu0 0
        %1851 = vmatmul.mubr.bf16.gmra.mrb[0].mxu0 %v1732
        %v1852 = vpop.f32.mrb[0].mxu0
        %v1853 = vadd.f32 0.0, %v1852
        %v1854 = vpop.f32.mrb[0].mxu0
        %v1855 = vpop.f32.mrb[0].mxu0
        %v1856 = vadd.f32 0.0, %v1855
        %v1857 = vpop.f32.mrb[0].mxu0
        %1858 = vmatprep.mubr.bf16.mxu0 0
        %1859 = vmatmul.mubr.bf16.gmra.mrb[0].mxu0 %v1733
        %v1860 = vpop.f32.mrb[0].mxu0
        %v1861 = vadd.f32 0.0, %v1860
        %v1862 = vpop.f32.mrb[0].mxu0
        %v1863 = vpop.f32.mrb[0].mxu0
        %v1864 = vadd.f32 0.0, %v1863
        %v1865 = vpop.f32.mrb[0].mxu0
        %1866 = vmatprep.mubr.bf16.mxu0 0
        %1867 = vmatmul.mubr.bf16.gmra.mrb[0].mxu0 %v1734
        %v1868 = vpop.f32.mrb[0].mxu0
        %v1869 = vadd.f32 0.0, %v1868
        %v1870 = vpop.f32.mrb[0].mxu0
        %v1871 = vpop.f32.mrb[0].mxu0
        %v1872 = vadd.f32 0.0, %v1871
        %v1873 = vpop.f32.mrb[0].mxu0
        %1874 = vmatprep.mubr.bf16.mxu0 0
        %1875 = vmatmul.mubr.bf16.gmra.mrb[0].mxu0 %v1735
        %v1876 = vpop.f32.mrb[0].mxu0
        %v1877 = vadd.f32 0.0, %v1876
        %v1878 = vpop.f32.mrb[0].mxu0
        %v1879 = vpop.f32.mrb[0].mxu0
        %v1880 = vadd.f32 0.0, %v1879
        %v1881 = vpop.f32.mrb[0].mxu0
        %1882 = vmatprep.mubr.bf16.mxu0 0
        %1883 = vmatmul.mubr.bf16.gmra.mrb[0].mxu0 %v1736
        %v1884 = vpop.f32.mrb[0].mxu0
        %v1885 = vadd.f32 0.0, %v1884
        %v1886 = vpop.f32.mrb[0].mxu0
        %v1887 = vpop.f32.mrb[0].mxu0
        %v1888 = vadd.f32 0.0, %v1887
        %v1889 = vpop.f32.mrb[0].mxu0
        %1890 = vmatprep.mubr.bf16.mxu0 0
        %1891 = vmatmul.mubr.bf16.gmra.mrb[0].mxu0 %v1737
        %v1892 = vpop.f32.mrb[0].mxu0
        %v1893 = vadd.f32 0.0, %v1892
        %v1894 = vpop.f32.mrb[0].mxu0
        %v1895 = vpop.f32.mrb[0].mxu0
        %v1896 = vadd.f32 0.0, %v1895
        %v1897 = vpop.f32.mrb[0].mxu0
        %1898 = vdwg.mxu0
        %v1899 = vadd.f32 %v1714, %v1837
        %v1900 = vadd.f32 %v1715, %v1840
        %v1901 = vadd.f32 %v1716, %v1845
        %v1902 = vadd.f32 %v1717, %v1848
        %v1903 = vadd.f32 %v1718, %v1853
        %v1904 = vadd.f32 %v1719, %v1856
        %v1905 = vadd.f32 %v1720, %v1861
        %v1906 = vadd.f32 %v1721, %v1864
        %v1907 = vadd.f32 %v1722, %v1869
        %v1908 = vadd.f32 %v1723, %v1872
        %v1909 = vadd.f32 %v1724, %v1877
        %v1910 = vadd.f32 %v1725, %v1880
        %v1911 = vadd.f32 %v1726, %v1885
        %v1912 = vadd.f32 %v1727, %v1888
        %v1913 = vadd.f32 %v1728, %v1893
        %v1914 = vadd.f32 %v1729, %v1896
        %1915 = vst.msk [vmem:[#allocation4] sm:$0xff] %vm694, %v1899
        %1916 = vst.msk [vmem:[#allocation4 + $0x8] sm:$0xff] %vm694, %v1900
        %1917 = vst.msk [vmem:[#allocation4 + $0x10] sm:$0xff] %vm694, %v1901
        %1918 = vst.msk [vmem:[#allocation4 + $0x18] sm:$0xff] %vm694, %v1902
        %1919 = vst.msk [vmem:[#allocation4 + $0x20] sm:$0xff] %vm694, %v1903
        %1920 = vst.msk [vmem:[#allocation4 + $0x28] sm:$0xff] %vm694, %v1904
        %1921 = vst.msk [vmem:[#allocation4 + $0x30] sm:$0xff] %vm694, %v1905
        %1922 = vst.msk [vmem:[#allocation4 + $0x38] sm:$0xff] %vm694, %v1906
        %1923 = vst.msk [vmem:[#allocation4 + $0x40] sm:$0xff] %vm694, %v1907
        %1924 = vst.msk [vmem:[#allocation4 + $0x48] sm:$0xff] %vm694, %v1908
        %1925 = vst.msk [vmem:[#allocation4 + $0x50] sm:$0xff] %vm694, %v1909
        %1926 = vst.msk [vmem:[#allocation4 + $0x58] sm:$0xff] %vm694, %v1910
        %1927 = vst.msk [vmem:[#allocation4 + $0x60] sm:$0xff] %vm694, %v1911
        %1928 = vst.msk [vmem:[#allocation4 + $0x68] sm:$0xff] %vm694, %v1912
        %1929 = vst.msk [vmem:[#allocation4 + $0x70] sm:$0xff] %vm694, %v1913
        %1930 = vst.msk [vmem:[#allocation4 + $0x78] sm:$0xff] %vm694, %v1914
        %1931 = vst.msk [vmem:[#allocation2] sm:$0xff] %vm1601, %v1329
        %1932 = vst.msk [vmem:[#allocation2 + $0x8] sm:$0xff] %vm1601, %v1330
        %1933 = vst.msk [vmem:[#allocation2 + $0x10] sm:$0xff] %vm1601, %v1331
        %1934 = vst.msk [vmem:[#allocation2 + $0x18] sm:$0xff] %vm1601, %v1332
        %1935 = vst.msk [vmem:[#allocation2 + $0x20] sm:$0xff] %vm1601, %v1333
        %1936 = vst.msk [vmem:[#allocation2 + $0x28] sm:$0xff] %vm1601, %v1334
        %1937 = vst.msk [vmem:[#allocation2 + $0x30] sm:$0xff] %vm1601, %v1335
        %1938 = vst.msk [vmem:[#allocation2 + $0x38] sm:$0xff] %vm1601, %v1336
        %1939 = vst.msk [vmem:[#allocation2 + $0x40] sm:$0xff] %vm1601, %v1337
        %1940 = vst.msk [vmem:[#allocation2 + $0x48] sm:$0xff] %vm1601, %v1338
        %1941 = vst.msk [vmem:[#allocation2 + $0x50] sm:$0xff] %vm1601, %v1339
        %1942 = vst.msk [vmem:[#allocation2 + $0x58] sm:$0xff] %vm1601, %v1340
        %1943 = vst.msk [vmem:[#allocation2 + $0x60] sm:$0xff] %vm1601, %v1341
        %1944 = vst.msk [vmem:[#allocation2 + $0x68] sm:$0xff] %vm1601, %v1342
        %1945 = vst.msk [vmem:[#allocation2 + $0x70] sm:$0xff] %vm1601, %v1343
        %1946 = vst.msk [vmem:[#allocation2 + $0x78] sm:$0xff] %vm1601, %v1344
        %p1947 = scmp.eq.s32.totalorder %s24, %s23
        // Predicated region
        $region45: #{expire_span_transformer_xl_forward.12} parent=39 // pred_check
          %p1948 = pneg %p1947
        $region46: #{expire_span_transformer_xl_forward.12} parent=39 // pred_check_branch
          %1950 = sbr.rel (%p1948) target = $region48
        $region47: #{expire_span_transformer_xl_forward.12} parent=39 // pred_region
          %v1951 = vld [vmem:[#allocation4] sm:$0xff]
          %v1952 = vld [vmem:[#allocation4 + $0x8] sm:$0xff]
          %v1953 = vld [vmem:[#allocation4 + $0x10] sm:$0xff]
          %v1954 = vld [vmem:[#allocation4 + $0x18] sm:$0xff]
          %v1955 = vld [vmem:[#allocation4 + $0x20] sm:$0xff]
          %v1956 = vld [vmem:[#allocation4 + $0x28] sm:$0xff]
          %v1957 = vld [vmem:[#allocation4 + $0x30] sm:$0xff]
          %v1958 = vld [vmem:[#allocation4 + $0x38] sm:$0xff]
          %v1959 = vld [vmem:[#allocation4 + $0x40] sm:$0xff]
          %v1960 = vld [vmem:[#allocation4 + $0x48] sm:$0xff]
          %v1961 = vld [vmem:[#allocation4 + $0x50] sm:$0xff]
          %v1962 = vld [vmem:[#allocation4 + $0x58] sm:$0xff]
          %v1963 = vld [vmem:[#allocation4 + $0x60] sm:$0xff]
          %v1964 = vld [vmem:[#allocation4 + $0x68] sm:$0xff]
          %v1965 = vld [vmem:[#allocation4 + $0x70] sm:$0xff]
          %v1966 = vld [vmem:[#allocation4 + $0x78] sm:$0xff]
          %v1967 = vld [vmem:[#allocation3] sm:$0xff]
          %v1968 = vld [vmem:[#allocation3 + $0x8] sm:$0xff]
          %v1969 = vld [vmem:[#allocation3 + $0x10] sm:$0xff]
          %v1970 = vld [vmem:[#allocation3 + $0x18] sm:$0xff]
          %v1971 = vld [vmem:[#allocation3 + $0x20] sm:$0xff]
          %v1972 = vld [vmem:[#allocation3 + $0x28] sm:$0xff]
          %v1973 = vld [vmem:[#allocation3 + $0x30] sm:$0xff]
          %v1974 = vld [vmem:[#allocation3 + $0x38] sm:$0xff]
          %v1975 = vld [vmem:[#allocation3 + $0x40] sm:$0xff]
          %v1976 = vld [vmem:[#allocation3 + $0x48] sm:$0xff]
          %v1977 = vld [vmem:[#allocation3 + $0x50] sm:$0xff]
          %v1978 = vld [vmem:[#allocation3 + $0x58] sm:$0xff]
          %v1979 = vld [vmem:[#allocation3 + $0x60] sm:$0xff]
          %v1980 = vld [vmem:[#allocation3 + $0x68] sm:$0xff]
          %v1981 = vld [vmem:[#allocation3 + $0x70] sm:$0xff]
          %v1982 = vld [vmem:[#allocation3 + $0x78] sm:$0xff]
          %v1983 = vrcp.pop %v1967
          %v1984 = vrcp.pop %v1968
          %v1985 = vrcp.pop %v1969
          %v1986 = vrcp.pop %v1970
          %v1987 = vrcp.pop %v1971
          %v1988 = vrcp.pop %v1972
          %v1989 = vrcp.pop %v1973
          %v1990 = vrcp.pop %v1974
          %v1991 = vrcp.pop %v1975
          %v1992 = vrcp.pop %v1976
          %v1993 = vrcp.pop %v1977
          %v1994 = vrcp.pop %v1978
          %v1995 = vrcp.pop %v1979
          %v1996 = vrcp.pop %v1980
          %v1997 = vrcp.pop %v1981
          %v1998 = vrcp.pop %v1982
          %2000 = vset.pattern.permute.xlu0 0
          %2001 = vperm.xlu0 %2000, %v1983
          %v2002 = vpop.permute.xlu0 %2001
          %2005 = vset.pattern.permute.xlu0 0
          %2006 = vperm.xlu0 %2005, %v1984
          %v2007 = vpop.permute.xlu0 %2006
          %2010 = vset.pattern.permute.xlu0 0
          %2011 = vperm.xlu0 %2010, %v1985
          %v2012 = vpop.permute.xlu0 %2011
          %2015 = vset.pattern.permute.xlu0 0
          %2016 = vperm.xlu0 %2015, %v1986
          %v2017 = vpop.permute.xlu0 %2016
          %2020 = vset.pattern.permute.xlu0 0
          %2021 = vperm.xlu0 %2020, %v1987
          %v2022 = vpop.permute.xlu0 %2021
          %2025 = vset.pattern.permute.xlu0 0
          %2026 = vperm.xlu0 %2025, %v1988
          %v2027 = vpop.permute.xlu0 %2026
          %2030 = vset.pattern.permute.xlu0 0
          %2031 = vperm.xlu0 %2030, %v1989
          %v2032 = vpop.permute.xlu0 %2031
          %2035 = vset.pattern.permute.xlu0 0
          %2036 = vperm.xlu0 %2035, %v1990
          %v2037 = vpop.permute.xlu0 %2036
          %2040 = vset.pattern.permute.xlu0 0
          %2041 = vperm.xlu0 %2040, %v1991
          %v2042 = vpop.permute.xlu0 %2041
          %2045 = vset.pattern.permute.xlu0 0
          %2046 = vperm.xlu0 %2045, %v1992
          %v2047 = vpop.permute.xlu0 %2046
          %2050 = vset.pattern.permute.xlu0 0
          %2051 = vperm.xlu0 %2050, %v1993
          %v2052 = vpop.permute.xlu0 %2051
          %2055 = vset.pattern.permute.xlu0 0
          %2056 = vperm.xlu0 %2055, %v1994
          %v2057 = vpop.permute.xlu0 %2056
          %2060 = vset.pattern.permute.xlu0 0
          %2061 = vperm.xlu0 %2060, %v1995
          %v2062 = vpop.permute.xlu0 %2061
          %2065 = vset.pattern.permute.xlu0 0
          %2066 = vperm.xlu0 %2065, %v1996
          %v2067 = vpop.permute.xlu0 %2066
          %2070 = vset.pattern.permute.xlu0 0
          %2071 = vperm.xlu0 %2070, %v1997
          %v2072 = vpop.permute.xlu0 %2071
          %2075 = vset.pattern.permute.xlu0 0
          %2076 = vperm.xlu0 %2075, %v1998
          %v2077 = vpop.permute.xlu0 %2076
          %v2079 = vmul.f32 %v1951, %v2002
          %v2080 = vmul.f32 %v1952, %v2007
          %v2081 = vmul.f32 %v1953, %v2012
          %v2082 = vmul.f32 %v1954, %v2017
          %v2083 = vmul.f32 %v1955, %v2022
          %v2084 = vmul.f32 %v1956, %v2027
          %v2085 = vmul.f32 %v1957, %v2032
          %v2086 = vmul.f32 %v1958, %v2037
          %v2087 = vmul.f32 %v1959, %v2042
          %v2088 = vmul.f32 %v1960, %v2047
          %v2089 = vmul.f32 %v1961, %v2052
          %v2090 = vmul.f32 %v1962, %v2057
          %v2091 = vmul.f32 %v1963, %v2062
          %v2092 = vmul.f32 %v1964, %v2067
          %v2093 = vmul.f32 %v1965, %v2072
          %v2094 = vmul.f32 %v1966, %v2077
          %v2095 = vpack.c.bf16 %v2080, %v2079
          %v2096 = vpack.c.bf16 %v2082, %v2081
          %v2097 = vpack.c.bf16 %v2084, %v2083
          %v2098 = vpack.c.bf16 %v2086, %v2085
          %v2099 = vpack.c.bf16 %v2088, %v2087
          %v2100 = vpack.c.bf16 %v2090, %v2089
          %v2101 = vpack.c.bf16 %v2092, %v2091
          %v2102 = vpack.c.bf16 %v2094, %v2093
          %v2111 = vunpack.c.l.b16 %v2095
          %v2112 = vunpack.c.h.b16 %v2095
          %v2113 = vunpack.c.l.b16 %v2096
          %v2114 = vunpack.c.h.b16 %v2096
          %v2115 = vunpack.c.l.b16 %v2097
          %v2116 = vunpack.c.h.b16 %v2097
          %v2117 = vunpack.c.l.b16 %v2098
          %v2118 = vunpack.c.h.b16 %v2098
          %v2119 = vunpack.c.l.b16 %v2099
          %v2120 = vunpack.c.h.b16 %v2099
          %v2121 = vunpack.c.l.b16 %v2100
          %v2122 = vunpack.c.h.b16 %v2100
          %v2123 = vunpack.c.l.b16 %v2101
          %v2124 = vunpack.c.h.b16 %v2101
          %v2125 = vunpack.c.l.b16 %v2102
          %v2126 = vunpack.c.h.b16 %v2102
          %v2127 = vpack.c.b16 %v2111, %v2111
          %v2128 = vpack.c.b16 %v2112, %v2112
          %v2129 = vpack.c.b16 %v2113, %v2113
          %v2130 = vpack.c.b16 %v2114, %v2114
          %v2131 = vpack.c.b16 %v2115, %v2115
          %v2132 = vpack.c.b16 %v2116, %v2116
          %v2133 = vpack.c.b16 %v2117, %v2117
          %v2134 = vpack.c.b16 %v2118, %v2118
          %v2135 = vpack.c.b16 %v2119, %v2119
          %v2136 = vpack.c.b16 %v2120, %v2120
          %v2137 = vpack.c.b16 %v2121, %v2121
          %v2138 = vpack.c.b16 %v2122, %v2122
          %v2139 = vpack.c.b16 %v2123, %v2123
          %v2140 = vpack.c.b16 %v2124, %v2124
          %v2141 = vpack.c.b16 %v2125, %v2125
          %v2142 = vpack.c.b16 %v2126, %v2126
          %vm2159 = vcmask 257024
          %2160 = vst.msk [vmem:[%s401] sm:$0xf] %vm2159, %v2127
          %2161 = vst.msk [vmem:[%s401 + $0x4] sm:$0xf] %vm2159, %v2128
          %2162 = vst.msk [vmem:[%s401 + $0x8] sm:$0xf] %vm2159, %v2129
          %2163 = vst.msk [vmem:[%s401 + $0xc] sm:$0xf] %vm2159, %v2130
          %2164 = vst.msk [vmem:[%s401 + $0x10] sm:$0xf] %vm2159, %v2131
          %2165 = vst.msk [vmem:[%s401 + $0x14] sm:$0xf] %vm2159, %v2132
          %2166 = vst.msk [vmem:[%s401 + $0x18] sm:$0xf] %vm2159, %v2133
          %2167 = vst.msk [vmem:[%s401 + $0x1c] sm:$0xf] %vm2159, %v2134
          %2168 = vst.msk [vmem:[%s401 + $0x20] sm:$0xf] %vm2159, %v2135
          %2169 = vst.msk [vmem:[%s401 + $0x24] sm:$0xf] %vm2159, %v2136
          %2170 = vst.msk [vmem:[%s401 + $0x28] sm:$0xf] %vm2159, %v2137
          %2171 = vst.msk [vmem:[%s401 + $0x2c] sm:$0xf] %vm2159, %v2138
          %2172 = vst.msk [vmem:[%s401 + $0x30] sm:$0xf] %vm2159, %v2139
          %2173 = vst.msk [vmem:[%s401 + $0x34] sm:$0xf] %vm2159, %v2140
          %2174 = vst.msk [vmem:[%s401 + $0x38] sm:$0xf] %vm2159, %v2141
          %2175 = vst.msk [vmem:[%s401 + $0x3c] sm:$0xf] %vm2159, %v2142
        $region48: #{expire_span_transformer_xl_forward.12} parent=39 // pred_fallthru
          _
      $region40: #{expire_span_transformer_xl_forward.12} parent=35 // pred_fallthru
        _
      %s2176 = smul.u32 16, %s23
      %p2177 = scmp.lt.s32.totalorder %s21, 1
      %s2178 = scalar_select %p2177, %s21, 1
      %p2179 = scmp.lt.s32.totalorder %s22, 3
      %s2180 = scalar_select %p2179, %s22, 3
      %p2181 = scmp.lt.s32.totalorder %s2176, 15
      %s2182 = scalar_select %p2181, %s2176, 15
      %s2183 = smul.addr %s2180, 16
      %s2184 = sadd.s32 %s2182, %s2183
      %s2185 = smul.addr %s2178, 64
      %s2186 = sadd.s32 %s2184, %s2185
      %s2187 = smul.addr %s2186, 4
      %s2188 = scalar_lea.vmem %s4, %s2187
      // Predicated region
      $region49: #{expire_span_transformer_xl_forward.12} parent=35 // pred_check
        %p2189 = pneg %p182
      $region50: #{expire_span_transformer_xl_forward.12} parent=35 // pred_check_branch
        %2191 = sbr.rel (%p2189) target = $region52
      $region51: #{expire_span_transformer_xl_forward.12} parent=35 // pred_region
        %s2192 = smul.u32 16, %s23
      $region52: #{expire_span_transformer_xl_forward.12} parent=35 // pred_fallthru
        _
    $region36: #{expire_span_transformer_xl_forward.12} parent=5 // pred_fallthru
      _
    %p2193 = scmp.le.s32.totalorder 2, %s10
    // Predicated region
    $region53: #{expire_span_transformer_xl_forward.12} parent=5 // pred_check
      %p2194 = pneg %p2193
    $region54: #{expire_span_transformer_xl_forward.12} parent=5 // pred_check_branch
      %2196 = sbr.rel (%p2194) target = $region56
    $region55: #{expire_span_transformer_xl_forward.12} parent=5 // pred_region
      %s2197 = ssub.s32 %s10, 2
      // Predicated region
      $region57: #{expire_span_transformer_xl_forward.12} parent=55 // pred_check
        %p2198 = pneg %p188
      $region58: #{expire_span_transformer_xl_forward.12} parent=55 // pred_check_branch
        %2200 = sbr.rel (%p2198) target = $region60
      $region59: #{expire_span_transformer_xl_forward.12} parent=55 // pred_region
        %s2201 = smul.u32 16, %s27
        %p2202 = scmp.lt.s32.totalorder %s25, 1
        %s2203 = scalar_select %p2202, %s25, 1
        %p2204 = scmp.lt.s32.totalorder %s26, 3
        %s2205 = scalar_select %p2204, %s26, 3
        %p2206 = scmp.lt.s32.totalorder %s2201, 15
        %s2207 = scalar_select %p2206, %s2201, 15
        %s2208 = smul.addr %s2205, 16
        %s2209 = sadd.s32 %s2207, %s2208
        %s2210 = smul.addr %s2203, 64
        %s2211 = sadd.s32 %s2209, %s2210
        %s2212 = smul.addr %s2211, 4
        %s2213 = scalar_lea.vmem %s4, %s2212
      $region60: #{expire_span_transformer_xl_forward.12} parent=55 // pred_fallthru
        _
    $region56: #{expire_span_transformer_xl_forward.12} parent=5 // pred_fallthru
      _
  $region6: #{expire_span_transformer_xl_forward.12} parent=0 // loop_footer
    %s14 = sadd.s32 1, %s10
  $region7: #{expire_span_transformer_xl_forward.12} parent=0 // loop_footer_branch
    %9 = sbr.rel target = $region3
  $region8: #{expire_span_transformer_xl_forward.12} parent=0 // loop_exit
    _

// kernel: expire_span_transformer_xl_forward.21
$region0: #{expire_span_transformer_xl_forward.21}
  #allocation0 [shape = 'u32[]', space=smem, size = 0x4, offset = 0x4, fixed_abs, tag = 'smem constant byte address 0x4 - core index']
  #allocation1 [shape = 'u32[144,128]{1,0:T(1,128)}', space=vmem, size = 0x12000, scoped, tag = 'internal scratch']
  #allocation2 [shape = 'f32[256,256]{1,0:T(8,128)}', space=vmem, size = 0x40000, scoped, tag = 'scratch operand']
  %s0 = inlined_call_operand.vmem [shape: bf16[256,128], index: 0, kind: input, shape index: {}]
  %s1 = inlined_call_operand.vmem [shape: bf16[128,256], index: 1, kind: input, shape index: {}]
  %s2 = inlined_call_operand.vmem [shape: f32[1,256], index: 2, kind: input, shape index: {}]
  %s3 = inlined_call_operand.hbm [shape: f32[256,256], index: 3, kind: output, shape index: {}]
  %s4 = sld [smem:[#allocation0]]
  $region30: #{expire_span_transformer_xl_forward.21} parent=0
    _
  %s6 = ssub.s32 1, %s4
  %s7 = scalar_select 0, %s6, %s4
  $region1: #{expire_span_transformer_xl_forward.21} parent=0
    #allocation3 [shape = 'u8[262144]{0}', space=vmem, size = 0x40000, scoped, tag = 'output window, operand 0, single buffered']
    #allocation4 [shape = 's32[1]{0}', space=sflag, size = 0x4, scoped, tag = 'scoped memory for expire_span_transformer_xl_forward.21']
    %8 = vsyncpa [#allocation4], 0
    // Predicated region
    $region2: #{expire_span_transformer_xl_forward.21} parent=1 // pred_check
      _
    $region3: #{expire_span_transformer_xl_forward.21} parent=1 // pred_check_branch
      %10 = sbr.rel (0) target = $region5
    $region4: #{expire_span_transformer_xl_forward.21} parent=1 // pred_region
      _
    $region5: #{expire_span_transformer_xl_forward.21} parent=1 // pred_fallthru
      _
    // Predicated region
    $region6: #{expire_span_transformer_xl_forward.21} parent=1 // pred_check
      _
    $region7: #{expire_span_transformer_xl_forward.21} parent=1 // pred_check_branch
      %12 = sbr.rel (0) target = $region9
    $region8: #{expire_span_transformer_xl_forward.21} parent=1 // pred_region
      _
    $region9: #{expire_span_transformer_xl_forward.21} parent=1 // pred_fallthru
      _
    // Predicated region
    $region10: #{expire_span_transformer_xl_forward.21} parent=1 // pred_check
      _
    $region11: #{expire_span_transformer_xl_forward.21} parent=1 // pred_check_branch
      %14 = sbr.rel (0) target = $region13
    $region12: #{expire_span_transformer_xl_forward.21} parent=1 // pred_region
      _
    $region13: #{expire_span_transformer_xl_forward.21} parent=1 // pred_fallthru
      _
    %p16 = scmp.eq.s32.totalorder 0, 0
    // Predicated region
    $region14: #{expire_span_transformer_xl_forward.21} parent=1 // pred_check
      %p17 = pneg %p16
    $region15: #{expire_span_transformer_xl_forward.21} parent=1 // pred_check_branch
      %19 = sbr.rel (%p17) target = $region17
    $region16: #{expire_span_transformer_xl_forward.21} parent=1 // pred_region
      %20 = vst [vmem:[#allocation2] sm:$0xff] 0.0
      %21 = vst [vmem:[#allocation2 + $0x8] sm:$0xff] 0.0
      %22 = vst [vmem:[#allocation2 + $0x10] sm:$0xff] 0.0
      %23 = vst [vmem:[#allocation2 + $0x18] sm:$0xff] 0.0
      %24 = vst [vmem:[#allocation2 + $0x20] sm:$0xff] 0.0
      %25 = vst [vmem:[#allocation2 + $0x28] sm:$0xff] 0.0
      %26 = vst [vmem:[#allocation2 + $0x30] sm:$0xff] 0.0
      %27 = vst [vmem:[#allocation2 + $0x38] sm:$0xff] 0.0
      %28 = vst [vmem:[#allocation2 + $0x40] sm:$0xff] 0.0
      %29 = vst [vmem:[#allocation2 + $0x48] sm:$0xff] 0.0
      %30 = vst [vmem:[#allocation2 + $0x50] sm:$0xff] 0.0
      %31 = vst [vmem:[#allocation2 + $0x58] sm:$0xff] 0.0
      %32 = vst [vmem:[#allocation2 + $0x60] sm:$0xff] 0.0
      %33 = vst [vmem:[#allocation2 + $0x68] sm:$0xff] 0.0
      %34 = vst [vmem:[#allocation2 + $0x70] sm:$0xff] 0.0
      %35 = vst [vmem:[#allocation2 + $0x78] sm:$0xff] 0.0
      %36 = vst [vmem:[#allocation2 + $0x80] sm:$0xff] 0.0
      %37 = vst [vmem:[#allocation2 + $0x88] sm:$0xff] 0.0
      %38 = vst [vmem:[#allocation2 + $0x90] sm:$0xff] 0.0
      %39 = vst [vmem:[#allocation2 + $0x98] sm:$0xff] 0.0
      %40 = vst [vmem:[#allocation2 + $0xa0] sm:$0xff] 0.0
      %41 = vst [vmem:[#allocation2 + $0xa8] sm:$0xff] 0.0
      %42 = vst [vmem:[#allocation2 + $0xb0] sm:$0xff] 0.0
      %43 = vst [vmem:[#allocation2 + $0xb8] sm:$0xff] 0.0
      %44 = vst [vmem:[#allocation2 + $0xc0] sm:$0xff] 0.0
      %45 = vst [vmem:[#allocation2 + $0xc8] sm:$0xff] 0.0
      %46 = vst [vmem:[#allocation2 + $0xd0] sm:$0xff] 0.0
      %47 = vst [vmem:[#allocation2 + $0xd8] sm:$0xff] 0.0
      %48 = vst [vmem:[#allocation2 + $0xe0] sm:$0xff] 0.0
      %49 = vst [vmem:[#allocation2 + $0xe8] sm:$0xff] 0.0
      %50 = vst [vmem:[#allocation2 + $0xf0] sm:$0xff] 0.0
      %51 = vst [vmem:[#allocation2 + $0xf8] sm:$0xff] 0.0
      %52 = vst [vmem:[#allocation2 + $0x100] sm:$0xff] 0.0
      %53 = vst [vmem:[#allocation2 + $0x108] sm:$0xff] 0.0
      %54 = vst [vmem:[#allocation2 + $0x110] sm:$0xff] 0.0
      %55 = vst [vmem:[#allocation2 + $0x118] sm:$0xff] 0.0
      %56 = vst [vmem:[#allocation2 + $0x120] sm:$0xff] 0.0
      %57 = vst [vmem:[#allocation2 + $0x128] sm:$0xff] 0.0
      %58 = vst [vmem:[#allocation2 + $0x130] sm:$0xff] 0.0
      %59 = vst [vmem:[#allocation2 + $0x138] sm:$0xff] 0.0
      %60 = vst [vmem:[#allocation2 + $0x140] sm:$0xff] 0.0
      %61 = vst [vmem:[#allocation2 + $0x148] sm:$0xff] 0.0
      %62 = vst [vmem:[#allocation2 + $0x150] sm:$0xff] 0.0
      %63 = vst [vmem:[#allocation2 + $0x158] sm:$0xff] 0.0
      %64 = vst [vmem:[#allocation2 + $0x160] sm:$0xff] 0.0
      %65 = vst [vmem:[#allocation2 + $0x168] sm:$0xff] 0.0
      %66 = vst [vmem:[#allocation2 + $0x170] sm:$0xff] 0.0
      %67 = vst [vmem:[#allocation2 + $0x178] sm:$0xff] 0.0
      %68 = vst [vmem:[#allocation2 + $0x180] sm:$0xff] 0.0
      %69 = vst [vmem:[#allocation2 + $0x188] sm:$0xff] 0.0
      %70 = vst [vmem:[#allocation2 + $0x190] sm:$0xff] 0.0
      %71 = vst [vmem:[#allocation2 + $0x198] sm:$0xff] 0.0
      %72 = vst [vmem:[#allocation2 + $0x1a0] sm:$0xff] 0.0
      %73 = vst [vmem:[#allocation2 + $0x1a8] sm:$0xff] 0.0
      %74 = vst [vmem:[#allocation2 + $0x1b0] sm:$0xff] 0.0
      %75 = vst [vmem:[#allocation2 + $0x1b8] sm:$0xff] 0.0
      %76 = vst [vmem:[#allocation2 + $0x1c0] sm:$0xff] 0.0
      %77 = vst [vmem:[#allocation2 + $0x1c8] sm:$0xff] 0.0
      %78 = vst [vmem:[#allocation2 + $0x1d0] sm:$0xff] 0.0
      %79 = vst [vmem:[#allocation2 + $0x1d8] sm:$0xff] 0.0
      %80 = vst [vmem:[#allocation2 + $0x1e0] sm:$0xff] 0.0
      %81 = vst [vmem:[#allocation2 + $0x1e8] sm:$0xff] 0.0
      %82 = vst [vmem:[#allocation2 + $0x1f0] sm:$0xff] 0.0
      %83 = vst [vmem:[#allocation2 + $0x1f8] sm:$0xff] 0.0
    $region17: #{expire_span_transformer_xl_forward.21} parent=1 // pred_fallthru
      _
    %v84 = vld [vmem:[%s0] sm:$0xf]
    %v85 = vld [vmem:[%s0 + $0x4] sm:$0xf]
    %v86 = vld [vmem:[%s0 + $0x8] sm:$0xf]
    %v87 = vld [vmem:[%s0 + $0xc] sm:$0xf]
    %v88 = vld [vmem:[%s0 + $0x10] sm:$0xf]
    %v89 = vld [vmem:[%s0 + $0x14] sm:$0xf]
    %v90 = vld [vmem:[%s0 + $0x18] sm:$0xf]
    %v91 = vld [vmem:[%s0 + $0x1c] sm:$0xf]
    %v92 = vld [vmem:[%s0 + $0x20] sm:$0xf]
    %v93 = vld [vmem:[%s0 + $0x24] sm:$0xf]
    %v94 = vld [vmem:[%s0 + $0x28] sm:$0xf]
    %v95 = vld [vmem:[%s0 + $0x2c] sm:$0xf]
    %v96 = vld [vmem:[%s0 + $0x30] sm:$0xf]
    %v97 = vld [vmem:[%s0 + $0x34] sm:$0xf]
    %v98 = vld [vmem:[%s0 + $0x38] sm:$0xf]
    %v99 = vld [vmem:[%s0 + $0x3c] sm:$0xf]
    %v100 = vld [vmem:[%s0 + $0x40] sm:$0xf]
    %v101 = vld [vmem:[%s0 + $0x44] sm:$0xf]
    %v102 = vld [vmem:[%s0 + $0x48] sm:$0xf]
    %v103 = vld [vmem:[%s0 + $0x4c] sm:$0xf]
    %v104 = vld [vmem:[%s0 + $0x50] sm:$0xf]
    %v105 = vld [vmem:[%s0 + $0x54] sm:$0xf]
    %v106 = vld [vmem:[%s0 + $0x58] sm:$0xf]
    %v107 = vld [vmem:[%s0 + $0x5c] sm:$0xf]
    %v108 = vld [vmem:[%s0 + $0x60] sm:$0xf]
    %v109 = vld [vmem:[%s0 + $0x64] sm:$0xf]
    %v110 = vld [vmem:[%s0 + $0x68] sm:$0xf]
    %v111 = vld [vmem:[%s0 + $0x6c] sm:$0xf]
    %v112 = vld [vmem:[%s0 + $0x70] sm:$0xf]
    %v113 = vld [vmem:[%s0 + $0x74] sm:$0xf]
    %v114 = vld [vmem:[%s0 + $0x78] sm:$0xf]
    %v115 = vld [vmem:[%s0 + $0x7c] sm:$0xf]
    %v116 = vld [vmem:[#allocation2] sm:$0xff]
    %v117 = vld [vmem:[#allocation2 + $0x8] sm:$0xff]
    %v118 = vld [vmem:[#allocation2 + $0x10] sm:$0xff]
    %v119 = vld [vmem:[#allocation2 + $0x18] sm:$0xff]
    %v120 = vld [vmem:[#allocation2 + $0x20] sm:$0xff]
    %v121 = vld [vmem:[#allocation2 + $0x28] sm:$0xff]
    %v122 = vld [vmem:[#allocation2 + $0x30] sm:$0xff]
    %v123 = vld [vmem:[#allocation2 + $0x38] sm:$0xff]
    %v124 = vld [vmem:[#allocation2 + $0x40] sm:$0xff]
    %v125 = vld [vmem:[#allocation2 + $0x48] sm:$0xff]
    %v126 = vld [vmem:[#allocation2 + $0x50] sm:$0xff]
    %v127 = vld [vmem:[#allocation2 + $0x58] sm:$0xff]
    %v128 = vld [vmem:[#allocation2 + $0x60] sm:$0xff]
    %v129 = vld [vmem:[#allocation2 + $0x68] sm:$0xff]
    %v130 = vld [vmem:[#allocation2 + $0x70] sm:$0xff]
    %v131 = vld [vmem:[#allocation2 + $0x78] sm:$0xff]
    %v132 = vld [vmem:[#allocation2 + $0x80] sm:$0xff]
    %v133 = vld [vmem:[#allocation2 + $0x88] sm:$0xff]
    %v134 = vld [vmem:[#allocation2 + $0x90] sm:$0xff]
    %v135 = vld [vmem:[#allocation2 + $0x98] sm:$0xff]
    %v136 = vld [vmem:[#allocation2 + $0xa0] sm:$0xff]
    %v137 = vld [vmem:[#allocation2 + $0xa8] sm:$0xff]
    %v138 = vld [vmem:[#allocation2 + $0xb0] sm:$0xff]
    %v139 = vld [vmem:[#allocation2 + $0xb8] sm:$0xff]
    %v140 = vld [vmem:[#allocation2 + $0xc0] sm:$0xff]
    %v141 = vld [vmem:[#allocation2 + $0xc8] sm:$0xff]
    %v142 = vld [vmem:[#allocation2 + $0xd0] sm:$0xff]
    %v143 = vld [vmem:[#allocation2 + $0xd8] sm:$0xff]
    %v144 = vld [vmem:[#allocation2 + $0xe0] sm:$0xff]
    %v145 = vld [vmem:[#allocation2 + $0xe8] sm:$0xff]
    %v146 = vld [vmem:[#allocation2 + $0xf0] sm:$0xff]
    %v147 = vld [vmem:[#allocation2 + $0xf8] sm:$0xff]
    %v148 = vld [vmem:[#allocation2 + $0x100] sm:$0xff]
    %v149 = vld [vmem:[#allocation2 + $0x108] sm:$0xff]
    %v150 = vld [vmem:[#allocation2 + $0x110] sm:$0xff]
    %v151 = vld [vmem:[#allocation2 + $0x118] sm:$0xff]
    %v152 = vld [vmem:[#allocation2 + $0x120] sm:$0xff]
    %v153 = vld [vmem:[#allocation2 + $0x128] sm:$0xff]
    %v154 = vld [vmem:[#allocation2 + $0x130] sm:$0xff]
    %v155 = vld [vmem:[#allocation2 + $0x138] sm:$0xff]
    %v156 = vld [vmem:[#allocation2 + $0x140] sm:$0xff]
    %v157 = vld [vmem:[#allocation2 + $0x148] sm:$0xff]
    %v158 = vld [vmem:[#allocation2 + $0x150] sm:$0xff]
    %v159 = vld [vmem:[#allocation2 + $0x158] sm:$0xff]
    %v160 = vld [vmem:[#allocation2 + $0x160] sm:$0xff]
    %v161 = vld [vmem:[#allocation2 + $0x168] sm:$0xff]
    %v162 = vld [vmem:[#allocation2 + $0x170] sm:$0xff]
    %v163 = vld [vmem:[#allocation2 + $0x178] sm:$0xff]
    %v164 = vld [vmem:[#allocation2 + $0x180] sm:$0xff]
    %v165 = vld [vmem:[#allocation2 + $0x188] sm:$0xff]
    %v166 = vld [vmem:[#allocation2 + $0x190] sm:$0xff]
    %v167 = vld [vmem:[#allocation2 + $0x198] sm:$0xff]
    %v168 = vld [vmem:[#allocation2 + $0x1a0] sm:$0xff]
    %v169 = vld [vmem:[#allocation2 + $0x1a8] sm:$0xff]
    %v170 = vld [vmem:[#allocation2 + $0x1b0] sm:$0xff]
    %v171 = vld [vmem:[#allocation2 + $0x1b8] sm:$0xff]
    %v172 = vld [vmem:[#allocation2 + $0x1c0] sm:$0xff]
    %v173 = vld [vmem:[#allocation2 + $0x1c8] sm:$0xff]
    %v174 = vld [vmem:[#allocation2 + $0x1d0] sm:$0xff]
    %v175 = vld [vmem:[#allocation2 + $0x1d8] sm:$0xff]
    %v176 = vld [vmem:[#allocation2 + $0x1e0] sm:$0xff]
    %v177 = vld [vmem:[#allocation2 + $0x1e8] sm:$0xff]
    %v178 = vld [vmem:[#allocation2 + $0x1f0] sm:$0xff]
    %v179 = vld [vmem:[#allocation2 + $0x1f8] sm:$0xff]
    %v180 = vld [vmem:[%s1] sm:$0xff]
    %v181 = vld [vmem:[%s1 + $0x8] sm:$0xff]
    %v182 = vld [vmem:[%s1 + $0x10] sm:$0xff]
    %v183 = vld [vmem:[%s1 + $0x18] sm:$0xff]
    %v184 = vld [vmem:[%s1 + $0x20] sm:$0xff]
    %v185 = vld [vmem:[%s1 + $0x28] sm:$0xff]
    %v186 = vld [vmem:[%s1 + $0x30] sm:$0xff]
    %v187 = vld [vmem:[%s1 + $0x38] sm:$0xff]
    %v188 = vld [vmem:[%s1 + $0x40] sm:$0xff]
    %v189 = vld [vmem:[%s1 + $0x48] sm:$0xff]
    %v190 = vld [vmem:[%s1 + $0x50] sm:$0xff]
    %v191 = vld [vmem:[%s1 + $0x58] sm:$0xff]
    %v192 = vld [vmem:[%s1 + $0x60] sm:$0xff]
    %v193 = vld [vmem:[%s1 + $0x68] sm:$0xff]
    %v194 = vld [vmem:[%s1 + $0x70] sm:$0xff]
    %v195 = vld [vmem:[%s1 + $0x78] sm:$0xff]
    %v228 = vunpack.c.l.b16 %v84
    %v229 = vunpack.c.l.b16 %v85
    %v230 = vunpack.c.l.b16 %v86
    %v231 = vunpack.c.l.b16 %v87
    %v232 = vunpack.c.l.b16 %v88
    %v233 = vunpack.c.l.b16 %v89
    %v234 = vunpack.c.l.b16 %v90
    %v235 = vunpack.c.l.b16 %v91
    %v236 = vunpack.c.l.b16 %v92
    %v237 = vunpack.c.l.b16 %v93
    %v238 = vunpack.c.l.b16 %v94
    %v239 = vunpack.c.l.b16 %v95
    %v240 = vunpack.c.l.b16 %v96
    %v241 = vunpack.c.l.b16 %v97
    %v242 = vunpack.c.l.b16 %v98
    %v243 = vunpack.c.l.b16 %v99
    %v244 = vunpack.c.l.b16 %v100
    %v245 = vunpack.c.l.b16 %v101
    %v246 = vunpack.c.l.b16 %v102
    %v247 = vunpack.c.l.b16 %v103
    %v248 = vunpack.c.l.b16 %v104
    %v249 = vunpack.c.l.b16 %v105
    %v250 = vunpack.c.l.b16 %v106
    %v251 = vunpack.c.l.b16 %v107
    %v252 = vunpack.c.l.b16 %v108
    %v253 = vunpack.c.l.b16 %v109
    %v254 = vunpack.c.l.b16 %v110
    %v255 = vunpack.c.l.b16 %v111
    %v256 = vunpack.c.l.b16 %v112
    %v257 = vunpack.c.l.b16 %v113
    %v258 = vunpack.c.l.b16 %v114
    %v259 = vunpack.c.l.b16 %v115
    %v260 = vpack.c.b16 %v229, %v228
    %v261 = vpack.c.b16 %v231, %v230
    %v262 = vpack.c.b16 %v233, %v232
    %v263 = vpack.c.b16 %v235, %v234
    %v264 = vpack.c.b16 %v237, %v236
    %v265 = vpack.c.b16 %v239, %v238
    %v266 = vpack.c.b16 %v241, %v240
    %v267 = vpack.c.b16 %v243, %v242
    %v268 = vpack.c.b16 %v245, %v244
    %v269 = vpack.c.b16 %v247, %v246
    %v270 = vpack.c.b16 %v249, %v248
    %v271 = vpack.c.b16 %v251, %v250
    %v272 = vpack.c.b16 %v253, %v252
    %v273 = vpack.c.b16 %v255, %v254
    %v274 = vpack.c.b16 %v257, %v256
    %v275 = vpack.c.b16 %v259, %v258
    %v308 = vunpack.c.l.b16 %v180
    %v309 = vunpack.c.h.b16 %v180
    %v310 = vunpack.c.l.b16 %v181
    %v311 = vunpack.c.h.b16 %v181
    %v312 = vunpack.c.l.b16 %v182
    %v313 = vunpack.c.h.b16 %v182
    %v314 = vunpack.c.l.b16 %v183
    %v315 = vunpack.c.h.b16 %v183
    %v316 = vunpack.c.l.b16 %v184
    %v317 = vunpack.c.h.b16 %v184
    %v318 = vunpack.c.l.b16 %v185
    %v319 = vunpack.c.h.b16 %v185
    %v320 = vunpack.c.l.b16 %v186
    %v321 = vunpack.c.h.b16 %v186
    %v322 = vunpack.c.l.b16 %v187
    %v323 = vunpack.c.h.b16 %v187
    %v324 = vunpack.c.l.b16 %v188
    %v325 = vunpack.c.h.b16 %v188
    %v326 = vunpack.c.l.b16 %v189
    %v327 = vunpack.c.h.b16 %v189
    %v328 = vunpack.c.l.b16 %v190
    %v329 = vunpack.c.h.b16 %v190
    %v330 = vunpack.c.l.b16 %v191
    %v331 = vunpack.c.h.b16 %v191
    %v332 = vunpack.c.l.b16 %v192
    %v333 = vunpack.c.h.b16 %v192
    %v334 = vunpack.c.l.b16 %v193
    %v335 = vunpack.c.h.b16 %v193
    %v336 = vunpack.c.l.b16 %v194
    %v337 = vunpack.c.h.b16 %v194
    %v338 = vunpack.c.l.b16 %v195
    %v339 = vunpack.c.h.b16 %v195
    %v340 = vpack.c.b16 %v310, %v308
    %v341 = vpack.c.b16 %v311, %v309
    %v342 = vpack.c.b16 %v314, %v312
    %v343 = vpack.c.b16 %v315, %v313
    %v344 = vpack.c.b16 %v318, %v316
    %v345 = vpack.c.b16 %v319, %v317
    %v346 = vpack.c.b16 %v322, %v320
    %v347 = vpack.c.b16 %v323, %v321
    %v348 = vpack.c.b16 %v326, %v324
    %v349 = vpack.c.b16 %v327, %v325
    %v350 = vpack.c.b16 %v330, %v328
    %v351 = vpack.c.b16 %v331, %v329
    %v352 = vpack.c.b16 %v334, %v332
    %v353 = vpack.c.b16 %v335, %v333
    %v354 = vpack.c.b16 %v338, %v336
    %v355 = vpack.c.b16 %v339, %v337
    %372 = vmatprep.subr.bf16.mxu0 %v341
    %373 = vmatpush1.bf16.msra.mxu0 %v340
    %374 = vmatprep.subr.bf16.mxu0 %v343
    %375 = vmatpush1.bf16.msra.mxu0 %v342
    %376 = vmatprep.subr.bf16.mxu0 %v345
    %377 = vmatpush1.bf16.msra.mxu0 %v344
    %378 = vmatprep.subr.bf16.mxu0 %v347
    %379 = vmatpush1.bf16.msra.mxu0 %v346
    %380 = vmatprep.subr.bf16.mxu0 %v349
    %381 = vmatpush1.bf16.msra.mxu0 %v348
    %382 = vmatprep.subr.bf16.mxu0 %v351
    %383 = vmatpush1.bf16.msra.mxu0 %v350
    %384 = vmatprep.subr.bf16.mxu0 %v353
    %385 = vmatpush1.bf16.msra.mxu0 %v352
    %386 = vmatprep.subr.bf16.mxu0 %v355
    %387 = vmatpush1.bf16.msra.mxu0 %v354
    %388 = vmatprep.subr.bf16.mxu0 0
    %389 = vmatpush1.bf16.msra.mxu0 0
    %390 = vmatprep.subr.bf16.mxu0 0
    %391 = vmatpush1.bf16.msra.mxu0 0
    %392 = vmatprep.subr.bf16.mxu0 0
    %393 = vmatpush1.bf16.msra.mxu0 0
    %394 = vmatprep.subr.bf16.mxu0 0
    %395 = vmatpush1.bf16.msra.mxu0 0
    %396 = vmatprep.subr.bf16.mxu0 0
    %397 = vmatpush1.bf16.msra.mxu0 0
    %398 = vmatprep.subr.bf16.mxu0 0
    %399 = vmatpush1.bf16.msra.mxu0 0
    %400 = vmatprep.subr.bf16.mxu0 0
    %401 = vmatpush1.bf16.msra.mxu0 0
    %402 = vmatprep.subr.bf16.mxu0 0
    %403 = vmatpush1.bf16.msra.mxu0 0
    %404 = vmatprep.mubr.bf16.mxu0 0
    %405 = vmatmul.mubr.bf16.gmra.mrb[0].mxu0 %v260
    %v406 = vpop.f32.mrb[0].mxu0
    %v407 = vadd.f32 0.0, %v406
    %v408 = vpop.f32.mrb[0].mxu0
    %v409 = vadd.f32 0.0, %v408
    %v410 = vpop.f32.mrb[0].mxu0
    %v411 = vadd.f32 0.0, %v410
    %v412 = vpop.f32.mrb[0].mxu0
    %v413 = vadd.f32 0.0, %v412
    %414 = vmatprep.mubr.bf16.mxu0 0
    %415 = vmatmul.mubr.bf16.gmra.mrb[0].mxu0 %v261
    %v416 = vpop.f32.mrb[0].mxu0
    %v417 = vadd.f32 0.0, %v416
    %v418 = vpop.f32.mrb[0].mxu0
    %v419 = vadd.f32 0.0, %v418
    %v420 = vpop.f32.mrb[0].mxu0
    %v421 = vadd.f32 0.0, %v420
    %v422 = vpop.f32.mrb[0].mxu0
    %v423 = vadd.f32 0.0, %v422
    %424 = vmatprep.mubr.bf16.mxu0 0
    %425 = vmatmul.mubr.bf16.gmra.mrb[0].mxu0 %v262
    %v426 = vpop.f32.mrb[0].mxu0
    %v427 = vadd.f32 0.0, %v426
    %v428 = vpop.f32.mrb[0].mxu0
    %v429 = vadd.f32 0.0, %v428
    %v430 = vpop.f32.mrb[0].mxu0
    %v431 = vadd.f32 0.0, %v430
    %v432 = vpop.f32.mrb[0].mxu0
    %v433 = vadd.f32 0.0, %v432
    %434 = vmatprep.mubr.bf16.mxu0 0
    %435 = vmatmul.mubr.bf16.gmra.mrb[0].mxu0 %v263
    %v436 = vpop.f32.mrb[0].mxu0
    %v437 = vadd.f32 0.0, %v436
    %v438 = vpop.f32.mrb[0].mxu0
    %v439 = vadd.f32 0.0, %v438
    %v440 = vpop.f32.mrb[0].mxu0
    %v441 = vadd.f32 0.0, %v440
    %v442 = vpop.f32.mrb[0].mxu0
    %v443 = vadd.f32 0.0, %v442
    %444 = vmatprep.mubr.bf16.mxu0 0
    %445 = vmatmul.mubr.bf16.gmra.mrb[0].mxu0 %v264
    %v446 = vpop.f32.mrb[0].mxu0
    %v447 = vadd.f32 0.0, %v446
    %v448 = vpop.f32.mrb[0].mxu0
    %v449 = vadd.f32 0.0, %v448
    %v450 = vpop.f32.mrb[0].mxu0
    %v451 = vadd.f32 0.0, %v450
    %v452 = vpop.f32.mrb[0].mxu0
    %v453 = vadd.f32 0.0, %v452
    %454 = vmatprep.mubr.bf16.mxu0 0
    %455 = vmatmul.mubr.bf16.gmra.mrb[0].mxu0 %v265
    %v456 = vpop.f32.mrb[0].mxu0
    %v457 = vadd.f32 0.0, %v456
    %v458 = vpop.f32.mrb[0].mxu0
    %v459 = vadd.f32 0.0, %v458
    %v460 = vpop.f32.mrb[0].mxu0
    %v461 = vadd.f32 0.0, %v460
    %v462 = vpop.f32.mrb[0].mxu0
    %v463 = vadd.f32 0.0, %v462
    %464 = vmatprep.mubr.bf16.mxu0 0
    %465 = vmatmul.mubr.bf16.gmra.mrb[0].mxu0 %v266
    %v466 = vpop.f32.mrb[0].mxu0
    %v467 = vadd.f32 0.0, %v466
    %v468 = vpop.f32.mrb[0].mxu0
    %v469 = vadd.f32 0.0, %v468
    %v470 = vpop.f32.mrb[0].mxu0
    %v471 = vadd.f32 0.0, %v470
    %v472 = vpop.f32.mrb[0].mxu0
    %v473 = vadd.f32 0.0, %v472
    %474 = vmatprep.mubr.bf16.mxu0 0
    %475 = vmatmul.mubr.bf16.gmra.mrb[0].mxu0 %v267
    %v476 = vpop.f32.mrb[0].mxu0
    %v477 = vadd.f32 0.0, %v476
    %v478 = vpop.f32.mrb[0].mxu0
    %v479 = vadd.f32 0.0, %v478
    %v480 = vpop.f32.mrb[0].mxu0
    %v481 = vadd.f32 0.0, %v480
    %v482 = vpop.f32.mrb[0].mxu0
    %v483 = vadd.f32 0.0, %v482
    %484 = vmatprep.mubr.bf16.mxu0 0
    %485 = vmatmul.mubr.bf16.gmra.mrb[0].mxu0 %v268
    %v486 = vpop.f32.mrb[0].mxu0
    %v487 = vadd.f32 0.0, %v486
    %v488 = vpop.f32.mrb[0].mxu0
    %v489 = vadd.f32 0.0, %v488
    %v490 = vpop.f32.mrb[0].mxu0
    %v491 = vadd.f32 0.0, %v490
    %v492 = vpop.f32.mrb[0].mxu0
    %v493 = vadd.f32 0.0, %v492
    %494 = vmatprep.mubr.bf16.mxu0 0
    %495 = vmatmul.mubr.bf16.gmra.mrb[0].mxu0 %v269
    %v496 = vpop.f32.mrb[0].mxu0
    %v497 = vadd.f32 0.0, %v496
    %v498 = vpop.f32.mrb[0].mxu0
    %v499 = vadd.f32 0.0, %v498
    %v500 = vpop.f32.mrb[0].mxu0
    %v501 = vadd.f32 0.0, %v500
    %v502 = vpop.f32.mrb[0].mxu0
    %v503 = vadd.f32 0.0, %v502
    %504 = vmatprep.mubr.bf16.mxu0 0
    %505 = vmatmul.mubr.bf16.gmra.mrb[0].mxu0 %v270
    %v506 = vpop.f32.mrb[0].mxu0
    %v507 = vadd.f32 0.0, %v506
    %v508 = vpop.f32.mrb[0].mxu0
    %v509 = vadd.f32 0.0, %v508
    %v510 = vpop.f32.mrb[0].mxu0
    %v511 = vadd.f32 0.0, %v510
    %v512 = vpop.f32.mrb[0].mxu0
    %v513 = vadd.f32 0.0, %v512
    %514 = vmatprep.mubr.bf16.mxu0 0
    %515 = vmatmul.mubr.bf16.gmra.mrb[0].mxu0 %v271
    %v516 = vpop.f32.mrb[0].mxu0
    %v517 = vadd.f32 0.0, %v516
    %v518 = vpop.f32.mrb[0].mxu0
    %v519 = vadd.f32 0.0, %v518
    %v520 = vpop.f32.mrb[0].mxu0
    %v521 = vadd.f32 0.0, %v520
    %v522 = vpop.f32.mrb[0].mxu0
    %v523 = vadd.f32 0.0, %v522
    %524 = vmatprep.mubr.bf16.mxu0 0
    %525 = vmatmul.mubr.bf16.gmra.mrb[0].mxu0 %v272
    %v526 = vpop.f32.mrb[0].mxu0
    %v527 = vadd.f32 0.0, %v526
    %v528 = vpop.f32.mrb[0].mxu0
    %v529 = vadd.f32 0.0, %v528
    %v530 = vpop.f32.mrb[0].mxu0
    %v531 = vadd.f32 0.0, %v530
    %v532 = vpop.f32.mrb[0].mxu0
    %v533 = vadd.f32 0.0, %v532
    %534 = vmatprep.mubr.bf16.mxu0 0
    %535 = vmatmul.mubr.bf16.gmra.mrb[0].mxu0 %v273
    %v536 = vpop.f32.mrb[0].mxu0
    %v537 = vadd.f32 0.0, %v536
    %v538 = vpop.f32.mrb[0].mxu0
    %v539 = vadd.f32 0.0, %v538
    %v540 = vpop.f32.mrb[0].mxu0
    %v541 = vadd.f32 0.0, %v540
    %v542 = vpop.f32.mrb[0].mxu0
    %v543 = vadd.f32 0.0, %v542
    %544 = vmatprep.mubr.bf16.mxu0 0
    %545 = vmatmul.mubr.bf16.gmra.mrb[0].mxu0 %v274
    %v546 = vpop.f32.mrb[0].mxu0
    %v547 = vadd.f32 0.0, %v546
    %v548 = vpop.f32.mrb[0].mxu0
    %v549 = vadd.f32 0.0, %v548
    %v550 = vpop.f32.mrb[0].mxu0
    %v551 = vadd.f32 0.0, %v550
    %v552 = vpop.f32.mrb[0].mxu0
    %v553 = vadd.f32 0.0, %v552
    %554 = vmatprep.mubr.bf16.mxu0 0
    %555 = vmatmul.mubr.bf16.gmra.mrb[0].mxu0 %v275
    %v556 = vpop.f32.mrb[0].mxu0
    %v557 = vadd.f32 0.0, %v556
    %v558 = vpop.f32.mrb[0].mxu0
    %v559 = vadd.f32 0.0, %v558
    %v560 = vpop.f32.mrb[0].mxu0
    %v561 = vadd.f32 0.0, %v560
    %v562 = vpop.f32.mrb[0].mxu0
    %v563 = vadd.f32 0.0, %v562
    %564 = vdwg.mxu0
    %v565 = vadd.f32 %v116, %v407
    %v566 = vadd.f32 %v117, %v409
    %v567 = vadd.f32 %v118, %v411
    %v568 = vadd.f32 %v119, %v413
    %v569 = vadd.f32 %v120, %v417
    %v570 = vadd.f32 %v121, %v419
    %v571 = vadd.f32 %v122, %v421
    %v572 = vadd.f32 %v123, %v423
    %v573 = vadd.f32 %v124, %v427
    %v574 = vadd.f32 %v125, %v429
    %v575 = vadd.f32 %v126, %v431
    %v576 = vadd.f32 %v127, %v433
    %v577 = vadd.f32 %v128, %v437
    %v578 = vadd.f32 %v129, %v439
    %v579 = vadd.f32 %v130, %v441
    %v580 = vadd.f32 %v131, %v443
    %v581 = vadd.f32 %v132, %v447
    %v582 = vadd.f32 %v133, %v449
    %v583 = vadd.f32 %v134, %v451
    %v584 = vadd.f32 %v135, %v453
    %v585 = vadd.f32 %v136, %v457
    %v586 = vadd.f32 %v137, %v459
    %v587 = vadd.f32 %v138, %v461
    %v588 = vadd.f32 %v139, %v463
    %v589 = vadd.f32 %v140, %v467
    %v590 = vadd.f32 %v141, %v469
    %v591 = vadd.f32 %v142, %v471
    %v592 = vadd.f32 %v143, %v473
    %v593 = vadd.f32 %v144, %v477
    %v594 = vadd.f32 %v145, %v479
    %v595 = vadd.f32 %v146, %v481
    %v596 = vadd.f32 %v147, %v483
    %v597 = vadd.f32 %v148, %v487
    %v598 = vadd.f32 %v149, %v489
    %v599 = vadd.f32 %v150, %v491
    %v600 = vadd.f32 %v151, %v493
    %v601 = vadd.f32 %v152, %v497
    %v602 = vadd.f32 %v153, %v499
    %v603 = vadd.f32 %v154, %v501
    %v604 = vadd.f32 %v155, %v503
    %v605 = vadd.f32 %v156, %v507
    %v606 = vadd.f32 %v157, %v509
    %v607 = vadd.f32 %v158, %v511
    %v608 = vadd.f32 %v159, %v513
    %v609 = vadd.f32 %v160, %v517
    %v610 = vadd.f32 %v161, %v519
    %v611 = vadd.f32 %v162, %v521
    %v612 = vadd.f32 %v163, %v523
    %v613 = vadd.f32 %v164, %v527
    %v614 = vadd.f32 %v165, %v529
    %v615 = vadd.f32 %v166, %v531
    %v616 = vadd.f32 %v167, %v533
    %v617 = vadd.f32 %v168, %v537
    %v618 = vadd.f32 %v169, %v539
    %v619 = vadd.f32 %v170, %v541
    %v620 = vadd.f32 %v171, %v543
    %v621 = vadd.f32 %v172, %v547
    %v622 = vadd.f32 %v173, %v549
    %v623 = vadd.f32 %v174, %v551
    %v624 = vadd.f32 %v175, %v553
    %v625 = vadd.f32 %v176, %v557
    %v626 = vadd.f32 %v177, %v559
    %v627 = vadd.f32 %v178, %v561
    %v628 = vadd.f32 %v179, %v563
    %629 = vst [vmem:[#allocation2] sm:$0xff] %v565
    %630 = vst [vmem:[#allocation2 + $0x8] sm:$0xff] %v566
    %631 = vst [vmem:[#allocation2 + $0x10] sm:$0xff] %v567
    %632 = vst [vmem:[#allocation2 + $0x18] sm:$0xff] %v568
    %633 = vst [vmem:[#allocation2 + $0x20] sm:$0xff] %v569
    %634 = vst [vmem:[#allocation2 + $0x28] sm:$0xff] %v570
    %635 = vst [vmem:[#allocation2 + $0x30] sm:$0xff] %v571
    %636 = vst [vmem:[#allocation2 + $0x38] sm:$0xff] %v572
    %637 = vst [vmem:[#allocation2 + $0x40] sm:$0xff] %v573
    %638 = vst [vmem:[#allocation2 + $0x48] sm:$0xff] %v574
    %639 = vst [vmem:[#allocation2 + $0x50] sm:$0xff] %v575
    %640 = vst [vmem:[#allocation2 + $0x58] sm:$0xff] %v576
    %641 = vst [vmem:[#allocation2 + $0x60] sm:$0xff] %v577
    %642 = vst [vmem:[#allocation2 + $0x68] sm:$0xff] %v578
    %643 = vst [vmem:[#allocation2 + $0x70] sm:$0xff] %v579
    %644 = vst [vmem:[#allocation2 + $0x78] sm:$0xff] %v580
    %645 = vst [vmem:[#allocation2 + $0x80] sm:$0xff] %v581
    %646 = vst [vmem:[#allocation2 + $0x88] sm:$0xff] %v582
    %647 = vst [vmem:[#allocation2 + $0x90] sm:$0xff] %v583
    %648 = vst [vmem:[#allocation2 + $0x98] sm:$0xff] %v584
    %649 = vst [vmem:[#allocation2 + $0xa0] sm:$0xff] %v585
    %650 = vst [vmem:[#allocation2 + $0xa8] sm:$0xff] %v586
    %651 = vst [vmem:[#allocation2 + $0xb0] sm:$0xff] %v587
    %652 = vst [vmem:[#allocation2 + $0xb8] sm:$0xff] %v588
    %653 = vst [vmem:[#allocation2 + $0xc0] sm:$0xff] %v589
    %654 = vst [vmem:[#allocation2 + $0xc8] sm:$0xff] %v590
    %655 = vst [vmem:[#allocation2 + $0xd0] sm:$0xff] %v591
    %656 = vst [vmem:[#allocation2 + $0xd8] sm:$0xff] %v592
    %657 = vst [vmem:[#allocation2 + $0xe0] sm:$0xff] %v593
    %658 = vst [vmem:[#allocation2 + $0xe8] sm:$0xff] %v594
    %659 = vst [vmem:[#allocation2 + $0xf0] sm:$0xff] %v595
    %660 = vst [vmem:[#allocation2 + $0xf8] sm:$0xff] %v596
    %661 = vst [vmem:[#allocation2 + $0x100] sm:$0xff] %v597
    %662 = vst [vmem:[#allocation2 + $0x108] sm:$0xff] %v598
    %663 = vst [vmem:[#allocation2 + $0x110] sm:$0xff] %v599
    %664 = vst [vmem:[#allocation2 + $0x118] sm:$0xff] %v600
    %665 = vst [vmem:[#allocation2 + $0x120] sm:$0xff] %v601
    %666 = vst [vmem:[#allocation2 + $0x128] sm:$0xff] %v602
    %667 = vst [vmem:[#allocation2 + $0x130] sm:$0xff] %v603
    %668 = vst [vmem:[#allocation2 + $0x138] sm:$0xff] %v604
    %669 = vst [vmem:[#allocation2 + $0x140] sm:$0xff] %v605
    %670 = vst [vmem:[#allocation2 + $0x148] sm:$0xff] %v606
    %671 = vst [vmem:[#allocation2 + $0x150] sm:$0xff] %v607
    %672 = vst [vmem:[#allocation2 + $0x158] sm:$0xff] %v608
    %673 = vst [vmem:[#allocation2 + $0x160] sm:$0xff] %v609
    %674 = vst [vmem:[#allocation2 + $0x168] sm:$0xff] %v610
    %675 = vst [vmem:[#allocation2 + $0x170] sm:$0xff] %v611
    %676 = vst [vmem:[#allocation2 + $0x178] sm:$0xff] %v612
    %677 = vst [vmem:[#allocation2 + $0x180] sm:$0xff] %v613
    %678 = vst [vmem:[#allocation2 + $0x188] sm:$0xff] %v614
    %679 = vst [vmem:[#allocation2 + $0x190] sm:$0xff] %v615
    %680 = vst [vmem:[#allocation2 + $0x198] sm:$0xff] %v616
    %681 = vst [vmem:[#allocation2 + $0x1a0] sm:$0xff] %v617
    %682 = vst [vmem:[#allocation2 + $0x1a8] sm:$0xff] %v618
    %683 = vst [vmem:[#allocation2 + $0x1b0] sm:$0xff] %v619
    %684 = vst [vmem:[#allocation2 + $0x1b8] sm:$0xff] %v620
    %685 = vst [vmem:[#allocation2 + $0x1c0] sm:$0xff] %v621
    %686 = vst [vmem:[#allocation2 + $0x1c8] sm:$0xff] %v622
    %687 = vst [vmem:[#allocation2 + $0x1d0] sm:$0xff] %v623
    %688 = vst [vmem:[#allocation2 + $0x1d8] sm:$0xff] %v624
    %689 = vst [vmem:[#allocation2 + $0x1e0] sm:$0xff] %v625
    %690 = vst [vmem:[#allocation2 + $0x1e8] sm:$0xff] %v626
    %691 = vst [vmem:[#allocation2 + $0x1f0] sm:$0xff] %v627
    %692 = vst [vmem:[#allocation2 + $0x1f8] sm:$0xff] %v628
    // Predicated region
    $region18: #{expire_span_transformer_xl_forward.21} parent=1 // pred_check
      %p693 = pneg %p16
    $region19: #{expire_span_transformer_xl_forward.21} parent=1 // pred_check_branch
      %695 = sbr.rel (%p693) target = $region21
    $region20: #{expire_span_transformer_xl_forward.21} parent=1 // pred_region
      %v696 = vld [vmem:[#allocation2] sm:$0xff]
      %v697 = vld [vmem:[#allocation2 + $0x8] sm:$0xff]
      %v698 = vld [vmem:[#allocation2 + $0x10] sm:$0xff]
      %v699 = vld [vmem:[#allocation2 + $0x18] sm:$0xff]
      %v700 = vld [vmem:[#allocation2 + $0x20] sm:$0xff]
      %v701 = vld [vmem:[#allocation2 + $0x28] sm:$0xff]
      %v702 = vld [vmem:[#allocation2 + $0x30] sm:$0xff]
      %v703 = vld [vmem:[#allocation2 + $0x38] sm:$0xff]
      %v704 = vld [vmem:[#allocation2 + $0x40] sm:$0xff]
      %v705 = vld [vmem:[#allocation2 + $0x48] sm:$0xff]
      %v706 = vld [vmem:[#allocation2 + $0x50] sm:$0xff]
      %v707 = vld [vmem:[#allocation2 + $0x58] sm:$0xff]
      %v708 = vld [vmem:[#allocation2 + $0x60] sm:$0xff]
      %v709 = vld [vmem:[#allocation2 + $0x68] sm:$0xff]
      %v710 = vld [vmem:[#allocation2 + $0x70] sm:$0xff]
      %v711 = vld [vmem:[#allocation2 + $0x78] sm:$0xff]
      %v712 = vld [vmem:[#allocation2 + $0x80] sm:$0xff]
      %v713 = vld [vmem:[#allocation2 + $0x88] sm:$0xff]
      %v714 = vld [vmem:[#allocation2 + $0x90] sm:$0xff]
      %v715 = vld [vmem:[#allocation2 + $0x98] sm:$0xff]
      %v716 = vld [vmem:[#allocation2 + $0xa0] sm:$0xff]
      %v717 = vld [vmem:[#allocation2 + $0xa8] sm:$0xff]
      %v718 = vld [vmem:[#allocation2 + $0xb0] sm:$0xff]
      %v719 = vld [vmem:[#allocation2 + $0xb8] sm:$0xff]
      %v720 = vld [vmem:[#allocation2 + $0xc0] sm:$0xff]
      %v721 = vld [vmem:[#allocation2 + $0xc8] sm:$0xff]
      %v722 = vld [vmem:[#allocation2 + $0xd0] sm:$0xff]
      %v723 = vld [vmem:[#allocation2 + $0xd8] sm:$0xff]
      %v724 = vld [vmem:[#allocation2 + $0xe0] sm:$0xff]
      %v725 = vld [vmem:[#allocation2 + $0xe8] sm:$0xff]
      %v726 = vld [vmem:[#allocation2 + $0xf0] sm:$0xff]
      %v727 = vld [vmem:[#allocation2 + $0xf8] sm:$0xff]
      %v728 = vld [vmem:[#allocation2 + $0x100] sm:$0xff]
      %v729 = vld [vmem:[#allocation2 + $0x108] sm:$0xff]
      %v730 = vld [vmem:[#allocation2 + $0x110] sm:$0xff]
      %v731 = vld [vmem:[#allocation2 + $0x118] sm:$0xff]
      %v732 = vld [vmem:[#allocation2 + $0x120] sm:$0xff]
      %v733 = vld [vmem:[#allocation2 + $0x128] sm:$0xff]
      %v734 = vld [vmem:[#allocation2 + $0x130] sm:$0xff]
      %v735 = vld [vmem:[#allocation2 + $0x138] sm:$0xff]
      %v736 = vld [vmem:[#allocation2 + $0x140] sm:$0xff]
      %v737 = vld [vmem:[#allocation2 + $0x148] sm:$0xff]
      %v738 = vld [vmem:[#allocation2 + $0x150] sm:$0xff]
      %v739 = vld [vmem:[#allocation2 + $0x158] sm:$0xff]
      %v740 = vld [vmem:[#allocation2 + $0x160] sm:$0xff]
      %v741 = vld [vmem:[#allocation2 + $0x168] sm:$0xff]
      %v742 = vld [vmem:[#allocation2 + $0x170] sm:$0xff]
      %v743 = vld [vmem:[#allocation2 + $0x178] sm:$0xff]
      %v744 = vld [vmem:[#allocation2 + $0x180] sm:$0xff]
      %v745 = vld [vmem:[#allocation2 + $0x188] sm:$0xff]
      %v746 = vld [vmem:[#allocation2 + $0x190] sm:$0xff]
      %v747 = vld [vmem:[#allocation2 + $0x198] sm:$0xff]
      %v748 = vld [vmem:[#allocation2 + $0x1a0] sm:$0xff]
      %v749 = vld [vmem:[#allocation2 + $0x1a8] sm:$0xff]
      %v750 = vld [vmem:[#allocation2 + $0x1b0] sm:$0xff]
      %v751 = vld [vmem:[#allocation2 + $0x1b8] sm:$0xff]
      %v752 = vld [vmem:[#allocation2 + $0x1c0] sm:$0xff]
      %v753 = vld [vmem:[#allocation2 + $0x1c8] sm:$0xff]
      %v754 = vld [vmem:[#allocation2 + $0x1d0] sm:$0xff]
      %v755 = vld [vmem:[#allocation2 + $0x1d8] sm:$0xff]
      %v756 = vld [vmem:[#allocation2 + $0x1e0] sm:$0xff]
      %v757 = vld [vmem:[#allocation2 + $0x1e8] sm:$0xff]
      %v758 = vld [vmem:[#allocation2 + $0x1f0] sm:$0xff]
      %v759 = vld [vmem:[#allocation2 + $0x1f8] sm:$0xff]
      %v760 = vld [vmem:[%s2] sm:$0x3]
      %v762 = vlaneseq
      %v763 = vshrl.u32 %v762, 7
      %v764 = vsub.s32 0, %v763
      %v765 = vrot.slane %v760, %v764
      %v766 = vlaneseq
      %v767 = vshrl.u32 %v766, 7
      %v768 = vsub.s32 1, %v767
      %v769 = vrot.slane %v760, %v768
      %v772 = vadd.f32 %v696, %v765
      %v773 = vadd.f32 %v697, %v769
      %v774 = vadd.f32 %v698, %v765
      %v775 = vadd.f32 %v699, %v769
      %v776 = vadd.f32 %v700, %v765
      %v777 = vadd.f32 %v701, %v769
      %v778 = vadd.f32 %v702, %v765
      %v779 = vadd.f32 %v703, %v769
      %v780 = vadd.f32 %v704, %v765
      %v781 = vadd.f32 %v705, %v769
      %v782 = vadd.f32 %v706, %v765
      %v783 = vadd.f32 %v707, %v769
      %v784 = vadd.f32 %v708, %v765
      %v785 = vadd.f32 %v709, %v769
      %v786 = vadd.f32 %v710, %v765
      %v787 = vadd.f32 %v711, %v769
      %v788 = vadd.f32 %v712, %v765
      %v789 = vadd.f32 %v713, %v769
      %v790 = vadd.f32 %v714, %v765
      %v791 = vadd.f32 %v715, %v769
      %v792 = vadd.f32 %v716, %v765
      %v793 = vadd.f32 %v717, %v769
      %v794 = vadd.f32 %v718, %v765
      %v795 = vadd.f32 %v719, %v769
      %v796 = vadd.f32 %v720, %v765
      %v797 = vadd.f32 %v721, %v769
      %v798 = vadd.f32 %v722, %v765
      %v799 = vadd.f32 %v723, %v769
      %v800 = vadd.f32 %v724, %v765
      %v801 = vadd.f32 %v725, %v769
      %v802 = vadd.f32 %v726, %v765
      %v803 = vadd.f32 %v727, %v769
      %v804 = vadd.f32 %v728, %v765
      %v805 = vadd.f32 %v729, %v769
      %v806 = vadd.f32 %v730, %v765
      %v807 = vadd.f32 %v731, %v769
      %v808 = vadd.f32 %v732, %v765
      %v809 = vadd.f32 %v733, %v769
      %v810 = vadd.f32 %v734, %v765
      %v811 = vadd.f32 %v735, %v769
      %v812 = vadd.f32 %v736, %v765
      %v813 = vadd.f32 %v737, %v769
      %v814 = vadd.f32 %v738, %v765
      %v815 = vadd.f32 %v739, %v769
      %v816 = vadd.f32 %v740, %v765
      %v817 = vadd.f32 %v741, %v769
      %v818 = vadd.f32 %v742, %v765
      %v819 = vadd.f32 %v743, %v769
      %v820 = vadd.f32 %v744, %v765
      %v821 = vadd.f32 %v745, %v769
      %v822 = vadd.f32 %v746, %v765
      %v823 = vadd.f32 %v747, %v769
      %v824 = vadd.f32 %v748, %v765
      %v825 = vadd.f32 %v749, %v769
      %v826 = vadd.f32 %v750, %v765
      %v827 = vadd.f32 %v751, %v769
      %v828 = vadd.f32 %v752, %v765
      %v829 = vadd.f32 %v753, %v769
      %v830 = vadd.f32 %v754, %v765
      %v831 = vadd.f32 %v755, %v769
      %v832 = vadd.f32 %v756, %v765
      %v833 = vadd.f32 %v757, %v769
      %v834 = vadd.f32 %v758, %v765
      %v835 = vadd.f32 %v759, %v769
      %836 = vst [vmem:[#allocation3] sm:$0xff] %v772
      %837 = vst [vmem:[#allocation3 + $0x8] sm:$0xff] %v773
      %838 = vst [vmem:[#allocation3 + $0x10] sm:$0xff] %v774
      %839 = vst [vmem:[#allocation3 + $0x18] sm:$0xff] %v775
      %840 = vst [vmem:[#allocation3 + $0x20] sm:$0xff] %v776
      %841 = vst [vmem:[#allocation3 + $0x28] sm:$0xff] %v777
      %842 = vst [vmem:[#allocation3 + $0x30] sm:$0xff] %v778
      %843 = vst [vmem:[#allocation3 + $0x38] sm:$0xff] %v779
      %844 = vst [vmem:[#allocation3 + $0x40] sm:$0xff] %v780
      %845 = vst [vmem:[#allocation3 + $0x48] sm:$0xff] %v781
      %846 = vst [vmem:[#allocation3 + $0x50] sm:$0xff] %v782
      %847 = vst [vmem:[#allocation3 + $0x58] sm:$0xff] %v783
      %848 = vst [vmem:[#allocation3 + $0x60] sm:$0xff] %v784
      %849 = vst [vmem:[#allocation3 + $0x68] sm:$0xff] %v785
      %850 = vst [vmem:[#allocation3 + $0x70] sm:$0xff] %v786
      %851 = vst [vmem:[#allocation3 + $0x78] sm:$0xff] %v787
      %852 = vst [vmem:[#allocation3 + $0x80] sm:$0xff] %v788
      %853 = vst [vmem:[#allocation3 + $0x88] sm:$0xff] %v789
      %854 = vst [vmem:[#allocation3 + $0x90] sm:$0xff] %v790
      %855 = vst [vmem:[#allocation3 + $0x98] sm:$0xff] %v791
      %856 = vst [vmem:[#allocation3 + $0xa0] sm:$0xff] %v792
      %857 = vst [vmem:[#allocation3 + $0xa8] sm:$0xff] %v793
      %858 = vst [vmem:[#allocation3 + $0xb0] sm:$0xff] %v794
      %859 = vst [vmem:[#allocation3 + $0xb8] sm:$0xff] %v795
      %860 = vst [vmem:[#allocation3 + $0xc0] sm:$0xff] %v796
      %861 = vst [vmem:[#allocation3 + $0xc8] sm:$0xff] %v797
      %862 = vst [vmem:[#allocation3 + $0xd0] sm:$0xff] %v798
      %863 = vst [vmem:[#allocation3 + $0xd8] sm:$0xff] %v799
      %864 = vst [vmem:[#allocation3 + $0xe0] sm:$0xff] %v800
      %865 = vst [vmem:[#allocation3 + $0xe8] sm:$0xff] %v801
      %866 = vst [vmem:[#allocation3 + $0xf0] sm:$0xff] %v802
      %867 = vst [vmem:[#allocation3 + $0xf8] sm:$0xff] %v803
      %868 = vst [vmem:[#allocation3 + $0x100] sm:$0xff] %v804
      %869 = vst [vmem:[#allocation3 + $0x108] sm:$0xff] %v805
      %870 = vst [vmem:[#allocation3 + $0x110] sm:$0xff] %v806
      %871 = vst [vmem:[#allocation3 + $0x118] sm:$0xff] %v807
      %872 = vst [vmem:[#allocation3 + $0x120] sm:$0xff] %v808
      %873 = vst [vmem:[#allocation3 + $0x128] sm:$0xff] %v809
      %874 = vst [vmem:[#allocation3 + $0x130] sm:$0xff] %v810
      %875 = vst [vmem:[#allocation3 + $0x138] sm:$0xff] %v811
      %876 = vst [vmem:[#allocation3 + $0x140] sm:$0xff] %v812
      %877 = vst [vmem:[#allocation3 + $0x148] sm:$0xff] %v813
      %878 = vst [vmem:[#allocation3 + $0x150] sm:$0xff] %v814
      %879 = vst [vmem:[#allocation3 + $0x158] sm:$0xff] %v815
      %880 = vst [vmem:[#allocation3 + $0x160] sm:$0xff] %v816
      %881 = vst [vmem:[#allocation3 + $0x168] sm:$0xff] %v817
      %882 = vst [vmem:[#allocation3 + $0x170] sm:$0xff] %v818
      %883 = vst [vmem:[#allocation3 + $0x178] sm:$0xff] %v819
      %884 = vst [vmem:[#allocation3 + $0x180] sm:$0xff] %v820
      %885 = vst [vmem:[#allocation3 + $0x188] sm:$0xff] %v821
      %886 = vst [vmem:[#allocation3 + $0x190] sm:$0xff] %v822
      %887 = vst [vmem:[#allocation3 + $0x198] sm:$0xff] %v823
      %888 = vst [vmem:[#allocation3 + $0x1a0] sm:$0xff] %v824
      %889 = vst [vmem:[#allocation3 + $0x1a8] sm:$0xff] %v825
      %890 = vst [vmem:[#allocation3 + $0x1b0] sm:$0xff] %v826
      %891 = vst [vmem:[#allocation3 + $0x1b8] sm:$0xff] %v827
      %892 = vst [vmem:[#allocation3 + $0x1c0] sm:$0xff] %v828
      %893 = vst [vmem:[#allocation3 + $0x1c8] sm:$0xff] %v829
      %894 = vst [vmem:[#allocation3 + $0x1d0] sm:$0xff] %v830
      %895 = vst [vmem:[#allocation3 + $0x1d8] sm:$0xff] %v831
      %896 = vst [vmem:[#allocation3 + $0x1e0] sm:$0xff] %v832
      %897 = vst [vmem:[#allocation3 + $0x1e8] sm:$0xff] %v833
      %898 = vst [vmem:[#allocation3 + $0x1f0] sm:$0xff] %v834
      %899 = vst [vmem:[#allocation3 + $0x1f8] sm:$0xff] %v835
    $region21: #{expire_span_transformer_xl_forward.21} parent=1 // pred_fallthru
      _
    // Predicated region
    $region22: #{expire_span_transformer_xl_forward.21} parent=1 // pred_check
      _
    $region23: #{expire_span_transformer_xl_forward.21} parent=1 // pred_check_branch
      %901 = sbr.rel (0) target = $region25
    $region24: #{expire_span_transformer_xl_forward.21} parent=1 // pred_region
      %s903 = ssub.s32 8192, 8192
      %904 = vsyncadd [#allocation4], %s903
      %s905 = sshll.u32 [#allocation3], 4
      %s906 = int_to_ptr.vmem [resolvable:$true] %s905
      %911 = dma.vmem_to_hbm [thread:$0]  %s906, 8192, %s3, [#allocation4], 256, 256, 16
    $region25: #{expire_span_transformer_xl_forward.21} parent=1 // pred_fallthru
      _
    // Predicated region
    $region26: #{expire_span_transformer_xl_forward.21} parent=1 // pred_check
      _
    $region27: #{expire_span_transformer_xl_forward.21} parent=1 // pred_check_branch
      %913 = sbr.rel (0) target = $region29
    $region28: #{expire_span_transformer_xl_forward.21} parent=1 // pred_region
      %914 = dma.done [#allocation4], 8192
    $region29: #{expire_span_transformer_xl_forward.21} parent=1 // pred_fallthru
      _
    %915 = vsyncpa [#allocation4], 1

// kernel: expire_span_transformer_xl_forward.14
$region0: #{expire_span_transformer_xl_forward.14}
  #allocation0 [shape = 'u32[]', space=smem, size = 0x4, offset = 0x4, fixed_abs, tag = 'smem constant byte address 0x4 - core index']
  #allocation1 [shape = 'u32[144,128]{1,0:T(1,128)}', space=vmem, size = 0x12000, scoped, tag = 'internal scratch']
  #allocation2 [shape = 'f32[256,256]{1,0:T(8,128)}', space=vmem, size = 0x40000, scoped, tag = 'scratch operand']
  %s0 = inlined_call_operand.vmem [shape: bf16[256,128], index: 0, kind: input, shape index: {}]
  %s1 = inlined_call_operand.vmem [shape: bf16[128,512], index: 1, kind: input, shape index: {}]
  %s2 = inlined_call_operand.vmem [shape: f32[1,512], index: 2, kind: input, shape index: {}]
  %s3 = inlined_call_operand.vmem [shape: f32[1,128], index: 3, kind: input, shape index: {}]
  %s4 = inlined_call_operand.vmem [shape: f32[1,128], index: 4, kind: input, shape index: {}]
  %s5 = inlined_call_operand.vmem [shape: bf16[256,512], index: 5, kind: output, shape index: {}]
  %s6 = sld [smem:[#allocation0]]
  $region133: #{expire_span_transformer_xl_forward.14} parent=0
    _
  %s8 = ssub.s32 1, %s6
  %s9 = scalar_select 0, %s8, %s6
  $region1: #{expire_span_transformer_xl_forward.14} parent=0
    #allocation3 [shape = 'u8[131072]{0}', space=vmem, size = 0x20000, scoped, tag = 'input window, operand 1']
    #allocation4 [shape = 'u8[262144]{0}', space=vmem, size = 0x40000, scoped, tag = 'output window, operand 0']
    loop: start=0, step=1, limit=4
    $region2: #{expire_span_transformer_xl_forward.14} parent=1 // loop_pre_header
      _
    $region3: #{expire_span_transformer_xl_forward.14} parent=1 // loop_header
      %s11 = sphi 0, %s15
      %p12 = scmp.ge.s32.totalorder %s11, 4
      %s18 = sphi 0, %s37
      %s19 = sphi 0, %s33
      %s20 = sphi 0, %s29
      %s21 = sphi 0, %s18
      %s22 = sphi 0, %s19
      %s23 = sphi 0, %s20
      %s24 = sphi 0, %s21
      %s25 = sphi 0, %s22
      %s26 = sphi 0, %s23
      %s42 = sphi 0, %s44
      %s45 = sphi 0, %s42
      %s46 = sphi 0, %s45
      %s62 = sphi 0, %s46
      %s70 = sphi 0, %s72
      %s73 = sphi 0, %s70
      %s74 = sphi 0, %s73
      %s90 = sphi 0, %s74
      %s96 = sphi 0, %s98
      %s99 = sphi 0, %s96
      %s100 = sphi 0, %s99
      %s116 = sphi 0, %s100
      %s122 = sphi 0, %s124
      %s125 = sphi 0, %s122
      %s126 = sphi 0, %s125
      %s142 = sphi 0, %s126
      %s148 = sphi 0, %s150
      %s151 = sphi 0, %s148
      %s152 = sphi 0, %s151
      %s168 = sphi 0, %s152
      %s176 = sphi 0, %s178
      %s179 = sphi 0, %s176
      %s180 = sphi 0, %s179
      %s196 = sphi 0, %s180
    $region4: #{expire_span_transformer_xl_forward.14} parent=1 // loop_header_branch
      %14 = sbr.rel (%p12) target = $region8
    $region5: #{expire_span_transformer_xl_forward.14} parent=1 // loop_body
      %s16 = ssub.s32 %s11, 1
      %s17 = ssub.s32 %s11, 2
      %s27 = sadd.s32 1, %s20
      %p28 = scmp.ge.s32.totalorder %s27, 1
      %s29 = scalar_select %p28, 0, %s27
      %s30 = sadd.s32 1, %s19
      %s31 = scalar_select %p28, %s30, %s19
      %p32 = scmp.ge.s32.totalorder %s31, 2
      %s33 = scalar_select %p32, 0, %s31
      %s34 = sadd.s32 1, %s18
      %s35 = scalar_select %p32, %s34, %s18
      %p36 = scmp.ge.s32.totalorder %s35, 1
      %s37 = scalar_select %p36, 0, %s35
      %s38 = ssub.s32 %s18, %s37
      %s39 = ssub.s32 %s20, %s29
      %s40 = sor.u32 %s38, %s39
      %p41 = scmp.eq.s32.totalorder %s40, 0
      %s43 = sadd.s32 %s42, 1
      %s44 = scalar_select %p41, %s42, %s43
      %p47 = pneg %p41
      %p48 = scmp.eq.s32.totalorder %s11, 1
      %p49 = por %p47, %p48
      %p50 = scmp.ne.s32.totalorder %s42, %s45
      %p51 = scmp.eq.s32.totalorder %s11, 0
      %p52 = por %p50, %p51
      %p53 = scmp.ne.s32.totalorder %s42, %s45
      %p54 = scmp.eq.s32.totalorder %s16, 1
      %p55 = por %p53, %p54
      %p56 = scmp.ne.s32.totalorder %s45, %s46
      %p57 = scmp.eq.s32.totalorder %s16, 0
      %p58 = por %p56, %p57
      %p59 = scmp.ne.s32.totalorder %s45, %s46
      %p60 = scmp.eq.s32.totalorder %s17, 1
      %p61 = por %p59, %p60
      %p63 = scmp.ne.s32.totalorder %s46, %s62
      %p64 = scmp.eq.s32.totalorder %s17, 0
      %p65 = por %p63, %p64
      %s66 = ssub.s32 %s20, %s29
      %s67 = ssub.s32 %s19, %s33
      %s68 = sor.u32 %s66, %s67
      %p69 = scmp.eq.s32.totalorder %s68, 0
      %s71 = sadd.s32 %s70, 1
      %s72 = scalar_select %p69, %s70, %s71
      %p75 = pneg %p69
      %p76 = scmp.eq.s32.totalorder %s11, 1
      %p77 = por %p75, %p76
      %p78 = scmp.ne.s32.totalorder %s70, %s73
      %p79 = scmp.eq.s32.totalorder %s11, 0
      %p80 = por %p78, %p79
      %p81 = scmp.ne.s32.totalorder %s70, %s73
      %p82 = scmp.eq.s32.totalorder %s16, 1
      %p83 = por %p81, %p82
      %p84 = scmp.ne.s32.totalorder %s73, %s74
      %p85 = scmp.eq.s32.totalorder %s16, 0
      %p86 = por %p84, %p85
      %p87 = scmp.ne.s32.totalorder %s73, %s74
      %p88 = scmp.eq.s32.totalorder %s17, 1
      %p89 = por %p87, %p88
      %p91 = scmp.ne.s32.totalorder %s74, %s90
      %p92 = scmp.eq.s32.totalorder %s17, 0
      %p93 = por %p91, %p92
      %s94 = ssub.s32 %s19, %s33
      %p95 = scmp.eq.s32.totalorder %s94, 0
      %s97 = sadd.s32 %s96, 1
      %s98 = scalar_select %p95, %s96, %s97
      %p101 = pneg %p95
      %p102 = scmp.eq.s32.totalorder %s11, 1
      %p103 = por %p101, %p102
      %p104 = scmp.ne.s32.totalorder %s96, %s99
      %p105 = scmp.eq.s32.totalorder %s11, 0
      %p106 = por %p104, %p105
      %p107 = scmp.ne.s32.totalorder %s96, %s99
      %p108 = scmp.eq.s32.totalorder %s16, 1
      %p109 = por %p107, %p108
      %p110 = scmp.ne.s32.totalorder %s99, %s100
      %p111 = scmp.eq.s32.totalorder %s16, 0
      %p112 = por %p110, %p111
      %p113 = scmp.ne.s32.totalorder %s99, %s100
      %p114 = scmp.eq.s32.totalorder %s17, 1
      %p115 = por %p113, %p114
      %p117 = scmp.ne.s32.totalorder %s100, %s116
      %p118 = scmp.eq.s32.totalorder %s17, 0
      %p119 = por %p117, %p118
      %s120 = ssub.s32 %s20, %s29
      %p121 = scmp.eq.s32.totalorder %s120, 0
      %s123 = sadd.s32 %s122, 1
      %s124 = scalar_select %p121, %s122, %s123
      %p127 = pneg %p121
      %p128 = scmp.eq.s32.totalorder %s11, 1
      %p129 = por %p127, %p128
      %p130 = scmp.ne.s32.totalorder %s122, %s125
      %p131 = scmp.eq.s32.totalorder %s11, 0
      %p132 = por %p130, %p131
      %p133 = scmp.ne.s32.totalorder %s122, %s125
      %p134 = scmp.eq.s32.totalorder %s16, 1
      %p135 = por %p133, %p134
      %p136 = scmp.ne.s32.totalorder %s125, %s126
      %p137 = scmp.eq.s32.totalorder %s16, 0
      %p138 = por %p136, %p137
      %p139 = scmp.ne.s32.totalorder %s125, %s126
      %p140 = scmp.eq.s32.totalorder %s17, 1
      %p141 = por %p139, %p140
      %p143 = scmp.ne.s32.totalorder %s126, %s142
      %p144 = scmp.eq.s32.totalorder %s17, 0
      %p145 = por %p143, %p144
      %s146 = ssub.s32 %s20, %s29
      %p147 = scmp.eq.s32.totalorder %s146, 0
      %s149 = sadd.s32 %s148, 1
      %s150 = scalar_select %p147, %s148, %s149
      %p153 = pneg %p147
      %p154 = scmp.eq.s32.totalorder %s11, 1
      %p155 = por %p153, %p154
      %p156 = scmp.ne.s32.totalorder %s148, %s151
      %p157 = scmp.eq.s32.totalorder %s11, 0
      %p158 = por %p156, %p157
      %p159 = scmp.ne.s32.totalorder %s148, %s151
      %p160 = scmp.eq.s32.totalorder %s16, 1
      %p161 = por %p159, %p160
      %p162 = scmp.ne.s32.totalorder %s151, %s152
      %p163 = scmp.eq.s32.totalorder %s16, 0
      %p164 = por %p162, %p163
      %p165 = scmp.ne.s32.totalorder %s151, %s152
      %p166 = scmp.eq.s32.totalorder %s17, 1
      %p167 = por %p165, %p166
      %p169 = scmp.ne.s32.totalorder %s152, %s168
      %p170 = scmp.eq.s32.totalorder %s17, 0
      %p171 = por %p169, %p170
      %s172 = ssub.s32 %s18, %s37
      %s173 = ssub.s32 %s19, %s33
      %s174 = sor.u32 %s172, %s173
      %p175 = scmp.eq.s32.totalorder %s174, 0
      %s177 = sadd.s32 %s176, 1
      %s178 = scalar_select %p175, %s176, %s177
      %p181 = pneg %p175
      %p182 = scmp.eq.s32.totalorder %s11, 1
      %p183 = por %p181, %p182
      %p184 = scmp.ne.s32.totalorder %s176, %s179
      %p185 = scmp.eq.s32.totalorder %s11, 0
      %p186 = por %p184, %p185
      %p187 = scmp.ne.s32.totalorder %s176, %s179
      %p188 = scmp.eq.s32.totalorder %s16, 1
      %p189 = por %p187, %p188
      %p190 = scmp.ne.s32.totalorder %s179, %s180
      %p191 = scmp.eq.s32.totalorder %s16, 0
      %p192 = por %p190, %p191
      %p193 = scmp.ne.s32.totalorder %s179, %s180
      %p194 = scmp.eq.s32.totalorder %s17, 1
      %p195 = por %p193, %p194
      %p197 = scmp.ne.s32.totalorder %s180, %s196
      %p198 = scmp.eq.s32.totalorder %s17, 0
      %p199 = por %p197, %p198
      %p200 = scmp.le.s32.totalorder 1, %s11
      %p201 = scmp.lt.s32.totalorder %s11, 3
      %p202 = pnand %p200, %p201
      %p203 = pneg %p202
      // Predicated region
      $region9: #{expire_span_transformer_xl_forward.14} parent=5 // pred_check
        _
      $region10: #{expire_span_transformer_xl_forward.14} parent=5 // pred_check_branch
        %205 = sbr.rel (%p202) target = $region12
      $region11: #{expire_span_transformer_xl_forward.14} parent=5 // pred_region
        %s206 = ssub.s32 %s11, 1
        // Predicated region
        $region13: #{expire_span_transformer_xl_forward.14} parent=11 // pred_check
          %p207 = pneg %p58
        $region14: #{expire_span_transformer_xl_forward.14} parent=11 // pred_check_branch
          %209 = sbr.rel (%p207) target = $region16
        $region15: #{expire_span_transformer_xl_forward.14} parent=11 // pred_region
          %s210 = smul.u32 32, %s21
          %p211 = scmp.lt.s32.totalorder %s210, 31
          %s212 = scalar_select %p211, %s210, 31
          %p213 = scmp.lt.s32.totalorder %s23, 0
          %s214 = scalar_select %p213, %s23, 0
          %s215 = sadd.s32 %s214, %s212
          %s216 = smul.addr %s215, 4
          %s217 = scalar_lea.vmem %s0, %s216
          %s218 = smul.u32 32, %s21
        $region16: #{expire_span_transformer_xl_forward.14} parent=11 // pred_fallthru
          _
        // Predicated region
        $region17: #{expire_span_transformer_xl_forward.14} parent=11 // pred_check
          %p219 = pneg %p138
        $region18: #{expire_span_transformer_xl_forward.14} parent=11 // pred_check_branch
          %221 = sbr.rel (%p219) target = $region20
        $region19: #{expire_span_transformer_xl_forward.14} parent=11 // pred_region
          %p222 = scmp.lt.s32.totalorder %s23, 0
          %s223 = scalar_select %p222, %s23, 0
          %s224 = scalar_lea.vmem %s3, %s223
        $region20: #{expire_span_transformer_xl_forward.14} parent=11 // pred_fallthru
          _
        // Predicated region
        $region21: #{expire_span_transformer_xl_forward.14} parent=11 // pred_check
          %p225 = pneg %p164
        $region22: #{expire_span_transformer_xl_forward.14} parent=11 // pred_check_branch
          %227 = sbr.rel (%p225) target = $region24
        $region23: #{expire_span_transformer_xl_forward.14} parent=11 // pred_region
          %p228 = scmp.lt.s32.totalorder %s23, 0
          %s229 = scalar_select %p228, %s23, 0
          %s230 = scalar_lea.vmem %s4, %s229
        $region24: #{expire_span_transformer_xl_forward.14} parent=11 // pred_fallthru
          _
      $region12: #{expire_span_transformer_xl_forward.14} parent=5 // pred_fallthru
        _
      %p231 = scmp.lt.s32.totalorder %s11, 2
      // Predicated region
      $region25: #{expire_span_transformer_xl_forward.14} parent=5 // pred_check
        %p232 = pneg %p231
      $region26: #{expire_span_transformer_xl_forward.14} parent=5 // pred_check_branch
        %234 = sbr.rel (%p232) target = $region28
      $region27: #{expire_span_transformer_xl_forward.14} parent=5 // pred_region
        // Predicated region
        $region29: #{expire_span_transformer_xl_forward.14} parent=27 // pred_check
          %p235 = pneg %p80
        $region30: #{expire_span_transformer_xl_forward.14} parent=27 // pred_check_branch
          %237 = sbr.rel (%p235) target = $region32
        $region31: #{expire_span_transformer_xl_forward.14} parent=27 // pred_region
          %s238 = sand.u32 %s70, 1
          %s239 = sand.u32 %s70, 1
          %s240 = smul.addr %s239, 128
          %s241 = scalar_lea.vmem [#allocation3], %s240
          %s242 = smul.u32 16, %s20
          %s243 = smul.u32 2, %s19
          %s244 = smul.addr %s242, 4
          %s245 = sadd.s32 %s243, %s244
          %s246 = smul.addr %s245, 4
          %s247 = scalar_lea.vmem %s1, %s246
          // Predicated region
          $region33: #{expire_span_transformer_xl_forward.14} parent=31 // pred_check
            _
          $region34: #{expire_span_transformer_xl_forward.14} parent=31 // pred_check_branch
            %249 = sbr.rel (0) target = $region36
          $region35: #{expire_span_transformer_xl_forward.14} parent=31 // pred_region
            // Predicated region
            $region37: #{expire_span_transformer_xl_forward.14} parent=35 // pred_check
              _
            $region38: #{expire_span_transformer_xl_forward.14} parent=35 // pred_check_branch
              %251 = sbr.rel (0) target = $region40
            $region39: #{expire_span_transformer_xl_forward.14} parent=35 // pred_region
              // Predicated region
              $region52: #{expire_span_transformer_xl_forward.14} parent=39 // pred_check
                _
              $region53: #{expire_span_transformer_xl_forward.14} parent=39 // pred_check_branch
                %296 = sbr.rel (0) target = $region55
              $region54: #{expire_span_transformer_xl_forward.14} parent=39 // pred_region
                loop: start=0, step=1, limit=1
                $region56: #{expire_span_transformer_xl_forward.14} parent=54 // loop_pre_header
                  _
                $region57: #{expire_span_transformer_xl_forward.14} parent=54 // loop_header
                  %s298 = sphi 0, %s302
                  %p299 = scmp.ge.s32.totalorder %s298, 1
                  %s303 = sphi %s247, %s247
                  %s304 = sphi %s241, %s241
                $region58: #{expire_span_transformer_xl_forward.14} parent=54 // loop_header_branch
                  %301 = sbr.rel (%p299) target = $region62
                $region59: #{expire_span_transformer_xl_forward.14} parent=54 // loop_body
                  %v305 = vld [vmem:[%s303] sm:$0xff]
                  %306 = vst [vmem:[%s304] sm:$0xff] %v305
                  %v307 = vld [vmem:[%s303 + $0x10] sm:$0xff]
                  %308 = vst [vmem:[%s304 + $0x8] sm:$0xff] %v307
                  %v309 = vld [vmem:[%s303 + $0x20] sm:$0xff]
                  %310 = vst [vmem:[%s304 + $0x10] sm:$0xff] %v309
                  %v311 = vld [vmem:[%s303 + $0x30] sm:$0xff]
                  %312 = vst [vmem:[%s304 + $0x18] sm:$0xff] %v311
                  %v313 = vld [vmem:[%s303 + $0x40] sm:$0xff]
                  %314 = vst [vmem:[%s304 + $0x20] sm:$0xff] %v313
                  %v315 = vld [vmem:[%s303 + $0x50] sm:$0xff]
                  %316 = vst [vmem:[%s304 + $0x28] sm:$0xff] %v315
                  %v317 = vld [vmem:[%s303 + $0x60] sm:$0xff]
                  %318 = vst [vmem:[%s304 + $0x30] sm:$0xff] %v317
                  %v319 = vld [vmem:[%s303 + $0x70] sm:$0xff]
                  %320 = vst [vmem:[%s304 + $0x38] sm:$0xff] %v319
                  %v321 = vld [vmem:[%s303 + $0x80] sm:$0xff]
                  %322 = vst [vmem:[%s304 + $0x40] sm:$0xff] %v321
                  %v323 = vld [vmem:[%s303 + $0x90] sm:$0xff]
                  %324 = vst [vmem:[%s304 + $0x48] sm:$0xff] %v323
                  %v325 = vld [vmem:[%s303 + $0xa0] sm:$0xff]
                  %326 = vst [vmem:[%s304 + $0x50] sm:$0xff] %v325
                  %v327 = vld [vmem:[%s303 + $0xb0] sm:$0xff]
                  %328 = vst [vmem:[%s304 + $0x58] sm:$0xff] %v327
                  %v329 = vld [vmem:[%s303 + $0xc0] sm:$0xff]
                  %330 = vst [vmem:[%s304 + $0x60] sm:$0xff] %v329
                  %v331 = vld [vmem:[%s303 + $0xd0] sm:$0xff]
                  %332 = vst [vmem:[%s304 + $0x68] sm:$0xff] %v331
                  %v333 = vld [vmem:[%s303 + $0xe0] sm:$0xff]
                  %334 = vst [vmem:[%s304 + $0x70] sm:$0xff] %v333
                  %v335 = vld [vmem:[%s303 + $0xf0] sm:$0xff]
                  %336 = vst [vmem:[%s304 + $0x78] sm:$0xff] %v335
                $region60: #{expire_span_transformer_xl_forward.14} parent=54 // loop_footer
                  %s302 = sadd.s32 1, %s298
                $region61: #{expire_span_transformer_xl_forward.14} parent=54 // loop_footer_branch
                  %297 = sbr.rel target = $region57
                $region62: #{expire_span_transformer_xl_forward.14} parent=54 // loop_exit
                  _
              $region55: #{expire_span_transformer_xl_forward.14} parent=39 // pred_fallthru
                _
              // Predicated region
              $region63: #{expire_span_transformer_xl_forward.14} parent=39 // pred_check
                _
              $region64: #{expire_span_transformer_xl_forward.14} parent=39 // pred_check_branch
                %338 = sbr.rel target = $region66
              $region65: #{expire_span_transformer_xl_forward.14} parent=39 // pred_region
                _
              $region66: #{expire_span_transformer_xl_forward.14} parent=39 // pred_fallthru
                _
            $region40: #{expire_span_transformer_xl_forward.14} parent=35 // pred_fallthru
              _
            // Predicated region
            $region41: #{expire_span_transformer_xl_forward.14} parent=35 // pred_check
              _
            $region42: #{expire_span_transformer_xl_forward.14} parent=35 // pred_check_branch
              %253 = sbr.rel target = $region44
            $region43: #{expire_span_transformer_xl_forward.14} parent=35 // pred_region
              loop: start=0, step=1, limit=1
              $region45: #{expire_span_transformer_xl_forward.14} parent=43 // loop_pre_header
                _
              $region46: #{expire_span_transformer_xl_forward.14} parent=43 // loop_header
                %s256 = sphi 0, %s260
                %p257 = scmp.ge.s32.totalorder %s256, 1
                %s261 = sphi %s247, %s247
                %s262 = sphi %s241, %s241
              $region47: #{expire_span_transformer_xl_forward.14} parent=43 // loop_header_branch
                %259 = sbr.rel (%p257) target = $region51
              $region48: #{expire_span_transformer_xl_forward.14} parent=43 // loop_body
                %v263 = vld [vmem:[%s261] sm:$0xff]
                %264 = vst [vmem:[%s262] sm:$0xff] %v263
                %v265 = vld [vmem:[%s261 + $0x10] sm:$0xff]
                %266 = vst [vmem:[%s262 + $0x8] sm:$0xff] %v265
                %v267 = vld [vmem:[%s261 + $0x20] sm:$0xff]
                %268 = vst [vmem:[%s262 + $0x10] sm:$0xff] %v267
                %v269 = vld [vmem:[%s261 + $0x30] sm:$0xff]
                %270 = vst [vmem:[%s262 + $0x18] sm:$0xff] %v269
                %v271 = vld [vmem:[%s261 + $0x40] sm:$0xff]
                %272 = vst [vmem:[%s262 + $0x20] sm:$0xff] %v271
                %v273 = vld [vmem:[%s261 + $0x50] sm:$0xff]
                %274 = vst [vmem:[%s262 + $0x28] sm:$0xff] %v273
                %v275 = vld [vmem:[%s261 + $0x60] sm:$0xff]
                %276 = vst [vmem:[%s262 + $0x30] sm:$0xff] %v275
                %v277 = vld [vmem:[%s261 + $0x70] sm:$0xff]
                %278 = vst [vmem:[%s262 + $0x38] sm:$0xff] %v277
                %v279 = vld [vmem:[%s261 + $0x80] sm:$0xff]
                %280 = vst [vmem:[%s262 + $0x40] sm:$0xff] %v279
                %v281 = vld [vmem:[%s261 + $0x90] sm:$0xff]
                %282 = vst [vmem:[%s262 + $0x48] sm:$0xff] %v281
                %v283 = vld [vmem:[%s261 + $0xa0] sm:$0xff]
                %284 = vst [vmem:[%s262 + $0x50] sm:$0xff] %v283
                %v285 = vld [vmem:[%s261 + $0xb0] sm:$0xff]
                %286 = vst [vmem:[%s262 + $0x58] sm:$0xff] %v285
                %v287 = vld [vmem:[%s261 + $0xc0] sm:$0xff]
                %288 = vst [vmem:[%s262 + $0x60] sm:$0xff] %v287
                %v289 = vld [vmem:[%s261 + $0xd0] sm:$0xff]
                %290 = vst [vmem:[%s262 + $0x68] sm:$0xff] %v289
                %v291 = vld [vmem:[%s261 + $0xe0] sm:$0xff]
                %292 = vst [vmem:[%s262 + $0x70] sm:$0xff] %v291
                %v293 = vld [vmem:[%s261 + $0xf0] sm:$0xff]
                %294 = vst [vmem:[%s262 + $0x78] sm:$0xff] %v293
              $region49: #{expire_span_transformer_xl_forward.14} parent=43 // loop_footer
                %s260 = sadd.s32 1, %s256
              $region50: #{expire_span_transformer_xl_forward.14} parent=43 // loop_footer_branch
                %255 = sbr.rel target = $region46
              $region51: #{expire_span_transformer_xl_forward.14} parent=43 // loop_exit
                _
            $region44: #{expire_span_transformer_xl_forward.14} parent=35 // pred_fallthru
              _
          $region36: #{expire_span_transformer_xl_forward.14} parent=31 // pred_fallthru
            _
          %339 = vnop
        $region32: #{expire_span_transformer_xl_forward.14} parent=27 // pred_fallthru
          _
        // Predicated region
        $region67: #{expire_span_transformer_xl_forward.14} parent=27 // pred_check
          %p340 = pneg %p106
        $region68: #{expire_span_transformer_xl_forward.14} parent=27 // pred_check_branch
          %342 = sbr.rel (%p340) target = $region70
        $region69: #{expire_span_transformer_xl_forward.14} parent=27 // pred_region
          %s343 = smul.u32 2, %s19
          %p344 = scmp.lt.s32.totalorder %s343, 3
          %s345 = scalar_select %p344, %s343, 3
          %s346 = scalar_lea.vmem %s2, %s345
          %s347 = smul.u32 2, %s19
        $region70: #{expire_span_transformer_xl_forward.14} parent=27 // pred_fallthru
          _
      $region28: #{expire_span_transformer_xl_forward.14} parent=5 // pred_fallthru
        _
      %p348 = scmp.le.s32.totalorder 1, %s11
      %p349 = scmp.lt.s32.totalorder %s11, 3
      %p350 = pnand %p348, %p349
      %p351 = pneg %p350
      // Predicated region
      $region71: #{expire_span_transformer_xl_forward.14} parent=5 // pred_check
        _
      $region72: #{expire_span_transformer_xl_forward.14} parent=5 // pred_check_branch
        %353 = sbr.rel (%p350) target = $region74
      $region73: #{expire_span_transformer_xl_forward.14} parent=5 // pred_region
        %s354 = ssub.s32 %s11, 1
        %s355 = sand.u32 %s73, 1
        %s356 = sand.u32 %s73, 1
        %s357 = smul.addr %s356, 128
        %s358 = scalar_lea.vmem [#allocation3], %s357
        // Predicated region
        $region75: #{expire_span_transformer_xl_forward.14} parent=73 // pred_check
          %p359 = pneg %p86
        $region76: #{expire_span_transformer_xl_forward.14} parent=73 // pred_check_branch
          %361 = sbr.rel (%p359) target = $region78
        $region77: #{expire_span_transformer_xl_forward.14} parent=73 // pred_region
          _
        $region78: #{expire_span_transformer_xl_forward.14} parent=73 // pred_fallthru
          _
        %s362 = smul.u32 32, %s21
        %p363 = scmp.lt.s32.totalorder %s362, 31
        %s364 = scalar_select %p363, %s362, 31
        %p365 = scmp.lt.s32.totalorder %s23, 0
        %s366 = scalar_select %p365, %s23, 0
        %s367 = sadd.s32 %s366, %s364
        %s368 = smul.addr %s367, 4
        %s369 = scalar_lea.vmem %s0, %s368
        %p370 = pneg %p58
        %p371 = pneg %p55
        %s372 = sand.u32 %s73, 1
        %s373 = sand.u32 %s73, 1
        %s374 = smul.addr %s373, 128
        %s375 = scalar_lea.vmem [#allocation3], %s374
        %p376 = pneg %p86
        %p377 = pneg %p83
        %s378 = smul.u32 2, %s22
        %p379 = scmp.lt.s32.totalorder %s378, 3
        %s380 = scalar_select %p379, %s378, 3
        %s381 = scalar_lea.vmem %s2, %s380
        %p382 = pneg %p112
        %p383 = pneg %p109
        %p384 = scmp.lt.s32.totalorder %s23, 0
        %s385 = scalar_select %p384, %s23, 0
        %s386 = scalar_lea.vmem %s3, %s385
        %p387 = pneg %p138
        %p388 = pneg %p135
        %p389 = scmp.lt.s32.totalorder %s23, 0
        %s390 = scalar_select %p389, %s23, 0
        %s391 = scalar_lea.vmem %s4, %s390
        %p392 = pneg %p164
        %p393 = pneg %p161
        %p394 = pneg %p192
        %p395 = pneg %p189
        %s396 = sand.u32 %s179, 1
        %s397 = sand.u32 %s179, 1
        %s398 = smul.addr %s397, 256
        %s399 = scalar_lea.vmem [#allocation4], %s398
        %s400 = smul.u32 32, %s21
        %p401 = scmp.lt.s32.totalorder %s400, 31
        %s402 = scalar_select %p401, %s400, 31
        %p403 = scmp.lt.s32.totalorder %s23, 0
        %s404 = scalar_select %p403, %s23, 0
        %s405 = sadd.s32 %s404, %s402
        %s406 = smul.addr %s405, 4
        %s407 = scalar_lea.vmem %s0, %s406
        %s408 = smul.u32 32, %s21
        %s409 = smul.u32 16, %s23
        %s410 = smul.u32 2, %s22
        %s411 = smul.u32 2, %s22
        %p412 = scmp.lt.s32.totalorder %s411, 3
        %s413 = scalar_select %p412, %s411, 3
        %s414 = scalar_lea.vmem %s2, %s413
        %s415 = smul.u32 2, %s22
        %p416 = scmp.lt.s32.totalorder %s23, 0
        %s417 = scalar_select %p416, %s23, 0
        %s418 = scalar_lea.vmem %s3, %s417
        %p419 = scmp.lt.s32.totalorder %s23, 0
        %s420 = scalar_select %p419, %s23, 0
        %s421 = scalar_lea.vmem %s4, %s420
        %s422 = smul.u32 32, %s21
        %s423 = smul.u32 2, %s22
        %p425 = scmp.eq.s32.totalorder %s23, 0
        // Predicated region
        $region79: #{expire_span_transformer_xl_forward.14} parent=73 // pred_check
          %p426 = pneg %p425
        $region80: #{expire_span_transformer_xl_forward.14} parent=73 // pred_check_branch
          %428 = sbr.rel (%p426) target = $region82
        $region81: #{expire_span_transformer_xl_forward.14} parent=73 // pred_region
          %429 = vst [vmem:[#allocation2] sm:$0xff] 0.0
          %430 = vst [vmem:[#allocation2 + $0x8] sm:$0xff] 0.0
          %431 = vst [vmem:[#allocation2 + $0x10] sm:$0xff] 0.0
          %432 = vst [vmem:[#allocation2 + $0x18] sm:$0xff] 0.0
          %433 = vst [vmem:[#allocation2 + $0x20] sm:$0xff] 0.0
          %434 = vst [vmem:[#allocation2 + $0x28] sm:$0xff] 0.0
          %435 = vst [vmem:[#allocation2 + $0x30] sm:$0xff] 0.0
          %436 = vst [vmem:[#allocation2 + $0x38] sm:$0xff] 0.0
          %437 = vst [vmem:[#allocation2 + $0x40] sm:$0xff] 0.0
          %438 = vst [vmem:[#allocation2 + $0x48] sm:$0xff] 0.0
          %439 = vst [vmem:[#allocation2 + $0x50] sm:$0xff] 0.0
          %440 = vst [vmem:[#allocation2 + $0x58] sm:$0xff] 0.0
          %441 = vst [vmem:[#allocation2 + $0x60] sm:$0xff] 0.0
          %442 = vst [vmem:[#allocation2 + $0x68] sm:$0xff] 0.0
          %443 = vst [vmem:[#allocation2 + $0x70] sm:$0xff] 0.0
          %444 = vst [vmem:[#allocation2 + $0x78] sm:$0xff] 0.0
          %445 = vst [vmem:[#allocation2 + $0x80] sm:$0xff] 0.0
          %446 = vst [vmem:[#allocation2 + $0x88] sm:$0xff] 0.0
          %447 = vst [vmem:[#allocation2 + $0x90] sm:$0xff] 0.0
          %448 = vst [vmem:[#allocation2 + $0x98] sm:$0xff] 0.0
          %449 = vst [vmem:[#allocation2 + $0xa0] sm:$0xff] 0.0
          %450 = vst [vmem:[#allocation2 + $0xa8] sm:$0xff] 0.0
          %451 = vst [vmem:[#allocation2 + $0xb0] sm:$0xff] 0.0
          %452 = vst [vmem:[#allocation2 + $0xb8] sm:$0xff] 0.0
          %453 = vst [vmem:[#allocation2 + $0xc0] sm:$0xff] 0.0
          %454 = vst [vmem:[#allocation2 + $0xc8] sm:$0xff] 0.0
          %455 = vst [vmem:[#allocation2 + $0xd0] sm:$0xff] 0.0
          %456 = vst [vmem:[#allocation2 + $0xd8] sm:$0xff] 0.0
          %457 = vst [vmem:[#allocation2 + $0xe0] sm:$0xff] 0.0
          %458 = vst [vmem:[#allocation2 + $0xe8] sm:$0xff] 0.0
          %459 = vst [vmem:[#allocation2 + $0xf0] sm:$0xff] 0.0
          %460 = vst [vmem:[#allocation2 + $0xf8] sm:$0xff] 0.0
          %461 = vst [vmem:[#allocation2 + $0x100] sm:$0xff] 0.0
          %462 = vst [vmem:[#allocation2 + $0x108] sm:$0xff] 0.0
          %463 = vst [vmem:[#allocation2 + $0x110] sm:$0xff] 0.0
          %464 = vst [vmem:[#allocation2 + $0x118] sm:$0xff] 0.0
          %465 = vst [vmem:[#allocation2 + $0x120] sm:$0xff] 0.0
          %466 = vst [vmem:[#allocation2 + $0x128] sm:$0xff] 0.0
          %467 = vst [vmem:[#allocation2 + $0x130] sm:$0xff] 0.0
          %468 = vst [vmem:[#allocation2 + $0x138] sm:$0xff] 0.0
          %469 = vst [vmem:[#allocation2 + $0x140] sm:$0xff] 0.0
          %470 = vst [vmem:[#allocation2 + $0x148] sm:$0xff] 0.0
          %471 = vst [vmem:[#allocation2 + $0x150] sm:$0xff] 0.0
          %472 = vst [vmem:[#allocation2 + $0x158] sm:$0xff] 0.0
          %473 = vst [vmem:[#allocation2 + $0x160] sm:$0xff] 0.0
          %474 = vst [vmem:[#allocation2 + $0x168] sm:$0xff] 0.0
          %475 = vst [vmem:[#allocation2 + $0x170] sm:$0xff] 0.0
          %476 = vst [vmem:[#allocation2 + $0x178] sm:$0xff] 0.0
          %477 = vst [vmem:[#allocation2 + $0x180] sm:$0xff] 0.0
          %478 = vst [vmem:[#allocation2 + $0x188] sm:$0xff] 0.0
          %479 = vst [vmem:[#allocation2 + $0x190] sm:$0xff] 0.0
          %480 = vst [vmem:[#allocation2 + $0x198] sm:$0xff] 0.0
          %481 = vst [vmem:[#allocation2 + $0x1a0] sm:$0xff] 0.0
          %482 = vst [vmem:[#allocation2 + $0x1a8] sm:$0xff] 0.0
          %483 = vst [vmem:[#allocation2 + $0x1b0] sm:$0xff] 0.0
          %484 = vst [vmem:[#allocation2 + $0x1b8] sm:$0xff] 0.0
          %485 = vst [vmem:[#allocation2 + $0x1c0] sm:$0xff] 0.0
          %486 = vst [vmem:[#allocation2 + $0x1c8] sm:$0xff] 0.0
          %487 = vst [vmem:[#allocation2 + $0x1d0] sm:$0xff] 0.0
          %488 = vst [vmem:[#allocation2 + $0x1d8] sm:$0xff] 0.0
          %489 = vst [vmem:[#allocation2 + $0x1e0] sm:$0xff] 0.0
          %490 = vst [vmem:[#allocation2 + $0x1e8] sm:$0xff] 0.0
          %491 = vst [vmem:[#allocation2 + $0x1f0] sm:$0xff] 0.0
          %492 = vst [vmem:[#allocation2 + $0x1f8] sm:$0xff] 0.0
        $region82: #{expire_span_transformer_xl_forward.14} parent=73 // pred_fallthru
          _
        %v493 = vld [vmem:[%s407] sm:$0xf]
        %v494 = vld [vmem:[%s407 + $0x4] sm:$0xf]
        %v495 = vld [vmem:[%s407 + $0x8] sm:$0xf]
        %v496 = vld [vmem:[%s407 + $0xc] sm:$0xf]
        %v497 = vld [vmem:[%s407 + $0x10] sm:$0xf]
        %v498 = vld [vmem:[%s407 + $0x14] sm:$0xf]
        %v499 = vld [vmem:[%s407 + $0x18] sm:$0xf]
        %v500 = vld [vmem:[%s407 + $0x1c] sm:$0xf]
        %v501 = vld [vmem:[%s407 + $0x20] sm:$0xf]
        %v502 = vld [vmem:[%s407 + $0x24] sm:$0xf]
        %v503 = vld [vmem:[%s407 + $0x28] sm:$0xf]
        %v504 = vld [vmem:[%s407 + $0x2c] sm:$0xf]
        %v505 = vld [vmem:[%s407 + $0x30] sm:$0xf]
        %v506 = vld [vmem:[%s407 + $0x34] sm:$0xf]
        %v507 = vld [vmem:[%s407 + $0x38] sm:$0xf]
        %v508 = vld [vmem:[%s407 + $0x3c] sm:$0xf]
        %v509 = vld [vmem:[%s407 + $0x40] sm:$0xf]
        %v510 = vld [vmem:[%s407 + $0x44] sm:$0xf]
        %v511 = vld [vmem:[%s407 + $0x48] sm:$0xf]
        %v512 = vld [vmem:[%s407 + $0x4c] sm:$0xf]
        %v513 = vld [vmem:[%s407 + $0x50] sm:$0xf]
        %v514 = vld [vmem:[%s407 + $0x54] sm:$0xf]
        %v515 = vld [vmem:[%s407 + $0x58] sm:$0xf]
        %v516 = vld [vmem:[%s407 + $0x5c] sm:$0xf]
        %v517 = vld [vmem:[%s407 + $0x60] sm:$0xf]
        %v518 = vld [vmem:[%s407 + $0x64] sm:$0xf]
        %v519 = vld [vmem:[%s407 + $0x68] sm:$0xf]
        %v520 = vld [vmem:[%s407 + $0x6c] sm:$0xf]
        %v521 = vld [vmem:[%s407 + $0x70] sm:$0xf]
        %v522 = vld [vmem:[%s407 + $0x74] sm:$0xf]
        %v523 = vld [vmem:[%s407 + $0x78] sm:$0xf]
        %v524 = vld [vmem:[%s407 + $0x7c] sm:$0xf]
        %v525 = vunpack.c.l.bf16 %v493
        %v526 = vunpack.c.l.bf16 %v494
        %v527 = vunpack.c.l.bf16 %v495
        %v528 = vunpack.c.l.bf16 %v496
        %v529 = vunpack.c.l.bf16 %v497
        %v530 = vunpack.c.l.bf16 %v498
        %v531 = vunpack.c.l.bf16 %v499
        %v532 = vunpack.c.l.bf16 %v500
        %v533 = vunpack.c.l.bf16 %v501
        %v534 = vunpack.c.l.bf16 %v502
        %v535 = vunpack.c.l.bf16 %v503
        %v536 = vunpack.c.l.bf16 %v504
        %v537 = vunpack.c.l.bf16 %v505
        %v538 = vunpack.c.l.bf16 %v506
        %v539 = vunpack.c.l.bf16 %v507
        %v540 = vunpack.c.l.bf16 %v508
        %v541 = vunpack.c.l.bf16 %v509
        %v542 = vunpack.c.l.bf16 %v510
        %v543 = vunpack.c.l.bf16 %v511
        %v544 = vunpack.c.l.bf16 %v512
        %v545 = vunpack.c.l.bf16 %v513
        %v546 = vunpack.c.l.bf16 %v514
        %v547 = vunpack.c.l.bf16 %v515
        %v548 = vunpack.c.l.bf16 %v516
        %v549 = vunpack.c.l.bf16 %v517
        %v550 = vunpack.c.l.bf16 %v518
        %v551 = vunpack.c.l.bf16 %v519
        %v552 = vunpack.c.l.bf16 %v520
        %v553 = vunpack.c.l.bf16 %v521
        %v554 = vunpack.c.l.bf16 %v522
        %v555 = vunpack.c.l.bf16 %v523
        %v556 = vunpack.c.l.bf16 %v524
        %557 = vadd.xlane.f32.xlu0 %v525
        %v558 = vpop.xlane.xlu0 %557
        %559 = vadd.xlane.f32.xlu0 %v526
        %v560 = vpop.xlane.xlu0 %559
        %561 = vadd.xlane.f32.xlu0 %v527
        %v562 = vpop.xlane.xlu0 %561
        %563 = vadd.xlane.f32.xlu0 %v528
        %v564 = vpop.xlane.xlu0 %563
        %565 = vadd.xlane.f32.xlu0 %v529
        %v566 = vpop.xlane.xlu0 %565
        %567 = vadd.xlane.f32.xlu0 %v530
        %v568 = vpop.xlane.xlu0 %567
        %569 = vadd.xlane.f32.xlu0 %v531
        %v570 = vpop.xlane.xlu0 %569
        %571 = vadd.xlane.f32.xlu0 %v532
        %v572 = vpop.xlane.xlu0 %571
        %573 = vadd.xlane.f32.xlu0 %v533
        %v574 = vpop.xlane.xlu0 %573
        %575 = vadd.xlane.f32.xlu0 %v534
        %v576 = vpop.xlane.xlu0 %575
        %577 = vadd.xlane.f32.xlu0 %v535
        %v578 = vpop.xlane.xlu0 %577
        %579 = vadd.xlane.f32.xlu0 %v536
        %v580 = vpop.xlane.xlu0 %579
        %581 = vadd.xlane.f32.xlu0 %v537
        %v582 = vpop.xlane.xlu0 %581
        %583 = vadd.xlane.f32.xlu0 %v538
        %v584 = vpop.xlane.xlu0 %583
        %585 = vadd.xlane.f32.xlu0 %v539
        %v586 = vpop.xlane.xlu0 %585
        %587 = vadd.xlane.f32.xlu0 %v540
        %v588 = vpop.xlane.xlu0 %587
        %589 = vadd.xlane.f32.xlu0 %v541
        %v590 = vpop.xlane.xlu0 %589
        %591 = vadd.xlane.f32.xlu0 %v542
        %v592 = vpop.xlane.xlu0 %591
        %593 = vadd.xlane.f32.xlu0 %v543
        %v594 = vpop.xlane.xlu0 %593
        %595 = vadd.xlane.f32.xlu0 %v544
        %v596 = vpop.xlane.xlu0 %595
        %597 = vadd.xlane.f32.xlu0 %v545
        %v598 = vpop.xlane.xlu0 %597
        %599 = vadd.xlane.f32.xlu0 %v546
        %v600 = vpop.xlane.xlu0 %599
        %601 = vadd.xlane.f32.xlu0 %v547
        %v602 = vpop.xlane.xlu0 %601
        %603 = vadd.xlane.f32.xlu0 %v548
        %v604 = vpop.xlane.xlu0 %603
        %605 = vadd.xlane.f32.xlu0 %v549
        %v606 = vpop.xlane.xlu0 %605
        %607 = vadd.xlane.f32.xlu0 %v550
        %v608 = vpop.xlane.xlu0 %607
        %609 = vadd.xlane.f32.xlu0 %v551
        %v610 = vpop.xlane.xlu0 %609
        %611 = vadd.xlane.f32.xlu0 %v552
        %v612 = vpop.xlane.xlu0 %611
        %613 = vadd.xlane.f32.xlu0 %v553
        %v614 = vpop.xlane.xlu0 %613
        %615 = vadd.xlane.f32.xlu0 %v554
        %v616 = vpop.xlane.xlu0 %615
        %617 = vadd.xlane.f32.xlu0 %v555
        %v618 = vpop.xlane.xlu0 %617
        %619 = vadd.xlane.f32.xlu0 %v556
        %v620 = vpop.xlane.xlu0 %619
        %v621 = vrcp.pop 128.0
        %v622 = vmul.f32 %v558, %v621
        %v623 = vmul.f32 %v560, %v621
        %v624 = vmul.f32 %v562, %v621
        %v625 = vmul.f32 %v564, %v621
        %v626 = vmul.f32 %v566, %v621
        %v627 = vmul.f32 %v568, %v621
        %v628 = vmul.f32 %v570, %v621
        %v629 = vmul.f32 %v572, %v621
        %v630 = vmul.f32 %v574, %v621
        %v631 = vmul.f32 %v576, %v621
        %v632 = vmul.f32 %v578, %v621
        %v633 = vmul.f32 %v580, %v621
        %v634 = vmul.f32 %v582, %v621
        %v635 = vmul.f32 %v584, %v621
        %v636 = vmul.f32 %v586, %v621
        %v637 = vmul.f32 %v588, %v621
        %v638 = vmul.f32 %v590, %v621
        %v639 = vmul.f32 %v592, %v621
        %v640 = vmul.f32 %v594, %v621
        %v641 = vmul.f32 %v596, %v621
        %v642 = vmul.f32 %v598, %v621
        %v643 = vmul.f32 %v600, %v621
        %v644 = vmul.f32 %v602, %v621
        %v645 = vmul.f32 %v604, %v621
        %v646 = vmul.f32 %v606, %v621
        %v647 = vmul.f32 %v608, %v621
        %v648 = vmul.f32 %v610, %v621
        %v649 = vmul.f32 %v612, %v621
        %v650 = vmul.f32 %v614, %v621
        %v651 = vmul.f32 %v616, %v621
        %v652 = vmul.f32 %v618, %v621
        %v653 = vmul.f32 %v620, %v621
        %v654 = vsub.f32 %v525, %v622
        %v655 = vsub.f32 %v526, %v623
        %v656 = vsub.f32 %v527, %v624
        %v657 = vsub.f32 %v528, %v625
        %v658 = vsub.f32 %v529, %v626
        %v659 = vsub.f32 %v530, %v627
        %v660 = vsub.f32 %v531, %v628
        %v661 = vsub.f32 %v532, %v629
        %v662 = vsub.f32 %v533, %v630
        %v663 = vsub.f32 %v534, %v631
        %v664 = vsub.f32 %v535, %v632
        %v665 = vsub.f32 %v536, %v633
        %v666 = vsub.f32 %v537, %v634
        %v667 = vsub.f32 %v538, %v635
        %v668 = vsub.f32 %v539, %v636
        %v669 = vsub.f32 %v540, %v637
        %v670 = vsub.f32 %v541, %v638
        %v671 = vsub.f32 %v542, %v639
        %v672 = vsub.f32 %v543, %v640
        %v673 = vsub.f32 %v544, %v641
        %v674 = vsub.f32 %v545, %v642
        %v675 = vsub.f32 %v546, %v643
        %v676 = vsub.f32 %v547, %v644
        %v677 = vsub.f32 %v548, %v645
        %v678 = vsub.f32 %v549, %v646
        %v679 = vsub.f32 %v550, %v647
        %v680 = vsub.f32 %v551, %v648
        %v681 = vsub.f32 %v552, %v649
        %v682 = vsub.f32 %v553, %v650
        %v683 = vsub.f32 %v554, %v651
        %v684 = vsub.f32 %v555, %v652
        %v685 = vsub.f32 %v556, %v653
        %v686 = vmul.f32 %v654, %v654
        %v687 = vmul.f32 %v655, %v655
        %v688 = vmul.f32 %v656, %v656
        %v689 = vmul.f32 %v657, %v657
        %v690 = vmul.f32 %v658, %v658
        %v691 = vmul.f32 %v659, %v659
        %v692 = vmul.f32 %v660, %v660
        %v693 = vmul.f32 %v661, %v661
        %v694 = vmul.f32 %v662, %v662
        %v695 = vmul.f32 %v663, %v663
        %v696 = vmul.f32 %v664, %v664
        %v697 = vmul.f32 %v665, %v665
        %v698 = vmul.f32 %v666, %v666
        %v699 = vmul.f32 %v667, %v667
        %v700 = vmul.f32 %v668, %v668
        %v701 = vmul.f32 %v669, %v669
        %v702 = vmul.f32 %v670, %v670
        %v703 = vmul.f32 %v671, %v671
        %v704 = vmul.f32 %v672, %v672
        %v705 = vmul.f32 %v673, %v673
        %v706 = vmul.f32 %v674, %v674
        %v707 = vmul.f32 %v675, %v675
        %v708 = vmul.f32 %v676, %v676
        %v709 = vmul.f32 %v677, %v677
        %v710 = vmul.f32 %v678, %v678
        %v711 = vmul.f32 %v679, %v679
        %v712 = vmul.f32 %v680, %v680
        %v713 = vmul.f32 %v681, %v681
        %v714 = vmul.f32 %v682, %v682
        %v715 = vmul.f32 %v683, %v683
        %v716 = vmul.f32 %v684, %v684
        %v717 = vmul.f32 %v685, %v685
        %718 = vadd.xlane.f32.xlu0 %v686
        %v719 = vpop.xlane.xlu0 %718
        %720 = vadd.xlane.f32.xlu0 %v687
        %v721 = vpop.xlane.xlu0 %720
        %722 = vadd.xlane.f32.xlu0 %v688
        %v723 = vpop.xlane.xlu0 %722
        %724 = vadd.xlane.f32.xlu0 %v689
        %v725 = vpop.xlane.xlu0 %724
        %726 = vadd.xlane.f32.xlu0 %v690
        %v727 = vpop.xlane.xlu0 %726
        %728 = vadd.xlane.f32.xlu0 %v691
        %v729 = vpop.xlane.xlu0 %728
        %730 = vadd.xlane.f32.xlu0 %v692
        %v731 = vpop.xlane.xlu0 %730
        %732 = vadd.xlane.f32.xlu0 %v693
        %v733 = vpop.xlane.xlu0 %732
        %734 = vadd.xlane.f32.xlu0 %v694
        %v735 = vpop.xlane.xlu0 %734
        %736 = vadd.xlane.f32.xlu0 %v695
        %v737 = vpop.xlane.xlu0 %736
        %738 = vadd.xlane.f32.xlu0 %v696
        %v739 = vpop.xlane.xlu0 %738
        %740 = vadd.xlane.f32.xlu0 %v697
        %v741 = vpop.xlane.xlu0 %740
        %742 = vadd.xlane.f32.xlu0 %v698
        %v743 = vpop.xlane.xlu0 %742
        %744 = vadd.xlane.f32.xlu0 %v699
        %v745 = vpop.xlane.xlu0 %744
        %746 = vadd.xlane.f32.xlu0 %v700
        %v747 = vpop.xlane.xlu0 %746
        %748 = vadd.xlane.f32.xlu0 %v701
        %v749 = vpop.xlane.xlu0 %748
        %750 = vadd.xlane.f32.xlu0 %v702
        %v751 = vpop.xlane.xlu0 %750
        %752 = vadd.xlane.f32.xlu0 %v703
        %v753 = vpop.xlane.xlu0 %752
        %754 = vadd.xlane.f32.xlu0 %v704
        %v755 = vpop.xlane.xlu0 %754
        %756 = vadd.xlane.f32.xlu0 %v705
        %v757 = vpop.xlane.xlu0 %756
        %758 = vadd.xlane.f32.xlu0 %v706
        %v759 = vpop.xlane.xlu0 %758
        %760 = vadd.xlane.f32.xlu0 %v707
        %v761 = vpop.xlane.xlu0 %760
        %762 = vadd.xlane.f32.xlu0 %v708
        %v763 = vpop.xlane.xlu0 %762
        %764 = vadd.xlane.f32.xlu0 %v709
        %v765 = vpop.xlane.xlu0 %764
        %766 = vadd.xlane.f32.xlu0 %v710
        %v767 = vpop.xlane.xlu0 %766
        %768 = vadd.xlane.f32.xlu0 %v711
        %v769 = vpop.xlane.xlu0 %768
        %770 = vadd.xlane.f32.xlu0 %v712
        %v771 = vpop.xlane.xlu0 %770
        %772 = vadd.xlane.f32.xlu0 %v713
        %v773 = vpop.xlane.xlu0 %772
        %774 = vadd.xlane.f32.xlu0 %v714
        %v775 = vpop.xlane.xlu0 %774
        %776 = vadd.xlane.f32.xlu0 %v715
        %v777 = vpop.xlane.xlu0 %776
        %778 = vadd.xlane.f32.xlu0 %v716
        %v779 = vpop.xlane.xlu0 %778
        %780 = vadd.xlane.f32.xlu0 %v717
        %v781 = vpop.xlane.xlu0 %780
        %v782 = vmul.f32 %v719, %v621
        %v783 = vmul.f32 %v721, %v621
        %v784 = vmul.f32 %v723, %v621
        %v785 = vmul.f32 %v725, %v621
        %v786 = vmul.f32 %v727, %v621
        %v787 = vmul.f32 %v729, %v621
        %v788 = vmul.f32 %v731, %v621
        %v789 = vmul.f32 %v733, %v621
        %v790 = vmul.f32 %v735, %v621
        %v791 = vmul.f32 %v737, %v621
        %v792 = vmul.f32 %v739, %v621
        %v793 = vmul.f32 %v741, %v621
        %v794 = vmul.f32 %v743, %v621
        %v795 = vmul.f32 %v745, %v621
        %v796 = vmul.f32 %v747, %v621
        %v797 = vmul.f32 %v749, %v621
        %v798 = vmul.f32 %v751, %v621
        %v799 = vmul.f32 %v753, %v621
        %v800 = vmul.f32 %v755, %v621
        %v801 = vmul.f32 %v757, %v621
        %v802 = vmul.f32 %v759, %v621
        %v803 = vmul.f32 %v761, %v621
        %v804 = vmul.f32 %v763, %v621
        %v805 = vmul.f32 %v765, %v621
        %v806 = vmul.f32 %v767, %v621
        %v807 = vmul.f32 %v769, %v621
        %v808 = vmul.f32 %v771, %v621
        %v809 = vmul.f32 %v773, %v621
        %v810 = vmul.f32 %v775, %v621
        %v811 = vmul.f32 %v777, %v621
        %v812 = vmul.f32 %v779, %v621
        %v813 = vmul.f32 %v781, %v621
        %v814 = vadd.f32 %v782, 1e-05
        %v815 = vadd.f32 %v783, 1e-05
        %v816 = vadd.f32 %v784, 1e-05
        %v817 = vadd.f32 %v785, 1e-05
        %v818 = vadd.f32 %v786, 1e-05
        %v819 = vadd.f32 %v787, 1e-05
        %v820 = vadd.f32 %v788, 1e-05
        %v821 = vadd.f32 %v789, 1e-05
        %v822 = vadd.f32 %v790, 1e-05
        %v823 = vadd.f32 %v791, 1e-05
        %v824 = vadd.f32 %v792, 1e-05
        %v825 = vadd.f32 %v793, 1e-05
        %v826 = vadd.f32 %v794, 1e-05
        %v827 = vadd.f32 %v795, 1e-05
        %v828 = vadd.f32 %v796, 1e-05
        %v829 = vadd.f32 %v797, 1e-05
        %v830 = vadd.f32 %v798, 1e-05
        %v831 = vadd.f32 %v799, 1e-05
        %v832 = vadd.f32 %v800, 1e-05
        %v833 = vadd.f32 %v801, 1e-05
        %v834 = vadd.f32 %v802, 1e-05
        %v835 = vadd.f32 %v803, 1e-05
        %v836 = vadd.f32 %v804, 1e-05
        %v837 = vadd.f32 %v805, 1e-05
        %v838 = vadd.f32 %v806, 1e-05
        %v839 = vadd.f32 %v807, 1e-05
        %v840 = vadd.f32 %v808, 1e-05
        %v841 = vadd.f32 %v809, 1e-05
        %v842 = vadd.f32 %v810, 1e-05
        %v843 = vadd.f32 %v811, 1e-05
        %v844 = vadd.f32 %v812, 1e-05
        %v845 = vadd.f32 %v813, 1e-05
        %v846 = vrsqrt.pop %v814
        %v847 = vrsqrt.pop %v815
        %v848 = vrsqrt.pop %v816
        %v849 = vrsqrt.pop %v817
        %v850 = vrsqrt.pop %v818
        %v851 = vrsqrt.pop %v819
        %v852 = vrsqrt.pop %v820
        %v853 = vrsqrt.pop %v821
        %v854 = vrsqrt.pop %v822
        %v855 = vrsqrt.pop %v823
        %v856 = vrsqrt.pop %v824
        %v857 = vrsqrt.pop %v825
        %v858 = vrsqrt.pop %v826
        %v859 = vrsqrt.pop %v827
        %v860 = vrsqrt.pop %v828
        %v861 = vrsqrt.pop %v829
        %v862 = vrsqrt.pop %v830
        %v863 = vrsqrt.pop %v831
        %v864 = vrsqrt.pop %v832
        %v865 = vrsqrt.pop %v833
        %v866 = vrsqrt.pop %v834
        %v867 = vrsqrt.pop %v835
        %v868 = vrsqrt.pop %v836
        %v869 = vrsqrt.pop %v837
        %v870 = vrsqrt.pop %v838
        %v871 = vrsqrt.pop %v839
        %v872 = vrsqrt.pop %v840
        %v873 = vrsqrt.pop %v841
        %v874 = vrsqrt.pop %v842
        %v875 = vrsqrt.pop %v843
        %v876 = vrsqrt.pop %v844
        %v877 = vrsqrt.pop %v845
        %v878 = vmul.f32 %v654, %v846
        %v879 = vmul.f32 %v655, %v847
        %v880 = vmul.f32 %v656, %v848
        %v881 = vmul.f32 %v657, %v849
        %v882 = vmul.f32 %v658, %v850
        %v883 = vmul.f32 %v659, %v851
        %v884 = vmul.f32 %v660, %v852
        %v885 = vmul.f32 %v661, %v853
        %v886 = vmul.f32 %v662, %v854
        %v887 = vmul.f32 %v663, %v855
        %v888 = vmul.f32 %v664, %v856
        %v889 = vmul.f32 %v665, %v857
        %v890 = vmul.f32 %v666, %v858
        %v891 = vmul.f32 %v667, %v859
        %v892 = vmul.f32 %v668, %v860
        %v893 = vmul.f32 %v669, %v861
        %v894 = vmul.f32 %v670, %v862
        %v895 = vmul.f32 %v671, %v863
        %v896 = vmul.f32 %v672, %v864
        %v897 = vmul.f32 %v673, %v865
        %v898 = vmul.f32 %v674, %v866
        %v899 = vmul.f32 %v675, %v867
        %v900 = vmul.f32 %v676, %v868
        %v901 = vmul.f32 %v677, %v869
        %v902 = vmul.f32 %v678, %v870
        %v903 = vmul.f32 %v679, %v871
        %v904 = vmul.f32 %v680, %v872
        %v905 = vmul.f32 %v681, %v873
        %v906 = vmul.f32 %v682, %v874
        %v907 = vmul.f32 %v683, %v875
        %v908 = vmul.f32 %v684, %v876
        %v909 = vmul.f32 %v685, %v877
        %v910 = vld [vmem:[%s418] sm:$0x1]
        %v912 = vlaneseq
        %v913 = vshrl.u32 %v912, 7
        %v914 = vsub.s32 0, %v913
        %v915 = vrot.slane %v910, %v914
        %v917 = vmul.f32 %v878, %v915
        %v918 = vmul.f32 %v879, %v915
        %v919 = vmul.f32 %v880, %v915
        %v920 = vmul.f32 %v881, %v915
        %v921 = vmul.f32 %v882, %v915
        %v922 = vmul.f32 %v883, %v915
        %v923 = vmul.f32 %v884, %v915
        %v924 = vmul.f32 %v885, %v915
        %v925 = vmul.f32 %v886, %v915
        %v926 = vmul.f32 %v887, %v915
        %v927 = vmul.f32 %v888, %v915
        %v928 = vmul.f32 %v889, %v915
        %v929 = vmul.f32 %v890, %v915
        %v930 = vmul.f32 %v891, %v915
        %v931 = vmul.f32 %v892, %v915
        %v932 = vmul.f32 %v893, %v915
        %v933 = vmul.f32 %v894, %v915
        %v934 = vmul.f32 %v895, %v915
        %v935 = vmul.f32 %v896, %v915
        %v936 = vmul.f32 %v897, %v915
        %v937 = vmul.f32 %v898, %v915
        %v938 = vmul.f32 %v899, %v915
        %v939 = vmul.f32 %v900, %v915
        %v940 = vmul.f32 %v901, %v915
        %v941 = vmul.f32 %v902, %v915
        %v942 = vmul.f32 %v903, %v915
        %v943 = vmul.f32 %v904, %v915
        %v944 = vmul.f32 %v905, %v915
        %v945 = vmul.f32 %v906, %v915
        %v946 = vmul.f32 %v907, %v915
        %v947 = vmul.f32 %v908, %v915
        %v948 = vmul.f32 %v909, %v915
        %v949 = vld [vmem:[%s421] sm:$0x1]
        %v951 = vlaneseq
        %v952 = vshrl.u32 %v951, 7
        %v953 = vsub.s32 0, %v952
        %v954 = vrot.slane %v949, %v953
        %v956 = vadd.f32 %v917, %v954
        %v957 = vadd.f32 %v918, %v954
        %v958 = vadd.f32 %v919, %v954
        %v959 = vadd.f32 %v920, %v954
        %v960 = vadd.f32 %v921, %v954
        %v961 = vadd.f32 %v922, %v954
        %v962 = vadd.f32 %v923, %v954
        %v963 = vadd.f32 %v924, %v954
        %v964 = vadd.f32 %v925, %v954
        %v965 = vadd.f32 %v926, %v954
        %v966 = vadd.f32 %v927, %v954
        %v967 = vadd.f32 %v928, %v954
        %v968 = vadd.f32 %v929, %v954
        %v969 = vadd.f32 %v930, %v954
        %v970 = vadd.f32 %v931, %v954
        %v971 = vadd.f32 %v932, %v954
        %v972 = vadd.f32 %v933, %v954
        %v973 = vadd.f32 %v934, %v954
        %v974 = vadd.f32 %v935, %v954
        %v975 = vadd.f32 %v936, %v954
        %v976 = vadd.f32 %v937, %v954
        %v977 = vadd.f32 %v938, %v954
        %v978 = vadd.f32 %v939, %v954
        %v979 = vadd.f32 %v940, %v954
        %v980 = vadd.f32 %v941, %v954
        %v981 = vadd.f32 %v942, %v954
        %v982 = vadd.f32 %v943, %v954
        %v983 = vadd.f32 %v944, %v954
        %v984 = vadd.f32 %v945, %v954
        %v985 = vadd.f32 %v946, %v954
        %v986 = vadd.f32 %v947, %v954
        %v987 = vadd.f32 %v948, %v954
        %v988 = vpack.c.bf16 %v957, %v956
        %v989 = vpack.c.bf16 %v959, %v958
        %v990 = vpack.c.bf16 %v961, %v960
        %v991 = vpack.c.bf16 %v963, %v962
        %v992 = vpack.c.bf16 %v965, %v964
        %v993 = vpack.c.bf16 %v967, %v966
        %v994 = vpack.c.bf16 %v969, %v968
        %v995 = vpack.c.bf16 %v971, %v970
        %v996 = vpack.c.bf16 %v973, %v972
        %v997 = vpack.c.bf16 %v975, %v974
        %v998 = vpack.c.bf16 %v977, %v976
        %v999 = vpack.c.bf16 %v979, %v978
        %v1000 = vpack.c.bf16 %v981, %v980
        %v1001 = vpack.c.bf16 %v983, %v982
        %v1002 = vpack.c.bf16 %v985, %v984
        %v1003 = vpack.c.bf16 %v987, %v986
        %v1004 = vld [vmem:[#allocation2] sm:$0xff]
        %v1005 = vld [vmem:[#allocation2 + $0x8] sm:$0xff]
        %v1006 = vld [vmem:[#allocation2 + $0x10] sm:$0xff]
        %v1007 = vld [vmem:[#allocation2 + $0x18] sm:$0xff]
        %v1008 = vld [vmem:[#allocation2 + $0x20] sm:$0xff]
        %v1009 = vld [vmem:[#allocation2 + $0x28] sm:$0xff]
        %v1010 = vld [vmem:[#allocation2 + $0x30] sm:$0xff]
        %v1011 = vld [vmem:[#allocation2 + $0x38] sm:$0xff]
        %v1012 = vld [vmem:[#allocation2 + $0x40] sm:$0xff]
        %v1013 = vld [vmem:[#allocation2 + $0x48] sm:$0xff]
        %v1014 = vld [vmem:[#allocation2 + $0x50] sm:$0xff]
        %v1015 = vld [vmem:[#allocation2 + $0x58] sm:$0xff]
        %v1016 = vld [vmem:[#allocation2 + $0x60] sm:$0xff]
        %v1017 = vld [vmem:[#allocation2 + $0x68] sm:$0xff]
        %v1018 = vld [vmem:[#allocation2 + $0x70] sm:$0xff]
        %v1019 = vld [vmem:[#allocation2 + $0x78] sm:$0xff]
        %v1020 = vld [vmem:[#allocation2 + $0x80] sm:$0xff]
        %v1021 = vld [vmem:[#allocation2 + $0x88] sm:$0xff]
        %v1022 = vld [vmem:[#allocation2 + $0x90] sm:$0xff]
        %v1023 = vld [vmem:[#allocation2 + $0x98] sm:$0xff]
        %v1024 = vld [vmem:[#allocation2 + $0xa0] sm:$0xff]
        %v1025 = vld [vmem:[#allocation2 + $0xa8] sm:$0xff]
        %v1026 = vld [vmem:[#allocation2 + $0xb0] sm:$0xff]
        %v1027 = vld [vmem:[#allocation2 + $0xb8] sm:$0xff]
        %v1028 = vld [vmem:[#allocation2 + $0xc0] sm:$0xff]
        %v1029 = vld [vmem:[#allocation2 + $0xc8] sm:$0xff]
        %v1030 = vld [vmem:[#allocation2 + $0xd0] sm:$0xff]
        %v1031 = vld [vmem:[#allocation2 + $0xd8] sm:$0xff]
        %v1032 = vld [vmem:[#allocation2 + $0xe0] sm:$0xff]
        %v1033 = vld [vmem:[#allocation2 + $0xe8] sm:$0xff]
        %v1034 = vld [vmem:[#allocation2 + $0xf0] sm:$0xff]
        %v1035 = vld [vmem:[#allocation2 + $0xf8] sm:$0xff]
        %v1036 = vld [vmem:[#allocation2 + $0x100] sm:$0xff]
        %v1037 = vld [vmem:[#allocation2 + $0x108] sm:$0xff]
        %v1038 = vld [vmem:[#allocation2 + $0x110] sm:$0xff]
        %v1039 = vld [vmem:[#allocation2 + $0x118] sm:$0xff]
        %v1040 = vld [vmem:[#allocation2 + $0x120] sm:$0xff]
        %v1041 = vld [vmem:[#allocation2 + $0x128] sm:$0xff]
        %v1042 = vld [vmem:[#allocation2 + $0x130] sm:$0xff]
        %v1043 = vld [vmem:[#allocation2 + $0x138] sm:$0xff]
        %v1044 = vld [vmem:[#allocation2 + $0x140] sm:$0xff]
        %v1045 = vld [vmem:[#allocation2 + $0x148] sm:$0xff]
        %v1046 = vld [vmem:[#allocation2 + $0x150] sm:$0xff]
        %v1047 = vld [vmem:[#allocation2 + $0x158] sm:$0xff]
        %v1048 = vld [vmem:[#allocation2 + $0x160] sm:$0xff]
        %v1049 = vld [vmem:[#allocation2 + $0x168] sm:$0xff]
        %v1050 = vld [vmem:[#allocation2 + $0x170] sm:$0xff]
        %v1051 = vld [vmem:[#allocation2 + $0x178] sm:$0xff]
        %v1052 = vld [vmem:[#allocation2 + $0x180] sm:$0xff]
        %v1053 = vld [vmem:[#allocation2 + $0x188] sm:$0xff]
        %v1054 = vld [vmem:[#allocation2 + $0x190] sm:$0xff]
        %v1055 = vld [vmem:[#allocation2 + $0x198] sm:$0xff]
        %v1056 = vld [vmem:[#allocation2 + $0x1a0] sm:$0xff]
        %v1057 = vld [vmem:[#allocation2 + $0x1a8] sm:$0xff]
        %v1058 = vld [vmem:[#allocation2 + $0x1b0] sm:$0xff]
        %v1059 = vld [vmem:[#allocation2 + $0x1b8] sm:$0xff]
        %v1060 = vld [vmem:[#allocation2 + $0x1c0] sm:$0xff]
        %v1061 = vld [vmem:[#allocation2 + $0x1c8] sm:$0xff]
        %v1062 = vld [vmem:[#allocation2 + $0x1d0] sm:$0xff]
        %v1063 = vld [vmem:[#allocation2 + $0x1d8] sm:$0xff]
        %v1064 = vld [vmem:[#allocation2 + $0x1e0] sm:$0xff]
        %v1065 = vld [vmem:[#allocation2 + $0x1e8] sm:$0xff]
        %v1066 = vld [vmem:[#allocation2 + $0x1f0] sm:$0xff]
        %v1067 = vld [vmem:[#allocation2 + $0x1f8] sm:$0xff]
        %v1068 = vld [vmem:[%s358] sm:$0xff]
        %v1069 = vld [vmem:[%s358 + $0x8] sm:$0xff]
        %v1070 = vld [vmem:[%s358 + $0x10] sm:$0xff]
        %v1071 = vld [vmem:[%s358 + $0x18] sm:$0xff]
        %v1072 = vld [vmem:[%s358 + $0x20] sm:$0xff]
        %v1073 = vld [vmem:[%s358 + $0x28] sm:$0xff]
        %v1074 = vld [vmem:[%s358 + $0x30] sm:$0xff]
        %v1075 = vld [vmem:[%s358 + $0x38] sm:$0xff]
        %v1076 = vld [vmem:[%s358 + $0x40] sm:$0xff]
        %v1077 = vld [vmem:[%s358 + $0x48] sm:$0xff]
        %v1078 = vld [vmem:[%s358 + $0x50] sm:$0xff]
        %v1079 = vld [vmem:[%s358 + $0x58] sm:$0xff]
        %v1080 = vld [vmem:[%s358 + $0x60] sm:$0xff]
        %v1081 = vld [vmem:[%s358 + $0x68] sm:$0xff]
        %v1082 = vld [vmem:[%s358 + $0x70] sm:$0xff]
        %v1083 = vld [vmem:[%s358 + $0x78] sm:$0xff]
        %v1100 = vunpack.c.l.b16 %v1068
        %v1101 = vunpack.c.h.b16 %v1068
        %v1102 = vunpack.c.l.b16 %v1069
        %v1103 = vunpack.c.h.b16 %v1069
        %v1104 = vunpack.c.l.b16 %v1070
        %v1105 = vunpack.c.h.b16 %v1070
        %v1106 = vunpack.c.l.b16 %v1071
        %v1107 = vunpack.c.h.b16 %v1071
        %v1108 = vunpack.c.l.b16 %v1072
        %v1109 = vunpack.c.h.b16 %v1072
        %v1110 = vunpack.c.l.b16 %v1073
        %v1111 = vunpack.c.h.b16 %v1073
        %v1112 = vunpack.c.l.b16 %v1074
        %v1113 = vunpack.c.h.b16 %v1074
        %v1114 = vunpack.c.l.b16 %v1075
        %v1115 = vunpack.c.h.b16 %v1075
        %v1116 = vunpack.c.l.b16 %v1076
        %v1117 = vunpack.c.h.b16 %v1076
        %v1118 = vunpack.c.l.b16 %v1077
        %v1119 = vunpack.c.h.b16 %v1077
        %v1120 = vunpack.c.l.b16 %v1078
        %v1121 = vunpack.c.h.b16 %v1078
        %v1122 = vunpack.c.l.b16 %v1079
        %v1123 = vunpack.c.h.b16 %v1079
        %v1124 = vunpack.c.l.b16 %v1080
        %v1125 = vunpack.c.h.b16 %v1080
        %v1126 = vunpack.c.l.b16 %v1081
        %v1127 = vunpack.c.h.b16 %v1081
        %v1128 = vunpack.c.l.b16 %v1082
        %v1129 = vunpack.c.h.b16 %v1082
        %v1130 = vunpack.c.l.b16 %v1083
        %v1131 = vunpack.c.h.b16 %v1083
        %v1132 = vpack.c.b16 %v1102, %v1100
        %v1133 = vpack.c.b16 %v1103, %v1101
        %v1134 = vpack.c.b16 %v1106, %v1104
        %v1135 = vpack.c.b16 %v1107, %v1105
        %v1136 = vpack.c.b16 %v1110, %v1108
        %v1137 = vpack.c.b16 %v1111, %v1109
        %v1138 = vpack.c.b16 %v1114, %v1112
        %v1139 = vpack.c.b16 %v1115, %v1113
        %v1140 = vpack.c.b16 %v1118, %v1116
        %v1141 = vpack.c.b16 %v1119, %v1117
        %v1142 = vpack.c.b16 %v1122, %v1120
        %v1143 = vpack.c.b16 %v1123, %v1121
        %v1144 = vpack.c.b16 %v1126, %v1124
        %v1145 = vpack.c.b16 %v1127, %v1125
        %v1146 = vpack.c.b16 %v1130, %v1128
        %v1147 = vpack.c.b16 %v1131, %v1129
        %1164 = vmatprep.subr.bf16.mxu0 %v1133
        %1165 = vmatpush1.bf16.msra.mxu0 %v1132
        %1166 = vmatprep.subr.bf16.mxu0 %v1135
        %1167 = vmatpush1.bf16.msra.mxu0 %v1134
        %1168 = vmatprep.subr.bf16.mxu0 %v1137
        %1169 = vmatpush1.bf16.msra.mxu0 %v1136
        %1170 = vmatprep.subr.bf16.mxu0 %v1139
        %1171 = vmatpush1.bf16.msra.mxu0 %v1138
        %1172 = vmatprep.subr.bf16.mxu0 %v1141
        %1173 = vmatpush1.bf16.msra.mxu0 %v1140
        %1174 = vmatprep.subr.bf16.mxu0 %v1143
        %1175 = vmatpush1.bf16.msra.mxu0 %v1142
        %1176 = vmatprep.subr.bf16.mxu0 %v1145
        %1177 = vmatpush1.bf16.msra.mxu0 %v1144
        %1178 = vmatprep.subr.bf16.mxu0 %v1147
        %1179 = vmatpush1.bf16.msra.mxu0 %v1146
        %1180 = vmatprep.subr.bf16.mxu0 0
        %1181 = vmatpush1.bf16.msra.mxu0 0
        %1182 = vmatprep.subr.bf16.mxu0 0
        %1183 = vmatpush1.bf16.msra.mxu0 0
        %1184 = vmatprep.subr.bf16.mxu0 0
        %1185 = vmatpush1.bf16.msra.mxu0 0
        %1186 = vmatprep.subr.bf16.mxu0 0
        %1187 = vmatpush1.bf16.msra.mxu0 0
        %1188 = vmatprep.subr.bf16.mxu0 0
        %1189 = vmatpush1.bf16.msra.mxu0 0
        %1190 = vmatprep.subr.bf16.mxu0 0
        %1191 = vmatpush1.bf16.msra.mxu0 0
        %1192 = vmatprep.subr.bf16.mxu0 0
        %1193 = vmatpush1.bf16.msra.mxu0 0
        %1194 = vmatprep.subr.bf16.mxu0 0
        %1195 = vmatpush1.bf16.msra.mxu0 0
        %1196 = vmatprep.mubr.bf16.mxu0 0
        %1197 = vmatmul.mubr.bf16.gmra.mrb[0].mxu0 %v988
        %v1198 = vpop.f32.mrb[0].mxu0
        %v1199 = vadd.f32 0.0, %v1198
        %v1200 = vpop.f32.mrb[0].mxu0
        %v1201 = vadd.f32 0.0, %v1200
        %v1202 = vpop.f32.mrb[0].mxu0
        %v1203 = vadd.f32 0.0, %v1202
        %v1204 = vpop.f32.mrb[0].mxu0
        %v1205 = vadd.f32 0.0, %v1204
        %1206 = vmatprep.mubr.bf16.mxu0 0
        %1207 = vmatmul.mubr.bf16.gmra.mrb[0].mxu0 %v989
        %v1208 = vpop.f32.mrb[0].mxu0
        %v1209 = vadd.f32 0.0, %v1208
        %v1210 = vpop.f32.mrb[0].mxu0
        %v1211 = vadd.f32 0.0, %v1210
        %v1212 = vpop.f32.mrb[0].mxu0
        %v1213 = vadd.f32 0.0, %v1212
        %v1214 = vpop.f32.mrb[0].mxu0
        %v1215 = vadd.f32 0.0, %v1214
        %1216 = vmatprep.mubr.bf16.mxu0 0
        %1217 = vmatmul.mubr.bf16.gmra.mrb[0].mxu0 %v990
        %v1218 = vpop.f32.mrb[0].mxu0
        %v1219 = vadd.f32 0.0, %v1218
        %v1220 = vpop.f32.mrb[0].mxu0
        %v1221 = vadd.f32 0.0, %v1220
        %v1222 = vpop.f32.mrb[0].mxu0
        %v1223 = vadd.f32 0.0, %v1222
        %v1224 = vpop.f32.mrb[0].mxu0
        %v1225 = vadd.f32 0.0, %v1224
        %1226 = vmatprep.mubr.bf16.mxu0 0
        %1227 = vmatmul.mubr.bf16.gmra.mrb[0].mxu0 %v991
        %v1228 = vpop.f32.mrb[0].mxu0
        %v1229 = vadd.f32 0.0, %v1228
        %v1230 = vpop.f32.mrb[0].mxu0
        %v1231 = vadd.f32 0.0, %v1230
        %v1232 = vpop.f32.mrb[0].mxu0
        %v1233 = vadd.f32 0.0, %v1232
        %v1234 = vpop.f32.mrb[0].mxu0
        %v1235 = vadd.f32 0.0, %v1234
        %1236 = vmatprep.mubr.bf16.mxu0 0
        %1237 = vmatmul.mubr.bf16.gmra.mrb[0].mxu0 %v992
        %v1238 = vpop.f32.mrb[0].mxu0
        %v1239 = vadd.f32 0.0, %v1238
        %v1240 = vpop.f32.mrb[0].mxu0
        %v1241 = vadd.f32 0.0, %v1240
        %v1242 = vpop.f32.mrb[0].mxu0
        %v1243 = vadd.f32 0.0, %v1242
        %v1244 = vpop.f32.mrb[0].mxu0
        %v1245 = vadd.f32 0.0, %v1244
        %1246 = vmatprep.mubr.bf16.mxu0 0
        %1247 = vmatmul.mubr.bf16.gmra.mrb[0].mxu0 %v993
        %v1248 = vpop.f32.mrb[0].mxu0
        %v1249 = vadd.f32 0.0, %v1248
        %v1250 = vpop.f32.mrb[0].mxu0
        %v1251 = vadd.f32 0.0, %v1250
        %v1252 = vpop.f32.mrb[0].mxu0
        %v1253 = vadd.f32 0.0, %v1252
        %v1254 = vpop.f32.mrb[0].mxu0
        %v1255 = vadd.f32 0.0, %v1254
        %1256 = vmatprep.mubr.bf16.mxu0 0
        %1257 = vmatmul.mubr.bf16.gmra.mrb[0].mxu0 %v994
        %v1258 = vpop.f32.mrb[0].mxu0
        %v1259 = vadd.f32 0.0, %v1258
        %v1260 = vpop.f32.mrb[0].mxu0
        %v1261 = vadd.f32 0.0, %v1260
        %v1262 = vpop.f32.mrb[0].mxu0
        %v1263 = vadd.f32 0.0, %v1262
        %v1264 = vpop.f32.mrb[0].mxu0
        %v1265 = vadd.f32 0.0, %v1264
        %1266 = vmatprep.mubr.bf16.mxu0 0
        %1267 = vmatmul.mubr.bf16.gmra.mrb[0].mxu0 %v995
        %v1268 = vpop.f32.mrb[0].mxu0
        %v1269 = vadd.f32 0.0, %v1268
        %v1270 = vpop.f32.mrb[0].mxu0
        %v1271 = vadd.f32 0.0, %v1270
        %v1272 = vpop.f32.mrb[0].mxu0
        %v1273 = vadd.f32 0.0, %v1272
        %v1274 = vpop.f32.mrb[0].mxu0
        %v1275 = vadd.f32 0.0, %v1274
        %1276 = vmatprep.mubr.bf16.mxu0 0
        %1277 = vmatmul.mubr.bf16.gmra.mrb[0].mxu0 %v996
        %v1278 = vpop.f32.mrb[0].mxu0
        %v1279 = vadd.f32 0.0, %v1278
        %v1280 = vpop.f32.mrb[0].mxu0
        %v1281 = vadd.f32 0.0, %v1280
        %v1282 = vpop.f32.mrb[0].mxu0
        %v1283 = vadd.f32 0.0, %v1282
        %v1284 = vpop.f32.mrb[0].mxu0
        %v1285 = vadd.f32 0.0, %v1284
        %1286 = vmatprep.mubr.bf16.mxu0 0
        %1287 = vmatmul.mubr.bf16.gmra.mrb[0].mxu0 %v997
        %v1288 = vpop.f32.mrb[0].mxu0
        %v1289 = vadd.f32 0.0, %v1288
        %v1290 = vpop.f32.mrb[0].mxu0
        %v1291 = vadd.f32 0.0, %v1290
        %v1292 = vpop.f32.mrb[0].mxu0
        %v1293 = vadd.f32 0.0, %v1292
        %v1294 = vpop.f32.mrb[0].mxu0
        %v1295 = vadd.f32 0.0, %v1294
        %1296 = vmatprep.mubr.bf16.mxu0 0
        %1297 = vmatmul.mubr.bf16.gmra.mrb[0].mxu0 %v998
        %v1298 = vpop.f32.mrb[0].mxu0
        %v1299 = vadd.f32 0.0, %v1298
        %v1300 = vpop.f32.mrb[0].mxu0
        %v1301 = vadd.f32 0.0, %v1300
        %v1302 = vpop.f32.mrb[0].mxu0
        %v1303 = vadd.f32 0.0, %v1302
        %v1304 = vpop.f32.mrb[0].mxu0
        %v1305 = vadd.f32 0.0, %v1304
        %1306 = vmatprep.mubr.bf16.mxu0 0
        %1307 = vmatmul.mubr.bf16.gmra.mrb[0].mxu0 %v999
        %v1308 = vpop.f32.mrb[0].mxu0
        %v1309 = vadd.f32 0.0, %v1308
        %v1310 = vpop.f32.mrb[0].mxu0
        %v1311 = vadd.f32 0.0, %v1310
        %v1312 = vpop.f32.mrb[0].mxu0
        %v1313 = vadd.f32 0.0, %v1312
        %v1314 = vpop.f32.mrb[0].mxu0
        %v1315 = vadd.f32 0.0, %v1314
        %1316 = vmatprep.mubr.bf16.mxu0 0
        %1317 = vmatmul.mubr.bf16.gmra.mrb[0].mxu0 %v1000
        %v1318 = vpop.f32.mrb[0].mxu0
        %v1319 = vadd.f32 0.0, %v1318
        %v1320 = vpop.f32.mrb[0].mxu0
        %v1321 = vadd.f32 0.0, %v1320
        %v1322 = vpop.f32.mrb[0].mxu0
        %v1323 = vadd.f32 0.0, %v1322
        %v1324 = vpop.f32.mrb[0].mxu0
        %v1325 = vadd.f32 0.0, %v1324
        %1326 = vmatprep.mubr.bf16.mxu0 0
        %1327 = vmatmul.mubr.bf16.gmra.mrb[0].mxu0 %v1001
        %v1328 = vpop.f32.mrb[0].mxu0
        %v1329 = vadd.f32 0.0, %v1328
        %v1330 = vpop.f32.mrb[0].mxu0
        %v1331 = vadd.f32 0.0, %v1330
        %v1332 = vpop.f32.mrb[0].mxu0
        %v1333 = vadd.f32 0.0, %v1332
        %v1334 = vpop.f32.mrb[0].mxu0
        %v1335 = vadd.f32 0.0, %v1334
        %1336 = vmatprep.mubr.bf16.mxu0 0
        %1337 = vmatmul.mubr.bf16.gmra.mrb[0].mxu0 %v1002
        %v1338 = vpop.f32.mrb[0].mxu0
        %v1339 = vadd.f32 0.0, %v1338
        %v1340 = vpop.f32.mrb[0].mxu0
        %v1341 = vadd.f32 0.0, %v1340
        %v1342 = vpop.f32.mrb[0].mxu0
        %v1343 = vadd.f32 0.0, %v1342
        %v1344 = vpop.f32.mrb[0].mxu0
        %v1345 = vadd.f32 0.0, %v1344
        %1346 = vmatprep.mubr.bf16.mxu0 0
        %1347 = vmatmul.mubr.bf16.gmra.mrb[0].mxu0 %v1003
        %v1348 = vpop.f32.mrb[0].mxu0
        %v1349 = vadd.f32 0.0, %v1348
        %v1350 = vpop.f32.mrb[0].mxu0
        %v1351 = vadd.f32 0.0, %v1350
        %v1352 = vpop.f32.mrb[0].mxu0
        %v1353 = vadd.f32 0.0, %v1352
        %v1354 = vpop.f32.mrb[0].mxu0
        %v1355 = vadd.f32 0.0, %v1354
        %1356 = vdwg.mxu0
        %v1357 = vadd.f32 %v1004, %v1199
        %v1358 = vadd.f32 %v1005, %v1201
        %v1359 = vadd.f32 %v1006, %v1203
        %v1360 = vadd.f32 %v1007, %v1205
        %v1361 = vadd.f32 %v1008, %v1209
        %v1362 = vadd.f32 %v1009, %v1211
        %v1363 = vadd.f32 %v1010, %v1213
        %v1364 = vadd.f32 %v1011, %v1215
        %v1365 = vadd.f32 %v1012, %v1219
        %v1366 = vadd.f32 %v1013, %v1221
        %v1367 = vadd.f32 %v1014, %v1223
        %v1368 = vadd.f32 %v1015, %v1225
        %v1369 = vadd.f32 %v1016, %v1229
        %v1370 = vadd.f32 %v1017, %v1231
        %v1371 = vadd.f32 %v1018, %v1233
        %v1372 = vadd.f32 %v1019, %v1235
        %v1373 = vadd.f32 %v1020, %v1239
        %v1374 = vadd.f32 %v1021, %v1241
        %v1375 = vadd.f32 %v1022, %v1243
        %v1376 = vadd.f32 %v1023, %v1245
        %v1377 = vadd.f32 %v1024, %v1249
        %v1378 = vadd.f32 %v1025, %v1251
        %v1379 = vadd.f32 %v1026, %v1253
        %v1380 = vadd.f32 %v1027, %v1255
        %v1381 = vadd.f32 %v1028, %v1259
        %v1382 = vadd.f32 %v1029, %v1261
        %v1383 = vadd.f32 %v1030, %v1263
        %v1384 = vadd.f32 %v1031, %v1265
        %v1385 = vadd.f32 %v1032, %v1269
        %v1386 = vadd.f32 %v1033, %v1271
        %v1387 = vadd.f32 %v1034, %v1273
        %v1388 = vadd.f32 %v1035, %v1275
        %v1389 = vadd.f32 %v1036, %v1279
        %v1390 = vadd.f32 %v1037, %v1281
        %v1391 = vadd.f32 %v1038, %v1283
        %v1392 = vadd.f32 %v1039, %v1285
        %v1393 = vadd.f32 %v1040, %v1289
        %v1394 = vadd.f32 %v1041, %v1291
        %v1395 = vadd.f32 %v1042, %v1293
        %v1396 = vadd.f32 %v1043, %v1295
        %v1397 = vadd.f32 %v1044, %v1299
        %v1398 = vadd.f32 %v1045, %v1301
        %v1399 = vadd.f32 %v1046, %v1303
        %v1400 = vadd.f32 %v1047, %v1305
        %v1401 = vadd.f32 %v1048, %v1309
        %v1402 = vadd.f32 %v1049, %v1311
        %v1403 = vadd.f32 %v1050, %v1313
        %v1404 = vadd.f32 %v1051, %v1315
        %v1405 = vadd.f32 %v1052, %v1319
        %v1406 = vadd.f32 %v1053, %v1321
        %v1407 = vadd.f32 %v1054, %v1323
        %v1408 = vadd.f32 %v1055, %v1325
        %v1409 = vadd.f32 %v1056, %v1329
        %v1410 = vadd.f32 %v1057, %v1331
        %v1411 = vadd.f32 %v1058, %v1333
        %v1412 = vadd.f32 %v1059, %v1335
        %v1413 = vadd.f32 %v1060, %v1339
        %v1414 = vadd.f32 %v1061, %v1341
        %v1415 = vadd.f32 %v1062, %v1343
        %v1416 = vadd.f32 %v1063, %v1345
        %v1417 = vadd.f32 %v1064, %v1349
        %v1418 = vadd.f32 %v1065, %v1351
        %v1419 = vadd.f32 %v1066, %v1353
        %v1420 = vadd.f32 %v1067, %v1355
        %1421 = vst [vmem:[#allocation2] sm:$0xff] %v1357
        %1422 = vst [vmem:[#allocation2 + $0x8] sm:$0xff] %v1358
        %1423 = vst [vmem:[#allocation2 + $0x10] sm:$0xff] %v1359
        %1424 = vst [vmem:[#allocation2 + $0x18] sm:$0xff] %v1360
        %1425 = vst [vmem:[#allocation2 + $0x20] sm:$0xff] %v1361
        %1426 = vst [vmem:[#allocation2 + $0x28] sm:$0xff] %v1362
        %1427 = vst [vmem:[#allocation2 + $0x30] sm:$0xff] %v1363
        %1428 = vst [vmem:[#allocation2 + $0x38] sm:$0xff] %v1364
        %1429 = vst [vmem:[#allocation2 + $0x40] sm:$0xff] %v1365
        %1430 = vst [vmem:[#allocation2 + $0x48] sm:$0xff] %v1366
        %1431 = vst [vmem:[#allocation2 + $0x50] sm:$0xff] %v1367
        %1432 = vst [vmem:[#allocation2 + $0x58] sm:$0xff] %v1368
        %1433 = vst [vmem:[#allocation2 + $0x60] sm:$0xff] %v1369
        %1434 = vst [vmem:[#allocation2 + $0x68] sm:$0xff] %v1370
        %1435 = vst [vmem:[#allocation2 + $0x70] sm:$0xff] %v1371
        %1436 = vst [vmem:[#allocation2 + $0x78] sm:$0xff] %v1372
        %1437 = vst [vmem:[#allocation2 + $0x80] sm:$0xff] %v1373
        %1438 = vst [vmem:[#allocation2 + $0x88] sm:$0xff] %v1374
        %1439 = vst [vmem:[#allocation2 + $0x90] sm:$0xff] %v1375
        %1440 = vst [vmem:[#allocation2 + $0x98] sm:$0xff] %v1376
        %1441 = vst [vmem:[#allocation2 + $0xa0] sm:$0xff] %v1377
        %1442 = vst [vmem:[#allocation2 + $0xa8] sm:$0xff] %v1378
        %1443 = vst [vmem:[#allocation2 + $0xb0] sm:$0xff] %v1379
        %1444 = vst [vmem:[#allocation2 + $0xb8] sm:$0xff] %v1380
        %1445 = vst [vmem:[#allocation2 + $0xc0] sm:$0xff] %v1381
        %1446 = vst [vmem:[#allocation2 + $0xc8] sm:$0xff] %v1382
        %1447 = vst [vmem:[#allocation2 + $0xd0] sm:$0xff] %v1383
        %1448 = vst [vmem:[#allocation2 + $0xd8] sm:$0xff] %v1384
        %1449 = vst [vmem:[#allocation2 + $0xe0] sm:$0xff] %v1385
        %1450 = vst [vmem:[#allocation2 + $0xe8] sm:$0xff] %v1386
        %1451 = vst [vmem:[#allocation2 + $0xf0] sm:$0xff] %v1387
        %1452 = vst [vmem:[#allocation2 + $0xf8] sm:$0xff] %v1388
        %1453 = vst [vmem:[#allocation2 + $0x100] sm:$0xff] %v1389
        %1454 = vst [vmem:[#allocation2 + $0x108] sm:$0xff] %v1390
        %1455 = vst [vmem:[#allocation2 + $0x110] sm:$0xff] %v1391
        %1456 = vst [vmem:[#allocation2 + $0x118] sm:$0xff] %v1392
        %1457 = vst [vmem:[#allocation2 + $0x120] sm:$0xff] %v1393
        %1458 = vst [vmem:[#allocation2 + $0x128] sm:$0xff] %v1394
        %1459 = vst [vmem:[#allocation2 + $0x130] sm:$0xff] %v1395
        %1460 = vst [vmem:[#allocation2 + $0x138] sm:$0xff] %v1396
        %1461 = vst [vmem:[#allocation2 + $0x140] sm:$0xff] %v1397
        %1462 = vst [vmem:[#allocation2 + $0x148] sm:$0xff] %v1398
        %1463 = vst [vmem:[#allocation2 + $0x150] sm:$0xff] %v1399
        %1464 = vst [vmem:[#allocation2 + $0x158] sm:$0xff] %v1400
        %1465 = vst [vmem:[#allocation2 + $0x160] sm:$0xff] %v1401
        %1466 = vst [vmem:[#allocation2 + $0x168] sm:$0xff] %v1402
        %1467 = vst [vmem:[#allocation2 + $0x170] sm:$0xff] %v1403
        %1468 = vst [vmem:[#allocation2 + $0x178] sm:$0xff] %v1404
        %1469 = vst [vmem:[#allocation2 + $0x180] sm:$0xff] %v1405
        %1470 = vst [vmem:[#allocation2 + $0x188] sm:$0xff] %v1406
        %1471 = vst [vmem:[#allocation2 + $0x190] sm:$0xff] %v1407
        %1472 = vst [vmem:[#allocation2 + $0x198] sm:$0xff] %v1408
        %1473 = vst [vmem:[#allocation2 + $0x1a0] sm:$0xff] %v1409
        %1474 = vst [vmem:[#allocation2 + $0x1a8] sm:$0xff] %v1410
        %1475 = vst [vmem:[#allocation2 + $0x1b0] sm:$0xff] %v1411
        %1476 = vst [vmem:[#allocation2 + $0x1b8] sm:$0xff] %v1412
        %1477 = vst [vmem:[#allocation2 + $0x1c0] sm:$0xff] %v1413
        %1478 = vst [vmem:[#allocation2 + $0x1c8] sm:$0xff] %v1414
        %1479 = vst [vmem:[#allocation2 + $0x1d0] sm:$0xff] %v1415
        %1480 = vst [vmem:[#allocation2 + $0x1d8] sm:$0xff] %v1416
        %1481 = vst [vmem:[#allocation2 + $0x1e0] sm:$0xff] %v1417
        %1482 = vst [vmem:[#allocation2 + $0x1e8] sm:$0xff] %v1418
        %1483 = vst [vmem:[#allocation2 + $0x1f0] sm:$0xff] %v1419
        %1484 = vst [vmem:[#allocation2 + $0x1f8] sm:$0xff] %v1420
        // Predicated region
        $region83: #{expire_span_transformer_xl_forward.14} parent=73 // pred_check
          %p1485 = pneg %p425
        $region84: #{expire_span_transformer_xl_forward.14} parent=73 // pred_check_branch
          %1487 = sbr.rel (%p1485) target = $region86
        $region85: #{expire_span_transformer_xl_forward.14} parent=73 // pred_region
          %v1488 = vld [vmem:[#allocation2] sm:$0xff]
          %v1489 = vld [vmem:[#allocation2 + $0x8] sm:$0xff]
          %v1490 = vld [vmem:[#allocation2 + $0x10] sm:$0xff]
          %v1491 = vld [vmem:[#allocation2 + $0x18] sm:$0xff]
          %v1492 = vld [vmem:[#allocation2 + $0x20] sm:$0xff]
          %v1493 = vld [vmem:[#allocation2 + $0x28] sm:$0xff]
          %v1494 = vld [vmem:[#allocation2 + $0x30] sm:$0xff]
          %v1495 = vld [vmem:[#allocation2 + $0x38] sm:$0xff]
          %v1496 = vld [vmem:[#allocation2 + $0x40] sm:$0xff]
          %v1497 = vld [vmem:[#allocation2 + $0x48] sm:$0xff]
          %v1498 = vld [vmem:[#allocation2 + $0x50] sm:$0xff]
          %v1499 = vld [vmem:[#allocation2 + $0x58] sm:$0xff]
          %v1500 = vld [vmem:[#allocation2 + $0x60] sm:$0xff]
          %v1501 = vld [vmem:[#allocation2 + $0x68] sm:$0xff]
          %v1502 = vld [vmem:[#allocation2 + $0x70] sm:$0xff]
          %v1503 = vld [vmem:[#allocation2 + $0x78] sm:$0xff]
          %v1504 = vld [vmem:[#allocation2 + $0x80] sm:$0xff]
          %v1505 = vld [vmem:[#allocation2 + $0x88] sm:$0xff]
          %v1506 = vld [vmem:[#allocation2 + $0x90] sm:$0xff]
          %v1507 = vld [vmem:[#allocation2 + $0x98] sm:$0xff]
          %v1508 = vld [vmem:[#allocation2 + $0xa0] sm:$0xff]
          %v1509 = vld [vmem:[#allocation2 + $0xa8] sm:$0xff]
          %v1510 = vld [vmem:[#allocation2 + $0xb0] sm:$0xff]
          %v1511 = vld [vmem:[#allocation2 + $0xb8] sm:$0xff]
          %v1512 = vld [vmem:[#allocation2 + $0xc0] sm:$0xff]
          %v1513 = vld [vmem:[#allocation2 + $0xc8] sm:$0xff]
          %v1514 = vld [vmem:[#allocation2 + $0xd0] sm:$0xff]
          %v1515 = vld [vmem:[#allocation2 + $0xd8] sm:$0xff]
          %v1516 = vld [vmem:[#allocation2 + $0xe0] sm:$0xff]
          %v1517 = vld [vmem:[#allocation2 + $0xe8] sm:$0xff]
          %v1518 = vld [vmem:[#allocation2 + $0xf0] sm:$0xff]
          %v1519 = vld [vmem:[#allocation2 + $0xf8] sm:$0xff]
          %v1520 = vld [vmem:[#allocation2 + $0x100] sm:$0xff]
          %v1521 = vld [vmem:[#allocation2 + $0x108] sm:$0xff]
          %v1522 = vld [vmem:[#allocation2 + $0x110] sm:$0xff]
          %v1523 = vld [vmem:[#allocation2 + $0x118] sm:$0xff]
          %v1524 = vld [vmem:[#allocation2 + $0x120] sm:$0xff]
          %v1525 = vld [vmem:[#allocation2 + $0x128] sm:$0xff]
          %v1526 = vld [vmem:[#allocation2 + $0x130] sm:$0xff]
          %v1527 = vld [vmem:[#allocation2 + $0x138] sm:$0xff]
          %v1528 = vld [vmem:[#allocation2 + $0x140] sm:$0xff]
          %v1529 = vld [vmem:[#allocation2 + $0x148] sm:$0xff]
          %v1530 = vld [vmem:[#allocation2 + $0x150] sm:$0xff]
          %v1531 = vld [vmem:[#allocation2 + $0x158] sm:$0xff]
          %v1532 = vld [vmem:[#allocation2 + $0x160] sm:$0xff]
          %v1533 = vld [vmem:[#allocation2 + $0x168] sm:$0xff]
          %v1534 = vld [vmem:[#allocation2 + $0x170] sm:$0xff]
          %v1535 = vld [vmem:[#allocation2 + $0x178] sm:$0xff]
          %v1536 = vld [vmem:[#allocation2 + $0x180] sm:$0xff]
          %v1537 = vld [vmem:[#allocation2 + $0x188] sm:$0xff]
          %v1538 = vld [vmem:[#allocation2 + $0x190] sm:$0xff]
          %v1539 = vld [vmem:[#allocation2 + $0x198] sm:$0xff]
          %v1540 = vld [vmem:[#allocation2 + $0x1a0] sm:$0xff]
          %v1541 = vld [vmem:[#allocation2 + $0x1a8] sm:$0xff]
          %v1542 = vld [vmem:[#allocation2 + $0x1b0] sm:$0xff]
          %v1543 = vld [vmem:[#allocation2 + $0x1b8] sm:$0xff]
          %v1544 = vld [vmem:[#allocation2 + $0x1c0] sm:$0xff]
          %v1545 = vld [vmem:[#allocation2 + $0x1c8] sm:$0xff]
          %v1546 = vld [vmem:[#allocation2 + $0x1d0] sm:$0xff]
          %v1547 = vld [vmem:[#allocation2 + $0x1d8] sm:$0xff]
          %v1548 = vld [vmem:[#allocation2 + $0x1e0] sm:$0xff]
          %v1549 = vld [vmem:[#allocation2 + $0x1e8] sm:$0xff]
          %v1550 = vld [vmem:[#allocation2 + $0x1f0] sm:$0xff]
          %v1551 = vld [vmem:[#allocation2 + $0x1f8] sm:$0xff]
          %v1552 = vld [vmem:[%s414] sm:$0x3]
          %v1554 = vlaneseq
          %v1555 = vshrl.u32 %v1554, 7
          %v1556 = vsub.s32 0, %v1555
          %v1557 = vrot.slane %v1552, %v1556
          %v1558 = vlaneseq
          %v1559 = vshrl.u32 %v1558, 7
          %v1560 = vsub.s32 1, %v1559
          %v1561 = vrot.slane %v1552, %v1560
          %v1564 = vadd.f32 %v1488, %v1557
          %v1565 = vadd.f32 %v1489, %v1561
          %v1566 = vadd.f32 %v1490, %v1557
          %v1567 = vadd.f32 %v1491, %v1561
          %v1568 = vadd.f32 %v1492, %v1557
          %v1569 = vadd.f32 %v1493, %v1561
          %v1570 = vadd.f32 %v1494, %v1557
          %v1571 = vadd.f32 %v1495, %v1561
          %v1572 = vadd.f32 %v1496, %v1557
          %v1573 = vadd.f32 %v1497, %v1561
          %v1574 = vadd.f32 %v1498, %v1557
          %v1575 = vadd.f32 %v1499, %v1561
          %v1576 = vadd.f32 %v1500, %v1557
          %v1577 = vadd.f32 %v1501, %v1561
          %v1578 = vadd.f32 %v1502, %v1557
          %v1579 = vadd.f32 %v1503, %v1561
          %v1580 = vadd.f32 %v1504, %v1557
          %v1581 = vadd.f32 %v1505, %v1561
          %v1582 = vadd.f32 %v1506, %v1557
          %v1583 = vadd.f32 %v1507, %v1561
          %v1584 = vadd.f32 %v1508, %v1557
          %v1585 = vadd.f32 %v1509, %v1561
          %v1586 = vadd.f32 %v1510, %v1557
          %v1587 = vadd.f32 %v1511, %v1561
          %v1588 = vadd.f32 %v1512, %v1557
          %v1589 = vadd.f32 %v1513, %v1561
          %v1590 = vadd.f32 %v1514, %v1557
          %v1591 = vadd.f32 %v1515, %v1561
          %v1592 = vadd.f32 %v1516, %v1557
          %v1593 = vadd.f32 %v1517, %v1561
          %v1594 = vadd.f32 %v1518, %v1557
          %v1595 = vadd.f32 %v1519, %v1561
          %v1596 = vadd.f32 %v1520, %v1557
          %v1597 = vadd.f32 %v1521, %v1561
          %v1598 = vadd.f32 %v1522, %v1557
          %v1599 = vadd.f32 %v1523, %v1561
          %v1600 = vadd.f32 %v1524, %v1557
          %v1601 = vadd.f32 %v1525, %v1561
          %v1602 = vadd.f32 %v1526, %v1557
          %v1603 = vadd.f32 %v1527, %v1561
          %v1604 = vadd.f32 %v1528, %v1557
          %v1605 = vadd.f32 %v1529, %v1561
          %v1606 = vadd.f32 %v1530, %v1557
          %v1607 = vadd.f32 %v1531, %v1561
          %v1608 = vadd.f32 %v1532, %v1557
          %v1609 = vadd.f32 %v1533, %v1561
          %v1610 = vadd.f32 %v1534, %v1557
          %v1611 = vadd.f32 %v1535, %v1561
          %v1612 = vadd.f32 %v1536, %v1557
          %v1613 = vadd.f32 %v1537, %v1561
          %v1614 = vadd.f32 %v1538, %v1557
          %v1615 = vadd.f32 %v1539, %v1561
          %v1616 = vadd.f32 %v1540, %v1557
          %v1617 = vadd.f32 %v1541, %v1561
          %v1618 = vadd.f32 %v1542, %v1557
          %v1619 = vadd.f32 %v1543, %v1561
          %v1620 = vadd.f32 %v1544, %v1557
          %v1621 = vadd.f32 %v1545, %v1561
          %v1622 = vadd.f32 %v1546, %v1557
          %v1623 = vadd.f32 %v1547, %v1561
          %v1624 = vadd.f32 %v1548, %v1557
          %v1625 = vadd.f32 %v1549, %v1561
          %v1626 = vadd.f32 %v1550, %v1557
          %v1627 = vadd.f32 %v1551, %v1561
          %v1628 = vmul.f32 %v1564, %v1564
          %v1629 = vmul.f32 %v1565, %v1565
          %v1630 = vmul.f32 %v1566, %v1566
          %v1631 = vmul.f32 %v1567, %v1567
          %v1632 = vmul.f32 %v1568, %v1568
          %v1633 = vmul.f32 %v1569, %v1569
          %v1634 = vmul.f32 %v1570, %v1570
          %v1635 = vmul.f32 %v1571, %v1571
          %v1636 = vmul.f32 %v1572, %v1572
          %v1637 = vmul.f32 %v1573, %v1573
          %v1638 = vmul.f32 %v1574, %v1574
          %v1639 = vmul.f32 %v1575, %v1575
          %v1640 = vmul.f32 %v1576, %v1576
          %v1641 = vmul.f32 %v1577, %v1577
          %v1642 = vmul.f32 %v1578, %v1578
          %v1643 = vmul.f32 %v1579, %v1579
          %v1644 = vmul.f32 %v1580, %v1580
          %v1645 = vmul.f32 %v1581, %v1581
          %v1646 = vmul.f32 %v1582, %v1582
          %v1647 = vmul.f32 %v1583, %v1583
          %v1648 = vmul.f32 %v1584, %v1584
          %v1649 = vmul.f32 %v1585, %v1585
          %v1650 = vmul.f32 %v1586, %v1586
          %v1651 = vmul.f32 %v1587, %v1587
          %v1652 = vmul.f32 %v1588, %v1588
          %v1653 = vmul.f32 %v1589, %v1589
          %v1654 = vmul.f32 %v1590, %v1590
          %v1655 = vmul.f32 %v1591, %v1591
          %v1656 = vmul.f32 %v1592, %v1592
          %v1657 = vmul.f32 %v1593, %v1593
          %v1658 = vmul.f32 %v1594, %v1594
          %v1659 = vmul.f32 %v1595, %v1595
          %v1660 = vmul.f32 %v1596, %v1596
          %v1661 = vmul.f32 %v1597, %v1597
          %v1662 = vmul.f32 %v1598, %v1598
          %v1663 = vmul.f32 %v1599, %v1599
          %v1664 = vmul.f32 %v1600, %v1600
          %v1665 = vmul.f32 %v1601, %v1601
          %v1666 = vmul.f32 %v1602, %v1602
          %v1667 = vmul.f32 %v1603, %v1603
          %v1668 = vmul.f32 %v1604, %v1604
          %v1669 = vmul.f32 %v1605, %v1605
          %v1670 = vmul.f32 %v1606, %v1606
          %v1671 = vmul.f32 %v1607, %v1607
          %v1672 = vmul.f32 %v1608, %v1608
          %v1673 = vmul.f32 %v1609, %v1609
          %v1674 = vmul.f32 %v1610, %v1610
          %v1675 = vmul.f32 %v1611, %v1611
          %v1676 = vmul.f32 %v1612, %v1612
          %v1677 = vmul.f32 %v1613, %v1613
          %v1678 = vmul.f32 %v1614, %v1614
          %v1679 = vmul.f32 %v1615, %v1615
          %v1680 = vmul.f32 %v1616, %v1616
          %v1681 = vmul.f32 %v1617, %v1617
          %v1682 = vmul.f32 %v1618, %v1618
          %v1683 = vmul.f32 %v1619, %v1619
          %v1684 = vmul.f32 %v1620, %v1620
          %v1685 = vmul.f32 %v1621, %v1621
          %v1686 = vmul.f32 %v1622, %v1622
          %v1687 = vmul.f32 %v1623, %v1623
          %v1688 = vmul.f32 %v1624, %v1624
          %v1689 = vmul.f32 %v1625, %v1625
          %v1690 = vmul.f32 %v1626, %v1626
          %v1691 = vmul.f32 %v1627, %v1627
          %v1692 = vmul.f32 %v1564, %v1628
          %v1693 = vmul.f32 %v1565, %v1629
          %v1694 = vmul.f32 %v1566, %v1630
          %v1695 = vmul.f32 %v1567, %v1631
          %v1696 = vmul.f32 %v1568, %v1632
          %v1697 = vmul.f32 %v1569, %v1633
          %v1698 = vmul.f32 %v1570, %v1634
          %v1699 = vmul.f32 %v1571, %v1635
          %v1700 = vmul.f32 %v1572, %v1636
          %v1701 = vmul.f32 %v1573, %v1637
          %v1702 = vmul.f32 %v1574, %v1638
          %v1703 = vmul.f32 %v1575, %v1639
          %v1704 = vmul.f32 %v1576, %v1640
          %v1705 = vmul.f32 %v1577, %v1641
          %v1706 = vmul.f32 %v1578, %v1642
          %v1707 = vmul.f32 %v1579, %v1643
          %v1708 = vmul.f32 %v1580, %v1644
          %v1709 = vmul.f32 %v1581, %v1645
          %v1710 = vmul.f32 %v1582, %v1646
          %v1711 = vmul.f32 %v1583, %v1647
          %v1712 = vmul.f32 %v1584, %v1648
          %v1713 = vmul.f32 %v1585, %v1649
          %v1714 = vmul.f32 %v1586, %v1650
          %v1715 = vmul.f32 %v1587, %v1651
          %v1716 = vmul.f32 %v1588, %v1652
          %v1717 = vmul.f32 %v1589, %v1653
          %v1718 = vmul.f32 %v1590, %v1654
          %v1719 = vmul.f32 %v1591, %v1655
          %v1720 = vmul.f32 %v1592, %v1656
          %v1721 = vmul.f32 %v1593, %v1657
          %v1722 = vmul.f32 %v1594, %v1658
          %v1723 = vmul.f32 %v1595, %v1659
          %v1724 = vmul.f32 %v1596, %v1660
          %v1725 = vmul.f32 %v1597, %v1661
          %v1726 = vmul.f32 %v1598, %v1662
          %v1727 = vmul.f32 %v1599, %v1663
          %v1728 = vmul.f32 %v1600, %v1664
          %v1729 = vmul.f32 %v1601, %v1665
          %v1730 = vmul.f32 %v1602, %v1666
          %v1731 = vmul.f32 %v1603, %v1667
          %v1732 = vmul.f32 %v1604, %v1668
          %v1733 = vmul.f32 %v1605, %v1669
          %v1734 = vmul.f32 %v1606, %v1670
          %v1735 = vmul.f32 %v1607, %v1671
          %v1736 = vmul.f32 %v1608, %v1672
          %v1737 = vmul.f32 %v1609, %v1673
          %v1738 = vmul.f32 %v1610, %v1674
          %v1739 = vmul.f32 %v1611, %v1675
          %v1740 = vmul.f32 %v1612, %v1676
          %v1741 = vmul.f32 %v1613, %v1677
          %v1742 = vmul.f32 %v1614, %v1678
          %v1743 = vmul.f32 %v1615, %v1679
          %v1744 = vmul.f32 %v1616, %v1680
          %v1745 = vmul.f32 %v1617, %v1681
          %v1746 = vmul.f32 %v1618, %v1682
          %v1747 = vmul.f32 %v1619, %v1683
          %v1748 = vmul.f32 %v1620, %v1684
          %v1749 = vmul.f32 %v1621, %v1685
          %v1750 = vmul.f32 %v1622, %v1686
          %v1751 = vmul.f32 %v1623, %v1687
          %v1752 = vmul.f32 %v1624, %v1688
          %v1753 = vmul.f32 %v1625, %v1689
          %v1754 = vmul.f32 %v1626, %v1690
          %v1755 = vmul.f32 %v1627, %v1691
          %v1756 = vmul.f32 %v1692, 0.044715
          %v1757 = vmul.f32 %v1693, 0.044715
          %v1758 = vmul.f32 %v1694, 0.044715
          %v1759 = vmul.f32 %v1695, 0.044715
          %v1760 = vmul.f32 %v1696, 0.044715
          %v1761 = vmul.f32 %v1697, 0.044715
          %v1762 = vmul.f32 %v1698, 0.044715
          %v1763 = vmul.f32 %v1699, 0.044715
          %v1764 = vmul.f32 %v1700, 0.044715
          %v1765 = vmul.f32 %v1701, 0.044715
          %v1766 = vmul.f32 %v1702, 0.044715
          %v1767 = vmul.f32 %v1703, 0.044715
          %v1768 = vmul.f32 %v1704, 0.044715
          %v1769 = vmul.f32 %v1705, 0.044715
          %v1770 = vmul.f32 %v1706, 0.044715
          %v1771 = vmul.f32 %v1707, 0.044715
          %v1772 = vmul.f32 %v1708, 0.044715
          %v1773 = vmul.f32 %v1709, 0.044715
          %v1774 = vmul.f32 %v1710, 0.044715
          %v1775 = vmul.f32 %v1711, 0.044715
          %v1776 = vmul.f32 %v1712, 0.044715
          %v1777 = vmul.f32 %v1713, 0.044715
          %v1778 = vmul.f32 %v1714, 0.044715
          %v1779 = vmul.f32 %v1715, 0.044715
          %v1780 = vmul.f32 %v1716, 0.044715
          %v1781 = vmul.f32 %v1717, 0.044715
          %v1782 = vmul.f32 %v1718, 0.044715
          %v1783 = vmul.f32 %v1719, 0.044715
          %v1784 = vmul.f32 %v1720, 0.044715
          %v1785 = vmul.f32 %v1721, 0.044715
          %v1786 = vmul.f32 %v1722, 0.044715
          %v1787 = vmul.f32 %v1723, 0.044715
          %v1788 = vmul.f32 %v1724, 0.044715
          %v1789 = vmul.f32 %v1725, 0.044715
          %v1790 = vmul.f32 %v1726, 0.044715
          %v1791 = vmul.f32 %v1727, 0.044715
          %v1792 = vmul.f32 %v1728, 0.044715
          %v1793 = vmul.f32 %v1729, 0.044715
          %v1794 = vmul.f32 %v1730, 0.044715
          %v1795 = vmul.f32 %v1731, 0.044715
          %v1796 = vmul.f32 %v1732, 0.044715
          %v1797 = vmul.f32 %v1733, 0.044715
          %v1798 = vmul.f32 %v1734, 0.044715
          %v1799 = vmul.f32 %v1735, 0.044715
          %v1800 = vmul.f32 %v1736, 0.044715
          %v1801 = vmul.f32 %v1737, 0.044715
          %v1802 = vmul.f32 %v1738, 0.044715
          %v1803 = vmul.f32 %v1739, 0.044715
          %v1804 = vmul.f32 %v1740, 0.044715
          %v1805 = vmul.f32 %v1741, 0.044715
          %v1806 = vmul.f32 %v1742, 0.044715
          %v1807 = vmul.f32 %v1743, 0.044715
          %v1808 = vmul.f32 %v1744, 0.044715
          %v1809 = vmul.f32 %v1745, 0.044715
          %v1810 = vmul.f32 %v1746, 0.044715
          %v1811 = vmul.f32 %v1747, 0.044715
          %v1812 = vmul.f32 %v1748, 0.044715
          %v1813 = vmul.f32 %v1749, 0.044715
          %v1814 = vmul.f32 %v1750, 0.044715
          %v1815 = vmul.f32 %v1751, 0.044715
          %v1816 = vmul.f32 %v1752, 0.044715
          %v1817 = vmul.f32 %v1753, 0.044715
          %v1818 = vmul.f32 %v1754, 0.044715
          %v1819 = vmul.f32 %v1755, 0.044715
          %v1820 = vadd.f32 %v1564, %v1756
          %v1821 = vadd.f32 %v1565, %v1757
          %v1822 = vadd.f32 %v1566, %v1758
          %v1823 = vadd.f32 %v1567, %v1759
          %v1824 = vadd.f32 %v1568, %v1760
          %v1825 = vadd.f32 %v1569, %v1761
          %v1826 = vadd.f32 %v1570, %v1762
          %v1827 = vadd.f32 %v1571, %v1763
          %v1828 = vadd.f32 %v1572, %v1764
          %v1829 = vadd.f32 %v1573, %v1765
          %v1830 = vadd.f32 %v1574, %v1766
          %v1831 = vadd.f32 %v1575, %v1767
          %v1832 = vadd.f32 %v1576, %v1768
          %v1833 = vadd.f32 %v1577, %v1769
          %v1834 = vadd.f32 %v1578, %v1770
          %v1835 = vadd.f32 %v1579, %v1771
          %v1836 = vadd.f32 %v1580, %v1772
          %v1837 = vadd.f32 %v1581, %v1773
          %v1838 = vadd.f32 %v1582, %v1774
          %v1839 = vadd.f32 %v1583, %v1775
          %v1840 = vadd.f32 %v1584, %v1776
          %v1841 = vadd.f32 %v1585, %v1777
          %v1842 = vadd.f32 %v1586, %v1778
          %v1843 = vadd.f32 %v1587, %v1779
          %v1844 = vadd.f32 %v1588, %v1780
          %v1845 = vadd.f32 %v1589, %v1781
          %v1846 = vadd.f32 %v1590, %v1782
          %v1847 = vadd.f32 %v1591, %v1783
          %v1848 = vadd.f32 %v1592, %v1784
          %v1849 = vadd.f32 %v1593, %v1785
          %v1850 = vadd.f32 %v1594, %v1786
          %v1851 = vadd.f32 %v1595, %v1787
          %v1852 = vadd.f32 %v1596, %v1788
          %v1853 = vadd.f32 %v1597, %v1789
          %v1854 = vadd.f32 %v1598, %v1790
          %v1855 = vadd.f32 %v1599, %v1791
          %v1856 = vadd.f32 %v1600, %v1792
          %v1857 = vadd.f32 %v1601, %v1793
          %v1858 = vadd.f32 %v1602, %v1794
          %v1859 = vadd.f32 %v1603, %v1795
          %v1860 = vadd.f32 %v1604, %v1796
          %v1861 = vadd.f32 %v1605, %v1797
          %v1862 = vadd.f32 %v1606, %v1798
          %v1863 = vadd.f32 %v1607, %v1799
          %v1864 = vadd.f32 %v1608, %v1800
          %v1865 = vadd.f32 %v1609, %v1801
          %v1866 = vadd.f32 %v1610, %v1802
          %v1867 = vadd.f32 %v1611, %v1803
          %v1868 = vadd.f32 %v1612, %v1804
          %v1869 = vadd.f32 %v1613, %v1805
          %v1870 = vadd.f32 %v1614, %v1806
          %v1871 = vadd.f32 %v1615, %v1807
          %v1872 = vadd.f32 %v1616, %v1808
          %v1873 = vadd.f32 %v1617, %v1809
          %v1874 = vadd.f32 %v1618, %v1810
          %v1875 = vadd.f32 %v1619, %v1811
          %v1876 = vadd.f32 %v1620, %v1812
          %v1877 = vadd.f32 %v1621, %v1813
          %v1878 = vadd.f32 %v1622, %v1814
          %v1879 = vadd.f32 %v1623, %v1815
          %v1880 = vadd.f32 %v1624, %v1816
          %v1881 = vadd.f32 %v1625, %v1817
          %v1882 = vadd.f32 %v1626, %v1818
          %v1883 = vadd.f32 %v1627, %v1819
          %v1884 = vmul.f32 %v1820, 0.7978846
          %v1885 = vmul.f32 %v1821, 0.7978846
          %v1886 = vmul.f32 %v1822, 0.7978846
          %v1887 = vmul.f32 %v1823, 0.7978846
          %v1888 = vmul.f32 %v1824, 0.7978846
          %v1889 = vmul.f32 %v1825, 0.7978846
          %v1890 = vmul.f32 %v1826, 0.7978846
          %v1891 = vmul.f32 %v1827, 0.7978846
          %v1892 = vmul.f32 %v1828, 0.7978846
          %v1893 = vmul.f32 %v1829, 0.7978846
          %v1894 = vmul.f32 %v1830, 0.7978846
          %v1895 = vmul.f32 %v1831, 0.7978846
          %v1896 = vmul.f32 %v1832, 0.7978846
          %v1897 = vmul.f32 %v1833, 0.7978846
          %v1898 = vmul.f32 %v1834, 0.7978846
          %v1899 = vmul.f32 %v1835, 0.7978846
          %v1900 = vmul.f32 %v1836, 0.7978846
          %v1901 = vmul.f32 %v1837, 0.7978846
          %v1902 = vmul.f32 %v1838, 0.7978846
          %v1903 = vmul.f32 %v1839, 0.7978846
          %v1904 = vmul.f32 %v1840, 0.7978846
          %v1905 = vmul.f32 %v1841, 0.7978846
          %v1906 = vmul.f32 %v1842, 0.7978846
          %v1907 = vmul.f32 %v1843, 0.7978846
          %v1908 = vmul.f32 %v1844, 0.7978846
          %v1909 = vmul.f32 %v1845, 0.7978846
          %v1910 = vmul.f32 %v1846, 0.7978846
          %v1911 = vmul.f32 %v1847, 0.7978846
          %v1912 = vmul.f32 %v1848, 0.7978846
          %v1913 = vmul.f32 %v1849, 0.7978846
          %v1914 = vmul.f32 %v1850, 0.7978846
          %v1915 = vmul.f32 %v1851, 0.7978846
          %v1916 = vmul.f32 %v1852, 0.7978846
          %v1917 = vmul.f32 %v1853, 0.7978846
          %v1918 = vmul.f32 %v1854, 0.7978846
          %v1919 = vmul.f32 %v1855, 0.7978846
          %v1920 = vmul.f32 %v1856, 0.7978846
          %v1921 = vmul.f32 %v1857, 0.7978846
          %v1922 = vmul.f32 %v1858, 0.7978846
          %v1923 = vmul.f32 %v1859, 0.7978846
          %v1924 = vmul.f32 %v1860, 0.7978846
          %v1925 = vmul.f32 %v1861, 0.7978846
          %v1926 = vmul.f32 %v1862, 0.7978846
          %v1927 = vmul.f32 %v1863, 0.7978846
          %v1928 = vmul.f32 %v1864, 0.7978846
          %v1929 = vmul.f32 %v1865, 0.7978846
          %v1930 = vmul.f32 %v1866, 0.7978846
          %v1931 = vmul.f32 %v1867, 0.7978846
          %v1932 = vmul.f32 %v1868, 0.7978846
          %v1933 = vmul.f32 %v1869, 0.7978846
          %v1934 = vmul.f32 %v1870, 0.7978846
          %v1935 = vmul.f32 %v1871, 0.7978846
          %v1936 = vmul.f32 %v1872, 0.7978846
          %v1937 = vmul.f32 %v1873, 0.7978846
          %v1938 = vmul.f32 %v1874, 0.7978846
          %v1939 = vmul.f32 %v1875, 0.7978846
          %v1940 = vmul.f32 %v1876, 0.7978846
          %v1941 = vmul.f32 %v1877, 0.7978846
          %v1942 = vmul.f32 %v1878, 0.7978846
          %v1943 = vmul.f32 %v1879, 0.7978846
          %v1944 = vmul.f32 %v1880, 0.7978846
          %v1945 = vmul.f32 %v1881, 0.7978846
          %v1946 = vmul.f32 %v1882, 0.7978846
          %v1947 = vmul.f32 %v1883, 0.7978846
          %v1948 = vtanh.pop %v1884
          %v1949 = vtanh.pop %v1885
          %v1950 = vtanh.pop %v1886
          %v1951 = vtanh.pop %v1887
          %v1952 = vtanh.pop %v1888
          %v1953 = vtanh.pop %v1889
          %v1954 = vtanh.pop %v1890
          %v1955 = vtanh.pop %v1891
          %v1956 = vtanh.pop %v1892
          %v1957 = vtanh.pop %v1893
          %v1958 = vtanh.pop %v1894
          %v1959 = vtanh.pop %v1895
          %v1960 = vtanh.pop %v1896
          %v1961 = vtanh.pop %v1897
          %v1962 = vtanh.pop %v1898
          %v1963 = vtanh.pop %v1899
          %v1964 = vtanh.pop %v1900
          %v1965 = vtanh.pop %v1901
          %v1966 = vtanh.pop %v1902
          %v1967 = vtanh.pop %v1903
          %v1968 = vtanh.pop %v1904
          %v1969 = vtanh.pop %v1905
          %v1970 = vtanh.pop %v1906
          %v1971 = vtanh.pop %v1907
          %v1972 = vtanh.pop %v1908
          %v1973 = vtanh.pop %v1909
          %v1974 = vtanh.pop %v1910
          %v1975 = vtanh.pop %v1911
          %v1976 = vtanh.pop %v1912
          %v1977 = vtanh.pop %v1913
          %v1978 = vtanh.pop %v1914
          %v1979 = vtanh.pop %v1915
          %v1980 = vtanh.pop %v1916
          %v1981 = vtanh.pop %v1917
          %v1982 = vtanh.pop %v1918
          %v1983 = vtanh.pop %v1919
          %v1984 = vtanh.pop %v1920
          %v1985 = vtanh.pop %v1921
          %v1986 = vtanh.pop %v1922
          %v1987 = vtanh.pop %v1923
          %v1988 = vtanh.pop %v1924
          %v1989 = vtanh.pop %v1925
          %v1990 = vtanh.pop %v1926
          %v1991 = vtanh.pop %v1927
          %v1992 = vtanh.pop %v1928
          %v1993 = vtanh.pop %v1929
          %v1994 = vtanh.pop %v1930
          %v1995 = vtanh.pop %v1931
          %v1996 = vtanh.pop %v1932
          %v1997 = vtanh.pop %v1933
          %v1998 = vtanh.pop %v1934
          %v1999 = vtanh.pop %v1935
          %v2000 = vtanh.pop %v1936
          %v2001 = vtanh.pop %v1937
          %v2002 = vtanh.pop %v1938
          %v2003 = vtanh.pop %v1939
          %v2004 = vtanh.pop %v1940
          %v2005 = vtanh.pop %v1941
          %v2006 = vtanh.pop %v1942
          %v2007 = vtanh.pop %v1943
          %v2008 = vtanh.pop %v1944
          %v2009 = vtanh.pop %v1945
          %v2010 = vtanh.pop %v1946
          %v2011 = vtanh.pop %v1947
          %v2012 = vadd.f32 %v1948, 1.0
          %v2013 = vadd.f32 %v1949, 1.0
          %v2014 = vadd.f32 %v1950, 1.0
          %v2015 = vadd.f32 %v1951, 1.0
          %v2016 = vadd.f32 %v1952, 1.0
          %v2017 = vadd.f32 %v1953, 1.0
          %v2018 = vadd.f32 %v1954, 1.0
          %v2019 = vadd.f32 %v1955, 1.0
          %v2020 = vadd.f32 %v1956, 1.0
          %v2021 = vadd.f32 %v1957, 1.0
          %v2022 = vadd.f32 %v1958, 1.0
          %v2023 = vadd.f32 %v1959, 1.0
          %v2024 = vadd.f32 %v1960, 1.0
          %v2025 = vadd.f32 %v1961, 1.0
          %v2026 = vadd.f32 %v1962, 1.0
          %v2027 = vadd.f32 %v1963, 1.0
          %v2028 = vadd.f32 %v1964, 1.0
          %v2029 = vadd.f32 %v1965, 1.0
          %v2030 = vadd.f32 %v1966, 1.0
          %v2031 = vadd.f32 %v1967, 1.0
          %v2032 = vadd.f32 %v1968, 1.0
          %v2033 = vadd.f32 %v1969, 1.0
          %v2034 = vadd.f32 %v1970, 1.0
          %v2035 = vadd.f32 %v1971, 1.0
          %v2036 = vadd.f32 %v1972, 1.0
          %v2037 = vadd.f32 %v1973, 1.0
          %v2038 = vadd.f32 %v1974, 1.0
          %v2039 = vadd.f32 %v1975, 1.0
          %v2040 = vadd.f32 %v1976, 1.0
          %v2041 = vadd.f32 %v1977, 1.0
          %v2042 = vadd.f32 %v1978, 1.0
          %v2043 = vadd.f32 %v1979, 1.0
          %v2044 = vadd.f32 %v1980, 1.0
          %v2045 = vadd.f32 %v1981, 1.0
          %v2046 = vadd.f32 %v1982, 1.0
          %v2047 = vadd.f32 %v1983, 1.0
          %v2048 = vadd.f32 %v1984, 1.0
          %v2049 = vadd.f32 %v1985, 1.0
          %v2050 = vadd.f32 %v1986, 1.0
          %v2051 = vadd.f32 %v1987, 1.0
          %v2052 = vadd.f32 %v1988, 1.0
          %v2053 = vadd.f32 %v1989, 1.0
          %v2054 = vadd.f32 %v1990, 1.0
          %v2055 = vadd.f32 %v1991, 1.0
          %v2056 = vadd.f32 %v1992, 1.0
          %v2057 = vadd.f32 %v1993, 1.0
          %v2058 = vadd.f32 %v1994, 1.0
          %v2059 = vadd.f32 %v1995, 1.0
          %v2060 = vadd.f32 %v1996, 1.0
          %v2061 = vadd.f32 %v1997, 1.0
          %v2062 = vadd.f32 %v1998, 1.0
          %v2063 = vadd.f32 %v1999, 1.0
          %v2064 = vadd.f32 %v2000, 1.0
          %v2065 = vadd.f32 %v2001, 1.0
          %v2066 = vadd.f32 %v2002, 1.0
          %v2067 = vadd.f32 %v2003, 1.0
          %v2068 = vadd.f32 %v2004, 1.0
          %v2069 = vadd.f32 %v2005, 1.0
          %v2070 = vadd.f32 %v2006, 1.0
          %v2071 = vadd.f32 %v2007, 1.0
          %v2072 = vadd.f32 %v2008, 1.0
          %v2073 = vadd.f32 %v2009, 1.0
          %v2074 = vadd.f32 %v2010, 1.0
          %v2075 = vadd.f32 %v2011, 1.0
          %v2076 = vmul.f32 %v2012, 0.5
          %v2077 = vmul.f32 %v2013, 0.5
          %v2078 = vmul.f32 %v2014, 0.5
          %v2079 = vmul.f32 %v2015, 0.5
          %v2080 = vmul.f32 %v2016, 0.5
          %v2081 = vmul.f32 %v2017, 0.5
          %v2082 = vmul.f32 %v2018, 0.5
          %v2083 = vmul.f32 %v2019, 0.5
          %v2084 = vmul.f32 %v2020, 0.5
          %v2085 = vmul.f32 %v2021, 0.5
          %v2086 = vmul.f32 %v2022, 0.5
          %v2087 = vmul.f32 %v2023, 0.5
          %v2088 = vmul.f32 %v2024, 0.5
          %v2089 = vmul.f32 %v2025, 0.5
          %v2090 = vmul.f32 %v2026, 0.5
          %v2091 = vmul.f32 %v2027, 0.5
          %v2092 = vmul.f32 %v2028, 0.5
          %v2093 = vmul.f32 %v2029, 0.5
          %v2094 = vmul.f32 %v2030, 0.5
          %v2095 = vmul.f32 %v2031, 0.5
          %v2096 = vmul.f32 %v2032, 0.5
          %v2097 = vmul.f32 %v2033, 0.5
          %v2098 = vmul.f32 %v2034, 0.5
          %v2099 = vmul.f32 %v2035, 0.5
          %v2100 = vmul.f32 %v2036, 0.5
          %v2101 = vmul.f32 %v2037, 0.5
          %v2102 = vmul.f32 %v2038, 0.5
          %v2103 = vmul.f32 %v2039, 0.5
          %v2104 = vmul.f32 %v2040, 0.5
          %v2105 = vmul.f32 %v2041, 0.5
          %v2106 = vmul.f32 %v2042, 0.5
          %v2107 = vmul.f32 %v2043, 0.5
          %v2108 = vmul.f32 %v2044, 0.5
          %v2109 = vmul.f32 %v2045, 0.5
          %v2110 = vmul.f32 %v2046, 0.5
          %v2111 = vmul.f32 %v2047, 0.5
          %v2112 = vmul.f32 %v2048, 0.5
          %v2113 = vmul.f32 %v2049, 0.5
          %v2114 = vmul.f32 %v2050, 0.5
          %v2115 = vmul.f32 %v2051, 0.5
          %v2116 = vmul.f32 %v2052, 0.5
          %v2117 = vmul.f32 %v2053, 0.5
          %v2118 = vmul.f32 %v2054, 0.5
          %v2119 = vmul.f32 %v2055, 0.5
          %v2120 = vmul.f32 %v2056, 0.5
          %v2121 = vmul.f32 %v2057, 0.5
          %v2122 = vmul.f32 %v2058, 0.5
          %v2123 = vmul.f32 %v2059, 0.5
          %v2124 = vmul.f32 %v2060, 0.5
          %v2125 = vmul.f32 %v2061, 0.5
          %v2126 = vmul.f32 %v2062, 0.5
          %v2127 = vmul.f32 %v2063, 0.5
          %v2128 = vmul.f32 %v2064, 0.5
          %v2129 = vmul.f32 %v2065, 0.5
          %v2130 = vmul.f32 %v2066, 0.5
          %v2131 = vmul.f32 %v2067, 0.5
          %v2132 = vmul.f32 %v2068, 0.5
          %v2133 = vmul.f32 %v2069, 0.5
          %v2134 = vmul.f32 %v2070, 0.5
          %v2135 = vmul.f32 %v2071, 0.5
          %v2136 = vmul.f32 %v2072, 0.5
          %v2137 = vmul.f32 %v2073, 0.5
          %v2138 = vmul.f32 %v2074, 0.5
          %v2139 = vmul.f32 %v2075, 0.5
          %v2140 = vmul.f32 %v1564, %v2076
          %v2141 = vmul.f32 %v1565, %v2077
          %v2142 = vmul.f32 %v1566, %v2078
          %v2143 = vmul.f32 %v1567, %v2079
          %v2144 = vmul.f32 %v1568, %v2080
          %v2145 = vmul.f32 %v1569, %v2081
          %v2146 = vmul.f32 %v1570, %v2082
          %v2147 = vmul.f32 %v1571, %v2083
          %v2148 = vmul.f32 %v1572, %v2084
          %v2149 = vmul.f32 %v1573, %v2085
          %v2150 = vmul.f32 %v1574, %v2086
          %v2151 = vmul.f32 %v1575, %v2087
          %v2152 = vmul.f32 %v1576, %v2088
          %v2153 = vmul.f32 %v1577, %v2089
          %v2154 = vmul.f32 %v1578, %v2090
          %v2155 = vmul.f32 %v1579, %v2091
          %v2156 = vmul.f32 %v1580, %v2092
          %v2157 = vmul.f32 %v1581, %v2093
          %v2158 = vmul.f32 %v1582, %v2094
          %v2159 = vmul.f32 %v1583, %v2095
          %v2160 = vmul.f32 %v1584, %v2096
          %v2161 = vmul.f32 %v1585, %v2097
          %v2162 = vmul.f32 %v1586, %v2098
          %v2163 = vmul.f32 %v1587, %v2099
          %v2164 = vmul.f32 %v1588, %v2100
          %v2165 = vmul.f32 %v1589, %v2101
          %v2166 = vmul.f32 %v1590, %v2102
          %v2167 = vmul.f32 %v1591, %v2103
          %v2168 = vmul.f32 %v1592, %v2104
          %v2169 = vmul.f32 %v1593, %v2105
          %v2170 = vmul.f32 %v1594, %v2106
          %v2171 = vmul.f32 %v1595, %v2107
          %v2172 = vmul.f32 %v1596, %v2108
          %v2173 = vmul.f32 %v1597, %v2109
          %v2174 = vmul.f32 %v1598, %v2110
          %v2175 = vmul.f32 %v1599, %v2111
          %v2176 = vmul.f32 %v1600, %v2112
          %v2177 = vmul.f32 %v1601, %v2113
          %v2178 = vmul.f32 %v1602, %v2114
          %v2179 = vmul.f32 %v1603, %v2115
          %v2180 = vmul.f32 %v1604, %v2116
          %v2181 = vmul.f32 %v1605, %v2117
          %v2182 = vmul.f32 %v1606, %v2118
          %v2183 = vmul.f32 %v1607, %v2119
          %v2184 = vmul.f32 %v1608, %v2120
          %v2185 = vmul.f32 %v1609, %v2121
          %v2186 = vmul.f32 %v1610, %v2122
          %v2187 = vmul.f32 %v1611, %v2123
          %v2188 = vmul.f32 %v1612, %v2124
          %v2189 = vmul.f32 %v1613, %v2125
          %v2190 = vmul.f32 %v1614, %v2126
          %v2191 = vmul.f32 %v1615, %v2127
          %v2192 = vmul.f32 %v1616, %v2128
          %v2193 = vmul.f32 %v1617, %v2129
          %v2194 = vmul.f32 %v1618, %v2130
          %v2195 = vmul.f32 %v1619, %v2131
          %v2196 = vmul.f32 %v1620, %v2132
          %v2197 = vmul.f32 %v1621, %v2133
          %v2198 = vmul.f32 %v1622, %v2134
          %v2199 = vmul.f32 %v1623, %v2135
          %v2200 = vmul.f32 %v1624, %v2136
          %v2201 = vmul.f32 %v1625, %v2137
          %v2202 = vmul.f32 %v1626, %v2138
          %v2203 = vmul.f32 %v1627, %v2139
          %v2204 = vpack.c.bf16 %v2142, %v2140
          %v2205 = vpack.c.bf16 %v2143, %v2141
          %v2206 = vpack.c.bf16 %v2146, %v2144
          %v2207 = vpack.c.bf16 %v2147, %v2145
          %v2208 = vpack.c.bf16 %v2150, %v2148
          %v2209 = vpack.c.bf16 %v2151, %v2149
          %v2210 = vpack.c.bf16 %v2154, %v2152
          %v2211 = vpack.c.bf16 %v2155, %v2153
          %v2212 = vpack.c.bf16 %v2158, %v2156
          %v2213 = vpack.c.bf16 %v2159, %v2157
          %v2214 = vpack.c.bf16 %v2162, %v2160
          %v2215 = vpack.c.bf16 %v2163, %v2161
          %v2216 = vpack.c.bf16 %v2166, %v2164
          %v2217 = vpack.c.bf16 %v2167, %v2165
          %v2218 = vpack.c.bf16 %v2170, %v2168
          %v2219 = vpack.c.bf16 %v2171, %v2169
          %v2220 = vpack.c.bf16 %v2174, %v2172
          %v2221 = vpack.c.bf16 %v2175, %v2173
          %v2222 = vpack.c.bf16 %v2178, %v2176
          %v2223 = vpack.c.bf16 %v2179, %v2177
          %v2224 = vpack.c.bf16 %v2182, %v2180
          %v2225 = vpack.c.bf16 %v2183, %v2181
          %v2226 = vpack.c.bf16 %v2186, %v2184
          %v2227 = vpack.c.bf16 %v2187, %v2185
          %v2228 = vpack.c.bf16 %v2190, %v2188
          %v2229 = vpack.c.bf16 %v2191, %v2189
          %v2230 = vpack.c.bf16 %v2194, %v2192
          %v2231 = vpack.c.bf16 %v2195, %v2193
          %v2232 = vpack.c.bf16 %v2198, %v2196
          %v2233 = vpack.c.bf16 %v2199, %v2197
          %v2234 = vpack.c.bf16 %v2202, %v2200
          %v2235 = vpack.c.bf16 %v2203, %v2201
          %v2268 = vunpack.c.l.b16 %v2204
          %v2269 = vunpack.c.l.b16 %v2205
          %v2270 = vunpack.c.h.b16 %v2204
          %v2271 = vunpack.c.h.b16 %v2205
          %v2272 = vunpack.c.l.b16 %v2206
          %v2273 = vunpack.c.l.b16 %v2207
          %v2274 = vunpack.c.h.b16 %v2206
          %v2275 = vunpack.c.h.b16 %v2207
          %v2276 = vunpack.c.l.b16 %v2208
          %v2277 = vunpack.c.l.b16 %v2209
          %v2278 = vunpack.c.h.b16 %v2208
          %v2279 = vunpack.c.h.b16 %v2209
          %v2280 = vunpack.c.l.b16 %v2210
          %v2281 = vunpack.c.l.b16 %v2211
          %v2282 = vunpack.c.h.b16 %v2210
          %v2283 = vunpack.c.h.b16 %v2211
          %v2284 = vunpack.c.l.b16 %v2212
          %v2285 = vunpack.c.l.b16 %v2213
          %v2286 = vunpack.c.h.b16 %v2212
          %v2287 = vunpack.c.h.b16 %v2213
          %v2288 = vunpack.c.l.b16 %v2214
          %v2289 = vunpack.c.l.b16 %v2215
          %v2290 = vunpack.c.h.b16 %v2214
          %v2291 = vunpack.c.h.b16 %v2215
          %v2292 = vunpack.c.l.b16 %v2216
          %v2293 = vunpack.c.l.b16 %v2217
          %v2294 = vunpack.c.h.b16 %v2216
          %v2295 = vunpack.c.h.b16 %v2217
          %v2296 = vunpack.c.l.b16 %v2218
          %v2297 = vunpack.c.l.b16 %v2219
          %v2298 = vunpack.c.h.b16 %v2218
          %v2299 = vunpack.c.h.b16 %v2219
          %v2300 = vunpack.c.l.b16 %v2220
          %v2301 = vunpack.c.l.b16 %v2221
          %v2302 = vunpack.c.h.b16 %v2220
          %v2303 = vunpack.c.h.b16 %v2221
          %v2304 = vunpack.c.l.b16 %v2222
          %v2305 = vunpack.c.l.b16 %v2223
          %v2306 = vunpack.c.h.b16 %v2222
          %v2307 = vunpack.c.h.b16 %v2223
          %v2308 = vunpack.c.l.b16 %v2224
          %v2309 = vunpack.c.l.b16 %v2225
          %v2310 = vunpack.c.h.b16 %v2224
          %v2311 = vunpack.c.h.b16 %v2225
          %v2312 = vunpack.c.l.b16 %v2226
          %v2313 = vunpack.c.l.b16 %v2227
          %v2314 = vunpack.c.h.b16 %v2226
          %v2315 = vunpack.c.h.b16 %v2227
          %v2316 = vunpack.c.l.b16 %v2228
          %v2317 = vunpack.c.l.b16 %v2229
          %v2318 = vunpack.c.h.b16 %v2228
          %v2319 = vunpack.c.h.b16 %v2229
          %v2320 = vunpack.c.l.b16 %v2230
          %v2321 = vunpack.c.l.b16 %v2231
          %v2322 = vunpack.c.h.b16 %v2230
          %v2323 = vunpack.c.h.b16 %v2231
          %v2324 = vunpack.c.l.b16 %v2232
          %v2325 = vunpack.c.l.b16 %v2233
          %v2326 = vunpack.c.h.b16 %v2232
          %v2327 = vunpack.c.h.b16 %v2233
          %v2328 = vunpack.c.l.b16 %v2234
          %v2329 = vunpack.c.l.b16 %v2235
          %v2330 = vunpack.c.h.b16 %v2234
          %v2331 = vunpack.c.h.b16 %v2235
          %v2332 = vpack.c.b16 %v2269, %v2268
          %v2333 = vpack.c.b16 %v2271, %v2270
          %v2334 = vpack.c.b16 %v2273, %v2272
          %v2335 = vpack.c.b16 %v2275, %v2274
          %v2336 = vpack.c.b16 %v2277, %v2276
          %v2337 = vpack.c.b16 %v2279, %v2278
          %v2338 = vpack.c.b16 %v2281, %v2280
          %v2339 = vpack.c.b16 %v2283, %v2282
          %v2340 = vpack.c.b16 %v2285, %v2284
          %v2341 = vpack.c.b16 %v2287, %v2286
          %v2342 = vpack.c.b16 %v2289, %v2288
          %v2343 = vpack.c.b16 %v2291, %v2290
          %v2344 = vpack.c.b16 %v2293, %v2292
          %v2345 = vpack.c.b16 %v2295, %v2294
          %v2346 = vpack.c.b16 %v2297, %v2296
          %v2347 = vpack.c.b16 %v2299, %v2298
          %v2348 = vpack.c.b16 %v2301, %v2300
          %v2349 = vpack.c.b16 %v2303, %v2302
          %v2350 = vpack.c.b16 %v2305, %v2304
          %v2351 = vpack.c.b16 %v2307, %v2306
          %v2352 = vpack.c.b16 %v2309, %v2308
          %v2353 = vpack.c.b16 %v2311, %v2310
          %v2354 = vpack.c.b16 %v2313, %v2312
          %v2355 = vpack.c.b16 %v2315, %v2314
          %v2356 = vpack.c.b16 %v2317, %v2316
          %v2357 = vpack.c.b16 %v2319, %v2318
          %v2358 = vpack.c.b16 %v2321, %v2320
          %v2359 = vpack.c.b16 %v2323, %v2322
          %v2360 = vpack.c.b16 %v2325, %v2324
          %v2361 = vpack.c.b16 %v2327, %v2326
          %v2362 = vpack.c.b16 %v2329, %v2328
          %v2363 = vpack.c.b16 %v2331, %v2330
          %2396 = vst [vmem:[%s399] sm:$0xff] %v2332
          %2397 = vst [vmem:[%s399 + $0x8] sm:$0xff] %v2333
          %2398 = vst [vmem:[%s399 + $0x10] sm:$0xff] %v2334
          %2399 = vst [vmem:[%s399 + $0x18] sm:$0xff] %v2335
          %2400 = vst [vmem:[%s399 + $0x20] sm:$0xff] %v2336
          %2401 = vst [vmem:[%s399 + $0x28] sm:$0xff] %v2337
          %2402 = vst [vmem:[%s399 + $0x30] sm:$0xff] %v2338
          %2403 = vst [vmem:[%s399 + $0x38] sm:$0xff] %v2339
          %2404 = vst [vmem:[%s399 + $0x40] sm:$0xff] %v2340
          %2405 = vst [vmem:[%s399 + $0x48] sm:$0xff] %v2341
          %2406 = vst [vmem:[%s399 + $0x50] sm:$0xff] %v2342
          %2407 = vst [vmem:[%s399 + $0x58] sm:$0xff] %v2343
          %2408 = vst [vmem:[%s399 + $0x60] sm:$0xff] %v2344
          %2409 = vst [vmem:[%s399 + $0x68] sm:$0xff] %v2345
          %2410 = vst [vmem:[%s399 + $0x70] sm:$0xff] %v2346
          %2411 = vst [vmem:[%s399 + $0x78] sm:$0xff] %v2347
          %2412 = vst [vmem:[%s399 + $0x80] sm:$0xff] %v2348
          %2413 = vst [vmem:[%s399 + $0x88] sm:$0xff] %v2349
          %2414 = vst [vmem:[%s399 + $0x90] sm:$0xff] %v2350
          %2415 = vst [vmem:[%s399 + $0x98] sm:$0xff] %v2351
          %2416 = vst [vmem:[%s399 + $0xa0] sm:$0xff] %v2352
          %2417 = vst [vmem:[%s399 + $0xa8] sm:$0xff] %v2353
          %2418 = vst [vmem:[%s399 + $0xb0] sm:$0xff] %v2354
          %2419 = vst [vmem:[%s399 + $0xb8] sm:$0xff] %v2355
          %2420 = vst [vmem:[%s399 + $0xc0] sm:$0xff] %v2356
          %2421 = vst [vmem:[%s399 + $0xc8] sm:$0xff] %v2357
          %2422 = vst [vmem:[%s399 + $0xd0] sm:$0xff] %v2358
          %2423 = vst [vmem:[%s399 + $0xd8] sm:$0xff] %v2359
          %2424 = vst [vmem:[%s399 + $0xe0] sm:$0xff] %v2360
          %2425 = vst [vmem:[%s399 + $0xe8] sm:$0xff] %v2361
          %2426 = vst [vmem:[%s399 + $0xf0] sm:$0xff] %v2362
          %2427 = vst [vmem:[%s399 + $0xf8] sm:$0xff] %v2363
        $region86: #{expire_span_transformer_xl_forward.14} parent=73 // pred_fallthru
          _
        %s2428 = sand.u32 %s179, 1
        %s2429 = sand.u32 %s179, 1
        %s2430 = smul.addr %s2429, 256
        %s2431 = scalar_lea.vmem [#allocation4], %s2430
        // Predicated region
        $region87: #{expire_span_transformer_xl_forward.14} parent=73 // pred_check
          %p2432 = pneg %p189
        $region88: #{expire_span_transformer_xl_forward.14} parent=73 // pred_check_branch
          %2434 = sbr.rel (%p2432) target = $region90
        $region89: #{expire_span_transformer_xl_forward.14} parent=73 // pred_region
          %s2435 = smul.u32 32, %s21
          %s2436 = smul.u32 2, %s22
          %s2437 = smul.addr %s2435, 4
          %s2438 = sadd.s32 %s2436, %s2437
          %s2439 = smul.addr %s2438, 4
          %s2440 = scalar_lea.vmem %s5, %s2439
          // Predicated region
          $region91: #{expire_span_transformer_xl_forward.14} parent=89 // pred_check
            _
          $region92: #{expire_span_transformer_xl_forward.14} parent=89 // pred_check_branch
            %2442 = sbr.rel (0) target = $region94
          $region93: #{expire_span_transformer_xl_forward.14} parent=89 // pred_region
            // Predicated region
            $region95: #{expire_span_transformer_xl_forward.14} parent=93 // pred_check
              _
            $region96: #{expire_span_transformer_xl_forward.14} parent=93 // pred_check_branch
              %2444 = sbr.rel (0) target = $region98
            $region97: #{expire_span_transformer_xl_forward.14} parent=93 // pred_region
              // Predicated region
              $region110: #{expire_span_transformer_xl_forward.14} parent=97 // pred_check
                _
              $region111: #{expire_span_transformer_xl_forward.14} parent=97 // pred_check_branch
                %2521 = sbr.rel (0) target = $region113
              $region112: #{expire_span_transformer_xl_forward.14} parent=97 // pred_region
                loop: start=0, step=1, limit=1
                $region114: #{expire_span_transformer_xl_forward.14} parent=112 // loop_pre_header
                  _
                $region115: #{expire_span_transformer_xl_forward.14} parent=112 // loop_header
                  %s2523 = sphi 0, %s2527
                  %p2524 = scmp.ge.s32.totalorder %s2523, 1
                  %s2528 = sphi %s2431, %s2431
                  %s2529 = sphi %s2440, %s2440
                $region116: #{expire_span_transformer_xl_forward.14} parent=112 // loop_header_branch
                  %2526 = sbr.rel (%p2524) target = $region120
                $region117: #{expire_span_transformer_xl_forward.14} parent=112 // loop_body
                  %v2530 = vld [vmem:[%s2528] sm:$0xff]
                  %2531 = vst [vmem:[%s2529] sm:$0xff] %v2530
                  %v2532 = vld [vmem:[%s2528 + $0x8] sm:$0xff]
                  %2533 = vst [vmem:[%s2529 + $0x10] sm:$0xff] %v2532
                  %v2534 = vld [vmem:[%s2528 + $0x10] sm:$0xff]
                  %2535 = vst [vmem:[%s2529 + $0x20] sm:$0xff] %v2534
                  %v2536 = vld [vmem:[%s2528 + $0x18] sm:$0xff]
                  %2537 = vst [vmem:[%s2529 + $0x30] sm:$0xff] %v2536
                  %v2538 = vld [vmem:[%s2528 + $0x20] sm:$0xff]
                  %2539 = vst [vmem:[%s2529 + $0x40] sm:$0xff] %v2538
                  %v2540 = vld [vmem:[%s2528 + $0x28] sm:$0xff]
                  %2541 = vst [vmem:[%s2529 + $0x50] sm:$0xff] %v2540
                  %v2542 = vld [vmem:[%s2528 + $0x30] sm:$0xff]
                  %2543 = vst [vmem:[%s2529 + $0x60] sm:$0xff] %v2542
                  %v2544 = vld [vmem:[%s2528 + $0x38] sm:$0xff]
                  %2545 = vst [vmem:[%s2529 + $0x70] sm:$0xff] %v2544
                  %v2546 = vld [vmem:[%s2528 + $0x40] sm:$0xff]
                  %2547 = vst [vmem:[%s2529 + $0x80] sm:$0xff] %v2546
                  %v2548 = vld [vmem:[%s2528 + $0x48] sm:$0xff]
                  %2549 = vst [vmem:[%s2529 + $0x90] sm:$0xff] %v2548
                  %v2550 = vld [vmem:[%s2528 + $0x50] sm:$0xff]
                  %2551 = vst [vmem:[%s2529 + $0xa0] sm:$0xff] %v2550
                  %v2552 = vld [vmem:[%s2528 + $0x58] sm:$0xff]
                  %2553 = vst [vmem:[%s2529 + $0xb0] sm:$0xff] %v2552
                  %v2554 = vld [vmem:[%s2528 + $0x60] sm:$0xff]
                  %2555 = vst [vmem:[%s2529 + $0xc0] sm:$0xff] %v2554
                  %v2556 = vld [vmem:[%s2528 + $0x68] sm:$0xff]
                  %2557 = vst [vmem:[%s2529 + $0xd0] sm:$0xff] %v2556
                  %v2558 = vld [vmem:[%s2528 + $0x70] sm:$0xff]
                  %2559 = vst [vmem:[%s2529 + $0xe0] sm:$0xff] %v2558
                  %v2560 = vld [vmem:[%s2528 + $0x78] sm:$0xff]
                  %2561 = vst [vmem:[%s2529 + $0xf0] sm:$0xff] %v2560
                  %v2562 = vld [vmem:[%s2528 + $0x80] sm:$0xff]
                  %2563 = vst [vmem:[%s2529 + $0x100] sm:$0xff] %v2562
                  %v2564 = vld [vmem:[%s2528 + $0x88] sm:$0xff]
                  %2565 = vst [vmem:[%s2529 + $0x110] sm:$0xff] %v2564
                  %v2566 = vld [vmem:[%s2528 + $0x90] sm:$0xff]
                  %2567 = vst [vmem:[%s2529 + $0x120] sm:$0xff] %v2566
                  %v2568 = vld [vmem:[%s2528 + $0x98] sm:$0xff]
                  %2569 = vst [vmem:[%s2529 + $0x130] sm:$0xff] %v2568
                  %v2570 = vld [vmem:[%s2528 + $0xa0] sm:$0xff]
                  %2571 = vst [vmem:[%s2529 + $0x140] sm:$0xff] %v2570
                  %v2572 = vld [vmem:[%s2528 + $0xa8] sm:$0xff]
                  %2573 = vst [vmem:[%s2529 + $0x150] sm:$0xff] %v2572
                  %v2574 = vld [vmem:[%s2528 + $0xb0] sm:$0xff]
                  %2575 = vst [vmem:[%s2529 + $0x160] sm:$0xff] %v2574
                  %v2576 = vld [vmem:[%s2528 + $0xb8] sm:$0xff]
                  %2577 = vst [vmem:[%s2529 + $0x170] sm:$0xff] %v2576
                  %v2578 = vld [vmem:[%s2528 + $0xc0] sm:$0xff]
                  %2579 = vst [vmem:[%s2529 + $0x180] sm:$0xff] %v2578
                  %v2580 = vld [vmem:[%s2528 + $0xc8] sm:$0xff]
                  %2581 = vst [vmem:[%s2529 + $0x190] sm:$0xff] %v2580
                  %v2582 = vld [vmem:[%s2528 + $0xd0] sm:$0xff]
                  %2583 = vst [vmem:[%s2529 + $0x1a0] sm:$0xff] %v2582
                  %v2584 = vld [vmem:[%s2528 + $0xd8] sm:$0xff]
                  %2585 = vst [vmem:[%s2529 + $0x1b0] sm:$0xff] %v2584
                  %v2586 = vld [vmem:[%s2528 + $0xe0] sm:$0xff]
                  %2587 = vst [vmem:[%s2529 + $0x1c0] sm:$0xff] %v2586
                  %v2588 = vld [vmem:[%s2528 + $0xe8] sm:$0xff]
                  %2589 = vst [vmem:[%s2529 + $0x1d0] sm:$0xff] %v2588
                  %v2590 = vld [vmem:[%s2528 + $0xf0] sm:$0xff]
                  %2591 = vst [vmem:[%s2529 + $0x1e0] sm:$0xff] %v2590
                  %v2592 = vld [vmem:[%s2528 + $0xf8] sm:$0xff]
                  %2593 = vst [vmem:[%s2529 + $0x1f0] sm:$0xff] %v2592
                $region118: #{expire_span_transformer_xl_forward.14} parent=112 // loop_footer
                  %s2527 = sadd.s32 1, %s2523
                $region119: #{expire_span_transformer_xl_forward.14} parent=112 // loop_footer_branch
                  %2522 = sbr.rel target = $region115
                $region120: #{expire_span_transformer_xl_forward.14} parent=112 // loop_exit
                  _
              $region113: #{expire_span_transformer_xl_forward.14} parent=97 // pred_fallthru
                _
              // Predicated region
              $region121: #{expire_span_transformer_xl_forward.14} parent=97 // pred_check
                _
              $region122: #{expire_span_transformer_xl_forward.14} parent=97 // pred_check_branch
                %2595 = sbr.rel target = $region124
              $region123: #{expire_span_transformer_xl_forward.14} parent=97 // pred_region
                _
              $region124: #{expire_span_transformer_xl_forward.14} parent=97 // pred_fallthru
                _
            $region98: #{expire_span_transformer_xl_forward.14} parent=93 // pred_fallthru
              _
            // Predicated region
            $region99: #{expire_span_transformer_xl_forward.14} parent=93 // pred_check
              _
            $region100: #{expire_span_transformer_xl_forward.14} parent=93 // pred_check_branch
              %2446 = sbr.rel target = $region102
            $region101: #{expire_span_transformer_xl_forward.14} parent=93 // pred_region
              loop: start=0, step=1, limit=1
              $region103: #{expire_span_transformer_xl_forward.14} parent=101 // loop_pre_header
                _
              $region104: #{expire_span_transformer_xl_forward.14} parent=101 // loop_header
                %s2449 = sphi 0, %s2453
                %p2450 = scmp.ge.s32.totalorder %s2449, 1
                %s2454 = sphi %s2431, %s2431
                %s2455 = sphi %s2440, %s2440
              $region105: #{expire_span_transformer_xl_forward.14} parent=101 // loop_header_branch
                %2452 = sbr.rel (%p2450) target = $region109
              $region106: #{expire_span_transformer_xl_forward.14} parent=101 // loop_body
                %v2456 = vld [vmem:[%s2454] sm:$0xff]
                %2457 = vst [vmem:[%s2455] sm:$0xff] %v2456
                %v2458 = vld [vmem:[%s2454 + $0x8] sm:$0xff]
                %2459 = vst [vmem:[%s2455 + $0x10] sm:$0xff] %v2458
                %v2460 = vld [vmem:[%s2454 + $0x10] sm:$0xff]
                %2461 = vst [vmem:[%s2455 + $0x20] sm:$0xff] %v2460
                %v2462 = vld [vmem:[%s2454 + $0x18] sm:$0xff]
                %2463 = vst [vmem:[%s2455 + $0x30] sm:$0xff] %v2462
                %v2464 = vld [vmem:[%s2454 + $0x20] sm:$0xff]
                %2465 = vst [vmem:[%s2455 + $0x40] sm:$0xff] %v2464
                %v2466 = vld [vmem:[%s2454 + $0x28] sm:$0xff]
                %2467 = vst [vmem:[%s2455 + $0x50] sm:$0xff] %v2466
                %v2468 = vld [vmem:[%s2454 + $0x30] sm:$0xff]
                %2469 = vst [vmem:[%s2455 + $0x60] sm:$0xff] %v2468
                %v2470 = vld [vmem:[%s2454 + $0x38] sm:$0xff]
                %2471 = vst [vmem:[%s2455 + $0x70] sm:$0xff] %v2470
                %v2472 = vld [vmem:[%s2454 + $0x40] sm:$0xff]
                %2473 = vst [vmem:[%s2455 + $0x80] sm:$0xff] %v2472
                %v2474 = vld [vmem:[%s2454 + $0x48] sm:$0xff]
                %2475 = vst [vmem:[%s2455 + $0x90] sm:$0xff] %v2474
                %v2476 = vld [vmem:[%s2454 + $0x50] sm:$0xff]
                %2477 = vst [vmem:[%s2455 + $0xa0] sm:$0xff] %v2476
                %v2478 = vld [vmem:[%s2454 + $0x58] sm:$0xff]
                %2479 = vst [vmem:[%s2455 + $0xb0] sm:$0xff] %v2478
                %v2480 = vld [vmem:[%s2454 + $0x60] sm:$0xff]
                %2481 = vst [vmem:[%s2455 + $0xc0] sm:$0xff] %v2480
                %v2482 = vld [vmem:[%s2454 + $0x68] sm:$0xff]
                %2483 = vst [vmem:[%s2455 + $0xd0] sm:$0xff] %v2482
                %v2484 = vld [vmem:[%s2454 + $0x70] sm:$0xff]
                %2485 = vst [vmem:[%s2455 + $0xe0] sm:$0xff] %v2484
                %v2486 = vld [vmem:[%s2454 + $0x78] sm:$0xff]
                %2487 = vst [vmem:[%s2455 + $0xf0] sm:$0xff] %v2486
                %v2488 = vld [vmem:[%s2454 + $0x80] sm:$0xff]
                %2489 = vst [vmem:[%s2455 + $0x100] sm:$0xff] %v2488
                %v2490 = vld [vmem:[%s2454 + $0x88] sm:$0xff]
                %2491 = vst [vmem:[%s2455 + $0x110] sm:$0xff] %v2490
                %v2492 = vld [vmem:[%s2454 + $0x90] sm:$0xff]
                %2493 = vst [vmem:[%s2455 + $0x120] sm:$0xff] %v2492
                %v2494 = vld [vmem:[%s2454 + $0x98] sm:$0xff]
                %2495 = vst [vmem:[%s2455 + $0x130] sm:$0xff] %v2494
                %v2496 = vld [vmem:[%s2454 + $0xa0] sm:$0xff]
                %2497 = vst [vmem:[%s2455 + $0x140] sm:$0xff] %v2496
                %v2498 = vld [vmem:[%s2454 + $0xa8] sm:$0xff]
                %2499 = vst [vmem:[%s2455 + $0x150] sm:$0xff] %v2498
                %v2500 = vld [vmem:[%s2454 + $0xb0] sm:$0xff]
                %2501 = vst [vmem:[%s2455 + $0x160] sm:$0xff] %v2500
                %v2502 = vld [vmem:[%s2454 + $0xb8] sm:$0xff]
                %2503 = vst [vmem:[%s2455 + $0x170] sm:$0xff] %v2502
                %v2504 = vld [vmem:[%s2454 + $0xc0] sm:$0xff]
                %2505 = vst [vmem:[%s2455 + $0x180] sm:$0xff] %v2504
                %v2506 = vld [vmem:[%s2454 + $0xc8] sm:$0xff]
                %2507 = vst [vmem:[%s2455 + $0x190] sm:$0xff] %v2506
                %v2508 = vld [vmem:[%s2454 + $0xd0] sm:$0xff]
                %2509 = vst [vmem:[%s2455 + $0x1a0] sm:$0xff] %v2508
                %v2510 = vld [vmem:[%s2454 + $0xd8] sm:$0xff]
                %2511 = vst [vmem:[%s2455 + $0x1b0] sm:$0xff] %v2510
                %v2512 = vld [vmem:[%s2454 + $0xe0] sm:$0xff]
                %2513 = vst [vmem:[%s2455 + $0x1c0] sm:$0xff] %v2512
                %v2514 = vld [vmem:[%s2454 + $0xe8] sm:$0xff]
                %2515 = vst [vmem:[%s2455 + $0x1d0] sm:$0xff] %v2514
                %v2516 = vld [vmem:[%s2454 + $0xf0] sm:$0xff]
                %2517 = vst [vmem:[%s2455 + $0x1e0] sm:$0xff] %v2516
                %v2518 = vld [vmem:[%s2454 + $0xf8] sm:$0xff]
                %2519 = vst [vmem:[%s2455 + $0x1f0] sm:$0xff] %v2518
              $region107: #{expire_span_transformer_xl_forward.14} parent=101 // loop_footer
                %s2453 = sadd.s32 1, %s2449
              $region108: #{expire_span_transformer_xl_forward.14} parent=101 // loop_footer_branch
                %2448 = sbr.rel target = $region104
              $region109: #{expire_span_transformer_xl_forward.14} parent=101 // loop_exit
                _
            $region102: #{expire_span_transformer_xl_forward.14} parent=93 // pred_fallthru
              _
          $region94: #{expire_span_transformer_xl_forward.14} parent=89 // pred_fallthru
            _
          %2596 = vnop
        $region90: #{expire_span_transformer_xl_forward.14} parent=73 // pred_fallthru
          _
      $region74: #{expire_span_transformer_xl_forward.14} parent=5 // pred_fallthru
        _
      %p2597 = scmp.le.s32.totalorder 2, %s11
      // Predicated region
      $region125: #{expire_span_transformer_xl_forward.14} parent=5 // pred_check
        %p2598 = pneg %p2597
      $region126: #{expire_span_transformer_xl_forward.14} parent=5 // pred_check_branch
        %2600 = sbr.rel (%p2598) target = $region128
      $region127: #{expire_span_transformer_xl_forward.14} parent=5 // pred_region
        %s2601 = ssub.s32 %s11, 2
        // Predicated region
        $region129: #{expire_span_transformer_xl_forward.14} parent=127 // pred_check
          %p2602 = pneg %p195
        $region130: #{expire_span_transformer_xl_forward.14} parent=127 // pred_check_branch
          %2604 = sbr.rel (%p2602) target = $region132
        $region131: #{expire_span_transformer_xl_forward.14} parent=127 // pred_region
          %s2605 = sand.u32 %s180, 1
          %s2606 = sand.u32 %s180, 1
          %s2607 = smul.addr %s2606, 256
          %s2608 = scalar_lea.vmem [#allocation4], %s2607
        $region132: #{expire_span_transformer_xl_forward.14} parent=127 // pred_fallthru
          _
      $region128: #{expire_span_transformer_xl_forward.14} parent=5 // pred_fallthru
        _
    $region6: #{expire_span_transformer_xl_forward.14} parent=1 // loop_footer
      %s15 = sadd.s32 1, %s11
    $region7: #{expire_span_transformer_xl_forward.14} parent=1 // loop_footer_branch
      %10 = sbr.rel target = $region3
    $region8: #{expire_span_transformer_xl_forward.14} parent=1 // loop_exit
      _

// kernel: expire_span_transformer_xl_forward.15
$region0: #{expire_span_transformer_xl_forward.15}
  #allocation0 [shape = 'u32[]', space=smem, size = 0x4, offset = 0x4, fixed_abs, tag = 'smem constant byte address 0x4 - core index']
  #allocation1 [shape = 'u32[144,128]{1,0:T(1,128)}', space=vmem, size = 0x12000, scoped, tag = 'internal scratch']
  #allocation2 [shape = 'f32[256,128]{1,0:T(8,128)}', space=vmem, size = 0x20000, scoped, tag = 'scratch operand']
  %s0 = inlined_call_operand.vmem [shape: bf16[256,512], index: 0, kind: input, shape index: {}]
  %s1 = inlined_call_operand.vmem [shape: bf16[512,128], index: 1, kind: input, shape index: {}]
  %s2 = inlined_call_operand.vmem [shape: f32[1,128], index: 2, kind: input, shape index: {}]
  %s3 = inlined_call_operand.vmem [shape: bf16[256,128], index: 3, kind: input, shape index: {}]
  %s4 = inlined_call_operand.vmem [shape: bf16[256,128], index: 4, kind: output, shape index: {}]
  %s5 = sld [smem:[#allocation0]]
  $region34: #{expire_span_transformer_xl_forward.15} parent=0
    _
  %s7 = ssub.s32 1, %s5
  %s8 = scalar_select 0, %s7, %s5
  // Predicated region
  $region2: #{expire_span_transformer_xl_forward.15} parent=0 // pred_check
    _
  $region3: #{expire_span_transformer_xl_forward.15} parent=0 // pred_check_branch
    %10 = sbr.rel (0) target = $region5
  $region4: #{expire_span_transformer_xl_forward.15} parent=0 // pred_region
    _
  $region5: #{expire_span_transformer_xl_forward.15} parent=0 // pred_fallthru
    _
  // Predicated region
  $region6: #{expire_span_transformer_xl_forward.15} parent=0 // pred_check
    _
  $region7: #{expire_span_transformer_xl_forward.15} parent=0 // pred_check_branch
    %12 = sbr.rel (0) target = $region9
  $region8: #{expire_span_transformer_xl_forward.15} parent=0 // pred_region
    _
  $region9: #{expire_span_transformer_xl_forward.15} parent=0 // pred_fallthru
    _
  // Predicated region
  $region10: #{expire_span_transformer_xl_forward.15} parent=0 // pred_check
    _
  $region11: #{expire_span_transformer_xl_forward.15} parent=0 // pred_check_branch
    %14 = sbr.rel (0) target = $region13
  $region12: #{expire_span_transformer_xl_forward.15} parent=0 // pred_region
    _
  $region13: #{expire_span_transformer_xl_forward.15} parent=0 // pred_fallthru
    _
  // Predicated region
  $region14: #{expire_span_transformer_xl_forward.15} parent=0 // pred_check
    _
  $region15: #{expire_span_transformer_xl_forward.15} parent=0 // pred_check_branch
    %16 = sbr.rel (0) target = $region17
  $region16: #{expire_span_transformer_xl_forward.15} parent=0 // pred_region
    _
  $region17: #{expire_span_transformer_xl_forward.15} parent=0 // pred_fallthru
    _
  %p18 = scmp.eq.s32.totalorder 0, 0
  // Predicated region
  $region18: #{expire_span_transformer_xl_forward.15} parent=0 // pred_check
    %p19 = pneg %p18
  $region19: #{expire_span_transformer_xl_forward.15} parent=0 // pred_check_branch
    %21 = sbr.rel (%p19) target = $region21
  $region20: #{expire_span_transformer_xl_forward.15} parent=0 // pred_region
    %22 = vst [vmem:[#allocation2] sm:$0xff] 0.0
    %23 = vst [vmem:[#allocation2 + $0x8] sm:$0xff] 0.0
    %24 = vst [vmem:[#allocation2 + $0x10] sm:$0xff] 0.0
    %25 = vst [vmem:[#allocation2 + $0x18] sm:$0xff] 0.0
    %26 = vst [vmem:[#allocation2 + $0x20] sm:$0xff] 0.0
    %27 = vst [vmem:[#allocation2 + $0x28] sm:$0xff] 0.0
    %28 = vst [vmem:[#allocation2 + $0x30] sm:$0xff] 0.0
    %29 = vst [vmem:[#allocation2 + $0x38] sm:$0xff] 0.0
    %30 = vst [vmem:[#allocation2 + $0x40] sm:$0xff] 0.0
    %31 = vst [vmem:[#allocation2 + $0x48] sm:$0xff] 0.0
    %32 = vst [vmem:[#allocation2 + $0x50] sm:$0xff] 0.0
    %33 = vst [vmem:[#allocation2 + $0x58] sm:$0xff] 0.0
    %34 = vst [vmem:[#allocation2 + $0x60] sm:$0xff] 0.0
    %35 = vst [vmem:[#allocation2 + $0x68] sm:$0xff] 0.0
    %36 = vst [vmem:[#allocation2 + $0x70] sm:$0xff] 0.0
    %37 = vst [vmem:[#allocation2 + $0x78] sm:$0xff] 0.0
    %38 = vst [vmem:[#allocation2 + $0x80] sm:$0xff] 0.0
    %39 = vst [vmem:[#allocation2 + $0x88] sm:$0xff] 0.0
    %40 = vst [vmem:[#allocation2 + $0x90] sm:$0xff] 0.0
    %41 = vst [vmem:[#allocation2 + $0x98] sm:$0xff] 0.0
    %42 = vst [vmem:[#allocation2 + $0xa0] sm:$0xff] 0.0
    %43 = vst [vmem:[#allocation2 + $0xa8] sm:$0xff] 0.0
    %44 = vst [vmem:[#allocation2 + $0xb0] sm:$0xff] 0.0
    %45 = vst [vmem:[#allocation2 + $0xb8] sm:$0xff] 0.0
    %46 = vst [vmem:[#allocation2 + $0xc0] sm:$0xff] 0.0
    %47 = vst [vmem:[#allocation2 + $0xc8] sm:$0xff] 0.0
    %48 = vst [vmem:[#allocation2 + $0xd0] sm:$0xff] 0.0
    %49 = vst [vmem:[#allocation2 + $0xd8] sm:$0xff] 0.0
    %50 = vst [vmem:[#allocation2 + $0xe0] sm:$0xff] 0.0
    %51 = vst [vmem:[#allocation2 + $0xe8] sm:$0xff] 0.0
    %52 = vst [vmem:[#allocation2 + $0xf0] sm:$0xff] 0.0
    %53 = vst [vmem:[#allocation2 + $0xf8] sm:$0xff] 0.0
  $region21: #{expire_span_transformer_xl_forward.15} parent=0 // pred_fallthru
    _
  %v54 = vld [vmem:[%s0] sm:$0xff]
  %v55 = vld [vmem:[%s0 + $0x8] sm:$0xff]
  %v56 = vld [vmem:[%s0 + $0x10] sm:$0xff]
  %v57 = vld [vmem:[%s0 + $0x18] sm:$0xff]
  %v58 = vld [vmem:[%s0 + $0x20] sm:$0xff]
  %v59 = vld [vmem:[%s0 + $0x28] sm:$0xff]
  %v60 = vld [vmem:[%s0 + $0x30] sm:$0xff]
  %v61 = vld [vmem:[%s0 + $0x38] sm:$0xff]
  %v62 = vld [vmem:[%s0 + $0x40] sm:$0xff]
  %v63 = vld [vmem:[%s0 + $0x48] sm:$0xff]
  %v64 = vld [vmem:[%s0 + $0x50] sm:$0xff]
  %v65 = vld [vmem:[%s0 + $0x58] sm:$0xff]
  %v66 = vld [vmem:[%s0 + $0x60] sm:$0xff]
  %v67 = vld [vmem:[%s0 + $0x68] sm:$0xff]
  %v68 = vld [vmem:[%s0 + $0x70] sm:$0xff]
  %v69 = vld [vmem:[%s0 + $0x78] sm:$0xff]
  %v70 = vld [vmem:[%s0 + $0x80] sm:$0xff]
  %v71 = vld [vmem:[%s0 + $0x88] sm:$0xff]
  %v72 = vld [vmem:[%s0 + $0x90] sm:$0xff]
  %v73 = vld [vmem:[%s0 + $0x98] sm:$0xff]
  %v74 = vld [vmem:[%s0 + $0xa0] sm:$0xff]
  %v75 = vld [vmem:[%s0 + $0xa8] sm:$0xff]
  %v76 = vld [vmem:[%s0 + $0xb0] sm:$0xff]
  %v77 = vld [vmem:[%s0 + $0xb8] sm:$0xff]
  %v78 = vld [vmem:[%s0 + $0xc0] sm:$0xff]
  %v79 = vld [vmem:[%s0 + $0xc8] sm:$0xff]
  %v80 = vld [vmem:[%s0 + $0xd0] sm:$0xff]
  %v81 = vld [vmem:[%s0 + $0xd8] sm:$0xff]
  %v82 = vld [vmem:[%s0 + $0xe0] sm:$0xff]
  %v83 = vld [vmem:[%s0 + $0xe8] sm:$0xff]
  %v84 = vld [vmem:[%s0 + $0xf0] sm:$0xff]
  %v85 = vld [vmem:[%s0 + $0xf8] sm:$0xff]
  %v86 = vld [vmem:[%s0 + $0x100] sm:$0xff]
  %v87 = vld [vmem:[%s0 + $0x108] sm:$0xff]
  %v88 = vld [vmem:[%s0 + $0x110] sm:$0xff]
  %v89 = vld [vmem:[%s0 + $0x118] sm:$0xff]
  %v90 = vld [vmem:[%s0 + $0x120] sm:$0xff]
  %v91 = vld [vmem:[%s0 + $0x128] sm:$0xff]
  %v92 = vld [vmem:[%s0 + $0x130] sm:$0xff]
  %v93 = vld [vmem:[%s0 + $0x138] sm:$0xff]
  %v94 = vld [vmem:[%s0 + $0x140] sm:$0xff]
  %v95 = vld [vmem:[%s0 + $0x148] sm:$0xff]
  %v96 = vld [vmem:[%s0 + $0x150] sm:$0xff]
  %v97 = vld [vmem:[%s0 + $0x158] sm:$0xff]
  %v98 = vld [vmem:[%s0 + $0x160] sm:$0xff]
  %v99 = vld [vmem:[%s0 + $0x168] sm:$0xff]
  %v100 = vld [vmem:[%s0 + $0x170] sm:$0xff]
  %v101 = vld [vmem:[%s0 + $0x178] sm:$0xff]
  %v102 = vld [vmem:[%s0 + $0x180] sm:$0xff]
  %v103 = vld [vmem:[%s0 + $0x188] sm:$0xff]
  %v104 = vld [vmem:[%s0 + $0x190] sm:$0xff]
  %v105 = vld [vmem:[%s0 + $0x198] sm:$0xff]
  %v106 = vld [vmem:[%s0 + $0x1a0] sm:$0xff]
  %v107 = vld [vmem:[%s0 + $0x1a8] sm:$0xff]
  %v108 = vld [vmem:[%s0 + $0x1b0] sm:$0xff]
  %v109 = vld [vmem:[%s0 + $0x1b8] sm:$0xff]
  %v110 = vld [vmem:[%s0 + $0x1c0] sm:$0xff]
  %v111 = vld [vmem:[%s0 + $0x1c8] sm:$0xff]
  %v112 = vld [vmem:[%s0 + $0x1d0] sm:$0xff]
  %v113 = vld [vmem:[%s0 + $0x1d8] sm:$0xff]
  %v114 = vld [vmem:[%s0 + $0x1e0] sm:$0xff]
  %v115 = vld [vmem:[%s0 + $0x1e8] sm:$0xff]
  %v116 = vld [vmem:[%s0 + $0x1f0] sm:$0xff]
  %v117 = vld [vmem:[%s0 + $0x1f8] sm:$0xff]
  %v118 = vld [vmem:[#allocation2] sm:$0xff]
  %v119 = vld [vmem:[#allocation2 + $0x8] sm:$0xff]
  %v120 = vld [vmem:[#allocation2 + $0x10] sm:$0xff]
  %v121 = vld [vmem:[#allocation2 + $0x18] sm:$0xff]
  %v122 = vld [vmem:[#allocation2 + $0x20] sm:$0xff]
  %v123 = vld [vmem:[#allocation2 + $0x28] sm:$0xff]
  %v124 = vld [vmem:[#allocation2 + $0x30] sm:$0xff]
  %v125 = vld [vmem:[#allocation2 + $0x38] sm:$0xff]
  %v126 = vld [vmem:[#allocation2 + $0x40] sm:$0xff]
  %v127 = vld [vmem:[#allocation2 + $0x48] sm:$0xff]
  %v128 = vld [vmem:[#allocation2 + $0x50] sm:$0xff]
  %v129 = vld [vmem:[#allocation2 + $0x58] sm:$0xff]
  %v130 = vld [vmem:[#allocation2 + $0x60] sm:$0xff]
  %v131 = vld [vmem:[#allocation2 + $0x68] sm:$0xff]
  %v132 = vld [vmem:[#allocation2 + $0x70] sm:$0xff]
  %v133 = vld [vmem:[#allocation2 + $0x78] sm:$0xff]
  %v134 = vld [vmem:[#allocation2 + $0x80] sm:$0xff]
  %v135 = vld [vmem:[#allocation2 + $0x88] sm:$0xff]
  %v136 = vld [vmem:[#allocation2 + $0x90] sm:$0xff]
  %v137 = vld [vmem:[#allocation2 + $0x98] sm:$0xff]
  %v138 = vld [vmem:[#allocation2 + $0xa0] sm:$0xff]
  %v139 = vld [vmem:[#allocation2 + $0xa8] sm:$0xff]
  %v140 = vld [vmem:[#allocation2 + $0xb0] sm:$0xff]
  %v141 = vld [vmem:[#allocation2 + $0xb8] sm:$0xff]
  %v142 = vld [vmem:[#allocation2 + $0xc0] sm:$0xff]
  %v143 = vld [vmem:[#allocation2 + $0xc8] sm:$0xff]
  %v144 = vld [vmem:[#allocation2 + $0xd0] sm:$0xff]
  %v145 = vld [vmem:[#allocation2 + $0xd8] sm:$0xff]
  %v146 = vld [vmem:[#allocation2 + $0xe0] sm:$0xff]
  %v147 = vld [vmem:[#allocation2 + $0xe8] sm:$0xff]
  %v148 = vld [vmem:[#allocation2 + $0xf0] sm:$0xff]
  %v149 = vld [vmem:[#allocation2 + $0xf8] sm:$0xff]
  %v150 = vld [vmem:[%s1] sm:$0xf]
  %v151 = vld [vmem:[%s1 + $0x4] sm:$0xf]
  %v152 = vld [vmem:[%s1 + $0x8] sm:$0xf]
  %v153 = vld [vmem:[%s1 + $0xc] sm:$0xf]
  %v154 = vld [vmem:[%s1 + $0x10] sm:$0xf]
  %v155 = vld [vmem:[%s1 + $0x14] sm:$0xf]
  %v156 = vld [vmem:[%s1 + $0x18] sm:$0xf]
  %v157 = vld [vmem:[%s1 + $0x1c] sm:$0xf]
  %v158 = vld [vmem:[%s1 + $0x20] sm:$0xf]
  %v159 = vld [vmem:[%s1 + $0x24] sm:$0xf]
  %v160 = vld [vmem:[%s1 + $0x28] sm:$0xf]
  %v161 = vld [vmem:[%s1 + $0x2c] sm:$0xf]
  %v162 = vld [vmem:[%s1 + $0x30] sm:$0xf]
  %v163 = vld [vmem:[%s1 + $0x34] sm:$0xf]
  %v164 = vld [vmem:[%s1 + $0x38] sm:$0xf]
  %v165 = vld [vmem:[%s1 + $0x3c] sm:$0xf]
  %v166 = vld [vmem:[%s1 + $0x40] sm:$0xf]
  %v167 = vld [vmem:[%s1 + $0x44] sm:$0xf]
  %v168 = vld [vmem:[%s1 + $0x48] sm:$0xf]
  %v169 = vld [vmem:[%s1 + $0x4c] sm:$0xf]
  %v170 = vld [vmem:[%s1 + $0x50] sm:$0xf]
  %v171 = vld [vmem:[%s1 + $0x54] sm:$0xf]
  %v172 = vld [vmem:[%s1 + $0x58] sm:$0xf]
  %v173 = vld [vmem:[%s1 + $0x5c] sm:$0xf]
  %v174 = vld [vmem:[%s1 + $0x60] sm:$0xf]
  %v175 = vld [vmem:[%s1 + $0x64] sm:$0xf]
  %v176 = vld [vmem:[%s1 + $0x68] sm:$0xf]
  %v177 = vld [vmem:[%s1 + $0x6c] sm:$0xf]
  %v178 = vld [vmem:[%s1 + $0x70] sm:$0xf]
  %v179 = vld [vmem:[%s1 + $0x74] sm:$0xf]
  %v180 = vld [vmem:[%s1 + $0x78] sm:$0xf]
  %v181 = vld [vmem:[%s1 + $0x7c] sm:$0xf]
  %v182 = vld [vmem:[%s1 + $0x80] sm:$0xf]
  %v183 = vld [vmem:[%s1 + $0x84] sm:$0xf]
  %v184 = vld [vmem:[%s1 + $0x88] sm:$0xf]
  %v185 = vld [vmem:[%s1 + $0x8c] sm:$0xf]
  %v186 = vld [vmem:[%s1 + $0x90] sm:$0xf]
  %v187 = vld [vmem:[%s1 + $0x94] sm:$0xf]
  %v188 = vld [vmem:[%s1 + $0x98] sm:$0xf]
  %v189 = vld [vmem:[%s1 + $0x9c] sm:$0xf]
  %v190 = vld [vmem:[%s1 + $0xa0] sm:$0xf]
  %v191 = vld [vmem:[%s1 + $0xa4] sm:$0xf]
  %v192 = vld [vmem:[%s1 + $0xa8] sm:$0xf]
  %v193 = vld [vmem:[%s1 + $0xac] sm:$0xf]
  %v194 = vld [vmem:[%s1 + $0xb0] sm:$0xf]
  %v195 = vld [vmem:[%s1 + $0xb4] sm:$0xf]
  %v196 = vld [vmem:[%s1 + $0xb8] sm:$0xf]
  %v197 = vld [vmem:[%s1 + $0xbc] sm:$0xf]
  %v198 = vld [vmem:[%s1 + $0xc0] sm:$0xf]
  %v199 = vld [vmem:[%s1 + $0xc4] sm:$0xf]
  %v200 = vld [vmem:[%s1 + $0xc8] sm:$0xf]
  %v201 = vld [vmem:[%s1 + $0xcc] sm:$0xf]
  %v202 = vld [vmem:[%s1 + $0xd0] sm:$0xf]
  %v203 = vld [vmem:[%s1 + $0xd4] sm:$0xf]
  %v204 = vld [vmem:[%s1 + $0xd8] sm:$0xf]
  %v205 = vld [vmem:[%s1 + $0xdc] sm:$0xf]
  %v206 = vld [vmem:[%s1 + $0xe0] sm:$0xf]
  %v207 = vld [vmem:[%s1 + $0xe4] sm:$0xf]
  %v208 = vld [vmem:[%s1 + $0xe8] sm:$0xf]
  %v209 = vld [vmem:[%s1 + $0xec] sm:$0xf]
  %v210 = vld [vmem:[%s1 + $0xf0] sm:$0xf]
  %v211 = vld [vmem:[%s1 + $0xf4] sm:$0xf]
  %v212 = vld [vmem:[%s1 + $0xf8] sm:$0xf]
  %v213 = vld [vmem:[%s1 + $0xfc] sm:$0xf]
  %v278 = vunpack.c.l.b16 %v54
  %v279 = vunpack.c.h.b16 %v54
  %v280 = vunpack.c.l.b16 %v55
  %v281 = vunpack.c.h.b16 %v55
  %v282 = vunpack.c.l.b16 %v56
  %v283 = vunpack.c.h.b16 %v56
  %v284 = vunpack.c.l.b16 %v57
  %v285 = vunpack.c.h.b16 %v57
  %v286 = vunpack.c.l.b16 %v58
  %v287 = vunpack.c.h.b16 %v58
  %v288 = vunpack.c.l.b16 %v59
  %v289 = vunpack.c.h.b16 %v59
  %v290 = vunpack.c.l.b16 %v60
  %v291 = vunpack.c.h.b16 %v60
  %v292 = vunpack.c.l.b16 %v61
  %v293 = vunpack.c.h.b16 %v61
  %v294 = vunpack.c.l.b16 %v62
  %v295 = vunpack.c.h.b16 %v62
  %v296 = vunpack.c.l.b16 %v63
  %v297 = vunpack.c.h.b16 %v63
  %v298 = vunpack.c.l.b16 %v64
  %v299 = vunpack.c.h.b16 %v64
  %v300 = vunpack.c.l.b16 %v65
  %v301 = vunpack.c.h.b16 %v65
  %v302 = vunpack.c.l.b16 %v66
  %v303 = vunpack.c.h.b16 %v66
  %v304 = vunpack.c.l.b16 %v67
  %v305 = vunpack.c.h.b16 %v67
  %v306 = vunpack.c.l.b16 %v68
  %v307 = vunpack.c.h.b16 %v68
  %v308 = vunpack.c.l.b16 %v69
  %v309 = vunpack.c.h.b16 %v69
  %v310 = vunpack.c.l.b16 %v70
  %v311 = vunpack.c.h.b16 %v70
  %v312 = vunpack.c.l.b16 %v71
  %v313 = vunpack.c.h.b16 %v71
  %v314 = vunpack.c.l.b16 %v72
  %v315 = vunpack.c.h.b16 %v72
  %v316 = vunpack.c.l.b16 %v73
  %v317 = vunpack.c.h.b16 %v73
  %v318 = vunpack.c.l.b16 %v74
  %v319 = vunpack.c.h.b16 %v74
  %v320 = vunpack.c.l.b16 %v75
  %v321 = vunpack.c.h.b16 %v75
  %v322 = vunpack.c.l.b16 %v76
  %v323 = vunpack.c.h.b16 %v76
  %v324 = vunpack.c.l.b16 %v77
  %v325 = vunpack.c.h.b16 %v77
  %v326 = vunpack.c.l.b16 %v78
  %v327 = vunpack.c.h.b16 %v78
  %v328 = vunpack.c.l.b16 %v79
  %v329 = vunpack.c.h.b16 %v79
  %v330 = vunpack.c.l.b16 %v80
  %v331 = vunpack.c.h.b16 %v80
  %v332 = vunpack.c.l.b16 %v81
  %v333 = vunpack.c.h.b16 %v81
  %v334 = vunpack.c.l.b16 %v82
  %v335 = vunpack.c.h.b16 %v82
  %v336 = vunpack.c.l.b16 %v83
  %v337 = vunpack.c.h.b16 %v83
  %v338 = vunpack.c.l.b16 %v84
  %v339 = vunpack.c.h.b16 %v84
  %v340 = vunpack.c.l.b16 %v85
  %v341 = vunpack.c.h.b16 %v85
  %v342 = vunpack.c.l.b16 %v86
  %v343 = vunpack.c.h.b16 %v86
  %v344 = vunpack.c.l.b16 %v87
  %v345 = vunpack.c.h.b16 %v87
  %v346 = vunpack.c.l.b16 %v88
  %v347 = vunpack.c.h.b16 %v88
  %v348 = vunpack.c.l.b16 %v89
  %v349 = vunpack.c.h.b16 %v89
  %v350 = vunpack.c.l.b16 %v90
  %v351 = vunpack.c.h.b16 %v90
  %v352 = vunpack.c.l.b16 %v91
  %v353 = vunpack.c.h.b16 %v91
  %v354 = vunpack.c.l.b16 %v92
  %v355 = vunpack.c.h.b16 %v92
  %v356 = vunpack.c.l.b16 %v93
  %v357 = vunpack.c.h.b16 %v93
  %v358 = vunpack.c.l.b16 %v94
  %v359 = vunpack.c.h.b16 %v94
  %v360 = vunpack.c.l.b16 %v95
  %v361 = vunpack.c.h.b16 %v95
  %v362 = vunpack.c.l.b16 %v96
  %v363 = vunpack.c.h.b16 %v96
  %v364 = vunpack.c.l.b16 %v97
  %v365 = vunpack.c.h.b16 %v97
  %v366 = vunpack.c.l.b16 %v98
  %v367 = vunpack.c.h.b16 %v98
  %v368 = vunpack.c.l.b16 %v99
  %v369 = vunpack.c.h.b16 %v99
  %v370 = vunpack.c.l.b16 %v100
  %v371 = vunpack.c.h.b16 %v100
  %v372 = vunpack.c.l.b16 %v101
  %v373 = vunpack.c.h.b16 %v101
  %v374 = vunpack.c.l.b16 %v102
  %v375 = vunpack.c.h.b16 %v102
  %v376 = vunpack.c.l.b16 %v103
  %v377 = vunpack.c.h.b16 %v103
  %v378 = vunpack.c.l.b16 %v104
  %v379 = vunpack.c.h.b16 %v104
  %v380 = vunpack.c.l.b16 %v105
  %v381 = vunpack.c.h.b16 %v105
  %v382 = vunpack.c.l.b16 %v106
  %v383 = vunpack.c.h.b16 %v106
  %v384 = vunpack.c.l.b16 %v107
  %v385 = vunpack.c.h.b16 %v107
  %v386 = vunpack.c.l.b16 %v108
  %v387 = vunpack.c.h.b16 %v108
  %v388 = vunpack.c.l.b16 %v109
  %v389 = vunpack.c.h.b16 %v109
  %v390 = vunpack.c.l.b16 %v110
  %v391 = vunpack.c.h.b16 %v110
  %v392 = vunpack.c.l.b16 %v111
  %v393 = vunpack.c.h.b16 %v111
  %v394 = vunpack.c.l.b16 %v112
  %v395 = vunpack.c.h.b16 %v112
  %v396 = vunpack.c.l.b16 %v113
  %v397 = vunpack.c.h.b16 %v113
  %v398 = vunpack.c.l.b16 %v114
  %v399 = vunpack.c.h.b16 %v114
  %v400 = vunpack.c.l.b16 %v115
  %v401 = vunpack.c.h.b16 %v115
  %v402 = vunpack.c.l.b16 %v116
  %v403 = vunpack.c.h.b16 %v116
  %v404 = vunpack.c.l.b16 %v117
  %v405 = vunpack.c.h.b16 %v117
  %v406 = vpack.c.b16 %v282, %v278
  %v407 = vpack.c.b16 %v283, %v279
  %v408 = vpack.c.b16 %v284, %v280
  %v409 = vpack.c.b16 %v285, %v281
  %v410 = vpack.c.b16 %v290, %v286
  %v411 = vpack.c.b16 %v291, %v287
  %v412 = vpack.c.b16 %v292, %v288
  %v413 = vpack.c.b16 %v293, %v289
  %v414 = vpack.c.b16 %v298, %v294
  %v415 = vpack.c.b16 %v299, %v295
  %v416 = vpack.c.b16 %v300, %v296
  %v417 = vpack.c.b16 %v301, %v297
  %v418 = vpack.c.b16 %v306, %v302
  %v419 = vpack.c.b16 %v307, %v303
  %v420 = vpack.c.b16 %v308, %v304
  %v421 = vpack.c.b16 %v309, %v305
  %v422 = vpack.c.b16 %v314, %v310
  %v423 = vpack.c.b16 %v315, %v311
  %v424 = vpack.c.b16 %v316, %v312
  %v425 = vpack.c.b16 %v317, %v313
  %v426 = vpack.c.b16 %v322, %v318
  %v427 = vpack.c.b16 %v323, %v319
  %v428 = vpack.c.b16 %v324, %v320
  %v429 = vpack.c.b16 %v325, %v321
  %v430 = vpack.c.b16 %v330, %v326
  %v431 = vpack.c.b16 %v331, %v327
  %v432 = vpack.c.b16 %v332, %v328
  %v433 = vpack.c.b16 %v333, %v329
  %v434 = vpack.c.b16 %v338, %v334
  %v435 = vpack.c.b16 %v339, %v335
  %v436 = vpack.c.b16 %v340, %v336
  %v437 = vpack.c.b16 %v341, %v337
  %v438 = vpack.c.b16 %v346, %v342
  %v439 = vpack.c.b16 %v347, %v343
  %v440 = vpack.c.b16 %v348, %v344
  %v441 = vpack.c.b16 %v349, %v345
  %v442 = vpack.c.b16 %v354, %v350
  %v443 = vpack.c.b16 %v355, %v351
  %v444 = vpack.c.b16 %v356, %v352
  %v445 = vpack.c.b16 %v357, %v353
  %v446 = vpack.c.b16 %v362, %v358
  %v447 = vpack.c.b16 %v363, %v359
  %v448 = vpack.c.b16 %v364, %v360
  %v449 = vpack.c.b16 %v365, %v361
  %v450 = vpack.c.b16 %v370, %v366
  %v451 = vpack.c.b16 %v371, %v367
  %v452 = vpack.c.b16 %v372, %v368
  %v453 = vpack.c.b16 %v373, %v369
  %v454 = vpack.c.b16 %v378, %v374
  %v455 = vpack.c.b16 %v379, %v375
  %v456 = vpack.c.b16 %v380, %v376
  %v457 = vpack.c.b16 %v381, %v377
  %v458 = vpack.c.b16 %v386, %v382
  %v459 = vpack.c.b16 %v387, %v383
  %v460 = vpack.c.b16 %v388, %v384
  %v461 = vpack.c.b16 %v389, %v385
  %v462 = vpack.c.b16 %v394, %v390
  %v463 = vpack.c.b16 %v395, %v391
  %v464 = vpack.c.b16 %v396, %v392
  %v465 = vpack.c.b16 %v397, %v393
  %v466 = vpack.c.b16 %v402, %v398
  %v467 = vpack.c.b16 %v403, %v399
  %v468 = vpack.c.b16 %v404, %v400
  %v469 = vpack.c.b16 %v405, %v401
  %v598 = vunpack.c.l.b16 %v150
  %v599 = vunpack.c.l.b16 %v151
  %v600 = vunpack.c.l.b16 %v152
  %v601 = vunpack.c.l.b16 %v153
  %v602 = vunpack.c.l.b16 %v154
  %v603 = vunpack.c.l.b16 %v155
  %v604 = vunpack.c.l.b16 %v156
  %v605 = vunpack.c.l.b16 %v157
  %v606 = vunpack.c.l.b16 %v158
  %v607 = vunpack.c.l.b16 %v159
  %v608 = vunpack.c.l.b16 %v160
  %v609 = vunpack.c.l.b16 %v161
  %v610 = vunpack.c.l.b16 %v162
  %v611 = vunpack.c.l.b16 %v163
  %v612 = vunpack.c.l.b16 %v164
  %v613 = vunpack.c.l.b16 %v165
  %v614 = vunpack.c.l.b16 %v166
  %v615 = vunpack.c.l.b16 %v167
  %v616 = vunpack.c.l.b16 %v168
  %v617 = vunpack.c.l.b16 %v169
  %v618 = vunpack.c.l.b16 %v170
  %v619 = vunpack.c.l.b16 %v171
  %v620 = vunpack.c.l.b16 %v172
  %v621 = vunpack.c.l.b16 %v173
  %v622 = vunpack.c.l.b16 %v174
  %v623 = vunpack.c.l.b16 %v175
  %v624 = vunpack.c.l.b16 %v176
  %v625 = vunpack.c.l.b16 %v177
  %v626 = vunpack.c.l.b16 %v178
  %v627 = vunpack.c.l.b16 %v179
  %v628 = vunpack.c.l.b16 %v180
  %v629 = vunpack.c.l.b16 %v181
  %v630 = vunpack.c.l.b16 %v182
  %v631 = vunpack.c.l.b16 %v183
  %v632 = vunpack.c.l.b16 %v184
  %v633 = vunpack.c.l.b16 %v185
  %v634 = vunpack.c.l.b16 %v186
  %v635 = vunpack.c.l.b16 %v187
  %v636 = vunpack.c.l.b16 %v188
  %v637 = vunpack.c.l.b16 %v189
  %v638 = vunpack.c.l.b16 %v190
  %v639 = vunpack.c.l.b16 %v191
  %v640 = vunpack.c.l.b16 %v192
  %v641 = vunpack.c.l.b16 %v193
  %v642 = vunpack.c.l.b16 %v194
  %v643 = vunpack.c.l.b16 %v195
  %v644 = vunpack.c.l.b16 %v196
  %v645 = vunpack.c.l.b16 %v197
  %v646 = vunpack.c.l.b16 %v198
  %v647 = vunpack.c.l.b16 %v199
  %v648 = vunpack.c.l.b16 %v200
  %v649 = vunpack.c.l.b16 %v201
  %v650 = vunpack.c.l.b16 %v202
  %v651 = vunpack.c.l.b16 %v203
  %v652 = vunpack.c.l.b16 %v204
  %v653 = vunpack.c.l.b16 %v205
  %v654 = vunpack.c.l.b16 %v206
  %v655 = vunpack.c.l.b16 %v207
  %v656 = vunpack.c.l.b16 %v208
  %v657 = vunpack.c.l.b16 %v209
  %v658 = vunpack.c.l.b16 %v210
  %v659 = vunpack.c.l.b16 %v211
  %v660 = vunpack.c.l.b16 %v212
  %v661 = vunpack.c.l.b16 %v213
  %v662 = vpack.c.b16 %v599, %v598
  %v663 = vpack.c.b16 %v601, %v600
  %v664 = vpack.c.b16 %v603, %v602
  %v665 = vpack.c.b16 %v605, %v604
  %v666 = vpack.c.b16 %v607, %v606
  %v667 = vpack.c.b16 %v609, %v608
  %v668 = vpack.c.b16 %v611, %v610
  %v669 = vpack.c.b16 %v613, %v612
  %v670 = vpack.c.b16 %v615, %v614
  %v671 = vpack.c.b16 %v617, %v616
  %v672 = vpack.c.b16 %v619, %v618
  %v673 = vpack.c.b16 %v621, %v620
  %v674 = vpack.c.b16 %v623, %v622
  %v675 = vpack.c.b16 %v625, %v624
  %v676 = vpack.c.b16 %v627, %v626
  %v677 = vpack.c.b16 %v629, %v628
  %v678 = vpack.c.b16 %v631, %v630
  %v679 = vpack.c.b16 %v633, %v632
  %v680 = vpack.c.b16 %v635, %v634
  %v681 = vpack.c.b16 %v637, %v636
  %v682 = vpack.c.b16 %v639, %v638
  %v683 = vpack.c.b16 %v641, %v640
  %v684 = vpack.c.b16 %v643, %v642
  %v685 = vpack.c.b16 %v645, %v644
  %v686 = vpack.c.b16 %v647, %v646
  %v687 = vpack.c.b16 %v649, %v648
  %v688 = vpack.c.b16 %v651, %v650
  %v689 = vpack.c.b16 %v653, %v652
  %v690 = vpack.c.b16 %v655, %v654
  %v691 = vpack.c.b16 %v657, %v656
  %v692 = vpack.c.b16 %v659, %v658
  %v693 = vpack.c.b16 %v661, %v660
  %726 = vmatprep.subr.bf16.mxu0 0
  %727 = vmatpush1.bf16.msra.mxu0 %v662
  %728 = vmatprep.subr.bf16.mxu0 0
  %729 = vmatpush1.bf16.msra.mxu0 %v663
  %730 = vmatprep.subr.bf16.mxu0 0
  %731 = vmatpush1.bf16.msra.mxu0 %v664
  %732 = vmatprep.subr.bf16.mxu0 0
  %733 = vmatpush1.bf16.msra.mxu0 %v665
  %734 = vmatprep.subr.bf16.mxu0 0
  %735 = vmatpush1.bf16.msra.mxu0 %v666
  %736 = vmatprep.subr.bf16.mxu0 0
  %737 = vmatpush1.bf16.msra.mxu0 %v667
  %738 = vmatprep.subr.bf16.mxu0 0
  %739 = vmatpush1.bf16.msra.mxu0 %v668
  %740 = vmatprep.subr.bf16.mxu0 0
  %741 = vmatpush1.bf16.msra.mxu0 %v669
  %742 = vmatprep.subr.bf16.mxu0 0
  %743 = vmatpush1.bf16.msra.mxu0 %v670
  %744 = vmatprep.subr.bf16.mxu0 0
  %745 = vmatpush1.bf16.msra.mxu0 %v671
  %746 = vmatprep.subr.bf16.mxu0 0
  %747 = vmatpush1.bf16.msra.mxu0 %v672
  %748 = vmatprep.subr.bf16.mxu0 0
  %749 = vmatpush1.bf16.msra.mxu0 %v673
  %750 = vmatprep.subr.bf16.mxu0 0
  %751 = vmatpush1.bf16.msra.mxu0 %v674
  %752 = vmatprep.subr.bf16.mxu0 0
  %753 = vmatpush1.bf16.msra.mxu0 %v675
  %754 = vmatprep.subr.bf16.mxu0 0
  %755 = vmatpush1.bf16.msra.mxu0 %v676
  %756 = vmatprep.subr.bf16.mxu0 0
  %757 = vmatpush1.bf16.msra.mxu0 %v677
  %758 = vmatprep.mubr.bf16.mxu0 %v407
  %759 = vmatmul.mubr.bf16.gmra.mrb[0].mxu0 %v406
  %v760 = vpop.f32.mrb[0].mxu0
  %v761 = vadd.f32 0.0, %v760
  %v762 = vpop.f32.mrb[0].mxu0
  %v763 = vpop.f32.mrb[0].mxu0
  %v764 = vadd.f32 0.0, %v763
  %v765 = vpop.f32.mrb[0].mxu0
  %766 = vmatprep.mubr.bf16.mxu0 %v411
  %767 = vmatmul.mubr.bf16.gmra.mrb[0].mxu0 %v410
  %v768 = vpop.f32.mrb[0].mxu0
  %v769 = vadd.f32 0.0, %v768
  %v770 = vpop.f32.mrb[0].mxu0
  %v771 = vpop.f32.mrb[0].mxu0
  %v772 = vadd.f32 0.0, %v771
  %v773 = vpop.f32.mrb[0].mxu0
  %774 = vmatprep.mubr.bf16.mxu0 %v415
  %775 = vmatmul.mubr.bf16.gmra.mrb[0].mxu0 %v414
  %v776 = vpop.f32.mrb[0].mxu0
  %v777 = vadd.f32 0.0, %v776
  %v778 = vpop.f32.mrb[0].mxu0
  %v779 = vpop.f32.mrb[0].mxu0
  %v780 = vadd.f32 0.0, %v779
  %v781 = vpop.f32.mrb[0].mxu0
  %782 = vmatprep.mubr.bf16.mxu0 %v419
  %783 = vmatmul.mubr.bf16.gmra.mrb[0].mxu0 %v418
  %v784 = vpop.f32.mrb[0].mxu0
  %v785 = vadd.f32 0.0, %v784
  %v786 = vpop.f32.mrb[0].mxu0
  %v787 = vpop.f32.mrb[0].mxu0
  %v788 = vadd.f32 0.0, %v787
  %v789 = vpop.f32.mrb[0].mxu0
  %790 = vmatprep.mubr.bf16.mxu0 %v423
  %791 = vmatmul.mubr.bf16.gmra.mrb[0].mxu0 %v422
  %v792 = vpop.f32.mrb[0].mxu0
  %v793 = vadd.f32 0.0, %v792
  %v794 = vpop.f32.mrb[0].mxu0
  %v795 = vpop.f32.mrb[0].mxu0
  %v796 = vadd.f32 0.0, %v795
  %v797 = vpop.f32.mrb[0].mxu0
  %798 = vmatprep.mubr.bf16.mxu0 %v427
  %799 = vmatmul.mubr.bf16.gmra.mrb[0].mxu0 %v426
  %v800 = vpop.f32.mrb[0].mxu0
  %v801 = vadd.f32 0.0, %v800
  %v802 = vpop.f32.mrb[0].mxu0
  %v803 = vpop.f32.mrb[0].mxu0
  %v804 = vadd.f32 0.0, %v803
  %v805 = vpop.f32.mrb[0].mxu0
  %806 = vmatprep.mubr.bf16.mxu0 %v431
  %807 = vmatmul.mubr.bf16.gmra.mrb[0].mxu0 %v430
  %v808 = vpop.f32.mrb[0].mxu0
  %v809 = vadd.f32 0.0, %v808
  %v810 = vpop.f32.mrb[0].mxu0
  %v811 = vpop.f32.mrb[0].mxu0
  %v812 = vadd.f32 0.0, %v811
  %v813 = vpop.f32.mrb[0].mxu0
  %814 = vmatprep.mubr.bf16.mxu0 %v435
  %815 = vmatmul.mubr.bf16.gmra.mrb[0].mxu0 %v434
  %v816 = vpop.f32.mrb[0].mxu0
  %v817 = vadd.f32 0.0, %v816
  %v818 = vpop.f32.mrb[0].mxu0
  %v819 = vpop.f32.mrb[0].mxu0
  %v820 = vadd.f32 0.0, %v819
  %v821 = vpop.f32.mrb[0].mxu0
  %822 = vmatprep.mubr.bf16.mxu0 %v439
  %823 = vmatmul.mubr.bf16.gmra.mrb[0].mxu0 %v438
  %v824 = vpop.f32.mrb[0].mxu0
  %v825 = vadd.f32 0.0, %v824
  %v826 = vpop.f32.mrb[0].mxu0
  %v827 = vpop.f32.mrb[0].mxu0
  %v828 = vadd.f32 0.0, %v827
  %v829 = vpop.f32.mrb[0].mxu0
  %830 = vmatprep.mubr.bf16.mxu0 %v443
  %831 = vmatmul.mubr.bf16.gmra.mrb[0].mxu0 %v442
  %v832 = vpop.f32.mrb[0].mxu0
  %v833 = vadd.f32 0.0, %v832
  %v834 = vpop.f32.mrb[0].mxu0
  %v835 = vpop.f32.mrb[0].mxu0
  %v836 = vadd.f32 0.0, %v835
  %v837 = vpop.f32.mrb[0].mxu0
  %838 = vmatprep.mubr.bf16.mxu0 %v447
  %839 = vmatmul.mubr.bf16.gmra.mrb[0].mxu0 %v446
  %v840 = vpop.f32.mrb[0].mxu0
  %v841 = vadd.f32 0.0, %v840
  %v842 = vpop.f32.mrb[0].mxu0
  %v843 = vpop.f32.mrb[0].mxu0
  %v844 = vadd.f32 0.0, %v843
  %v845 = vpop.f32.mrb[0].mxu0
  %846 = vmatprep.mubr.bf16.mxu0 %v451
  %847 = vmatmul.mubr.bf16.gmra.mrb[0].mxu0 %v450
  %v848 = vpop.f32.mrb[0].mxu0
  %v849 = vadd.f32 0.0, %v848
  %v850 = vpop.f32.mrb[0].mxu0
  %v851 = vpop.f32.mrb[0].mxu0
  %v852 = vadd.f32 0.0, %v851
  %v853 = vpop.f32.mrb[0].mxu0
  %854 = vmatprep.mubr.bf16.mxu0 %v455
  %855 = vmatmul.mubr.bf16.gmra.mrb[0].mxu0 %v454
  %v856 = vpop.f32.mrb[0].mxu0
  %v857 = vadd.f32 0.0, %v856
  %v858 = vpop.f32.mrb[0].mxu0
  %v859 = vpop.f32.mrb[0].mxu0
  %v860 = vadd.f32 0.0, %v859
  %v861 = vpop.f32.mrb[0].mxu0
  %862 = vmatprep.mubr.bf16.mxu0 %v459
  %863 = vmatmul.mubr.bf16.gmra.mrb[0].mxu0 %v458
  %v864 = vpop.f32.mrb[0].mxu0
  %v865 = vadd.f32 0.0, %v864
  %v866 = vpop.f32.mrb[0].mxu0
  %v867 = vpop.f32.mrb[0].mxu0
  %v868 = vadd.f32 0.0, %v867
  %v869 = vpop.f32.mrb[0].mxu0
  %870 = vmatprep.mubr.bf16.mxu0 %v463
  %871 = vmatmul.mubr.bf16.gmra.mrb[0].mxu0 %v462
  %v872 = vpop.f32.mrb[0].mxu0
  %v873 = vadd.f32 0.0, %v872
  %v874 = vpop.f32.mrb[0].mxu0
  %v875 = vpop.f32.mrb[0].mxu0
  %v876 = vadd.f32 0.0, %v875
  %v877 = vpop.f32.mrb[0].mxu0
  %878 = vmatprep.mubr.bf16.mxu0 %v467
  %879 = vmatmul.mubr.bf16.gmra.mrb[0].mxu0 %v466
  %v880 = vpop.f32.mrb[0].mxu0
  %v881 = vadd.f32 0.0, %v880
  %v882 = vpop.f32.mrb[0].mxu0
  %v883 = vpop.f32.mrb[0].mxu0
  %v884 = vadd.f32 0.0, %v883
  %v885 = vpop.f32.mrb[0].mxu0
  %886 = vdwg.mxu0
  %887 = vmatprep.subr.bf16.mxu0 0
  %888 = vmatpush1.bf16.msra.mxu0 %v678
  %889 = vmatprep.subr.bf16.mxu0 0
  %890 = vmatpush1.bf16.msra.mxu0 %v679
  %891 = vmatprep.subr.bf16.mxu0 0
  %892 = vmatpush1.bf16.msra.mxu0 %v680
  %893 = vmatprep.subr.bf16.mxu0 0
  %894 = vmatpush1.bf16.msra.mxu0 %v681
  %895 = vmatprep.subr.bf16.mxu0 0
  %896 = vmatpush1.bf16.msra.mxu0 %v682
  %897 = vmatprep.subr.bf16.mxu0 0
  %898 = vmatpush1.bf16.msra.mxu0 %v683
  %899 = vmatprep.subr.bf16.mxu0 0
  %900 = vmatpush1.bf16.msra.mxu0 %v684
  %901 = vmatprep.subr.bf16.mxu0 0
  %902 = vmatpush1.bf16.msra.mxu0 %v685
  %903 = vmatprep.subr.bf16.mxu0 0
  %904 = vmatpush1.bf16.msra.mxu0 %v686
  %905 = vmatprep.subr.bf16.mxu0 0
  %906 = vmatpush1.bf16.msra.mxu0 %v687
  %907 = vmatprep.subr.bf16.mxu0 0
  %908 = vmatpush1.bf16.msra.mxu0 %v688
  %909 = vmatprep.subr.bf16.mxu0 0
  %910 = vmatpush1.bf16.msra.mxu0 %v689
  %911 = vmatprep.subr.bf16.mxu0 0
  %912 = vmatpush1.bf16.msra.mxu0 %v690
  %913 = vmatprep.subr.bf16.mxu0 0
  %914 = vmatpush1.bf16.msra.mxu0 %v691
  %915 = vmatprep.subr.bf16.mxu0 0
  %916 = vmatpush1.bf16.msra.mxu0 %v692
  %917 = vmatprep.subr.bf16.mxu0 0
  %918 = vmatpush1.bf16.msra.mxu0 %v693
  %919 = vmatprep.mubr.bf16.mxu0 %v409
  %920 = vmatmul.mubr.bf16.gmra.mrb[0].mxu0 %v408
  %v921 = vpop.f32.mrb[0].mxu0
  %v922 = vadd.f32 %v761, %v921
  %v923 = vpop.f32.mrb[0].mxu0
  %v924 = vpop.f32.mrb[0].mxu0
  %v925 = vadd.f32 %v764, %v924
  %v926 = vpop.f32.mrb[0].mxu0
  %927 = vmatprep.mubr.bf16.mxu0 %v413
  %928 = vmatmul.mubr.bf16.gmra.mrb[0].mxu0 %v412
  %v929 = vpop.f32.mrb[0].mxu0
  %v930 = vadd.f32 %v769, %v929
  %v931 = vpop.f32.mrb[0].mxu0
  %v932 = vpop.f32.mrb[0].mxu0
  %v933 = vadd.f32 %v772, %v932
  %v934 = vpop.f32.mrb[0].mxu0
  %935 = vmatprep.mubr.bf16.mxu0 %v417
  %936 = vmatmul.mubr.bf16.gmra.mrb[0].mxu0 %v416
  %v937 = vpop.f32.mrb[0].mxu0
  %v938 = vadd.f32 %v777, %v937
  %v939 = vpop.f32.mrb[0].mxu0
  %v940 = vpop.f32.mrb[0].mxu0
  %v941 = vadd.f32 %v780, %v940
  %v942 = vpop.f32.mrb[0].mxu0
  %943 = vmatprep.mubr.bf16.mxu0 %v421
  %944 = vmatmul.mubr.bf16.gmra.mrb[0].mxu0 %v420
  %v945 = vpop.f32.mrb[0].mxu0
  %v946 = vadd.f32 %v785, %v945
  %v947 = vpop.f32.mrb[0].mxu0
  %v948 = vpop.f32.mrb[0].mxu0
  %v949 = vadd.f32 %v788, %v948
  %v950 = vpop.f32.mrb[0].mxu0
  %951 = vmatprep.mubr.bf16.mxu0 %v425
  %952 = vmatmul.mubr.bf16.gmra.mrb[0].mxu0 %v424
  %v953 = vpop.f32.mrb[0].mxu0
  %v954 = vadd.f32 %v793, %v953
  %v955 = vpop.f32.mrb[0].mxu0
  %v956 = vpop.f32.mrb[0].mxu0
  %v957 = vadd.f32 %v796, %v956
  %v958 = vpop.f32.mrb[0].mxu0
  %959 = vmatprep.mubr.bf16.mxu0 %v429
  %960 = vmatmul.mubr.bf16.gmra.mrb[0].mxu0 %v428
  %v961 = vpop.f32.mrb[0].mxu0
  %v962 = vadd.f32 %v801, %v961
  %v963 = vpop.f32.mrb[0].mxu0
  %v964 = vpop.f32.mrb[0].mxu0
  %v965 = vadd.f32 %v804, %v964
  %v966 = vpop.f32.mrb[0].mxu0
  %967 = vmatprep.mubr.bf16.mxu0 %v433
  %968 = vmatmul.mubr.bf16.gmra.mrb[0].mxu0 %v432
  %v969 = vpop.f32.mrb[0].mxu0
  %v970 = vadd.f32 %v809, %v969
  %v971 = vpop.f32.mrb[0].mxu0
  %v972 = vpop.f32.mrb[0].mxu0
  %v973 = vadd.f32 %v812, %v972
  %v974 = vpop.f32.mrb[0].mxu0
  %975 = vmatprep.mubr.bf16.mxu0 %v437
  %976 = vmatmul.mubr.bf16.gmra.mrb[0].mxu0 %v436
  %v977 = vpop.f32.mrb[0].mxu0
  %v978 = vadd.f32 %v817, %v977
  %v979 = vpop.f32.mrb[0].mxu0
  %v980 = vpop.f32.mrb[0].mxu0
  %v981 = vadd.f32 %v820, %v980
  %v982 = vpop.f32.mrb[0].mxu0
  %983 = vmatprep.mubr.bf16.mxu0 %v441
  %984 = vmatmul.mubr.bf16.gmra.mrb[0].mxu0 %v440
  %v985 = vpop.f32.mrb[0].mxu0
  %v986 = vadd.f32 %v825, %v985
  %v987 = vpop.f32.mrb[0].mxu0
  %v988 = vpop.f32.mrb[0].mxu0
  %v989 = vadd.f32 %v828, %v988
  %v990 = vpop.f32.mrb[0].mxu0
  %991 = vmatprep.mubr.bf16.mxu0 %v445
  %992 = vmatmul.mubr.bf16.gmra.mrb[0].mxu0 %v444
  %v993 = vpop.f32.mrb[0].mxu0
  %v994 = vadd.f32 %v833, %v993
  %v995 = vpop.f32.mrb[0].mxu0
  %v996 = vpop.f32.mrb[0].mxu0
  %v997 = vadd.f32 %v836, %v996
  %v998 = vpop.f32.mrb[0].mxu0
  %999 = vmatprep.mubr.bf16.mxu0 %v449
  %1000 = vmatmul.mubr.bf16.gmra.mrb[0].mxu0 %v448
  %v1001 = vpop.f32.mrb[0].mxu0
  %v1002 = vadd.f32 %v841, %v1001
  %v1003 = vpop.f32.mrb[0].mxu0
  %v1004 = vpop.f32.mrb[0].mxu0
  %v1005 = vadd.f32 %v844, %v1004
  %v1006 = vpop.f32.mrb[0].mxu0
  %1007 = vmatprep.mubr.bf16.mxu0 %v453
  %1008 = vmatmul.mubr.bf16.gmra.mrb[0].mxu0 %v452
  %v1009 = vpop.f32.mrb[0].mxu0
  %v1010 = vadd.f32 %v849, %v1009
  %v1011 = vpop.f32.mrb[0].mxu0
  %v1012 = vpop.f32.mrb[0].mxu0
  %v1013 = vadd.f32 %v852, %v1012
  %v1014 = vpop.f32.mrb[0].mxu0
  %1015 = vmatprep.mubr.bf16.mxu0 %v457
  %1016 = vmatmul.mubr.bf16.gmra.mrb[0].mxu0 %v456
  %v1017 = vpop.f32.mrb[0].mxu0
  %v1018 = vadd.f32 %v857, %v1017
  %v1019 = vpop.f32.mrb[0].mxu0
  %v1020 = vpop.f32.mrb[0].mxu0
  %v1021 = vadd.f32 %v860, %v1020
  %v1022 = vpop.f32.mrb[0].mxu0
  %1023 = vmatprep.mubr.bf16.mxu0 %v461
  %1024 = vmatmul.mubr.bf16.gmra.mrb[0].mxu0 %v460
  %v1025 = vpop.f32.mrb[0].mxu0
  %v1026 = vadd.f32 %v865, %v1025
  %v1027 = vpop.f32.mrb[0].mxu0
  %v1028 = vpop.f32.mrb[0].mxu0
  %v1029 = vadd.f32 %v868, %v1028
  %v1030 = vpop.f32.mrb[0].mxu0
  %1031 = vmatprep.mubr.bf16.mxu0 %v465
  %1032 = vmatmul.mubr.bf16.gmra.mrb[0].mxu0 %v464
  %v1033 = vpop.f32.mrb[0].mxu0
  %v1034 = vadd.f32 %v873, %v1033
  %v1035 = vpop.f32.mrb[0].mxu0
  %v1036 = vpop.f32.mrb[0].mxu0
  %v1037 = vadd.f32 %v876, %v1036
  %v1038 = vpop.f32.mrb[0].mxu0
  %1039 = vmatprep.mubr.bf16.mxu0 %v469
  %1040 = vmatmul.mubr.bf16.gmra.mrb[0].mxu0 %v468
  %v1041 = vpop.f32.mrb[0].mxu0
  %v1042 = vadd.f32 %v881, %v1041
  %v1043 = vpop.f32.mrb[0].mxu0
  %v1044 = vpop.f32.mrb[0].mxu0
  %v1045 = vadd.f32 %v884, %v1044
  %v1046 = vpop.f32.mrb[0].mxu0
  %1047 = vdwg.mxu0
  %v1048 = vadd.f32 %v118, %v922
  %v1049 = vadd.f32 %v119, %v925
  %v1050 = vadd.f32 %v120, %v930
  %v1051 = vadd.f32 %v121, %v933
  %v1052 = vadd.f32 %v122, %v938
  %v1053 = vadd.f32 %v123, %v941
  %v1054 = vadd.f32 %v124, %v946
  %v1055 = vadd.f32 %v125, %v949
  %v1056 = vadd.f32 %v126, %v954
  %v1057 = vadd.f32 %v127, %v957
  %v1058 = vadd.f32 %v128, %v962
  %v1059 = vadd.f32 %v129, %v965
  %v1060 = vadd.f32 %v130, %v970
  %v1061 = vadd.f32 %v131, %v973
  %v1062 = vadd.f32 %v132, %v978
  %v1063 = vadd.f32 %v133, %v981
  %v1064 = vadd.f32 %v134, %v986
  %v1065 = vadd.f32 %v135, %v989
  %v1066 = vadd.f32 %v136, %v994
  %v1067 = vadd.f32 %v137, %v997
  %v1068 = vadd.f32 %v138, %v1002
  %v1069 = vadd.f32 %v139, %v1005
  %v1070 = vadd.f32 %v140, %v1010
  %v1071 = vadd.f32 %v141, %v1013
  %v1072 = vadd.f32 %v142, %v1018
  %v1073 = vadd.f32 %v143, %v1021
  %v1074 = vadd.f32 %v144, %v1026
  %v1075 = vadd.f32 %v145, %v1029
  %v1076 = vadd.f32 %v146, %v1034
  %v1077 = vadd.f32 %v147, %v1037
  %v1078 = vadd.f32 %v148, %v1042
  %v1079 = vadd.f32 %v149, %v1045
  %1080 = vst [vmem:[#allocation2] sm:$0xff] %v1048
  %1081 = vst [vmem:[#allocation2 + $0x8] sm:$0xff] %v1049
  %1082 = vst [vmem:[#allocation2 + $0x10] sm:$0xff] %v1050
  %1083 = vst [vmem:[#allocation2 + $0x18] sm:$0xff] %v1051
  %1084 = vst [vmem:[#allocation2 + $0x20] sm:$0xff] %v1052
  %1085 = vst [vmem:[#allocation2 + $0x28] sm:$0xff] %v1053
  %1086 = vst [vmem:[#allocation2 + $0x30] sm:$0xff] %v1054
  %1087 = vst [vmem:[#allocation2 + $0x38] sm:$0xff] %v1055
  %1088 = vst [vmem:[#allocation2 + $0x40] sm:$0xff] %v1056
  %1089 = vst [vmem:[#allocation2 + $0x48] sm:$0xff] %v1057
  %1090 = vst [vmem:[#allocation2 + $0x50] sm:$0xff] %v1058
  %1091 = vst [vmem:[#allocation2 + $0x58] sm:$0xff] %v1059
  %1092 = vst [vmem:[#allocation2 + $0x60] sm:$0xff] %v1060
  %1093 = vst [vmem:[#allocation2 + $0x68] sm:$0xff] %v1061
  %1094 = vst [vmem:[#allocation2 + $0x70] sm:$0xff] %v1062
  %1095 = vst [vmem:[#allocation2 + $0x78] sm:$0xff] %v1063
  %1096 = vst [vmem:[#allocation2 + $0x80] sm:$0xff] %v1064
  %1097 = vst [vmem:[#allocation2 + $0x88] sm:$0xff] %v1065
  %1098 = vst [vmem:[#allocation2 + $0x90] sm:$0xff] %v1066
  %1099 = vst [vmem:[#allocation2 + $0x98] sm:$0xff] %v1067
  %1100 = vst [vmem:[#allocation2 + $0xa0] sm:$0xff] %v1068
  %1101 = vst [vmem:[#allocation2 + $0xa8] sm:$0xff] %v1069
  %1102 = vst [vmem:[#allocation2 + $0xb0] sm:$0xff] %v1070
  %1103 = vst [vmem:[#allocation2 + $0xb8] sm:$0xff] %v1071
  %1104 = vst [vmem:[#allocation2 + $0xc0] sm:$0xff] %v1072
  %1105 = vst [vmem:[#allocation2 + $0xc8] sm:$0xff] %v1073
  %1106 = vst [vmem:[#allocation2 + $0xd0] sm:$0xff] %v1074
  %1107 = vst [vmem:[#allocation2 + $0xd8] sm:$0xff] %v1075
  %1108 = vst [vmem:[#allocation2 + $0xe0] sm:$0xff] %v1076
  %1109 = vst [vmem:[#allocation2 + $0xe8] sm:$0xff] %v1077
  %1110 = vst [vmem:[#allocation2 + $0xf0] sm:$0xff] %v1078
  %1111 = vst [vmem:[#allocation2 + $0xf8] sm:$0xff] %v1079
  // Predicated region
  $region22: #{expire_span_transformer_xl_forward.15} parent=0 // pred_check
    %p1112 = pneg %p18
  $region23: #{expire_span_transformer_xl_forward.15} parent=0 // pred_check_branch
    %1114 = sbr.rel (%p1112) target = $region25
  $region24: #{expire_span_transformer_xl_forward.15} parent=0 // pred_region
    %v1115 = vld [vmem:[#allocation2] sm:$0xff]
    %v1116 = vld [vmem:[#allocation2 + $0x8] sm:$0xff]
    %v1117 = vld [vmem:[#allocation2 + $0x10] sm:$0xff]
    %v1118 = vld [vmem:[#allocation2 + $0x18] sm:$0xff]
    %v1119 = vld [vmem:[#allocation2 + $0x20] sm:$0xff]
    %v1120 = vld [vmem:[#allocation2 + $0x28] sm:$0xff]
    %v1121 = vld [vmem:[#allocation2 + $0x30] sm:$0xff]
    %v1122 = vld [vmem:[#allocation2 + $0x38] sm:$0xff]
    %v1123 = vld [vmem:[#allocation2 + $0x40] sm:$0xff]
    %v1124 = vld [vmem:[#allocation2 + $0x48] sm:$0xff]
    %v1125 = vld [vmem:[#allocation2 + $0x50] sm:$0xff]
    %v1126 = vld [vmem:[#allocation2 + $0x58] sm:$0xff]
    %v1127 = vld [vmem:[#allocation2 + $0x60] sm:$0xff]
    %v1128 = vld [vmem:[#allocation2 + $0x68] sm:$0xff]
    %v1129 = vld [vmem:[#allocation2 + $0x70] sm:$0xff]
    %v1130 = vld [vmem:[#allocation2 + $0x78] sm:$0xff]
    %v1131 = vld [vmem:[#allocation2 + $0x80] sm:$0xff]
    %v1132 = vld [vmem:[#allocation2 + $0x88] sm:$0xff]
    %v1133 = vld [vmem:[#allocation2 + $0x90] sm:$0xff]
    %v1134 = vld [vmem:[#allocation2 + $0x98] sm:$0xff]
    %v1135 = vld [vmem:[#allocation2 + $0xa0] sm:$0xff]
    %v1136 = vld [vmem:[#allocation2 + $0xa8] sm:$0xff]
    %v1137 = vld [vmem:[#allocation2 + $0xb0] sm:$0xff]
    %v1138 = vld [vmem:[#allocation2 + $0xb8] sm:$0xff]
    %v1139 = vld [vmem:[#allocation2 + $0xc0] sm:$0xff]
    %v1140 = vld [vmem:[#allocation2 + $0xc8] sm:$0xff]
    %v1141 = vld [vmem:[#allocation2 + $0xd0] sm:$0xff]
    %v1142 = vld [vmem:[#allocation2 + $0xd8] sm:$0xff]
    %v1143 = vld [vmem:[#allocation2 + $0xe0] sm:$0xff]
    %v1144 = vld [vmem:[#allocation2 + $0xe8] sm:$0xff]
    %v1145 = vld [vmem:[#allocation2 + $0xf0] sm:$0xff]
    %v1146 = vld [vmem:[#allocation2 + $0xf8] sm:$0xff]
    %v1147 = vld [vmem:[%s2] sm:$0x1]
    %v1149 = vlaneseq
    %v1150 = vshrl.u32 %v1149, 7
    %v1151 = vsub.s32 0, %v1150
    %v1152 = vrot.slane %v1147, %v1151
    %v1154 = vadd.f32 %v1115, %v1152
    %v1155 = vadd.f32 %v1116, %v1152
    %v1156 = vadd.f32 %v1117, %v1152
    %v1157 = vadd.f32 %v1118, %v1152
    %v1158 = vadd.f32 %v1119, %v1152
    %v1159 = vadd.f32 %v1120, %v1152
    %v1160 = vadd.f32 %v1121, %v1152
    %v1161 = vadd.f32 %v1122, %v1152
    %v1162 = vadd.f32 %v1123, %v1152
    %v1163 = vadd.f32 %v1124, %v1152
    %v1164 = vadd.f32 %v1125, %v1152
    %v1165 = vadd.f32 %v1126, %v1152
    %v1166 = vadd.f32 %v1127, %v1152
    %v1167 = vadd.f32 %v1128, %v1152
    %v1168 = vadd.f32 %v1129, %v1152
    %v1169 = vadd.f32 %v1130, %v1152
    %v1170 = vadd.f32 %v1131, %v1152
    %v1171 = vadd.f32 %v1132, %v1152
    %v1172 = vadd.f32 %v1133, %v1152
    %v1173 = vadd.f32 %v1134, %v1152
    %v1174 = vadd.f32 %v1135, %v1152
    %v1175 = vadd.f32 %v1136, %v1152
    %v1176 = vadd.f32 %v1137, %v1152
    %v1177 = vadd.f32 %v1138, %v1152
    %v1178 = vadd.f32 %v1139, %v1152
    %v1179 = vadd.f32 %v1140, %v1152
    %v1180 = vadd.f32 %v1141, %v1152
    %v1181 = vadd.f32 %v1142, %v1152
    %v1182 = vadd.f32 %v1143, %v1152
    %v1183 = vadd.f32 %v1144, %v1152
    %v1184 = vadd.f32 %v1145, %v1152
    %v1185 = vadd.f32 %v1146, %v1152
    %v1186 = vld [vmem:[%s3] sm:$0xf]
    %v1187 = vld [vmem:[%s3 + $0x4] sm:$0xf]
    %v1188 = vld [vmem:[%s3 + $0x8] sm:$0xf]
    %v1189 = vld [vmem:[%s3 + $0xc] sm:$0xf]
    %v1190 = vld [vmem:[%s3 + $0x10] sm:$0xf]
    %v1191 = vld [vmem:[%s3 + $0x14] sm:$0xf]
    %v1192 = vld [vmem:[%s3 + $0x18] sm:$0xf]
    %v1193 = vld [vmem:[%s3 + $0x1c] sm:$0xf]
    %v1194 = vld [vmem:[%s3 + $0x20] sm:$0xf]
    %v1195 = vld [vmem:[%s3 + $0x24] sm:$0xf]
    %v1196 = vld [vmem:[%s3 + $0x28] sm:$0xf]
    %v1197 = vld [vmem:[%s3 + $0x2c] sm:$0xf]
    %v1198 = vld [vmem:[%s3 + $0x30] sm:$0xf]
    %v1199 = vld [vmem:[%s3 + $0x34] sm:$0xf]
    %v1200 = vld [vmem:[%s3 + $0x38] sm:$0xf]
    %v1201 = vld [vmem:[%s3 + $0x3c] sm:$0xf]
    %v1202 = vld [vmem:[%s3 + $0x40] sm:$0xf]
    %v1203 = vld [vmem:[%s3 + $0x44] sm:$0xf]
    %v1204 = vld [vmem:[%s3 + $0x48] sm:$0xf]
    %v1205 = vld [vmem:[%s3 + $0x4c] sm:$0xf]
    %v1206 = vld [vmem:[%s3 + $0x50] sm:$0xf]
    %v1207 = vld [vmem:[%s3 + $0x54] sm:$0xf]
    %v1208 = vld [vmem:[%s3 + $0x58] sm:$0xf]
    %v1209 = vld [vmem:[%s3 + $0x5c] sm:$0xf]
    %v1210 = vld [vmem:[%s3 + $0x60] sm:$0xf]
    %v1211 = vld [vmem:[%s3 + $0x64] sm:$0xf]
    %v1212 = vld [vmem:[%s3 + $0x68] sm:$0xf]
    %v1213 = vld [vmem:[%s3 + $0x6c] sm:$0xf]
    %v1214 = vld [vmem:[%s3 + $0x70] sm:$0xf]
    %v1215 = vld [vmem:[%s3 + $0x74] sm:$0xf]
    %v1216 = vld [vmem:[%s3 + $0x78] sm:$0xf]
    %v1217 = vld [vmem:[%s3 + $0x7c] sm:$0xf]
    %v1218 = vunpack.c.l.bf16 %v1186
    %v1219 = vunpack.c.l.bf16 %v1187
    %v1220 = vunpack.c.l.bf16 %v1188
    %v1221 = vunpack.c.l.bf16 %v1189
    %v1222 = vunpack.c.l.bf16 %v1190
    %v1223 = vunpack.c.l.bf16 %v1191
    %v1224 = vunpack.c.l.bf16 %v1192
    %v1225 = vunpack.c.l.bf16 %v1193
    %v1226 = vunpack.c.l.bf16 %v1194
    %v1227 = vunpack.c.l.bf16 %v1195
    %v1228 = vunpack.c.l.bf16 %v1196
    %v1229 = vunpack.c.l.bf16 %v1197
    %v1230 = vunpack.c.l.bf16 %v1198
    %v1231 = vunpack.c.l.bf16 %v1199
    %v1232 = vunpack.c.l.bf16 %v1200
    %v1233 = vunpack.c.l.bf16 %v1201
    %v1234 = vunpack.c.l.bf16 %v1202
    %v1235 = vunpack.c.l.bf16 %v1203
    %v1236 = vunpack.c.l.bf16 %v1204
    %v1237 = vunpack.c.l.bf16 %v1205
    %v1238 = vunpack.c.l.bf16 %v1206
    %v1239 = vunpack.c.l.bf16 %v1207
    %v1240 = vunpack.c.l.bf16 %v1208
    %v1241 = vunpack.c.l.bf16 %v1209
    %v1242 = vunpack.c.l.bf16 %v1210
    %v1243 = vunpack.c.l.bf16 %v1211
    %v1244 = vunpack.c.l.bf16 %v1212
    %v1245 = vunpack.c.l.bf16 %v1213
    %v1246 = vunpack.c.l.bf16 %v1214
    %v1247 = vunpack.c.l.bf16 %v1215
    %v1248 = vunpack.c.l.bf16 %v1216
    %v1249 = vunpack.c.l.bf16 %v1217
    %v1250 = vadd.f32 %v1154, %v1218
    %v1251 = vadd.f32 %v1155, %v1219
    %v1252 = vadd.f32 %v1156, %v1220
    %v1253 = vadd.f32 %v1157, %v1221
    %v1254 = vadd.f32 %v1158, %v1222
    %v1255 = vadd.f32 %v1159, %v1223
    %v1256 = vadd.f32 %v1160, %v1224
    %v1257 = vadd.f32 %v1161, %v1225
    %v1258 = vadd.f32 %v1162, %v1226
    %v1259 = vadd.f32 %v1163, %v1227
    %v1260 = vadd.f32 %v1164, %v1228
    %v1261 = vadd.f32 %v1165, %v1229
    %v1262 = vadd.f32 %v1166, %v1230
    %v1263 = vadd.f32 %v1167, %v1231
    %v1264 = vadd.f32 %v1168, %v1232
    %v1265 = vadd.f32 %v1169, %v1233
    %v1266 = vadd.f32 %v1170, %v1234
    %v1267 = vadd.f32 %v1171, %v1235
    %v1268 = vadd.f32 %v1172, %v1236
    %v1269 = vadd.f32 %v1173, %v1237
    %v1270 = vadd.f32 %v1174, %v1238
    %v1271 = vadd.f32 %v1175, %v1239
    %v1272 = vadd.f32 %v1176, %v1240
    %v1273 = vadd.f32 %v1177, %v1241
    %v1274 = vadd.f32 %v1178, %v1242
    %v1275 = vadd.f32 %v1179, %v1243
    %v1276 = vadd.f32 %v1180, %v1244
    %v1277 = vadd.f32 %v1181, %v1245
    %v1278 = vadd.f32 %v1182, %v1246
    %v1279 = vadd.f32 %v1183, %v1247
    %v1280 = vadd.f32 %v1184, %v1248
    %v1281 = vadd.f32 %v1185, %v1249
    %v1282 = vpack.c.bf16 %v1251, %v1250
    %v1283 = vpack.c.bf16 %v1253, %v1252
    %v1284 = vpack.c.bf16 %v1255, %v1254
    %v1285 = vpack.c.bf16 %v1257, %v1256
    %v1286 = vpack.c.bf16 %v1259, %v1258
    %v1287 = vpack.c.bf16 %v1261, %v1260
    %v1288 = vpack.c.bf16 %v1263, %v1262
    %v1289 = vpack.c.bf16 %v1265, %v1264
    %v1290 = vpack.c.bf16 %v1267, %v1266
    %v1291 = vpack.c.bf16 %v1269, %v1268
    %v1292 = vpack.c.bf16 %v1271, %v1270
    %v1293 = vpack.c.bf16 %v1273, %v1272
    %v1294 = vpack.c.bf16 %v1275, %v1274
    %v1295 = vpack.c.bf16 %v1277, %v1276
    %v1296 = vpack.c.bf16 %v1279, %v1278
    %v1297 = vpack.c.bf16 %v1281, %v1280
    %v1314 = vunpack.c.l.b16 %v1282
    %v1315 = vunpack.c.h.b16 %v1282
    %v1316 = vunpack.c.l.b16 %v1283
    %v1317 = vunpack.c.h.b16 %v1283
    %v1318 = vunpack.c.l.b16 %v1284
    %v1319 = vunpack.c.h.b16 %v1284
    %v1320 = vunpack.c.l.b16 %v1285
    %v1321 = vunpack.c.h.b16 %v1285
    %v1322 = vunpack.c.l.b16 %v1286
    %v1323 = vunpack.c.h.b16 %v1286
    %v1324 = vunpack.c.l.b16 %v1287
    %v1325 = vunpack.c.h.b16 %v1287
    %v1326 = vunpack.c.l.b16 %v1288
    %v1327 = vunpack.c.h.b16 %v1288
    %v1328 = vunpack.c.l.b16 %v1289
    %v1329 = vunpack.c.h.b16 %v1289
    %v1330 = vunpack.c.l.b16 %v1290
    %v1331 = vunpack.c.h.b16 %v1290
    %v1332 = vunpack.c.l.b16 %v1291
    %v1333 = vunpack.c.h.b16 %v1291
    %v1334 = vunpack.c.l.b16 %v1292
    %v1335 = vunpack.c.h.b16 %v1292
    %v1336 = vunpack.c.l.b16 %v1293
    %v1337 = vunpack.c.h.b16 %v1293
    %v1338 = vunpack.c.l.b16 %v1294
    %v1339 = vunpack.c.h.b16 %v1294
    %v1340 = vunpack.c.l.b16 %v1295
    %v1341 = vunpack.c.h.b16 %v1295
    %v1342 = vunpack.c.l.b16 %v1296
    %v1343 = vunpack.c.h.b16 %v1296
    %v1344 = vunpack.c.l.b16 %v1297
    %v1345 = vunpack.c.h.b16 %v1297
    %v1346 = vpack.c.b16 %v1314, %v1314
    %v1347 = vpack.c.b16 %v1315, %v1315
    %v1348 = vpack.c.b16 %v1316, %v1316
    %v1349 = vpack.c.b16 %v1317, %v1317
    %v1350 = vpack.c.b16 %v1318, %v1318
    %v1351 = vpack.c.b16 %v1319, %v1319
    %v1352 = vpack.c.b16 %v1320, %v1320
    %v1353 = vpack.c.b16 %v1321, %v1321
    %v1354 = vpack.c.b16 %v1322, %v1322
    %v1355 = vpack.c.b16 %v1323, %v1323
    %v1356 = vpack.c.b16 %v1324, %v1324
    %v1357 = vpack.c.b16 %v1325, %v1325
    %v1358 = vpack.c.b16 %v1326, %v1326
    %v1359 = vpack.c.b16 %v1327, %v1327
    %v1360 = vpack.c.b16 %v1328, %v1328
    %v1361 = vpack.c.b16 %v1329, %v1329
    %v1362 = vpack.c.b16 %v1330, %v1330
    %v1363 = vpack.c.b16 %v1331, %v1331
    %v1364 = vpack.c.b16 %v1332, %v1332
    %v1365 = vpack.c.b16 %v1333, %v1333
    %v1366 = vpack.c.b16 %v1334, %v1334
    %v1367 = vpack.c.b16 %v1335, %v1335
    %v1368 = vpack.c.b16 %v1336, %v1336
    %v1369 = vpack.c.b16 %v1337, %v1337
    %v1370 = vpack.c.b16 %v1338, %v1338
    %v1371 = vpack.c.b16 %v1339, %v1339
    %v1372 = vpack.c.b16 %v1340, %v1340
    %v1373 = vpack.c.b16 %v1341, %v1341
    %v1374 = vpack.c.b16 %v1342, %v1342
    %v1375 = vpack.c.b16 %v1343, %v1343
    %v1376 = vpack.c.b16 %v1344, %v1344
    %v1377 = vpack.c.b16 %v1345, %v1345
    %1410 = vst [vmem:[%s4] sm:$0xf] %v1346
    %1411 = vst [vmem:[%s4 + $0x4] sm:$0xf] %v1347
    %1412 = vst [vmem:[%s4 + $0x8] sm:$0xf] %v1348
    %1413 = vst [vmem:[%s4 + $0xc] sm:$0xf] %v1349
    %1414 = vst [vmem:[%s4 + $0x10] sm:$0xf] %v1350
    %1415 = vst [vmem:[%s4 + $0x14] sm:$0xf] %v1351
    %1416 = vst [vmem:[%s4 + $0x18] sm:$0xf] %v1352
    %1417 = vst [vmem:[%s4 + $0x1c] sm:$0xf] %v1353
    %1418 = vst [vmem:[%s4 + $0x20] sm:$0xf] %v1354
    %1419 = vst [vmem:[%s4 + $0x24] sm:$0xf] %v1355
    %1420 = vst [vmem:[%s4 + $0x28] sm:$0xf] %v1356
    %1421 = vst [vmem:[%s4 + $0x2c] sm:$0xf] %v1357
    %1422 = vst [vmem:[%s4 + $0x30] sm:$0xf] %v1358
    %1423 = vst [vmem:[%s4 + $0x34] sm:$0xf] %v1359
    %1424 = vst [vmem:[%s4 + $0x38] sm:$0xf] %v1360
    %1425 = vst [vmem:[%s4 + $0x3c] sm:$0xf] %v1361
    %1426 = vst [vmem:[%s4 + $0x40] sm:$0xf] %v1362
    %1427 = vst [vmem:[%s4 + $0x44] sm:$0xf] %v1363
    %1428 = vst [vmem:[%s4 + $0x48] sm:$0xf] %v1364
    %1429 = vst [vmem:[%s4 + $0x4c] sm:$0xf] %v1365
    %1430 = vst [vmem:[%s4 + $0x50] sm:$0xf] %v1366
    %1431 = vst [vmem:[%s4 + $0x54] sm:$0xf] %v1367
    %1432 = vst [vmem:[%s4 + $0x58] sm:$0xf] %v1368
    %1433 = vst [vmem:[%s4 + $0x5c] sm:$0xf] %v1369
    %1434 = vst [vmem:[%s4 + $0x60] sm:$0xf] %v1370
    %1435 = vst [vmem:[%s4 + $0x64] sm:$0xf] %v1371
    %1436 = vst [vmem:[%s4 + $0x68] sm:$0xf] %v1372
    %1437 = vst [vmem:[%s4 + $0x6c] sm:$0xf] %v1373
    %1438 = vst [vmem:[%s4 + $0x70] sm:$0xf] %v1374
    %1439 = vst [vmem:[%s4 + $0x74] sm:$0xf] %v1375
    %1440 = vst [vmem:[%s4 + $0x78] sm:$0xf] %v1376
    %1441 = vst [vmem:[%s4 + $0x7c] sm:$0xf] %v1377
  $region25: #{expire_span_transformer_xl_forward.15} parent=0 // pred_fallthru
    _
  // Predicated region
  $region26: #{expire_span_transformer_xl_forward.15} parent=0 // pred_check
    _
  $region27: #{expire_span_transformer_xl_forward.15} parent=0 // pred_check_branch
    %1443 = sbr.rel (0) target = $region29
  $region28: #{expire_span_transformer_xl_forward.15} parent=0 // pred_region
    _
  $region29: #{expire_span_transformer_xl_forward.15} parent=0 // pred_fallthru
    _
  // Predicated region
  $region30: #{expire_span_transformer_xl_forward.15} parent=0 // pred_check
    _
  $region31: #{expire_span_transformer_xl_forward.15} parent=0 // pred_check_branch
    %1445 = sbr.rel (0) target = $region33
  $region32: #{expire_span_transformer_xl_forward.15} parent=0 // pred_region
    _
  $region33: #{expire_span_transformer_xl_forward.15} parent=0 // pred_fallthru
    _

</llo_original>
